<compile_context>
chip_gen: v5e
topology: v5e:2x2
jax: 0.10.0
libtpu: 0.0.40
codegen_flags: <defaults>
</compile_context>

<pallas_src>
import jax
import jax.numpy as jnp
from jax.experimental import pallas as pl
from jax.experimental.pallas import tpu as pltpu

BN_EPS = 1e-5

B_IN, B_PAD = 200, 256      # VAEFC_AE input/output feature dim (padded)
H1, H1_PAD = 400, 512
H2 = 256
H3 = 128
Z_DIM, Z_PAD = 32, 128      # latent dim (z_dim constructor arg)

# Packed per-column vector slab: one f32 [VEC_ROWS, VEC_W] array, zero-padded.
VEC_W = 512
VEC_ROWS = 16
(ROW_G1, ROW_BE1, ROW_G2, ROW_BE2, ROW_G3, ROW_BE3, ROW_BZ,
 ROW_GD1, ROW_BED1, ROW_GD2, ROW_BED2, ROW_GD3, ROW_BED3, ROW_B4) = range(14)


# ----------------------------- kernel ---------------------------------------

def vaefc_ae_kernel(
    x_ref,                          # [M, B_PAD]  bf16 (VMEM, auto DMA)
    w1_ref, w2_ref, w3_ref,         # encoder weights, bf16 (VMEM, auto DMA)
    wz_ref, wd1_ref,                # latent + first decoder weight (VMEM)
    vecs_ref,                       # [16, 512] f32 packed gammas/betas/biases
    wd2_hbm, wd3_hbm, w4_hbm,       # late decoder weights, bf16, left in HBM
    out_ref,                        # [M, B_PAD] f32
    wd2_buf, wd3_buf, w4_buf,       # VMEM scratch for the manual weight DMAs
    sems,                           # DMA semaphores (3,)
):
    # Prefetch the decoder-half weights: they are not needed until the whole
    # encoder has run, so their HBM->VMEM DMA hides behind the encoder
    # matmuls/BN instead of serializing ahead of the kernel body.
    cp_wd2 = pltpu.make_async_copy(wd2_hbm, wd2_buf, sems.at[0])
    cp_wd3 = pltpu.make_async_copy(wd3_hbm, wd3_buf, sems.at[1])
    cp_w4 = pltpu.make_async_copy(w4_hbm, w4_buf, sems.at[2])
    cp_wd2.start()
    cp_wd3.start()
    cp_w4.start()

    def vec(row, width):            # static (1, width) slice of the slab
        return vecs_ref[row:row + 1, :width]

    def mm(h_bf16, w):              # bf16 x bf16 -> f32-accumulated MXU matmul
        return jnp.dot(h_bf16, w[...], preferred_element_type=jnp.float32)

    def bn_relu(y, g_row, b_row):
        # Training-mode BatchNorm1d folded into one per-column scale/shift.
        # Single-pass batch stats (sum, sum-of-squares), f32 accumulation;
        # rsqrt goes to the EUP (free slot).
        inv_n = 1.0 / y.shape[0]
        mean = jnp.sum(y, axis=0, keepdims=True) * inv_n
        var = jnp.maximum(
            jnp.sum(y * y, axis=0, keepdims=True) * inv_n - mean * mean, 0.0)
        w = y.shape[1]
        scale = vec(g_row, w) * jax.lax.rsqrt(var + BN_EPS)
        shift = vec(b_row, w) - mean * scale
        # Carry activations as bf16: halves vreg/VMEM pressure and feeds the
        # next MXU matmul directly (stats above remain in f32).
        return jnp.maximum(y * scale + shift, 0.0).astype(jnp.bfloat16)

    h = x_ref[...]                                                # bf16

    # --- encode: h1 = relu(fc1(x)); z = fc2(h1) ---
    # (trailing F.relu is idempotent after BN+ReLU and is omitted; the pre-BN
    #  Linear biases are exactly cancelled by BN's mean subtraction.)
    h = bn_relu(mm(h, w1_ref), ROW_G1, ROW_BE1)                   # 256 -> 512
    h = bn_relu(mm(h, w2_ref), ROW_G2, ROW_BE2)                   # 512 -> 256
    h = bn_relu(mm(h, w3_ref), ROW_G3, ROW_BE3)                   # 256 -> 128
    z = (mm(h, wz_ref) + vec(ROW_BZ, Z_PAD)).astype(jnp.bfloat16)  # -> 128

    # --- decode: h3 = relu(fc3(z)); out = sigmoid(fc4(h3)) ---
    h = bn_relu(mm(z, wd1_ref), ROW_GD1, ROW_BED1)                # 128 -> 128
    cp_wd2.wait()
    h = bn_relu(mm(h, wd2_buf), ROW_GD2, ROW_BED2)                # 128 -> 256
    cp_wd3.wait()
    h = bn_relu(mm(h, wd3_buf), ROW_GD3, ROW_BED3)                # 256 -> 512
    cp_w4.wait()
    y = mm(h, w4_buf) + vec(ROW_B4, B_PAD)                        # 512 -> 256
    out_ref[...] = jax.nn.sigmoid(y)                              # lane-dense


# --------------------------- parameters --------------------------------------

def init_params(key, z_dim=Z_DIM):
    """Unpadded f32 parameters matching the PyTorch module's structure.
    Linear weights stored pre-transposed as [in, out]; biases / BN as [out].
    BN gamma/beta are randomly perturbed from the 1/0 defaults so the
    end-to-end correctness checks are discriminating."""
    keys = iter(jax.random.split(key, 40))

    def linear(fi, fo):
        k = 1.0 / jnp.sqrt(jnp.float32(fi))
        w = jax.random.uniform(next(keys), (fi, fo), jnp.float32, -k, k)
        bias = jax.random.uniform(next(keys), (fo,), jnp.float32, -k, k)
        return w, bias

    def bn(fo):
        g = 1.0 + 0.1 * jax.random.normal(next(keys), (fo,), jnp.float32)
        be = 0.1 * jax.random.normal(next(keys), (fo,), jnp.float32)
        return g, be

    p = {}
    for name, (fi, fo) in zip(("e1", "e2", "e3"),
                              ((B_IN, H1), (H1, H2), (H2, H3))):
        w, bias = linear(fi, fo)
        g, be = bn(fo)
        p[name] = (w, bias, g, be)
    p["fc2"] = linear(H3, z_dim)
    for name, (fi, fo) in zip(("d1", "d2", "d3"),
                              ((z_dim, H3), (H3, H2), (H2, H1))):
        w, bias = linear(fi, fo)
        g, be = bn(fo)
        p[name] = (w, bias, g, be)
    p["fc4"] = linear(H1, B_IN)
    return p


def _pad_w(w, rows, cols):
    """Zero-pad a weight to [rows, cols] and cast to bf16.  The padding MUST be
    zero: zero output-columns keep padded lanes at exactly 0 (and gamma/beta
    pads of 0 keep them 0 through BN), zero input-rows make padded lanes inert
    in the next matmul."""
    return jnp.pad(w, ((0, rows - w.shape[0]),
                       (0, cols - w.shape[1]))).astype(jnp.bfloat16)


def _vec_row(v):
    v = jnp.asarray(v, jnp.float32).reshape(1, -1)
    return jnp.pad(v, ((0, 0), (0, VEC_W - v.shape[1])))


def prepare_params(p):
    """Pad feature dims to 128-multiples, cast matmul weights to bf16, drop the
    pre-BN Linear biases (cancelled by training-mode BN), and pack the 14
    per-column vectors into a single f32 [16, 512] slab."""
    w1 = _pad_w(p["e1"][0], B_PAD, H1_PAD)
    w2 = _pad_w(p["e2"][0], H1_PAD, H2)
    w3 = _pad_w(p["e3"][0], H2, H3)
    wz = _pad_w(p["fc2"][0], H3, Z_PAD)
    wd1 = _pad_w(p["d1"][0], Z_PAD, H3)
    wd2 = _pad_w(p["d2"][0], H3, H2)
    wd3 = _pad_w(p["d3"][0], H2, H1_PAD)
    w4 = _pad_w(p["fc4"][0], H1_PAD, B_PAD)

    rows = [
        _vec_row(p["e1"][2]), _vec_row(p["e1"][3]),
        _vec_row(p["e2"][2]), _vec_row(p["e2"][3]),
        _vec_row(p["e3"][2]), _vec_row(p["e3"][3]),
        _vec_row(p["fc2"][1]),
        _vec_row(p["d1"][2]), _vec_row(p["d1"][3]),
        _vec_row(p["d2"][2]), _vec_row(p["d2"][3]),
        _vec_row(p["d3"][2]), _vec_row(p["d3"][3]),
        _vec_row(p["fc4"][1]),
    ]
    rows.append(jnp.zeros((VEC_ROWS - len(rows), VEC_W), jnp.float32))
    vecs = jnp.concatenate(rows, axis=0)
    return (w1, w2, w3, wz, wd1, wd2, wd3, w4, vecs)


# ------------------------------ wrapper ---------------------------------------

@jax.jit
def vaefc_ae_forward(x, w1, w2, w3, wz, wd1, wd2, wd3, w4, vecs):
    n = x.shape[0]
    # Pre-pad/cast x in the wrapper: halves its HBM->VMEM DMA and removes the
    # in-kernel cast pass (a bytes reduction, not a compute hoist).
    x_p = jnp.pad(x, ((0, 0), (0, B_PAD - B_IN))).astype(jnp.bfloat16)
    vmem = pl.BlockSpec(memory_space=pltpu.MemorySpace.VMEM)
    hbm = pl.BlockSpec(memory_space=pl.ANY)
    out = pl.pallas_call(
        vaefc_ae_kernel,
        out_shape=jax.ShapeDtypeStruct((n, B_PAD), jnp.float32),
        in_specs=[vmem] * 7 + [hbm] * 3,
        out_specs=vmem,
        scratch_shapes=[
            pltpu.VMEM((H3, H2), jnp.bfloat16),         # wd2 buffer
            pltpu.VMEM((H2, H1_PAD), jnp.bfloat16),     # wd3 buffer
            pltpu.VMEM((H1_PAD, B_PAD), jnp.bfloat16),  # w4 buffer
            pltpu.SemaphoreType.DMA((3,)),
        ],
        compiler_params=pltpu.CompilerParams(vmem_limit_bytes=16 << 20),
    )(x_p, w1, w2, w3, wz, wd1, vecs, wd2, wd3, w4)
    return out[:, :B_IN]


# --------------------------- references ---------------------------------------

def kernel_math_reference(x, prep):
    """Plain-JAX replica of the kernel's own padded / bf16 / single-pass-BN
    math (tight check on the Pallas plumbing: DMA overlap, slab slicing)."""
    w1, w2, w3, wz, wd1, wd2, wd3, w4, vecs = prep

    def vec(row, width):
        return vecs[row:row + 1, :width]

    def mm(h, w):
        return jnp.dot(h, w, preferred_element_type=jnp.float32)

    def bn_relu(y, g_row, b_row):
        inv_n = 1.0 / y.shape[0]
        mean = jnp.sum(y, axis=0, keepdims=True) * inv_n
        var = jnp.maximum(
            jnp.sum(y * y, axis=0, keepdims=True) * inv_n - mean * mean, 0.0)
        scale = vec(g_row, y.shape[1]) * jax.lax.rsqrt(var + BN_EPS)
        shift = vec(b_row, y.shape[1]) - mean * scale
        return jnp.maximum(y * scale + shift, 0.0).astype(jnp.bfloat16)

    h = jnp.pad(x, ((0, 0), (0, B_PAD - B_IN))).astype(jnp.bfloat16)
    h = bn_relu(mm(h, w1), ROW_G1, ROW_BE1)
    h = bn_relu(mm(h, w2), ROW_G2, ROW_BE2)
    h = bn_relu(mm(h, w3), ROW_G3, ROW_BE3)
    z = (mm(h, wz) + vec(ROW_BZ, Z_PAD)).astype(jnp.bfloat16)
    h = bn_relu(mm(z, wd1), ROW_GD1, ROW_BED1)
    h = bn_relu(mm(h, wd2), ROW_GD2, ROW_BED2)
    h = bn_relu(mm(h, wd3), ROW_GD3, ROW_BED3)
    y = mm(h, w4) + vec(ROW_B4, B_PAD)
    return jax.nn.sigmoid(y)[:, :B_IN]


def reference_module(x, p):
    """Independent f32 reference equivalent to the PyTorch module: unpadded
    shapes, Linear biases kept, two-pass training-mode BatchNorm1d, and the
    (redundant) F.relu calls included.  Validates bias-cancellation,
    padding-inertness and bf16 accuracy of the kernel."""
    def bn(y, g, be):
        mean = jnp.mean(y, axis=0, keepdims=True)
        var = jnp.mean((y - mean) ** 2, axis=0, keepdims=True)
        return g * (y - mean) / jnp.sqrt(var + BN_EPS) + be

    h = x
    for name in ("e1", "e2", "e3"):
        w, bias, g, be = p[name]
        h = jax.nn.relu(bn(h @ w + bias, g, be))
    h = jax.nn.relu(h)                       # F.relu in encode()
    wz, bz = p["fc2"]
    h = h @ wz + bz                          # z = fc2(h1)
    for name in ("d1", "d2", "d3"):
        w, bias, g, be = p[name]
        h = jax.nn.relu(bn(h @ w + bias, g, be))
    h = jax.nn.relu(h)                       # F.relu in decode()
    w4, b4 = p["fc4"]
    return jax.nn.sigmoid(h @ w4 + b4)


if __name__ == "__main__":
    key = jax.random.PRNGKey(0)
    k_x, k_p = jax.random.split(key)

    # batch=256: fills the 256-wide MXU on v6e/v7x (v5e's 128x128 is full at
    # 128 already); training-mode BatchNorm needs batch > 1.
    batch = 256
    x = jax.random.normal(k_x, (batch, B_IN), dtype=jnp.float32)

    params = init_params(k_p, z_dim=Z_DIM)
    prep = prepare_params(params)

    out = jax.block_until_ready(vaefc_ae_forward(x, *prep))

    assert out.shape == (batch, B_IN), out.shape
    assert out.dtype == jnp.float32, out.dtype
    assert bool(jnp.all(jnp.isfinite(out)))
    assert bool(jnp.all((out >= 0.0) & (out <= 1.0)))  # sigmoid range

    # (1) tight check vs. a replica of the kernel's own bf16/padded math.
    ref_bf16 = kernel_math_reference(x, prep)
    assert bool(jnp.allclose(out, ref_bf16, atol=2e-3, rtol=2e-3)), \
        float(jnp.max(jnp.abs(out - ref_bf16)))

    # (2) loose check vs. an independent f32 PyTorch-equivalent reference.
    ref_f32 = reference_module(x, params)
    assert bool(jnp.allclose(out, ref_f32, atol=3e-2)), \
        float(jnp.max(jnp.abs(out - ref_f32)))

    print("KERNEL_OK")
</pallas_src>

<mosaic_0001>
module attributes {stable_mosaic.version = 11 : i64} {
  func.func @vaefc_ae_kernel(%arg0: memref<256x256xbf16, #tpu.memory_space<vmem>>, %arg1: memref<256x512xbf16, #tpu.memory_space<vmem>>, %arg2: memref<512x256xbf16, #tpu.memory_space<vmem>>, %arg3: memref<256x128xbf16, #tpu.memory_space<vmem>>, %arg4: memref<128x128xbf16, #tpu.memory_space<vmem>>, %arg5: memref<128x128xbf16, #tpu.memory_space<vmem>>, %arg6: memref<16x512xf32, #tpu.memory_space<vmem>>, %arg7: memref<128x256xbf16, #tpu.memory_space<any>>, %arg8: memref<256x512xbf16, #tpu.memory_space<any>>, %arg9: memref<512x256xbf16, #tpu.memory_space<any>>, %arg10: memref<256x256xf32, #tpu.memory_space<vmem>>, %arg11: memref<128x256xbf16, #tpu.memory_space<vmem>>, %arg12: memref<256x512xbf16, #tpu.memory_space<vmem>>, %arg13: memref<512x256xbf16, #tpu.memory_space<vmem>>, %arg14: memref<3x!tpu.dma_semaphore, #tpu.memory_space<semaphore_mem>>) attributes {dimension_semantics = [], scalar_prefetch = 0 : i64, scratch_operands = 4 : i64, tpu.core_type = #tpu.core_type<tc>} {
    %c0_i32 = arith.constant 0 : i32
    %0 = tpu.memref_slice %arg14[%c0_i32] : memref<3x!tpu.dma_semaphore, #tpu.memory_space<semaphore_mem>> -> memref<1x!tpu.dma_semaphore, #tpu.memory_space<semaphore_mem>>
    %1 = tpu.memref_squeeze %0 : memref<1x!tpu.dma_semaphore, #tpu.memory_space<semaphore_mem>> -> memref<!tpu.dma_semaphore, #tpu.memory_space<semaphore_mem>>
    tpu.enqueue_dma source(%arg7 : memref<128x256xbf16, #tpu.memory_space<any>>) target(%arg11 : memref<128x256xbf16, #tpu.memory_space<vmem>>) target_semaphore(%1 : memref<!tpu.dma_semaphore, #tpu.memory_space<semaphore_mem>>)
    %c1_i32 = arith.constant 1 : i32
    %2 = tpu.memref_slice %arg14[%c1_i32] : memref<3x!tpu.dma_semaphore, #tpu.memory_space<semaphore_mem>> -> memref<1x!tpu.dma_semaphore, #tpu.memory_space<semaphore_mem>>
    %3 = tpu.memref_squeeze %2 : memref<1x!tpu.dma_semaphore, #tpu.memory_space<semaphore_mem>> -> memref<!tpu.dma_semaphore, #tpu.memory_space<semaphore_mem>>
    tpu.enqueue_dma source(%arg8 : memref<256x512xbf16, #tpu.memory_space<any>>) target(%arg12 : memref<256x512xbf16, #tpu.memory_space<vmem>>) target_semaphore(%3 : memref<!tpu.dma_semaphore, #tpu.memory_space<semaphore_mem>>)
    %c2_i32 = arith.constant 2 : i32
    %4 = tpu.memref_slice %arg14[%c2_i32] : memref<3x!tpu.dma_semaphore, #tpu.memory_space<semaphore_mem>> -> memref<1x!tpu.dma_semaphore, #tpu.memory_space<semaphore_mem>>
    %5 = tpu.memref_squeeze %4 : memref<1x!tpu.dma_semaphore, #tpu.memory_space<semaphore_mem>> -> memref<!tpu.dma_semaphore, #tpu.memory_space<semaphore_mem>>
    tpu.enqueue_dma source(%arg9 : memref<512x256xbf16, #tpu.memory_space<any>>) target(%arg13 : memref<512x256xbf16, #tpu.memory_space<vmem>>) target_semaphore(%5 : memref<!tpu.dma_semaphore, #tpu.memory_space<semaphore_mem>>)
    %c0 = arith.constant 0 : index
    %c0_0 = arith.constant 0 : index
    %6 = vector.load %arg0[%c0, %c0_0] : memref<256x256xbf16, #tpu.memory_space<vmem>>, vector<256x256xbf16>
    %c0_1 = arith.constant 0 : index
    %c0_2 = arith.constant 0 : index
    %7 = vector.load %arg1[%c0_1, %c0_2] : memref<256x512xbf16, #tpu.memory_space<vmem>>, vector<256x512xbf16>
    %cst = arith.constant dense<0.000000e+00> : vector<256x512xf32>
    %8 = tpu.matmul %6, %7, %cst {dimension_numbers = #tpu.dot_dimension_numbers<[1], [0], [0], [1], [0, 0, 1, 1], [], []>} : vector<256x256xbf16>, vector<256x512xbf16>, vector<256x512xf32> -> vector<256x512xf32>
    %cst_3 = arith.constant dense<0.000000e+00> : vector<512xf32>
    %9 = vector.multi_reduction <add>, %8, %cst_3 [0] : vector<256x512xf32> to vector<512xf32>
    %10 = vector.shape_cast %9 : vector<512xf32> to vector<1x512xf32>
    %cst_4 = arith.constant 3.906250e-03 : f32
    %11 = vector.broadcast %cst_4 : f32 to vector<1x512xf32>
    %12 = arith.mulf %10, %11 : vector<1x512xf32>
    %13 = arith.mulf %8, %8 : vector<256x512xf32>
    %cst_5 = arith.constant dense<0.000000e+00> : vector<512xf32>
    %14 = vector.multi_reduction <add>, %13, %cst_5 [0] : vector<256x512xf32> to vector<512xf32>
    %15 = vector.shape_cast %14 : vector<512xf32> to vector<1x512xf32>
    %cst_6 = arith.constant 3.906250e-03 : f32
    %16 = vector.broadcast %cst_6 : f32 to vector<1x512xf32>
    %17 = arith.mulf %15, %16 : vector<1x512xf32>
    %18 = arith.mulf %12, %12 : vector<1x512xf32>
    %19 = arith.subf %17, %18 : vector<1x512xf32>
    %cst_7 = arith.constant 0.000000e+00 : f32
    %20 = vector.broadcast %cst_7 : f32 to vector<1x512xf32>
    %21 = arith.maximumf %19, %20 : vector<1x512xf32>
    %c0_8 = arith.constant 0 : index
    %c0_9 = arith.constant 0 : index
    %22 = vector.load %arg6[%c0_8, %c0_9] : memref<16x512xf32, #tpu.memory_space<vmem>>, vector<1x512xf32>
    %cst_10 = arith.constant 9.99999974E-6 : f32
    %23 = vector.broadcast %cst_10 : f32 to vector<1x512xf32>
    %24 = arith.addf %21, %23 : vector<1x512xf32>
    %25 = math.rsqrt %24 : vector<1x512xf32>
    %26 = arith.mulf %22, %25 : vector<1x512xf32>
    %c1 = arith.constant 1 : index
    %c0_11 = arith.constant 0 : index
    %27 = vector.load %arg6[%c1, %c0_11] : memref<16x512xf32, #tpu.memory_space<vmem>>, vector<1x512xf32>
    %28 = arith.mulf %12, %26 : vector<1x512xf32>
    %29 = arith.subf %27, %28 : vector<1x512xf32>
    %30 = vector.broadcast %26 : vector<1x512xf32> to vector<256x512xf32>
    %31 = arith.mulf %8, %30 : vector<256x512xf32>
    %32 = vector.broadcast %29 : vector<1x512xf32> to vector<256x512xf32>
    %33 = arith.addf %31, %32 : vector<256x512xf32>
    %cst_12 = arith.constant 0.000000e+00 : f32
    %34 = vector.broadcast %cst_12 : f32 to vector<256x512xf32>
    %35 = arith.maximumf %33, %34 : vector<256x512xf32>
    %36 = arith.truncf %35 : vector<256x512xf32> to vector<256x512xbf16>
    %c0_13 = arith.constant 0 : index
    %c0_14 = arith.constant 0 : index
    %37 = vector.load %arg2[%c0_13, %c0_14] : memref<512x256xbf16, #tpu.memory_space<vmem>>, vector<512x256xbf16>
    %cst_15 = arith.constant dense<0.000000e+00> : vector<256x256xf32>
    %38 = tpu.matmul %36, %37, %cst_15 {dimension_numbers = #tpu.dot_dimension_numbers<[1], [0], [0], [1], [0, 0, 1, 1], [], []>} : vector<256x512xbf16>, vector<512x256xbf16>, vector<256x256xf32> -> vector<256x256xf32>
    %cst_16 = arith.constant dense<0.000000e+00> : vector<256xf32>
    %39 = vector.multi_reduction <add>, %38, %cst_16 [0] : vector<256x256xf32> to vector<256xf32>
    %40 = vector.shape_cast %39 : vector<256xf32> to vector<1x256xf32>
    %cst_17 = arith.constant 3.906250e-03 : f32
    %41 = vector.broadcast %cst_17 : f32 to vector<1x256xf32>
    %42 = arith.mulf %40, %41 : vector<1x256xf32>
    %43 = arith.mulf %38, %38 : vector<256x256xf32>
    %cst_18 = arith.constant dense<0.000000e+00> : vector<256xf32>
    %44 = vector.multi_reduction <add>, %43, %cst_18 [0] : vector<256x256xf32> to vector<256xf32>
    %45 = vector.shape_cast %44 : vector<256xf32> to vector<1x256xf32>
    %cst_19 = arith.constant 3.906250e-03 : f32
    %46 = vector.broadcast %cst_19 : f32 to vector<1x256xf32>
    %47 = arith.mulf %45, %46 : vector<1x256xf32>
    %48 = arith.mulf %42, %42 : vector<1x256xf32>
    %49 = arith.subf %47, %48 : vector<1x256xf32>
    %cst_20 = arith.constant 0.000000e+00 : f32
    %50 = vector.broadcast %cst_20 : f32 to vector<1x256xf32>
    %51 = arith.maximumf %49, %50 : vector<1x256xf32>
    %c2 = arith.constant 2 : index
    %c0_21 = arith.constant 0 : index
    %52 = vector.load %arg6[%c2, %c0_21] : memref<16x512xf32, #tpu.memory_space<vmem>>, vector<1x256xf32>
    %cst_22 = arith.constant 9.99999974E-6 : f32
    %53 = vector.broadcast %cst_22 : f32 to vector<1x256xf32>
    %54 = arith.addf %51, %53 : vector<1x256xf32>
    %55 = math.rsqrt %54 : vector<1x256xf32>
    %56 = arith.mulf %52, %55 : vector<1x256xf32>
    %c3 = arith.constant 3 : index
    %c0_23 = arith.constant 0 : index
    %57 = vector.load %arg6[%c3, %c0_23] : memref<16x512xf32, #tpu.memory_space<vmem>>, vector<1x256xf32>
    %58 = arith.mulf %42, %56 : vector<1x256xf32>
    %59 = arith.subf %57, %58 : vector<1x256xf32>
    %60 = vector.broadcast %56 : vector<1x256xf32> to vector<256x256xf32>
    %61 = arith.mulf %38, %60 : vector<256x256xf32>
    %62 = vector.broadcast %59 : vector<1x256xf32> to vector<256x256xf32>
    %63 = arith.addf %61, %62 : vector<256x256xf32>
    %cst_24 = arith.constant 0.000000e+00 : f32
    %64 = vector.broadcast %cst_24 : f32 to vector<256x256xf32>
    %65 = arith.maximumf %63, %64 : vector<256x256xf32>
    %66 = arith.truncf %65 : vector<256x256xf32> to vector<256x256xbf16>
    %c0_25 = arith.constant 0 : index
    %c0_26 = arith.constant 0 : index
    %67 = vector.load %arg3[%c0_25, %c0_26] : memref<256x128xbf16, #tpu.memory_space<vmem>>, vector<256x128xbf16>
    %cst_27 = arith.constant dense<0.000000e+00> : vector<256x128xf32>
    %68 = tpu.matmul %66, %67, %cst_27 {dimension_numbers = #tpu.dot_dimension_numbers<[1], [0], [0], [1], [0, 0, 1, 1], [], []>} : vector<256x256xbf16>, vector<256x128xbf16>, vector<256x128xf32> -> vector<256x128xf32>
    %cst_28 = arith.constant dense<0.000000e+00> : vector<128xf32>
    %69 = vector.multi_reduction <add>, %68, %cst_28 [0] : vector<256x128xf32> to vector<128xf32>
    %70 = vector.shape_cast %69 : vector<128xf32> to vector<1x128xf32>
    %cst_29 = arith.constant 3.906250e-03 : f32
    %71 = vector.broadcast %cst_29 : f32 to vector<1x128xf32>
    %72 = arith.mulf %70, %71 : vector<1x128xf32>
    %73 = arith.mulf %68, %68 : vector<256x128xf32>
    %cst_30 = arith.constant dense<0.000000e+00> : vector<128xf32>
    %74 = vector.multi_reduction <add>, %73, %cst_30 [0] : vector<256x128xf32> to vector<128xf32>
    %75 = vector.shape_cast %74 : vector<128xf32> to vector<1x128xf32>
    %cst_31 = arith.constant 3.906250e-03 : f32
    %76 = vector.broadcast %cst_31 : f32 to vector<1x128xf32>
    %77 = arith.mulf %75, %76 : vector<1x128xf32>
    %78 = arith.mulf %72, %72 : vector<1x128xf32>
    %79 = arith.subf %77, %78 : vector<1x128xf32>
    %cst_32 = arith.constant 0.000000e+00 : f32
    %80 = vector.broadcast %cst_32 : f32 to vector<1x128xf32>
    %81 = arith.maximumf %79, %80 : vector<1x128xf32>
    %c4 = arith.constant 4 : index
    %c0_33 = arith.constant 0 : index
    %82 = vector.load %arg6[%c4, %c0_33] : memref<16x512xf32, #tpu.memory_space<vmem>>, vector<1x128xf32>
    %cst_34 = arith.constant 9.99999974E-6 : f32
    %83 = vector.broadcast %cst_34 : f32 to vector<1x128xf32>
    %84 = arith.addf %81, %83 : vector<1x128xf32>
    %85 = math.rsqrt %84 : vector<1x128xf32>
    %86 = arith.mulf %82, %85 : vector<1x128xf32>
    %c5 = arith.constant 5 : index
    %c0_35 = arith.constant 0 : index
    %87 = vector.load %arg6[%c5, %c0_35] : memref<16x512xf32, #tpu.memory_space<vmem>>, vector<1x128xf32>
    %88 = arith.mulf %72, %86 : vector<1x128xf32>
    %89 = arith.subf %87, %88 : vector<1x128xf32>
    %90 = vector.broadcast %86 : vector<1x128xf32> to vector<256x128xf32>
    %91 = arith.mulf %68, %90 : vector<256x128xf32>
    %92 = vector.broadcast %89 : vector<1x128xf32> to vector<256x128xf32>
    %93 = arith.addf %91, %92 : vector<256x128xf32>
    %cst_36 = arith.constant 0.000000e+00 : f32
    %94 = vector.broadcast %cst_36 : f32 to vector<256x128xf32>
    %95 = arith.maximumf %93, %94 : vector<256x128xf32>
    %96 = arith.truncf %95 : vector<256x128xf32> to vector<256x128xbf16>
    %c0_37 = arith.constant 0 : index
    %c0_38 = arith.constant 0 : index
    %97 = vector.load %arg4[%c0_37, %c0_38] : memref<128x128xbf16, #tpu.memory_space<vmem>>, vector<128x128xbf16>
    %cst_39 = arith.constant dense<0.000000e+00> : vector<256x128xf32>
    %98 = tpu.matmul %96, %97, %cst_39 {dimension_numbers = #tpu.dot_dimension_numbers<[1], [0], [0], [1], [0, 0, 1, 1], [], []>} : vector<256x128xbf16>, vector<128x128xbf16>, vector<256x128xf32> -> vector<256x128xf32>
    %c6 = arith.constant 6 : index
    %c0_40 = arith.constant 0 : index
    %99 = vector.load %arg6[%c6, %c0_40] : memref<16x512xf32, #tpu.memory_space<vmem>>, vector<1x128xf32>
    %100 = vector.broadcast %99 : vector<1x128xf32> to vector<256x128xf32>
    %101 = arith.addf %98, %100 : vector<256x128xf32>
    %102 = arith.truncf %101 : vector<256x128xf32> to vector<256x128xbf16>
    %c0_41 = arith.constant 0 : index
    %c0_42 = arith.constant 0 : index
    %103 = vector.load %arg5[%c0_41, %c0_42] : memref<128x128xbf16, #tpu.memory_space<vmem>>, vector<128x128xbf16>
    %cst_43 = arith.constant dense<0.000000e+00> : vector<256x128xf32>
    %104 = tpu.matmul %102, %103, %cst_43 {dimension_numbers = #tpu.dot_dimension_numbers<[1], [0], [0], [1], [0, 0, 1, 1], [], []>} : vector<256x128xbf16>, vector<128x128xbf16>, vector<256x128xf32> -> vector<256x128xf32>
    %cst_44 = arith.constant dense<0.000000e+00> : vector<128xf32>
    %105 = vector.multi_reduction <add>, %104, %cst_44 [0] : vector<256x128xf32> to vector<128xf32>
    %106 = vector.shape_cast %105 : vector<128xf32> to vector<1x128xf32>
    %cst_45 = arith.constant 3.906250e-03 : f32
    %107 = vector.broadcast %cst_45 : f32 to vector<1x128xf32>
    %108 = arith.mulf %106, %107 : vector<1x128xf32>
    %109 = arith.mulf %104, %104 : vector<256x128xf32>
    %cst_46 = arith.constant dense<0.000000e+00> : vector<128xf32>
    %110 = vector.multi_reduction <add>, %109, %cst_46 [0] : vector<256x128xf32> to vector<128xf32>
    %111 = vector.shape_cast %110 : vector<128xf32> to vector<1x128xf32>
    %cst_47 = arith.constant 3.906250e-03 : f32
    %112 = vector.broadcast %cst_47 : f32 to vector<1x128xf32>
    %113 = arith.mulf %111, %112 : vector<1x128xf32>
    %114 = arith.mulf %108, %108 : vector<1x128xf32>
    %115 = arith.subf %113, %114 : vector<1x128xf32>
    %cst_48 = arith.constant 0.000000e+00 : f32
    %116 = vector.broadcast %cst_48 : f32 to vector<1x128xf32>
    %117 = arith.maximumf %115, %116 : vector<1x128xf32>
    %c7 = arith.constant 7 : index
    %c0_49 = arith.constant 0 : index
    %118 = vector.load %arg6[%c7, %c0_49] : memref<16x512xf32, #tpu.memory_space<vmem>>, vector<1x128xf32>
    %cst_50 = arith.constant 9.99999974E-6 : f32
    %119 = vector.broadcast %cst_50 : f32 to vector<1x128xf32>
    %120 = arith.addf %117, %119 : vector<1x128xf32>
    %121 = math.rsqrt %120 : vector<1x128xf32>
    %122 = arith.mulf %118, %121 : vector<1x128xf32>
    %c8 = arith.constant 8 : index
    %c0_51 = arith.constant 0 : index
    %123 = vector.load %arg6[%c8, %c0_51] : memref<16x512xf32, #tpu.memory_space<vmem>>, vector<1x128xf32>
    %124 = arith.mulf %108, %122 : vector<1x128xf32>
    %125 = arith.subf %123, %124 : vector<1x128xf32>
    %126 = vector.broadcast %122 : vector<1x128xf32> to vector<256x128xf32>
    %127 = arith.mulf %104, %126 : vector<256x128xf32>
    %128 = vector.broadcast %125 : vector<1x128xf32> to vector<256x128xf32>
    %129 = arith.addf %127, %128 : vector<256x128xf32>
    %cst_52 = arith.constant 0.000000e+00 : f32
    %130 = vector.broadcast %cst_52 : f32 to vector<256x128xf32>
    %131 = arith.maximumf %129, %130 : vector<256x128xf32>
    %132 = arith.truncf %131 : vector<256x128xf32> to vector<256x128xbf16>
    %c0_i32_53 = arith.constant 0 : i32
    %133 = tpu.memref_slice %arg14[%c0_i32_53] : memref<3x!tpu.dma_semaphore, #tpu.memory_space<semaphore_mem>> -> memref<1x!tpu.dma_semaphore, #tpu.memory_space<semaphore_mem>>
    %134 = tpu.memref_squeeze %133 : memref<1x!tpu.dma_semaphore, #tpu.memory_space<semaphore_mem>> -> memref<!tpu.dma_semaphore, #tpu.memory_space<semaphore_mem>>
    tpu.wait_dma2 semaphore(%134 : memref<!tpu.dma_semaphore, #tpu.memory_space<semaphore_mem>>) src(%arg7 : memref<128x256xbf16, #tpu.memory_space<any>>) dst(%arg11 : memref<128x256xbf16, #tpu.memory_space<vmem>>)
    %c0_54 = arith.constant 0 : index
    %c0_55 = arith.constant 0 : index
    %135 = vector.load %arg11[%c0_54, %c0_55] : memref<128x256xbf16, #tpu.memory_space<vmem>>, vector<128x256xbf16>
    %cst_56 = arith.constant dense<0.000000e+00> : vector<256x256xf32>
    %136 = tpu.matmul %132, %135, %cst_56 {dimension_numbers = #tpu.dot_dimension_numbers<[1], [0], [0], [1], [0, 0, 1, 1], [], []>} : vector<256x128xbf16>, vector<128x256xbf16>, vector<256x256xf32> -> vector<256x256xf32>
    %cst_57 = arith.constant dense<0.000000e+00> : vector<256xf32>
    %137 = vector.multi_reduction <add>, %136, %cst_57 [0] : vector<256x256xf32> to vector<256xf32>
    %138 = vector.shape_cast %137 : vector<256xf32> to vector<1x256xf32>
    %cst_58 = arith.constant 3.906250e-03 : f32
    %139 = vector.broadcast %cst_58 : f32 to vector<1x256xf32>
    %140 = arith.mulf %138, %139 : vector<1x256xf32>
    %141 = arith.mulf %136, %136 : vector<256x256xf32>
    %cst_59 = arith.constant dense<0.000000e+00> : vector<256xf32>
    %142 = vector.multi_reduction <add>, %141, %cst_59 [0] : vector<256x256xf32> to vector<256xf32>
    %143 = vector.shape_cast %142 : vector<256xf32> to vector<1x256xf32>
    %cst_60 = arith.constant 3.906250e-03 : f32
    %144 = vector.broadcast %cst_60 : f32 to vector<1x256xf32>
    %145 = arith.mulf %143, %144 : vector<1x256xf32>
    %146 = arith.mulf %140, %140 : vector<1x256xf32>
    %147 = arith.subf %145, %146 : vector<1x256xf32>
    %cst_61 = arith.constant 0.000000e+00 : f32
    %148 = vector.broadcast %cst_61 : f32 to vector<1x256xf32>
    %149 = arith.maximumf %147, %148 : vector<1x256xf32>
    %c9 = arith.constant 9 : index
    %c0_62 = arith.constant 0 : index
    %150 = vector.load %arg6[%c9, %c0_62] : memref<16x512xf32, #tpu.memory_space<vmem>>, vector<1x256xf32>
    %cst_63 = arith.constant 9.99999974E-6 : f32
    %151 = vector.broadcast %cst_63 : f32 to vector<1x256xf32>
    %152 = arith.addf %149, %151 : vector<1x256xf32>
    %153 = math.rsqrt %152 : vector<1x256xf32>
    %154 = arith.mulf %150, %153 : vector<1x256xf32>
    %c10 = arith.constant 10 : index
    %c0_64 = arith.constant 0 : index
    %155 = vector.load %arg6[%c10, %c0_64] : memref<16x512xf32, #tpu.memory_space<vmem>>, vector<1x256xf32>
    %156 = arith.mulf %140, %154 : vector<1x256xf32>
    %157 = arith.subf %155, %156 : vector<1x256xf32>
    %158 = vector.broadcast %154 : vector<1x256xf32> to vector<256x256xf32>
    %159 = arith.mulf %136, %158 : vector<256x256xf32>
    %160 = vector.broadcast %157 : vector<1x256xf32> to vector<256x256xf32>
    %161 = arith.addf %159, %160 : vector<256x256xf32>
    %cst_65 = arith.constant 0.000000e+00 : f32
    %162 = vector.broadcast %cst_65 : f32 to vector<256x256xf32>
    %163 = arith.maximumf %161, %162 : vector<256x256xf32>
    %164 = arith.truncf %163 : vector<256x256xf32> to vector<256x256xbf16>
    %c1_i32_66 = arith.constant 1 : i32
    %165 = tpu.memref_slice %arg14[%c1_i32_66] : memref<3x!tpu.dma_semaphore, #tpu.memory_space<semaphore_mem>> -> memref<1x!tpu.dma_semaphore, #tpu.memory_space<semaphore_mem>>
    %166 = tpu.memref_squeeze %165 : memref<1x!tpu.dma_semaphore, #tpu.memory_space<semaphore_mem>> -> memref<!tpu.dma_semaphore, #tpu.memory_space<semaphore_mem>>
    tpu.wait_dma2 semaphore(%166 : memref<!tpu.dma_semaphore, #tpu.memory_space<semaphore_mem>>) src(%arg8 : memref<256x512xbf16, #tpu.memory_space<any>>) dst(%arg12 : memref<256x512xbf16, #tpu.memory_space<vmem>>)
    %c0_67 = arith.constant 0 : index
    %c0_68 = arith.constant 0 : index
    %167 = vector.load %arg12[%c0_67, %c0_68] : memref<256x512xbf16, #tpu.memory_space<vmem>>, vector<256x512xbf16>
    %cst_69 = arith.constant dense<0.000000e+00> : vector<256x512xf32>
    %168 = tpu.matmul %164, %167, %cst_69 {dimension_numbers = #tpu.dot_dimension_numbers<[1], [0], [0], [1], [0, 0, 1, 1], [], []>} : vector<256x256xbf16>, vector<256x512xbf16>, vector<256x512xf32> -> vector<256x512xf32>
    %cst_70 = arith.constant dense<0.000000e+00> : vector<512xf32>
    %169 = vector.multi_reduction <add>, %168, %cst_70 [0] : vector<256x512xf32> to vector<512xf32>
    %170 = vector.shape_cast %169 : vector<512xf32> to vector<1x512xf32>
    %cst_71 = arith.constant 3.906250e-03 : f32
    %171 = vector.broadcast %cst_71 : f32 to vector<1x512xf32>
    %172 = arith.mulf %170, %171 : vector<1x512xf32>
    %173 = arith.mulf %168, %168 : vector<256x512xf32>
    %cst_72 = arith.constant dense<0.000000e+00> : vector<512xf32>
    %174 = vector.multi_reduction <add>, %173, %cst_72 [0] : vector<256x512xf32> to vector<512xf32>
    %175 = vector.shape_cast %174 : vector<512xf32> to vector<1x512xf32>
    %cst_73 = arith.constant 3.906250e-03 : f32
    %176 = vector.broadcast %cst_73 : f32 to vector<1x512xf32>
    %177 = arith.mulf %175, %176 : vector<1x512xf32>
    %178 = arith.mulf %172, %172 : vector<1x512xf32>
    %179 = arith.subf %177, %178 : vector<1x512xf32>
    %cst_74 = arith.constant 0.000000e+00 : f32
    %180 = vector.broadcast %cst_74 : f32 to vector<1x512xf32>
    %181 = arith.maximumf %179, %180 : vector<1x512xf32>
    %c11 = arith.constant 11 : index
    %c0_75 = arith.constant 0 : index
    %182 = vector.load %arg6[%c11, %c0_75] : memref<16x512xf32, #tpu.memory_space<vmem>>, vector<1x512xf32>
    %cst_76 = arith.constant 9.99999974E-6 : f32
    %183 = vector.broadcast %cst_76 : f32 to vector<1x512xf32>
    %184 = arith.addf %181, %183 : vector<1x512xf32>
    %185 = math.rsqrt %184 : vector<1x512xf32>
    %186 = arith.mulf %182, %185 : vector<1x512xf32>
    %c12 = arith.constant 12 : index
    %c0_77 = arith.constant 0 : index
    %187 = vector.load %arg6[%c12, %c0_77] : memref<16x512xf32, #tpu.memory_space<vmem>>, vector<1x512xf32>
    %188 = arith.mulf %172, %186 : vector<1x512xf32>
    %189 = arith.subf %187, %188 : vector<1x512xf32>
    %190 = vector.broadcast %186 : vector<1x512xf32> to vector<256x512xf32>
    %191 = arith.mulf %168, %190 : vector<256x512xf32>
    %192 = vector.broadcast %189 : vector<1x512xf32> to vector<256x512xf32>
    %193 = arith.addf %191, %192 : vector<256x512xf32>
    %cst_78 = arith.constant 0.000000e+00 : f32
    %194 = vector.broadcast %cst_78 : f32 to vector<256x512xf32>
    %195 = arith.maximumf %193, %194 : vector<256x512xf32>
    %196 = arith.truncf %195 : vector<256x512xf32> to vector<256x512xbf16>
    %c2_i32_79 = arith.constant 2 : i32
    %197 = tpu.memref_slice %arg14[%c2_i32_79] : memref<3x!tpu.dma_semaphore, #tpu.memory_space<semaphore_mem>> -> memref<1x!tpu.dma_semaphore, #tpu.memory_space<semaphore_mem>>
    %198 = tpu.memref_squeeze %197 : memref<1x!tpu.dma_semaphore, #tpu.memory_space<semaphore_mem>> -> memref<!tpu.dma_semaphore, #tpu.memory_space<semaphore_mem>>
    tpu.wait_dma2 semaphore(%198 : memref<!tpu.dma_semaphore, #tpu.memory_space<semaphore_mem>>) src(%arg9 : memref<512x256xbf16, #tpu.memory_space<any>>) dst(%arg13 : memref<512x256xbf16, #tpu.memory_space<vmem>>)
    %c0_80 = arith.constant 0 : index
    %c0_81 = arith.constant 0 : index
    %199 = vector.load %arg13[%c0_80, %c0_81] : memref<512x256xbf16, #tpu.memory_space<vmem>>, vector<512x256xbf16>
    %cst_82 = arith.constant dense<0.000000e+00> : vector<256x256xf32>
    %200 = tpu.matmul %196, %199, %cst_82 {dimension_numbers = #tpu.dot_dimension_numbers<[1], [0], [0], [1], [0, 0, 1, 1], [], []>} : vector<256x512xbf16>, vector<512x256xbf16>, vector<256x256xf32> -> vector<256x256xf32>
    %c13 = arith.constant 13 : index
    %c0_83 = arith.constant 0 : index
    %201 = vector.load %arg6[%c13, %c0_83] : memref<16x512xf32, #tpu.memory_space<vmem>>, vector<1x256xf32>
    %202 = vector.broadcast %201 : vector<1x256xf32> to vector<256x256xf32>
    %203 = arith.addf %200, %202 : vector<256x256xf32>
    %204 = arith.negf %203 : vector<256x256xf32>
    %205 = math.exp %204 : vector<256x256xf32>
    %cst_84 = arith.constant 1.000000e+00 : f32
    %206 = vector.broadcast %cst_84 : f32 to vector<256x256xf32>
    %207 = arith.addf %206, %205 : vector<256x256xf32>
    %208 = arith.divf %206, %207 : vector<256x256xf32>
    %c0_85 = arith.constant 0 : index
    %c0_86 = arith.constant 0 : index
    %209 = vector.load %arg10[%c0_85, %c0_86] : memref<256x256xf32, #tpu.memory_space<vmem>>, vector<256x256xf32>
    tpu.vector_store %arg10[%c0_85, %c0_86], %208 {strides = array<i32>} : memref<256x256xf32, #tpu.memory_space<vmem>>, vector<256x256xf32>,
    return
  }
}

</mosaic_0001>

<llo_original>
// kernel: vaefc_ae_forward.1
$region0: #{vaefc_ae_forward.1}
  #allocation0 [shape = 'u32[]', space=smem, size = 0x4, offset = 0x4, fixed_abs, tag = 'smem constant byte address 0x4 - core index']
  #allocation1 [shape = 'u32[72,128]{1,0:T(1,128)}', space=vmem, size = 0x9000, scoped, tag = 'internal scratch']
  #allocation2 [shape = 'bf16[128,256]{1,0:T(8,128)(2,1)}', space=vmem, size = 0x10000, scoped, tag = 'scratch operand']
  #allocation3 [shape = 'bf16[256,512]{1,0:T(8,128)(2,1)}', space=vmem, size = 0x40000, scoped, tag = 'scratch operand']
  #allocation4 [shape = 'bf16[512,256]{1,0:T(8,128)(2,1)}', space=vmem, size = 0x40000, scoped, tag = 'scratch operand']
  #allocation5 [shape = 's32[3]{0}', space=sflag, size = 0xc, scoped, tag = 'scratch operand']
  #allocation13 [shape = 's32[]', space=sflag, size = 0x4, offset = 0, fixed_abs, tag = 'sflag constant byte address 0x0 - dummy sync flag']
  #allocation14 [shape = 's32[]', space=sflag, size = 0x4, offset = 0, fixed_abs, tag = 'sflag constant byte address 0x0 - dummy sync flag']
  #allocation15 [shape = 'u32[]', space=smem, size = 0x4, offset = 0x44, fixed_abs, tag = 'smem constant byte address 0x44 - assertion arg 0']
  #allocation16 [shape = 'u32[]', space=smem, size = 0x4, offset = 0x48, fixed_abs, tag = 'smem constant byte address 0x48 - assertion arg 1']
  #allocation17 [shape = 's32[]', space=sflag, size = 0x4, offset = 0, fixed_abs, tag = 'sflag constant byte address 0x0 - dummy sync flag']
  #allocation18 [shape = 's32[]', space=sflag, size = 0x4, offset = 0, fixed_abs, tag = 'sflag constant byte address 0x0 - dummy sync flag']
  #allocation19 [shape = 's32[]', space=sflag, size = 0x4, offset = 0, fixed_abs, tag = 'sflag constant byte address 0x0 - dummy sync flag']
  %s0 = inlined_call_operand.vmem [shape: bf16[256,256], index: 0, kind: input, shape index: {}]
  %s1 = inlined_call_operand.vmem [shape: bf16[256,512], index: 1, kind: input, shape index: {}]
  %s2 = inlined_call_operand.vmem [shape: bf16[512,256], index: 2, kind: input, shape index: {}]
  %s3 = inlined_call_operand.hbm [shape: bf16[256,128], index: 3, kind: input, shape index: {}]
  %s4 = inlined_call_operand.hbm [shape: bf16[128,128], index: 4, kind: input, shape index: {}]
  %s5 = inlined_call_operand.hbm [shape: bf16[128,128], index: 5, kind: input, shape index: {}]
  %s6 = inlined_call_operand.hbm [shape: f32[16,512], index: 6, kind: input, shape index: {}]
  %s7 = inlined_call_operand.hbm [shape: bf16[128,256], index: 7, kind: input, shape index: {}]
  %s8 = inlined_call_operand.vmem [shape: bf16[256,512], index: 8, kind: input, shape index: {}]
  %s9 = inlined_call_operand.hbm [shape: bf16[512,256], index: 9, kind: input, shape index: {}]
  %s10 = inlined_call_operand.vmem [shape: f32[256,256], index: 10, kind: output, shape index: {}]
  %s11 = sld [smem:[#allocation0]]
  $region81: #{vaefc_ae_forward.1} parent=0
    _
  %s13 = ssub.s32 1, %s11
  %s14 = scalar_select 0, %s13, %s11
  $region1: #{vaefc_ae_forward.1} parent=0
    #allocation6 [shape = 'u8[65536]{0}', space=vmem, size = 0x10000, scoped, tag = 'input window, operand 3, single buffered']
    #allocation7 [shape = 's32[1]{0}', space=sflag, size = 0x4, scoped, tag = 'scoped memory for vaefc_ae_forward.1']
    #allocation8 [shape = 'u8[32768]{0}', space=vmem, size = 0x8000, scoped, tag = 'input window, operand 4, single buffered']
    #allocation9 [shape = 's32[1]{0}', space=sflag, size = 0x4, scoped, tag = 'scoped memory for vaefc_ae_forward.1']
    #allocation10 [shape = 'u8[32768]{0}', space=vmem, size = 0x8000, scoped, tag = 'input window, operand 5, single buffered']
    #allocation11 [shape = 'u8[32768]{0}', space=vmem, size = 0x8000, scoped, tag = 'input window, operand 6, single buffered']
    #allocation12 [shape = 's32[1]{0}', space=sflag, size = 0x4, scoped, tag = 'scoped memory for vaefc_ae_forward.1']
    %15 = vsyncpa [#allocation7], 0
    %16 = vsyncpa [#allocation9], 0
    %17 = vsyncpa [#allocation12], 0
    // Predicated region
    $region2: #{vaefc_ae_forward.1} parent=1 // pred_check
      _
    $region3: #{vaefc_ae_forward.1} parent=1 // pred_check_branch
      %19 = sbr.rel (0) target = $region5
    $region4: #{vaefc_ae_forward.1} parent=1 // pred_region
      _
    $region5: #{vaefc_ae_forward.1} parent=1 // pred_fallthru
      _
    // Predicated region
    $region6: #{vaefc_ae_forward.1} parent=1 // pred_check
      _
    $region7: #{vaefc_ae_forward.1} parent=1 // pred_check_branch
      %21 = sbr.rel (0) target = $region9
    $region8: #{vaefc_ae_forward.1} parent=1 // pred_region
      _
    $region9: #{vaefc_ae_forward.1} parent=1 // pred_fallthru
      _
    // Predicated region
    $region10: #{vaefc_ae_forward.1} parent=1 // pred_check
      _
    $region11: #{vaefc_ae_forward.1} parent=1 // pred_check_branch
      %23 = sbr.rel (0) target = $region13
    $region12: #{vaefc_ae_forward.1} parent=1 // pred_region
      _
    $region13: #{vaefc_ae_forward.1} parent=1 // pred_fallthru
      _
    // Predicated region
    $region14: #{vaefc_ae_forward.1} parent=1 // pred_check
      _
    $region15: #{vaefc_ae_forward.1} parent=1 // pred_check_branch
      %25 = sbr.rel (0) target = $region17
    $region16: #{vaefc_ae_forward.1} parent=1 // pred_region
      %27 = vsyncadd [#allocation7], 0
      %s28 = sshll.u32 %s3, 4
      %s29 = int_to_ptr.hbm [resolvable:$true] %s28
      %s30 = sshll.u32 [#allocation6], 4
      %s31 = int_to_ptr.vmem [resolvable:$true] %s30
      %36 = dma.hbm_to_vmem [thread:$0]  %s29, 2048, %s31, [#allocation7], 64, 64, 4
    $region17: #{vaefc_ae_forward.1} parent=1 // pred_fallthru
      _
    // Predicated region
    $region18: #{vaefc_ae_forward.1} parent=1 // pred_check
      _
    $region19: #{vaefc_ae_forward.1} parent=1 // pred_check_branch
      %38 = sbr.rel (0) target = $region21
    $region20: #{vaefc_ae_forward.1} parent=1 // pred_region
      %40 = vsyncadd [#allocation9], 0
      %s41 = sshll.u32 %s4, 4
      %s42 = int_to_ptr.hbm [resolvable:$true] %s41
      %s43 = sshll.u32 [#allocation8], 4
      %s44 = int_to_ptr.vmem [resolvable:$true] %s43
      %49 = dma.hbm_to_vmem [thread:$0]  %s42, 1024, %s44, [#allocation9], 64, 64, 4
    $region21: #{vaefc_ae_forward.1} parent=1 // pred_fallthru
      _
    // Predicated region
    $region22: #{vaefc_ae_forward.1} parent=1 // pred_check
      _
    $region23: #{vaefc_ae_forward.1} parent=1 // pred_check_branch
      %51 = sbr.rel (0) target = $region25
    $region24: #{vaefc_ae_forward.1} parent=1 // pred_region
      %53 = vsyncadd [#allocation9], 0
      %s54 = sshll.u32 %s5, 4
      %s55 = int_to_ptr.hbm [resolvable:$true] %s54
      %s56 = sshll.u32 [#allocation10], 4
      %s57 = int_to_ptr.vmem [resolvable:$true] %s56
      %62 = dma.hbm_to_vmem [thread:$0]  %s55, 1024, %s57, [#allocation9], 64, 64, 4
    $region25: #{vaefc_ae_forward.1} parent=1 // pred_fallthru
      _
    // Predicated region
    $region26: #{vaefc_ae_forward.1} parent=1 // pred_check
      _
    $region27: #{vaefc_ae_forward.1} parent=1 // pred_check_branch
      %64 = sbr.rel (0) target = $region29
    $region28: #{vaefc_ae_forward.1} parent=1 // pred_region
      %66 = vsyncadd [#allocation12], 0
      %s67 = sshll.u32 %s6, 4
      %s68 = int_to_ptr.hbm [resolvable:$true] %s67
      %s69 = sshll.u32 [#allocation11], 4
      %s70 = int_to_ptr.vmem [resolvable:$true] %s69
      %75 = dma.hbm_to_vmem [thread:$0]  %s68, 1024, %s70, [#allocation12], 512, 512, 32
    $region29: #{vaefc_ae_forward.1} parent=1 // pred_fallthru
      _
    // Predicated region
    $region30: #{vaefc_ae_forward.1} parent=1 // pred_check
      _
    $region31: #{vaefc_ae_forward.1} parent=1 // pred_check_branch
      %77 = sbr.rel (0) target = $region33
    $region32: #{vaefc_ae_forward.1} parent=1 // pred_region
      %79 = dma.done [#allocation7], 2048
    $region33: #{vaefc_ae_forward.1} parent=1 // pred_fallthru
      _
    // Predicated region
    $region34: #{vaefc_ae_forward.1} parent=1 // pred_check
      _
    $region35: #{vaefc_ae_forward.1} parent=1 // pred_check_branch
      %81 = sbr.rel (0) target = $region37
    $region36: #{vaefc_ae_forward.1} parent=1 // pred_region
      %83 = dma.done [#allocation9], 1024
    $region37: #{vaefc_ae_forward.1} parent=1 // pred_fallthru
      _
    // Predicated region
    $region38: #{vaefc_ae_forward.1} parent=1 // pred_check
      _
    $region39: #{vaefc_ae_forward.1} parent=1 // pred_check_branch
      %85 = sbr.rel (0) target = $region41
    $region40: #{vaefc_ae_forward.1} parent=1 // pred_region
      %87 = dma.done [#allocation9], 1024
    $region41: #{vaefc_ae_forward.1} parent=1 // pred_fallthru
      _
    // Predicated region
    $region42: #{vaefc_ae_forward.1} parent=1 // pred_check
      _
    $region43: #{vaefc_ae_forward.1} parent=1 // pred_check_branch
      %89 = sbr.rel (0) target = $region45
    $region44: #{vaefc_ae_forward.1} parent=1 // pred_region
      %91 = dma.done [#allocation12], 1024
    $region45: #{vaefc_ae_forward.1} parent=1 // pred_fallthru
      _
    // Predicated region
    $region46: #{vaefc_ae_forward.1} parent=1 // pred_check
      _
    $region47: #{vaefc_ae_forward.1} parent=1 // pred_check_branch
      %93 = sbr.rel target = $region49
    $region48: #{vaefc_ae_forward.1} parent=1 // pred_region
      %94 = sst [smem:[#allocation15]] [#allocation14]
      %95 = sst [smem:[#allocation16]] [#allocation13]
    $region49: #{vaefc_ae_forward.1} parent=1 // pred_fallthru
      _
    %97 = shalt.err (0)
    %s99 = sshll.u32 %s7, 4
    %s100 = int_to_ptr.hbm [resolvable:$true] %s99
    %s101 = sshll.u32 [#allocation2], 4
    %s102 = int_to_ptr.vmem [resolvable:$true] %s101
    %104 = dma.hbm_to_vmem [thread:$0]  %s100, 2048, %s102, [#allocation5]
    %s105 = scalar_lea.sflag [#allocation5], 1
    // Predicated region
    $region50: #{vaefc_ae_forward.1} parent=1 // pred_check
      _
    $region51: #{vaefc_ae_forward.1} parent=1 // pred_check_branch
      %107 = sbr.rel (0) target = $region53
    $region52: #{vaefc_ae_forward.1} parent=1 // pred_region
      loop: start=0, step=1, limit=1
      $region54: #{vaefc_ae_forward.1} parent=52 // loop_pre_header
        _
      $region55: #{vaefc_ae_forward.1} parent=52 // loop_header
        %s109 = sphi 0, %s113
        %p110 = scmp.ge.s32.totalorder %s109, 1
        %s114 = sphi %s8, %s8
        %s115 = sphi [#allocation3], [#allocation3]
      $region56: #{vaefc_ae_forward.1} parent=52 // loop_header_branch
        %112 = sbr.rel (%p110) target = $region60
      $region57: #{vaefc_ae_forward.1} parent=52 // loop_body
        %v116 = vld [vmem:[%s114] sm:$0xff]
        %117 = vst [vmem:[%s115] sm:$0xff] %v116
        %v118 = vld [vmem:[%s114 + $0x8] sm:$0xff]
        %119 = vst [vmem:[%s115 + $0x8] sm:$0xff] %v118
        %v120 = vld [vmem:[%s114 + $0x10] sm:$0xff]
        %121 = vst [vmem:[%s115 + $0x10] sm:$0xff] %v120
        %v122 = vld [vmem:[%s114 + $0x18] sm:$0xff]
        %123 = vst [vmem:[%s115 + $0x18] sm:$0xff] %v122
        %v124 = vld [vmem:[%s114 + $0x20] sm:$0xff]
        %125 = vst [vmem:[%s115 + $0x20] sm:$0xff] %v124
        %v126 = vld [vmem:[%s114 + $0x28] sm:$0xff]
        %127 = vst [vmem:[%s115 + $0x28] sm:$0xff] %v126
        %v128 = vld [vmem:[%s114 + $0x30] sm:$0xff]
        %129 = vst [vmem:[%s115 + $0x30] sm:$0xff] %v128
        %v130 = vld [vmem:[%s114 + $0x38] sm:$0xff]
        %131 = vst [vmem:[%s115 + $0x38] sm:$0xff] %v130
        %v132 = vld [vmem:[%s114 + $0x40] sm:$0xff]
        %133 = vst [vmem:[%s115 + $0x40] sm:$0xff] %v132
        %v134 = vld [vmem:[%s114 + $0x48] sm:$0xff]
        %135 = vst [vmem:[%s115 + $0x48] sm:$0xff] %v134
        %v136 = vld [vmem:[%s114 + $0x50] sm:$0xff]
        %137 = vst [vmem:[%s115 + $0x50] sm:$0xff] %v136
        %v138 = vld [vmem:[%s114 + $0x58] sm:$0xff]
        %139 = vst [vmem:[%s115 + $0x58] sm:$0xff] %v138
        %v140 = vld [vmem:[%s114 + $0x60] sm:$0xff]
        %141 = vst [vmem:[%s115 + $0x60] sm:$0xff] %v140
        %v142 = vld [vmem:[%s114 + $0x68] sm:$0xff]
        %143 = vst [vmem:[%s115 + $0x68] sm:$0xff] %v142
        %v144 = vld [vmem:[%s114 + $0x70] sm:$0xff]
        %145 = vst [vmem:[%s115 + $0x70] sm:$0xff] %v144
        %v146 = vld [vmem:[%s114 + $0x78] sm:$0xff]
        %147 = vst [vmem:[%s115 + $0x78] sm:$0xff] %v146
        %v148 = vld [vmem:[%s114 + $0x80] sm:$0xff]
        %149 = vst [vmem:[%s115 + $0x80] sm:$0xff] %v148
        %v150 = vld [vmem:[%s114 + $0x88] sm:$0xff]
        %151 = vst [vmem:[%s115 + $0x88] sm:$0xff] %v150
        %v152 = vld [vmem:[%s114 + $0x90] sm:$0xff]
        %153 = vst [vmem:[%s115 + $0x90] sm:$0xff] %v152
        %v154 = vld [vmem:[%s114 + $0x98] sm:$0xff]
        %155 = vst [vmem:[%s115 + $0x98] sm:$0xff] %v154
        %v156 = vld [vmem:[%s114 + $0xa0] sm:$0xff]
        %157 = vst [vmem:[%s115 + $0xa0] sm:$0xff] %v156
        %v158 = vld [vmem:[%s114 + $0xa8] sm:$0xff]
        %159 = vst [vmem:[%s115 + $0xa8] sm:$0xff] %v158
        %v160 = vld [vmem:[%s114 + $0xb0] sm:$0xff]
        %161 = vst [vmem:[%s115 + $0xb0] sm:$0xff] %v160
        %v162 = vld [vmem:[%s114 + $0xb8] sm:$0xff]
        %163 = vst [vmem:[%s115 + $0xb8] sm:$0xff] %v162
        %v164 = vld [vmem:[%s114 + $0xc0] sm:$0xff]
        %165 = vst [vmem:[%s115 + $0xc0] sm:$0xff] %v164
        %v166 = vld [vmem:[%s114 + $0xc8] sm:$0xff]
        %167 = vst [vmem:[%s115 + $0xc8] sm:$0xff] %v166
        %v168 = vld [vmem:[%s114 + $0xd0] sm:$0xff]
        %169 = vst [vmem:[%s115 + $0xd0] sm:$0xff] %v168
        %v170 = vld [vmem:[%s114 + $0xd8] sm:$0xff]
        %171 = vst [vmem:[%s115 + $0xd8] sm:$0xff] %v170
        %v172 = vld [vmem:[%s114 + $0xe0] sm:$0xff]
        %173 = vst [vmem:[%s115 + $0xe0] sm:$0xff] %v172
        %v174 = vld [vmem:[%s114 + $0xe8] sm:$0xff]
        %175 = vst [vmem:[%s115 + $0xe8] sm:$0xff] %v174
        %v176 = vld [vmem:[%s114 + $0xf0] sm:$0xff]
        %177 = vst [vmem:[%s115 + $0xf0] sm:$0xff] %v176
        %v178 = vld [vmem:[%s114 + $0xf8] sm:$0xff]
        %179 = vst [vmem:[%s115 + $0xf8] sm:$0xff] %v178
        %v180 = vld [vmem:[%s114 + $0x100] sm:$0xff]
        %181 = vst [vmem:[%s115 + $0x100] sm:$0xff] %v180
        %v182 = vld [vmem:[%s114 + $0x108] sm:$0xff]
        %183 = vst [vmem:[%s115 + $0x108] sm:$0xff] %v182
        %v184 = vld [vmem:[%s114 + $0x110] sm:$0xff]
        %185 = vst [vmem:[%s115 + $0x110] sm:$0xff] %v184
        %v186 = vld [vmem:[%s114 + $0x118] sm:$0xff]
        %187 = vst [vmem:[%s115 + $0x118] sm:$0xff] %v186
        %v188 = vld [vmem:[%s114 + $0x120] sm:$0xff]
        %189 = vst [vmem:[%s115 + $0x120] sm:$0xff] %v188
        %v190 = vld [vmem:[%s114 + $0x128] sm:$0xff]
        %191 = vst [vmem:[%s115 + $0x128] sm:$0xff] %v190
        %v192 = vld [vmem:[%s114 + $0x130] sm:$0xff]
        %193 = vst [vmem:[%s115 + $0x130] sm:$0xff] %v192
        %v194 = vld [vmem:[%s114 + $0x138] sm:$0xff]
        %195 = vst [vmem:[%s115 + $0x138] sm:$0xff] %v194
        %v196 = vld [vmem:[%s114 + $0x140] sm:$0xff]
        %197 = vst [vmem:[%s115 + $0x140] sm:$0xff] %v196
        %v198 = vld [vmem:[%s114 + $0x148] sm:$0xff]
        %199 = vst [vmem:[%s115 + $0x148] sm:$0xff] %v198
        %v200 = vld [vmem:[%s114 + $0x150] sm:$0xff]
        %201 = vst [vmem:[%s115 + $0x150] sm:$0xff] %v200
        %v202 = vld [vmem:[%s114 + $0x158] sm:$0xff]
        %203 = vst [vmem:[%s115 + $0x158] sm:$0xff] %v202
        %v204 = vld [vmem:[%s114 + $0x160] sm:$0xff]
        %205 = vst [vmem:[%s115 + $0x160] sm:$0xff] %v204
        %v206 = vld [vmem:[%s114 + $0x168] sm:$0xff]
        %207 = vst [vmem:[%s115 + $0x168] sm:$0xff] %v206
        %v208 = vld [vmem:[%s114 + $0x170] sm:$0xff]
        %209 = vst [vmem:[%s115 + $0x170] sm:$0xff] %v208
        %v210 = vld [vmem:[%s114 + $0x178] sm:$0xff]
        %211 = vst [vmem:[%s115 + $0x178] sm:$0xff] %v210
        %v212 = vld [vmem:[%s114 + $0x180] sm:$0xff]
        %213 = vst [vmem:[%s115 + $0x180] sm:$0xff] %v212
        %v214 = vld [vmem:[%s114 + $0x188] sm:$0xff]
        %215 = vst [vmem:[%s115 + $0x188] sm:$0xff] %v214
        %v216 = vld [vmem:[%s114 + $0x190] sm:$0xff]
        %217 = vst [vmem:[%s115 + $0x190] sm:$0xff] %v216
        %v218 = vld [vmem:[%s114 + $0x198] sm:$0xff]
        %219 = vst [vmem:[%s115 + $0x198] sm:$0xff] %v218
        %v220 = vld [vmem:[%s114 + $0x1a0] sm:$0xff]
        %221 = vst [vmem:[%s115 + $0x1a0] sm:$0xff] %v220
        %v222 = vld [vmem:[%s114 + $0x1a8] sm:$0xff]
        %223 = vst [vmem:[%s115 + $0x1a8] sm:$0xff] %v222
        %v224 = vld [vmem:[%s114 + $0x1b0] sm:$0xff]
        %225 = vst [vmem:[%s115 + $0x1b0] sm:$0xff] %v224
        %v226 = vld [vmem:[%s114 + $0x1b8] sm:$0xff]
        %227 = vst [vmem:[%s115 + $0x1b8] sm:$0xff] %v226
        %v228 = vld [vmem:[%s114 + $0x1c0] sm:$0xff]
        %229 = vst [vmem:[%s115 + $0x1c0] sm:$0xff] %v228
        %v230 = vld [vmem:[%s114 + $0x1c8] sm:$0xff]
        %231 = vst [vmem:[%s115 + $0x1c8] sm:$0xff] %v230
        %v232 = vld [vmem:[%s114 + $0x1d0] sm:$0xff]
        %233 = vst [vmem:[%s115 + $0x1d0] sm:$0xff] %v232
        %v234 = vld [vmem:[%s114 + $0x1d8] sm:$0xff]
        %235 = vst [vmem:[%s115 + $0x1d8] sm:$0xff] %v234
        %v236 = vld [vmem:[%s114 + $0x1e0] sm:$0xff]
        %237 = vst [vmem:[%s115 + $0x1e0] sm:$0xff] %v236
        %v238 = vld [vmem:[%s114 + $0x1e8] sm:$0xff]
        %239 = vst [vmem:[%s115 + $0x1e8] sm:$0xff] %v238
        %v240 = vld [vmem:[%s114 + $0x1f0] sm:$0xff]
        %241 = vst [vmem:[%s115 + $0x1f0] sm:$0xff] %v240
        %v242 = vld [vmem:[%s114 + $0x1f8] sm:$0xff]
        %243 = vst [vmem:[%s115 + $0x1f8] sm:$0xff] %v242
      $region58: #{vaefc_ae_forward.1} parent=52 // loop_footer
        %s113 = sadd.s32 1, %s109
      $region59: #{vaefc_ae_forward.1} parent=52 // loop_footer_branch
        %108 = sbr.rel target = $region55
      $region60: #{vaefc_ae_forward.1} parent=52 // loop_exit
        _
    $region53: #{vaefc_ae_forward.1} parent=1 // pred_fallthru
      _
    // Predicated region
    $region61: #{vaefc_ae_forward.1} parent=1 // pred_check
      _
    $region62: #{vaefc_ae_forward.1} parent=1 // pred_check_branch
      %245 = sbr.rel target = $region64
    $region63: #{vaefc_ae_forward.1} parent=1 // pred_region
      _
    $region64: #{vaefc_ae_forward.1} parent=1 // pred_fallthru
      _
    // Predicated region
    $region65: #{vaefc_ae_forward.1} parent=1 // pred_check
      _
    $region66: #{vaefc_ae_forward.1} parent=1 // pred_check_branch
      %248 = sbr.rel (0) target = $region68
    $region67: #{vaefc_ae_forward.1} parent=1 // pred_region
      %249 = vsyncadd %s105, 8192
    $region68: #{vaefc_ae_forward.1} parent=1 // pred_fallthru
      _
    %s250 = scalar_lea.sflag [#allocation5], 2
    // Predicated region
    $region69: #{vaefc_ae_forward.1} parent=1 // pred_check
      _
    $region70: #{vaefc_ae_forward.1} parent=1 // pred_check_branch
      %252 = sbr.rel target = $region72
    $region71: #{vaefc_ae_forward.1} parent=1 // pred_region
      %253 = sst [smem:[#allocation15]] [#allocation19]
      %254 = sst [smem:[#allocation16]] [#allocation18]
    $region72: #{vaefc_ae_forward.1} parent=1 // pred_fallthru
      _
    %256 = shalt.err (0)
    %s258 = sshll.u32 %s9, 4
    %s259 = int_to_ptr.hbm [resolvable:$true] %s258
    %s260 = sshll.u32 [#allocation4], 4
    %s261 = int_to_ptr.vmem [resolvable:$true] %s260
    %263 = dma.hbm_to_vmem [thread:$0]  %s259, 8192, %s261, %s250
    %v264 = vld [vmem:[%s0] sm:$0xff]
    %v265 = vld [vmem:[%s0 + $0x8] sm:$0xff]
    %v266 = vld [vmem:[%s0 + $0x10] sm:$0xff]
    %v267 = vld [vmem:[%s0 + $0x18] sm:$0xff]
    %v268 = vld [vmem:[%s0 + $0x20] sm:$0xff]
    %v269 = vld [vmem:[%s0 + $0x28] sm:$0xff]
    %v270 = vld [vmem:[%s0 + $0x30] sm:$0xff]
    %v271 = vld [vmem:[%s0 + $0x38] sm:$0xff]
    %v272 = vld [vmem:[%s0 + $0x40] sm:$0xff]
    %v273 = vld [vmem:[%s0 + $0x48] sm:$0xff]
    %v274 = vld [vmem:[%s0 + $0x50] sm:$0xff]
    %v275 = vld [vmem:[%s0 + $0x58] sm:$0xff]
    %v276 = vld [vmem:[%s0 + $0x60] sm:$0xff]
    %v277 = vld [vmem:[%s0 + $0x68] sm:$0xff]
    %v278 = vld [vmem:[%s0 + $0x70] sm:$0xff]
    %v279 = vld [vmem:[%s0 + $0x78] sm:$0xff]
    %v280 = vld [vmem:[%s0 + $0x80] sm:$0xff]
    %v281 = vld [vmem:[%s0 + $0x88] sm:$0xff]
    %v282 = vld [vmem:[%s0 + $0x90] sm:$0xff]
    %v283 = vld [vmem:[%s0 + $0x98] sm:$0xff]
    %v284 = vld [vmem:[%s0 + $0xa0] sm:$0xff]
    %v285 = vld [vmem:[%s0 + $0xa8] sm:$0xff]
    %v286 = vld [vmem:[%s0 + $0xb0] sm:$0xff]
    %v287 = vld [vmem:[%s0 + $0xb8] sm:$0xff]
    %v288 = vld [vmem:[%s0 + $0xc0] sm:$0xff]
    %v289 = vld [vmem:[%s0 + $0xc8] sm:$0xff]
    %v290 = vld [vmem:[%s0 + $0xd0] sm:$0xff]
    %v291 = vld [vmem:[%s0 + $0xd8] sm:$0xff]
    %v292 = vld [vmem:[%s0 + $0xe0] sm:$0xff]
    %v293 = vld [vmem:[%s0 + $0xe8] sm:$0xff]
    %v294 = vld [vmem:[%s0 + $0xf0] sm:$0xff]
    %v295 = vld [vmem:[%s0 + $0xf8] sm:$0xff]
    %v296 = vld [vmem:[%s1] sm:$0xff]
    %v297 = vld [vmem:[%s1 + $0x8] sm:$0xff]
    %v298 = vld [vmem:[%s1 + $0x10] sm:$0xff]
    %v299 = vld [vmem:[%s1 + $0x18] sm:$0xff]
    %v300 = vld [vmem:[%s1 + $0x20] sm:$0xff]
    %v301 = vld [vmem:[%s1 + $0x28] sm:$0xff]
    %v302 = vld [vmem:[%s1 + $0x30] sm:$0xff]
    %v303 = vld [vmem:[%s1 + $0x38] sm:$0xff]
    %v304 = vld [vmem:[%s1 + $0x40] sm:$0xff]
    %v305 = vld [vmem:[%s1 + $0x48] sm:$0xff]
    %v306 = vld [vmem:[%s1 + $0x50] sm:$0xff]
    %v307 = vld [vmem:[%s1 + $0x58] sm:$0xff]
    %v308 = vld [vmem:[%s1 + $0x60] sm:$0xff]
    %v309 = vld [vmem:[%s1 + $0x68] sm:$0xff]
    %v310 = vld [vmem:[%s1 + $0x70] sm:$0xff]
    %v311 = vld [vmem:[%s1 + $0x78] sm:$0xff]
    %v312 = vld [vmem:[%s1 + $0x80] sm:$0xff]
    %v313 = vld [vmem:[%s1 + $0x88] sm:$0xff]
    %v314 = vld [vmem:[%s1 + $0x90] sm:$0xff]
    %v315 = vld [vmem:[%s1 + $0x98] sm:$0xff]
    %v316 = vld [vmem:[%s1 + $0xa0] sm:$0xff]
    %v317 = vld [vmem:[%s1 + $0xa8] sm:$0xff]
    %v318 = vld [vmem:[%s1 + $0xb0] sm:$0xff]
    %v319 = vld [vmem:[%s1 + $0xb8] sm:$0xff]
    %v320 = vld [vmem:[%s1 + $0xc0] sm:$0xff]
    %v321 = vld [vmem:[%s1 + $0xc8] sm:$0xff]
    %v322 = vld [vmem:[%s1 + $0xd0] sm:$0xff]
    %v323 = vld [vmem:[%s1 + $0xd8] sm:$0xff]
    %v324 = vld [vmem:[%s1 + $0xe0] sm:$0xff]
    %v325 = vld [vmem:[%s1 + $0xe8] sm:$0xff]
    %v326 = vld [vmem:[%s1 + $0xf0] sm:$0xff]
    %v327 = vld [vmem:[%s1 + $0xf8] sm:$0xff]
    %v328 = vld [vmem:[%s1 + $0x100] sm:$0xff]
    %v329 = vld [vmem:[%s1 + $0x108] sm:$0xff]
    %v330 = vld [vmem:[%s1 + $0x110] sm:$0xff]
    %v331 = vld [vmem:[%s1 + $0x118] sm:$0xff]
    %v332 = vld [vmem:[%s1 + $0x120] sm:$0xff]
    %v333 = vld [vmem:[%s1 + $0x128] sm:$0xff]
    %v334 = vld [vmem:[%s1 + $0x130] sm:$0xff]
    %v335 = vld [vmem:[%s1 + $0x138] sm:$0xff]
    %v336 = vld [vmem:[%s1 + $0x140] sm:$0xff]
    %v337 = vld [vmem:[%s1 + $0x148] sm:$0xff]
    %v338 = vld [vmem:[%s1 + $0x150] sm:$0xff]
    %v339 = vld [vmem:[%s1 + $0x158] sm:$0xff]
    %v340 = vld [vmem:[%s1 + $0x160] sm:$0xff]
    %v341 = vld [vmem:[%s1 + $0x168] sm:$0xff]
    %v342 = vld [vmem:[%s1 + $0x170] sm:$0xff]
    %v343 = vld [vmem:[%s1 + $0x178] sm:$0xff]
    %v344 = vld [vmem:[%s1 + $0x180] sm:$0xff]
    %v345 = vld [vmem:[%s1 + $0x188] sm:$0xff]
    %v346 = vld [vmem:[%s1 + $0x190] sm:$0xff]
    %v347 = vld [vmem:[%s1 + $0x198] sm:$0xff]
    %v348 = vld [vmem:[%s1 + $0x1a0] sm:$0xff]
    %v349 = vld [vmem:[%s1 + $0x1a8] sm:$0xff]
    %v350 = vld [vmem:[%s1 + $0x1b0] sm:$0xff]
    %v351 = vld [vmem:[%s1 + $0x1b8] sm:$0xff]
    %v352 = vld [vmem:[%s1 + $0x1c0] sm:$0xff]
    %v353 = vld [vmem:[%s1 + $0x1c8] sm:$0xff]
    %v354 = vld [vmem:[%s1 + $0x1d0] sm:$0xff]
    %v355 = vld [vmem:[%s1 + $0x1d8] sm:$0xff]
    %v356 = vld [vmem:[%s1 + $0x1e0] sm:$0xff]
    %v357 = vld [vmem:[%s1 + $0x1e8] sm:$0xff]
    %v358 = vld [vmem:[%s1 + $0x1f0] sm:$0xff]
    %v359 = vld [vmem:[%s1 + $0x1f8] sm:$0xff]
    %v392 = vunpack.c.l.b16 %v264
    %v393 = vunpack.c.h.b16 %v264
    %v394 = vunpack.c.l.b16 %v265
    %v395 = vunpack.c.h.b16 %v265
    %v396 = vunpack.c.l.b16 %v266
    %v397 = vunpack.c.h.b16 %v266
    %v398 = vunpack.c.l.b16 %v267
    %v399 = vunpack.c.h.b16 %v267
    %v400 = vunpack.c.l.b16 %v268
    %v401 = vunpack.c.h.b16 %v268
    %v402 = vunpack.c.l.b16 %v269
    %v403 = vunpack.c.h.b16 %v269
    %v404 = vunpack.c.l.b16 %v270
    %v405 = vunpack.c.h.b16 %v270
    %v406 = vunpack.c.l.b16 %v271
    %v407 = vunpack.c.h.b16 %v271
    %v408 = vunpack.c.l.b16 %v272
    %v409 = vunpack.c.h.b16 %v272
    %v410 = vunpack.c.l.b16 %v273
    %v411 = vunpack.c.h.b16 %v273
    %v412 = vunpack.c.l.b16 %v274
    %v413 = vunpack.c.h.b16 %v274
    %v414 = vunpack.c.l.b16 %v275
    %v415 = vunpack.c.h.b16 %v275
    %v416 = vunpack.c.l.b16 %v276
    %v417 = vunpack.c.h.b16 %v276
    %v418 = vunpack.c.l.b16 %v277
    %v419 = vunpack.c.h.b16 %v277
    %v420 = vunpack.c.l.b16 %v278
    %v421 = vunpack.c.h.b16 %v278
    %v422 = vunpack.c.l.b16 %v279
    %v423 = vunpack.c.h.b16 %v279
    %v424 = vunpack.c.l.b16 %v280
    %v425 = vunpack.c.h.b16 %v280
    %v426 = vunpack.c.l.b16 %v281
    %v427 = vunpack.c.h.b16 %v281
    %v428 = vunpack.c.l.b16 %v282
    %v429 = vunpack.c.h.b16 %v282
    %v430 = vunpack.c.l.b16 %v283
    %v431 = vunpack.c.h.b16 %v283
    %v432 = vunpack.c.l.b16 %v284
    %v433 = vunpack.c.h.b16 %v284
    %v434 = vunpack.c.l.b16 %v285
    %v435 = vunpack.c.h.b16 %v285
    %v436 = vunpack.c.l.b16 %v286
    %v437 = vunpack.c.h.b16 %v286
    %v438 = vunpack.c.l.b16 %v287
    %v439 = vunpack.c.h.b16 %v287
    %v440 = vunpack.c.l.b16 %v288
    %v441 = vunpack.c.h.b16 %v288
    %v442 = vunpack.c.l.b16 %v289
    %v443 = vunpack.c.h.b16 %v289
    %v444 = vunpack.c.l.b16 %v290
    %v445 = vunpack.c.h.b16 %v290
    %v446 = vunpack.c.l.b16 %v291
    %v447 = vunpack.c.h.b16 %v291
    %v448 = vunpack.c.l.b16 %v292
    %v449 = vunpack.c.h.b16 %v292
    %v450 = vunpack.c.l.b16 %v293
    %v451 = vunpack.c.h.b16 %v293
    %v452 = vunpack.c.l.b16 %v294
    %v453 = vunpack.c.h.b16 %v294
    %v454 = vunpack.c.l.b16 %v295
    %v455 = vunpack.c.h.b16 %v295
    %v456 = vpack.c.b16 %v394, %v392
    %v457 = vpack.c.b16 %v395, %v393
    %v458 = vpack.c.b16 %v398, %v396
    %v459 = vpack.c.b16 %v399, %v397
    %v460 = vpack.c.b16 %v402, %v400
    %v461 = vpack.c.b16 %v403, %v401
    %v462 = vpack.c.b16 %v406, %v404
    %v463 = vpack.c.b16 %v407, %v405
    %v464 = vpack.c.b16 %v410, %v408
    %v465 = vpack.c.b16 %v411, %v409
    %v466 = vpack.c.b16 %v414, %v412
    %v467 = vpack.c.b16 %v415, %v413
    %v468 = vpack.c.b16 %v418, %v416
    %v469 = vpack.c.b16 %v419, %v417
    %v470 = vpack.c.b16 %v422, %v420
    %v471 = vpack.c.b16 %v423, %v421
    %v472 = vpack.c.b16 %v426, %v424
    %v473 = vpack.c.b16 %v427, %v425
    %v474 = vpack.c.b16 %v430, %v428
    %v475 = vpack.c.b16 %v431, %v429
    %v476 = vpack.c.b16 %v434, %v432
    %v477 = vpack.c.b16 %v435, %v433
    %v478 = vpack.c.b16 %v438, %v436
    %v479 = vpack.c.b16 %v439, %v437
    %v480 = vpack.c.b16 %v442, %v440
    %v481 = vpack.c.b16 %v443, %v441
    %v482 = vpack.c.b16 %v446, %v444
    %v483 = vpack.c.b16 %v447, %v445
    %v484 = vpack.c.b16 %v450, %v448
    %v485 = vpack.c.b16 %v451, %v449
    %v486 = vpack.c.b16 %v454, %v452
    %v487 = vpack.c.b16 %v455, %v453
    %v584 = vunpack.c.l.b16 %v296
    %v585 = vunpack.c.h.b16 %v296
    %v586 = vunpack.c.l.b16 %v297
    %v587 = vunpack.c.h.b16 %v297
    %v588 = vunpack.c.l.b16 %v298
    %v589 = vunpack.c.h.b16 %v298
    %v590 = vunpack.c.l.b16 %v299
    %v591 = vunpack.c.h.b16 %v299
    %v592 = vunpack.c.l.b16 %v300
    %v593 = vunpack.c.h.b16 %v300
    %v594 = vunpack.c.l.b16 %v301
    %v595 = vunpack.c.h.b16 %v301
    %v596 = vunpack.c.l.b16 %v302
    %v597 = vunpack.c.h.b16 %v302
    %v598 = vunpack.c.l.b16 %v303
    %v599 = vunpack.c.h.b16 %v303
    %v600 = vunpack.c.l.b16 %v304
    %v601 = vunpack.c.h.b16 %v304
    %v602 = vunpack.c.l.b16 %v305
    %v603 = vunpack.c.h.b16 %v305
    %v604 = vunpack.c.l.b16 %v306
    %v605 = vunpack.c.h.b16 %v306
    %v606 = vunpack.c.l.b16 %v307
    %v607 = vunpack.c.h.b16 %v307
    %v608 = vunpack.c.l.b16 %v308
    %v609 = vunpack.c.h.b16 %v308
    %v610 = vunpack.c.l.b16 %v309
    %v611 = vunpack.c.h.b16 %v309
    %v612 = vunpack.c.l.b16 %v310
    %v613 = vunpack.c.h.b16 %v310
    %v614 = vunpack.c.l.b16 %v311
    %v615 = vunpack.c.h.b16 %v311
    %v616 = vunpack.c.l.b16 %v312
    %v617 = vunpack.c.h.b16 %v312
    %v618 = vunpack.c.l.b16 %v313
    %v619 = vunpack.c.h.b16 %v313
    %v620 = vunpack.c.l.b16 %v314
    %v621 = vunpack.c.h.b16 %v314
    %v622 = vunpack.c.l.b16 %v315
    %v623 = vunpack.c.h.b16 %v315
    %v624 = vunpack.c.l.b16 %v316
    %v625 = vunpack.c.h.b16 %v316
    %v626 = vunpack.c.l.b16 %v317
    %v627 = vunpack.c.h.b16 %v317
    %v628 = vunpack.c.l.b16 %v318
    %v629 = vunpack.c.h.b16 %v318
    %v630 = vunpack.c.l.b16 %v319
    %v631 = vunpack.c.h.b16 %v319
    %v632 = vunpack.c.l.b16 %v320
    %v633 = vunpack.c.h.b16 %v320
    %v634 = vunpack.c.l.b16 %v321
    %v635 = vunpack.c.h.b16 %v321
    %v636 = vunpack.c.l.b16 %v322
    %v637 = vunpack.c.h.b16 %v322
    %v638 = vunpack.c.l.b16 %v323
    %v639 = vunpack.c.h.b16 %v323
    %v640 = vunpack.c.l.b16 %v324
    %v641 = vunpack.c.h.b16 %v324
    %v642 = vunpack.c.l.b16 %v325
    %v643 = vunpack.c.h.b16 %v325
    %v644 = vunpack.c.l.b16 %v326
    %v645 = vunpack.c.h.b16 %v326
    %v646 = vunpack.c.l.b16 %v327
    %v647 = vunpack.c.h.b16 %v327
    %v648 = vunpack.c.l.b16 %v328
    %v649 = vunpack.c.h.b16 %v328
    %v650 = vunpack.c.l.b16 %v329
    %v651 = vunpack.c.h.b16 %v329
    %v652 = vunpack.c.l.b16 %v330
    %v653 = vunpack.c.h.b16 %v330
    %v654 = vunpack.c.l.b16 %v331
    %v655 = vunpack.c.h.b16 %v331
    %v656 = vunpack.c.l.b16 %v332
    %v657 = vunpack.c.h.b16 %v332
    %v658 = vunpack.c.l.b16 %v333
    %v659 = vunpack.c.h.b16 %v333
    %v660 = vunpack.c.l.b16 %v334
    %v661 = vunpack.c.h.b16 %v334
    %v662 = vunpack.c.l.b16 %v335
    %v663 = vunpack.c.h.b16 %v335
    %v664 = vunpack.c.l.b16 %v336
    %v665 = vunpack.c.h.b16 %v336
    %v666 = vunpack.c.l.b16 %v337
    %v667 = vunpack.c.h.b16 %v337
    %v668 = vunpack.c.l.b16 %v338
    %v669 = vunpack.c.h.b16 %v338
    %v670 = vunpack.c.l.b16 %v339
    %v671 = vunpack.c.h.b16 %v339
    %v672 = vunpack.c.l.b16 %v340
    %v673 = vunpack.c.h.b16 %v340
    %v674 = vunpack.c.l.b16 %v341
    %v675 = vunpack.c.h.b16 %v341
    %v676 = vunpack.c.l.b16 %v342
    %v677 = vunpack.c.h.b16 %v342
    %v678 = vunpack.c.l.b16 %v343
    %v679 = vunpack.c.h.b16 %v343
    %v680 = vunpack.c.l.b16 %v344
    %v681 = vunpack.c.h.b16 %v344
    %v682 = vunpack.c.l.b16 %v345
    %v683 = vunpack.c.h.b16 %v345
    %v684 = vunpack.c.l.b16 %v346
    %v685 = vunpack.c.h.b16 %v346
    %v686 = vunpack.c.l.b16 %v347
    %v687 = vunpack.c.h.b16 %v347
    %v688 = vunpack.c.l.b16 %v348
    %v689 = vunpack.c.h.b16 %v348
    %v690 = vunpack.c.l.b16 %v349
    %v691 = vunpack.c.h.b16 %v349
    %v692 = vunpack.c.l.b16 %v350
    %v693 = vunpack.c.h.b16 %v350
    %v694 = vunpack.c.l.b16 %v351
    %v695 = vunpack.c.h.b16 %v351
    %v696 = vunpack.c.l.b16 %v352
    %v697 = vunpack.c.h.b16 %v352
    %v698 = vunpack.c.l.b16 %v353
    %v699 = vunpack.c.h.b16 %v353
    %v700 = vunpack.c.l.b16 %v354
    %v701 = vunpack.c.h.b16 %v354
    %v702 = vunpack.c.l.b16 %v355
    %v703 = vunpack.c.h.b16 %v355
    %v704 = vunpack.c.l.b16 %v356
    %v705 = vunpack.c.h.b16 %v356
    %v706 = vunpack.c.l.b16 %v357
    %v707 = vunpack.c.h.b16 %v357
    %v708 = vunpack.c.l.b16 %v358
    %v709 = vunpack.c.h.b16 %v358
    %v710 = vunpack.c.l.b16 %v359
    %v711 = vunpack.c.h.b16 %v359
    %v712 = vpack.c.b16 %v588, %v584
    %v713 = vpack.c.b16 %v589, %v585
    %v714 = vpack.c.b16 %v590, %v586
    %v715 = vpack.c.b16 %v591, %v587
    %v716 = vpack.c.b16 %v596, %v592
    %v717 = vpack.c.b16 %v597, %v593
    %v718 = vpack.c.b16 %v598, %v594
    %v719 = vpack.c.b16 %v599, %v595
    %v720 = vpack.c.b16 %v604, %v600
    %v721 = vpack.c.b16 %v605, %v601
    %v722 = vpack.c.b16 %v606, %v602
    %v723 = vpack.c.b16 %v607, %v603
    %v724 = vpack.c.b16 %v612, %v608
    %v725 = vpack.c.b16 %v613, %v609
    %v726 = vpack.c.b16 %v614, %v610
    %v727 = vpack.c.b16 %v615, %v611
    %v728 = vpack.c.b16 %v620, %v616
    %v729 = vpack.c.b16 %v621, %v617
    %v730 = vpack.c.b16 %v622, %v618
    %v731 = vpack.c.b16 %v623, %v619
    %v732 = vpack.c.b16 %v628, %v624
    %v733 = vpack.c.b16 %v629, %v625
    %v734 = vpack.c.b16 %v630, %v626
    %v735 = vpack.c.b16 %v631, %v627
    %v736 = vpack.c.b16 %v636, %v632
    %v737 = vpack.c.b16 %v637, %v633
    %v738 = vpack.c.b16 %v638, %v634
    %v739 = vpack.c.b16 %v639, %v635
    %v740 = vpack.c.b16 %v644, %v640
    %v741 = vpack.c.b16 %v645, %v641
    %v742 = vpack.c.b16 %v646, %v642
    %v743 = vpack.c.b16 %v647, %v643
    %v744 = vpack.c.b16 %v652, %v648
    %v745 = vpack.c.b16 %v653, %v649
    %v746 = vpack.c.b16 %v654, %v650
    %v747 = vpack.c.b16 %v655, %v651
    %v748 = vpack.c.b16 %v660, %v656
    %v749 = vpack.c.b16 %v661, %v657
    %v750 = vpack.c.b16 %v662, %v658
    %v751 = vpack.c.b16 %v663, %v659
    %v752 = vpack.c.b16 %v668, %v664
    %v753 = vpack.c.b16 %v669, %v665
    %v754 = vpack.c.b16 %v670, %v666
    %v755 = vpack.c.b16 %v671, %v667
    %v756 = vpack.c.b16 %v676, %v672
    %v757 = vpack.c.b16 %v677, %v673
    %v758 = vpack.c.b16 %v678, %v674
    %v759 = vpack.c.b16 %v679, %v675
    %v760 = vpack.c.b16 %v684, %v680
    %v761 = vpack.c.b16 %v685, %v681
    %v762 = vpack.c.b16 %v686, %v682
    %v763 = vpack.c.b16 %v687, %v683
    %v764 = vpack.c.b16 %v692, %v688
    %v765 = vpack.c.b16 %v693, %v689
    %v766 = vpack.c.b16 %v694, %v690
    %v767 = vpack.c.b16 %v695, %v691
    %v768 = vpack.c.b16 %v700, %v696
    %v769 = vpack.c.b16 %v701, %v697
    %v770 = vpack.c.b16 %v702, %v698
    %v771 = vpack.c.b16 %v703, %v699
    %v772 = vpack.c.b16 %v708, %v704
    %v773 = vpack.c.b16 %v709, %v705
    %v774 = vpack.c.b16 %v710, %v706
    %v775 = vpack.c.b16 %v711, %v707
    %840 = vmatpush.bf16.msra.mxu0 %v740
    %841 = vmatpush.bf16.msra.mxu0 %v736
    %842 = vmatpush.bf16.msra.mxu0 %v732
    %843 = vmatpush.bf16.msra.mxu0 %v728
    %844 = vmatpush.bf16.msra.mxu0 %v724
    %845 = vmatpush.bf16.msra.mxu0 %v720
    %846 = vmatpush.bf16.msra.mxu0 %v716
    %847 = vmatpush.bf16.msra.mxu0 %v712
    %848 = vmatmul.bf16.gmra.mxu0 %v456
    %v849 = vpop.f32.mrf.mxu0
    %v850 = vadd.f32 0.0, %v849
    %v851 = vpop.f32.mrf.mxu0
    %v852 = vadd.f32 0.0, %v851
    %853 = vmatmul.bf16.gmra.mxu0 %v458
    %v854 = vpop.f32.mrf.mxu0
    %v855 = vadd.f32 0.0, %v854
    %v856 = vpop.f32.mrf.mxu0
    %v857 = vadd.f32 0.0, %v856
    %858 = vmatmul.bf16.gmra.mxu0 %v460
    %v859 = vpop.f32.mrf.mxu0
    %v860 = vadd.f32 0.0, %v859
    %v861 = vpop.f32.mrf.mxu0
    %v862 = vadd.f32 0.0, %v861
    %863 = vmatmul.bf16.gmra.mxu0 %v462
    %v864 = vpop.f32.mrf.mxu0
    %v865 = vadd.f32 0.0, %v864
    %v866 = vpop.f32.mrf.mxu0
    %v867 = vadd.f32 0.0, %v866
    %868 = vmatmul.bf16.gmra.mxu0 %v464
    %v869 = vpop.f32.mrf.mxu0
    %v870 = vadd.f32 0.0, %v869
    %v871 = vpop.f32.mrf.mxu0
    %v872 = vadd.f32 0.0, %v871
    %873 = vmatmul.bf16.gmra.mxu0 %v466
    %v874 = vpop.f32.mrf.mxu0
    %v875 = vadd.f32 0.0, %v874
    %v876 = vpop.f32.mrf.mxu0
    %v877 = vadd.f32 0.0, %v876
    %878 = vmatmul.bf16.gmra.mxu0 %v468
    %v879 = vpop.f32.mrf.mxu0
    %v880 = vadd.f32 0.0, %v879
    %v881 = vpop.f32.mrf.mxu0
    %v882 = vadd.f32 0.0, %v881
    %883 = vmatmul.bf16.gmra.mxu0 %v470
    %v884 = vpop.f32.mrf.mxu0
    %v885 = vadd.f32 0.0, %v884
    %v886 = vpop.f32.mrf.mxu0
    %v887 = vadd.f32 0.0, %v886
    %888 = vmatmul.bf16.gmra.mxu0 %v472
    %v889 = vpop.f32.mrf.mxu0
    %v890 = vadd.f32 0.0, %v889
    %v891 = vpop.f32.mrf.mxu0
    %v892 = vadd.f32 0.0, %v891
    %893 = vmatmul.bf16.gmra.mxu0 %v474
    %v894 = vpop.f32.mrf.mxu0
    %v895 = vadd.f32 0.0, %v894
    %v896 = vpop.f32.mrf.mxu0
    %v897 = vadd.f32 0.0, %v896
    %898 = vmatmul.bf16.gmra.mxu0 %v476
    %v899 = vpop.f32.mrf.mxu0
    %v900 = vadd.f32 0.0, %v899
    %v901 = vpop.f32.mrf.mxu0
    %v902 = vadd.f32 0.0, %v901
    %903 = vmatmul.bf16.gmra.mxu0 %v478
    %v904 = vpop.f32.mrf.mxu0
    %v905 = vadd.f32 0.0, %v904
    %v906 = vpop.f32.mrf.mxu0
    %v907 = vadd.f32 0.0, %v906
    %908 = vmatmul.bf16.gmra.mxu0 %v480
    %v909 = vpop.f32.mrf.mxu0
    %v910 = vadd.f32 0.0, %v909
    %v911 = vpop.f32.mrf.mxu0
    %v912 = vadd.f32 0.0, %v911
    %913 = vmatmul.bf16.gmra.mxu0 %v482
    %v914 = vpop.f32.mrf.mxu0
    %v915 = vadd.f32 0.0, %v914
    %v916 = vpop.f32.mrf.mxu0
    %v917 = vadd.f32 0.0, %v916
    %918 = vmatmul.bf16.gmra.mxu0 %v484
    %v919 = vpop.f32.mrf.mxu0
    %v920 = vadd.f32 0.0, %v919
    %v921 = vpop.f32.mrf.mxu0
    %v922 = vadd.f32 0.0, %v921
    %923 = vmatmul.bf16.gmra.mxu0 %v486
    %v924 = vpop.f32.mrf.mxu0
    %v925 = vadd.f32 0.0, %v924
    %v926 = vpop.f32.mrf.mxu0
    %v927 = vadd.f32 0.0, %v926
    %928 = vdwg.mxu0
    %929 = vmatpush.bf16.msra.mxu0 %v772
    %930 = vmatpush.bf16.msra.mxu0 %v768
    %931 = vmatpush.bf16.msra.mxu0 %v764
    %932 = vmatpush.bf16.msra.mxu0 %v760
    %933 = vmatpush.bf16.msra.mxu0 %v756
    %934 = vmatpush.bf16.msra.mxu0 %v752
    %935 = vmatpush.bf16.msra.mxu0 %v748
    %936 = vmatpush.bf16.msra.mxu0 %v744
    %937 = vmatmul.bf16.gmra.mxu0 %v457
    %v938 = vpop.f32.mrf.mxu0
    %v939 = vadd.f32 %v850, %v938
    %v940 = vpop.f32.mrf.mxu0
    %v941 = vadd.f32 %v852, %v940
    %942 = vmatmul.bf16.gmra.mxu0 %v459
    %v943 = vpop.f32.mrf.mxu0
    %v944 = vadd.f32 %v855, %v943
    %v945 = vpop.f32.mrf.mxu0
    %v946 = vadd.f32 %v857, %v945
    %947 = vmatmul.bf16.gmra.mxu0 %v461
    %v948 = vpop.f32.mrf.mxu0
    %v949 = vadd.f32 %v860, %v948
    %v950 = vpop.f32.mrf.mxu0
    %v951 = vadd.f32 %v862, %v950
    %952 = vmatmul.bf16.gmra.mxu0 %v463
    %v953 = vpop.f32.mrf.mxu0
    %v954 = vadd.f32 %v865, %v953
    %v955 = vpop.f32.mrf.mxu0
    %v956 = vadd.f32 %v867, %v955
    %957 = vmatmul.bf16.gmra.mxu0 %v465
    %v958 = vpop.f32.mrf.mxu0
    %v959 = vadd.f32 %v870, %v958
    %v960 = vpop.f32.mrf.mxu0
    %v961 = vadd.f32 %v872, %v960
    %962 = vmatmul.bf16.gmra.mxu0 %v467
    %v963 = vpop.f32.mrf.mxu0
    %v964 = vadd.f32 %v875, %v963
    %v965 = vpop.f32.mrf.mxu0
    %v966 = vadd.f32 %v877, %v965
    %967 = vmatmul.bf16.gmra.mxu0 %v469
    %v968 = vpop.f32.mrf.mxu0
    %v969 = vadd.f32 %v880, %v968
    %v970 = vpop.f32.mrf.mxu0
    %v971 = vadd.f32 %v882, %v970
    %972 = vmatmul.bf16.gmra.mxu0 %v471
    %v973 = vpop.f32.mrf.mxu0
    %v974 = vadd.f32 %v885, %v973
    %v975 = vpop.f32.mrf.mxu0
    %v976 = vadd.f32 %v887, %v975
    %977 = vmatmul.bf16.gmra.mxu0 %v473
    %v978 = vpop.f32.mrf.mxu0
    %v979 = vadd.f32 %v890, %v978
    %v980 = vpop.f32.mrf.mxu0
    %v981 = vadd.f32 %v892, %v980
    %982 = vmatmul.bf16.gmra.mxu0 %v475
    %v983 = vpop.f32.mrf.mxu0
    %v984 = vadd.f32 %v895, %v983
    %v985 = vpop.f32.mrf.mxu0
    %v986 = vadd.f32 %v897, %v985
    %987 = vmatmul.bf16.gmra.mxu0 %v477
    %v988 = vpop.f32.mrf.mxu0
    %v989 = vadd.f32 %v900, %v988
    %v990 = vpop.f32.mrf.mxu0
    %v991 = vadd.f32 %v902, %v990
    %992 = vmatmul.bf16.gmra.mxu0 %v479
    %v993 = vpop.f32.mrf.mxu0
    %v994 = vadd.f32 %v905, %v993
    %v995 = vpop.f32.mrf.mxu0
    %v996 = vadd.f32 %v907, %v995
    %997 = vmatmul.bf16.gmra.mxu0 %v481
    %v998 = vpop.f32.mrf.mxu0
    %v999 = vadd.f32 %v910, %v998
    %v1000 = vpop.f32.mrf.mxu0
    %v1001 = vadd.f32 %v912, %v1000
    %1002 = vmatmul.bf16.gmra.mxu0 %v483
    %v1003 = vpop.f32.mrf.mxu0
    %v1004 = vadd.f32 %v915, %v1003
    %v1005 = vpop.f32.mrf.mxu0
    %v1006 = vadd.f32 %v917, %v1005
    %1007 = vmatmul.bf16.gmra.mxu0 %v485
    %v1008 = vpop.f32.mrf.mxu0
    %v1009 = vadd.f32 %v920, %v1008
    %v1010 = vpop.f32.mrf.mxu0
    %v1011 = vadd.f32 %v922, %v1010
    %1012 = vmatmul.bf16.gmra.mxu0 %v487
    %v1013 = vpop.f32.mrf.mxu0
    %v1014 = vadd.f32 %v925, %v1013
    %v1015 = vpop.f32.mrf.mxu0
    %v1016 = vadd.f32 %v927, %v1015
    %1017 = vdwg.mxu0
    %1018 = vmatpush.bf16.msra.mxu0 %v741
    %1019 = vmatpush.bf16.msra.mxu0 %v737
    %1020 = vmatpush.bf16.msra.mxu0 %v733
    %1021 = vmatpush.bf16.msra.mxu0 %v729
    %1022 = vmatpush.bf16.msra.mxu0 %v725
    %1023 = vmatpush.bf16.msra.mxu0 %v721
    %1024 = vmatpush.bf16.msra.mxu0 %v717
    %1025 = vmatpush.bf16.msra.mxu0 %v713
    %1026 = vmatmul.bf16.gmra.mxu0 %v456
    %v1027 = vpop.f32.mrf.mxu0
    %v1028 = vadd.f32 0.0, %v1027
    %v1029 = vpop.f32.mrf.mxu0
    %v1030 = vadd.f32 0.0, %v1029
    %1031 = vmatmul.bf16.gmra.mxu0 %v458
    %v1032 = vpop.f32.mrf.mxu0
    %v1033 = vadd.f32 0.0, %v1032
    %v1034 = vpop.f32.mrf.mxu0
    %v1035 = vadd.f32 0.0, %v1034
    %1036 = vmatmul.bf16.gmra.mxu0 %v460
    %v1037 = vpop.f32.mrf.mxu0
    %v1038 = vadd.f32 0.0, %v1037
    %v1039 = vpop.f32.mrf.mxu0
    %v1040 = vadd.f32 0.0, %v1039
    %1041 = vmatmul.bf16.gmra.mxu0 %v462
    %v1042 = vpop.f32.mrf.mxu0
    %v1043 = vadd.f32 0.0, %v1042
    %v1044 = vpop.f32.mrf.mxu0
    %v1045 = vadd.f32 0.0, %v1044
    %1046 = vmatmul.bf16.gmra.mxu0 %v464
    %v1047 = vpop.f32.mrf.mxu0
    %v1048 = vadd.f32 0.0, %v1047
    %v1049 = vpop.f32.mrf.mxu0
    %v1050 = vadd.f32 0.0, %v1049
    %1051 = vmatmul.bf16.gmra.mxu0 %v466
    %v1052 = vpop.f32.mrf.mxu0
    %v1053 = vadd.f32 0.0, %v1052
    %v1054 = vpop.f32.mrf.mxu0
    %v1055 = vadd.f32 0.0, %v1054
    %1056 = vmatmul.bf16.gmra.mxu0 %v468
    %v1057 = vpop.f32.mrf.mxu0
    %v1058 = vadd.f32 0.0, %v1057
    %v1059 = vpop.f32.mrf.mxu0
    %v1060 = vadd.f32 0.0, %v1059
    %1061 = vmatmul.bf16.gmra.mxu0 %v470
    %v1062 = vpop.f32.mrf.mxu0
    %v1063 = vadd.f32 0.0, %v1062
    %v1064 = vpop.f32.mrf.mxu0
    %v1065 = vadd.f32 0.0, %v1064
    %1066 = vmatmul.bf16.gmra.mxu0 %v472
    %v1067 = vpop.f32.mrf.mxu0
    %v1068 = vadd.f32 0.0, %v1067
    %v1069 = vpop.f32.mrf.mxu0
    %v1070 = vadd.f32 0.0, %v1069
    %1071 = vmatmul.bf16.gmra.mxu0 %v474
    %v1072 = vpop.f32.mrf.mxu0
    %v1073 = vadd.f32 0.0, %v1072
    %v1074 = vpop.f32.mrf.mxu0
    %v1075 = vadd.f32 0.0, %v1074
    %1076 = vmatmul.bf16.gmra.mxu0 %v476
    %v1077 = vpop.f32.mrf.mxu0
    %v1078 = vadd.f32 0.0, %v1077
    %v1079 = vpop.f32.mrf.mxu0
    %v1080 = vadd.f32 0.0, %v1079
    %1081 = vmatmul.bf16.gmra.mxu0 %v478
    %v1082 = vpop.f32.mrf.mxu0
    %v1083 = vadd.f32 0.0, %v1082
    %v1084 = vpop.f32.mrf.mxu0
    %v1085 = vadd.f32 0.0, %v1084
    %1086 = vmatmul.bf16.gmra.mxu0 %v480
    %v1087 = vpop.f32.mrf.mxu0
    %v1088 = vadd.f32 0.0, %v1087
    %v1089 = vpop.f32.mrf.mxu0
    %v1090 = vadd.f32 0.0, %v1089
    %1091 = vmatmul.bf16.gmra.mxu0 %v482
    %v1092 = vpop.f32.mrf.mxu0
    %v1093 = vadd.f32 0.0, %v1092
    %v1094 = vpop.f32.mrf.mxu0
    %v1095 = vadd.f32 0.0, %v1094
    %1096 = vmatmul.bf16.gmra.mxu0 %v484
    %v1097 = vpop.f32.mrf.mxu0
    %v1098 = vadd.f32 0.0, %v1097
    %v1099 = vpop.f32.mrf.mxu0
    %v1100 = vadd.f32 0.0, %v1099
    %1101 = vmatmul.bf16.gmra.mxu0 %v486
    %v1102 = vpop.f32.mrf.mxu0
    %v1103 = vadd.f32 0.0, %v1102
    %v1104 = vpop.f32.mrf.mxu0
    %v1105 = vadd.f32 0.0, %v1104
    %1106 = vdwg.mxu0
    %1107 = vmatpush.bf16.msra.mxu0 %v773
    %1108 = vmatpush.bf16.msra.mxu0 %v769
    %1109 = vmatpush.bf16.msra.mxu0 %v765
    %1110 = vmatpush.bf16.msra.mxu0 %v761
    %1111 = vmatpush.bf16.msra.mxu0 %v757
    %1112 = vmatpush.bf16.msra.mxu0 %v753
    %1113 = vmatpush.bf16.msra.mxu0 %v749
    %1114 = vmatpush.bf16.msra.mxu0 %v745
    %1115 = vmatmul.bf16.gmra.mxu0 %v457
    %v1116 = vpop.f32.mrf.mxu0
    %v1117 = vadd.f32 %v1028, %v1116
    %v1118 = vpop.f32.mrf.mxu0
    %v1119 = vadd.f32 %v1030, %v1118
    %1120 = vmatmul.bf16.gmra.mxu0 %v459
    %v1121 = vpop.f32.mrf.mxu0
    %v1122 = vadd.f32 %v1033, %v1121
    %v1123 = vpop.f32.mrf.mxu0
    %v1124 = vadd.f32 %v1035, %v1123
    %1125 = vmatmul.bf16.gmra.mxu0 %v461
    %v1126 = vpop.f32.mrf.mxu0
    %v1127 = vadd.f32 %v1038, %v1126
    %v1128 = vpop.f32.mrf.mxu0
    %v1129 = vadd.f32 %v1040, %v1128
    %1130 = vmatmul.bf16.gmra.mxu0 %v463
    %v1131 = vpop.f32.mrf.mxu0
    %v1132 = vadd.f32 %v1043, %v1131
    %v1133 = vpop.f32.mrf.mxu0
    %v1134 = vadd.f32 %v1045, %v1133
    %1135 = vmatmul.bf16.gmra.mxu0 %v465
    %v1136 = vpop.f32.mrf.mxu0
    %v1137 = vadd.f32 %v1048, %v1136
    %v1138 = vpop.f32.mrf.mxu0
    %v1139 = vadd.f32 %v1050, %v1138
    %1140 = vmatmul.bf16.gmra.mxu0 %v467
    %v1141 = vpop.f32.mrf.mxu0
    %v1142 = vadd.f32 %v1053, %v1141
    %v1143 = vpop.f32.mrf.mxu0
    %v1144 = vadd.f32 %v1055, %v1143
    %1145 = vmatmul.bf16.gmra.mxu0 %v469
    %v1146 = vpop.f32.mrf.mxu0
    %v1147 = vadd.f32 %v1058, %v1146
    %v1148 = vpop.f32.mrf.mxu0
    %v1149 = vadd.f32 %v1060, %v1148
    %1150 = vmatmul.bf16.gmra.mxu0 %v471
    %v1151 = vpop.f32.mrf.mxu0
    %v1152 = vadd.f32 %v1063, %v1151
    %v1153 = vpop.f32.mrf.mxu0
    %v1154 = vadd.f32 %v1065, %v1153
    %1155 = vmatmul.bf16.gmra.mxu0 %v473
    %v1156 = vpop.f32.mrf.mxu0
    %v1157 = vadd.f32 %v1068, %v1156
    %v1158 = vpop.f32.mrf.mxu0
    %v1159 = vadd.f32 %v1070, %v1158
    %1160 = vmatmul.bf16.gmra.mxu0 %v475
    %v1161 = vpop.f32.mrf.mxu0
    %v1162 = vadd.f32 %v1073, %v1161
    %v1163 = vpop.f32.mrf.mxu0
    %v1164 = vadd.f32 %v1075, %v1163
    %1165 = vmatmul.bf16.gmra.mxu0 %v477
    %v1166 = vpop.f32.mrf.mxu0
    %v1167 = vadd.f32 %v1078, %v1166
    %v1168 = vpop.f32.mrf.mxu0
    %v1169 = vadd.f32 %v1080, %v1168
    %1170 = vmatmul.bf16.gmra.mxu0 %v479
    %v1171 = vpop.f32.mrf.mxu0
    %v1172 = vadd.f32 %v1083, %v1171
    %v1173 = vpop.f32.mrf.mxu0
    %v1174 = vadd.f32 %v1085, %v1173
    %1175 = vmatmul.bf16.gmra.mxu0 %v481
    %v1176 = vpop.f32.mrf.mxu0
    %v1177 = vadd.f32 %v1088, %v1176
    %v1178 = vpop.f32.mrf.mxu0
    %v1179 = vadd.f32 %v1090, %v1178
    %1180 = vmatmul.bf16.gmra.mxu0 %v483
    %v1181 = vpop.f32.mrf.mxu0
    %v1182 = vadd.f32 %v1093, %v1181
    %v1183 = vpop.f32.mrf.mxu0
    %v1184 = vadd.f32 %v1095, %v1183
    %1185 = vmatmul.bf16.gmra.mxu0 %v485
    %v1186 = vpop.f32.mrf.mxu0
    %v1187 = vadd.f32 %v1098, %v1186
    %v1188 = vpop.f32.mrf.mxu0
    %v1189 = vadd.f32 %v1100, %v1188
    %1190 = vmatmul.bf16.gmra.mxu0 %v487
    %v1191 = vpop.f32.mrf.mxu0
    %v1192 = vadd.f32 %v1103, %v1191
    %v1193 = vpop.f32.mrf.mxu0
    %v1194 = vadd.f32 %v1105, %v1193
    %1195 = vdwg.mxu0
    %1196 = vmatpush.bf16.msra.mxu0 %v742
    %1197 = vmatpush.bf16.msra.mxu0 %v738
    %1198 = vmatpush.bf16.msra.mxu0 %v734
    %1199 = vmatpush.bf16.msra.mxu0 %v730
    %1200 = vmatpush.bf16.msra.mxu0 %v726
    %1201 = vmatpush.bf16.msra.mxu0 %v722
    %1202 = vmatpush.bf16.msra.mxu0 %v718
    %1203 = vmatpush.bf16.msra.mxu0 %v714
    %1204 = vmatmul.bf16.gmra.mxu0 %v456
    %v1205 = vpop.f32.mrf.mxu0
    %v1206 = vadd.f32 0.0, %v1205
    %v1207 = vpop.f32.mrf.mxu0
    %v1208 = vadd.f32 0.0, %v1207
    %1209 = vmatmul.bf16.gmra.mxu0 %v458
    %v1210 = vpop.f32.mrf.mxu0
    %v1211 = vadd.f32 0.0, %v1210
    %v1212 = vpop.f32.mrf.mxu0
    %v1213 = vadd.f32 0.0, %v1212
    %1214 = vmatmul.bf16.gmra.mxu0 %v460
    %v1215 = vpop.f32.mrf.mxu0
    %v1216 = vadd.f32 0.0, %v1215
    %v1217 = vpop.f32.mrf.mxu0
    %v1218 = vadd.f32 0.0, %v1217
    %1219 = vmatmul.bf16.gmra.mxu0 %v462
    %v1220 = vpop.f32.mrf.mxu0
    %v1221 = vadd.f32 0.0, %v1220
    %v1222 = vpop.f32.mrf.mxu0
    %v1223 = vadd.f32 0.0, %v1222
    %1224 = vmatmul.bf16.gmra.mxu0 %v464
    %v1225 = vpop.f32.mrf.mxu0
    %v1226 = vadd.f32 0.0, %v1225
    %v1227 = vpop.f32.mrf.mxu0
    %v1228 = vadd.f32 0.0, %v1227
    %1229 = vmatmul.bf16.gmra.mxu0 %v466
    %v1230 = vpop.f32.mrf.mxu0
    %v1231 = vadd.f32 0.0, %v1230
    %v1232 = vpop.f32.mrf.mxu0
    %v1233 = vadd.f32 0.0, %v1232
    %1234 = vmatmul.bf16.gmra.mxu0 %v468
    %v1235 = vpop.f32.mrf.mxu0
    %v1236 = vadd.f32 0.0, %v1235
    %v1237 = vpop.f32.mrf.mxu0
    %v1238 = vadd.f32 0.0, %v1237
    %1239 = vmatmul.bf16.gmra.mxu0 %v470
    %v1240 = vpop.f32.mrf.mxu0
    %v1241 = vadd.f32 0.0, %v1240
    %v1242 = vpop.f32.mrf.mxu0
    %v1243 = vadd.f32 0.0, %v1242
    %1244 = vmatmul.bf16.gmra.mxu0 %v472
    %v1245 = vpop.f32.mrf.mxu0
    %v1246 = vadd.f32 0.0, %v1245
    %v1247 = vpop.f32.mrf.mxu0
    %v1248 = vadd.f32 0.0, %v1247
    %1249 = vmatmul.bf16.gmra.mxu0 %v474
    %v1250 = vpop.f32.mrf.mxu0
    %v1251 = vadd.f32 0.0, %v1250
    %v1252 = vpop.f32.mrf.mxu0
    %v1253 = vadd.f32 0.0, %v1252
    %1254 = vmatmul.bf16.gmra.mxu0 %v476
    %v1255 = vpop.f32.mrf.mxu0
    %v1256 = vadd.f32 0.0, %v1255
    %v1257 = vpop.f32.mrf.mxu0
    %v1258 = vadd.f32 0.0, %v1257
    %1259 = vmatmul.bf16.gmra.mxu0 %v478
    %v1260 = vpop.f32.mrf.mxu0
    %v1261 = vadd.f32 0.0, %v1260
    %v1262 = vpop.f32.mrf.mxu0
    %v1263 = vadd.f32 0.0, %v1262
    %1264 = vmatmul.bf16.gmra.mxu0 %v480
    %v1265 = vpop.f32.mrf.mxu0
    %v1266 = vadd.f32 0.0, %v1265
    %v1267 = vpop.f32.mrf.mxu0
    %v1268 = vadd.f32 0.0, %v1267
    %1269 = vmatmul.bf16.gmra.mxu0 %v482
    %v1270 = vpop.f32.mrf.mxu0
    %v1271 = vadd.f32 0.0, %v1270
    %v1272 = vpop.f32.mrf.mxu0
    %v1273 = vadd.f32 0.0, %v1272
    %1274 = vmatmul.bf16.gmra.mxu0 %v484
    %v1275 = vpop.f32.mrf.mxu0
    %v1276 = vadd.f32 0.0, %v1275
    %v1277 = vpop.f32.mrf.mxu0
    %v1278 = vadd.f32 0.0, %v1277
    %1279 = vmatmul.bf16.gmra.mxu0 %v486
    %v1280 = vpop.f32.mrf.mxu0
    %v1281 = vadd.f32 0.0, %v1280
    %v1282 = vpop.f32.mrf.mxu0
    %v1283 = vadd.f32 0.0, %v1282
    %1284 = vdwg.mxu0
    %1285 = vmatpush.bf16.msra.mxu0 %v774
    %1286 = vmatpush.bf16.msra.mxu0 %v770
    %1287 = vmatpush.bf16.msra.mxu0 %v766
    %1288 = vmatpush.bf16.msra.mxu0 %v762
    %1289 = vmatpush.bf16.msra.mxu0 %v758
    %1290 = vmatpush.bf16.msra.mxu0 %v754
    %1291 = vmatpush.bf16.msra.mxu0 %v750
    %1292 = vmatpush.bf16.msra.mxu0 %v746
    %1293 = vmatmul.bf16.gmra.mxu0 %v457
    %v1294 = vpop.f32.mrf.mxu0
    %v1295 = vadd.f32 %v1206, %v1294
    %v1296 = vpop.f32.mrf.mxu0
    %v1297 = vadd.f32 %v1208, %v1296
    %1298 = vmatmul.bf16.gmra.mxu0 %v459
    %v1299 = vpop.f32.mrf.mxu0
    %v1300 = vadd.f32 %v1211, %v1299
    %v1301 = vpop.f32.mrf.mxu0
    %v1302 = vadd.f32 %v1213, %v1301
    %1303 = vmatmul.bf16.gmra.mxu0 %v461
    %v1304 = vpop.f32.mrf.mxu0
    %v1305 = vadd.f32 %v1216, %v1304
    %v1306 = vpop.f32.mrf.mxu0
    %v1307 = vadd.f32 %v1218, %v1306
    %1308 = vmatmul.bf16.gmra.mxu0 %v463
    %v1309 = vpop.f32.mrf.mxu0
    %v1310 = vadd.f32 %v1221, %v1309
    %v1311 = vpop.f32.mrf.mxu0
    %v1312 = vadd.f32 %v1223, %v1311
    %1313 = vmatmul.bf16.gmra.mxu0 %v465
    %v1314 = vpop.f32.mrf.mxu0
    %v1315 = vadd.f32 %v1226, %v1314
    %v1316 = vpop.f32.mrf.mxu0
    %v1317 = vadd.f32 %v1228, %v1316
    %1318 = vmatmul.bf16.gmra.mxu0 %v467
    %v1319 = vpop.f32.mrf.mxu0
    %v1320 = vadd.f32 %v1231, %v1319
    %v1321 = vpop.f32.mrf.mxu0
    %v1322 = vadd.f32 %v1233, %v1321
    %1323 = vmatmul.bf16.gmra.mxu0 %v469
    %v1324 = vpop.f32.mrf.mxu0
    %v1325 = vadd.f32 %v1236, %v1324
    %v1326 = vpop.f32.mrf.mxu0
    %v1327 = vadd.f32 %v1238, %v1326
    %1328 = vmatmul.bf16.gmra.mxu0 %v471
    %v1329 = vpop.f32.mrf.mxu0
    %v1330 = vadd.f32 %v1241, %v1329
    %v1331 = vpop.f32.mrf.mxu0
    %v1332 = vadd.f32 %v1243, %v1331
    %1333 = vmatmul.bf16.gmra.mxu0 %v473
    %v1334 = vpop.f32.mrf.mxu0
    %v1335 = vadd.f32 %v1246, %v1334
    %v1336 = vpop.f32.mrf.mxu0
    %v1337 = vadd.f32 %v1248, %v1336
    %1338 = vmatmul.bf16.gmra.mxu0 %v475
    %v1339 = vpop.f32.mrf.mxu0
    %v1340 = vadd.f32 %v1251, %v1339
    %v1341 = vpop.f32.mrf.mxu0
    %v1342 = vadd.f32 %v1253, %v1341
    %1343 = vmatmul.bf16.gmra.mxu0 %v477
    %v1344 = vpop.f32.mrf.mxu0
    %v1345 = vadd.f32 %v1256, %v1344
    %v1346 = vpop.f32.mrf.mxu0
    %v1347 = vadd.f32 %v1258, %v1346
    %1348 = vmatmul.bf16.gmra.mxu0 %v479
    %v1349 = vpop.f32.mrf.mxu0
    %v1350 = vadd.f32 %v1261, %v1349
    %v1351 = vpop.f32.mrf.mxu0
    %v1352 = vadd.f32 %v1263, %v1351
    %1353 = vmatmul.bf16.gmra.mxu0 %v481
    %v1354 = vpop.f32.mrf.mxu0
    %v1355 = vadd.f32 %v1266, %v1354
    %v1356 = vpop.f32.mrf.mxu0
    %v1357 = vadd.f32 %v1268, %v1356
    %1358 = vmatmul.bf16.gmra.mxu0 %v483
    %v1359 = vpop.f32.mrf.mxu0
    %v1360 = vadd.f32 %v1271, %v1359
    %v1361 = vpop.f32.mrf.mxu0
    %v1362 = vadd.f32 %v1273, %v1361
    %1363 = vmatmul.bf16.gmra.mxu0 %v485
    %v1364 = vpop.f32.mrf.mxu0
    %v1365 = vadd.f32 %v1276, %v1364
    %v1366 = vpop.f32.mrf.mxu0
    %v1367 = vadd.f32 %v1278, %v1366
    %1368 = vmatmul.bf16.gmra.mxu0 %v487
    %v1369 = vpop.f32.mrf.mxu0
    %v1370 = vadd.f32 %v1281, %v1369
    %v1371 = vpop.f32.mrf.mxu0
    %v1372 = vadd.f32 %v1283, %v1371
    %1373 = vdwg.mxu0
    %1374 = vmatpush.bf16.msra.mxu0 %v743
    %1375 = vmatpush.bf16.msra.mxu0 %v739
    %1376 = vmatpush.bf16.msra.mxu0 %v735
    %1377 = vmatpush.bf16.msra.mxu0 %v731
    %1378 = vmatpush.bf16.msra.mxu0 %v727
    %1379 = vmatpush.bf16.msra.mxu0 %v723
    %1380 = vmatpush.bf16.msra.mxu0 %v719
    %1381 = vmatpush.bf16.msra.mxu0 %v715
    %1382 = vmatmul.bf16.gmra.mxu0 %v456
    %v1383 = vpop.f32.mrf.mxu0
    %v1384 = vadd.f32 0.0, %v1383
    %v1385 = vpop.f32.mrf.mxu0
    %v1386 = vadd.f32 0.0, %v1385
    %1387 = vmatmul.bf16.gmra.mxu0 %v458
    %v1388 = vpop.f32.mrf.mxu0
    %v1389 = vadd.f32 0.0, %v1388
    %v1390 = vpop.f32.mrf.mxu0
    %v1391 = vadd.f32 0.0, %v1390
    %1392 = vmatmul.bf16.gmra.mxu0 %v460
    %v1393 = vpop.f32.mrf.mxu0
    %v1394 = vadd.f32 0.0, %v1393
    %v1395 = vpop.f32.mrf.mxu0
    %v1396 = vadd.f32 0.0, %v1395
    %1397 = vmatmul.bf16.gmra.mxu0 %v462
    %v1398 = vpop.f32.mrf.mxu0
    %v1399 = vadd.f32 0.0, %v1398
    %v1400 = vpop.f32.mrf.mxu0
    %v1401 = vadd.f32 0.0, %v1400
    %1402 = vmatmul.bf16.gmra.mxu0 %v464
    %v1403 = vpop.f32.mrf.mxu0
    %v1404 = vadd.f32 0.0, %v1403
    %v1405 = vpop.f32.mrf.mxu0
    %v1406 = vadd.f32 0.0, %v1405
    %1407 = vmatmul.bf16.gmra.mxu0 %v466
    %v1408 = vpop.f32.mrf.mxu0
    %v1409 = vadd.f32 0.0, %v1408
    %v1410 = vpop.f32.mrf.mxu0
    %v1411 = vadd.f32 0.0, %v1410
    %1412 = vmatmul.bf16.gmra.mxu0 %v468
    %v1413 = vpop.f32.mrf.mxu0
    %v1414 = vadd.f32 0.0, %v1413
    %v1415 = vpop.f32.mrf.mxu0
    %v1416 = vadd.f32 0.0, %v1415
    %1417 = vmatmul.bf16.gmra.mxu0 %v470
    %v1418 = vpop.f32.mrf.mxu0
    %v1419 = vadd.f32 0.0, %v1418
    %v1420 = vpop.f32.mrf.mxu0
    %v1421 = vadd.f32 0.0, %v1420
    %1422 = vmatmul.bf16.gmra.mxu0 %v472
    %v1423 = vpop.f32.mrf.mxu0
    %v1424 = vadd.f32 0.0, %v1423
    %v1425 = vpop.f32.mrf.mxu0
    %v1426 = vadd.f32 0.0, %v1425
    %1427 = vmatmul.bf16.gmra.mxu0 %v474
    %v1428 = vpop.f32.mrf.mxu0
    %v1429 = vadd.f32 0.0, %v1428
    %v1430 = vpop.f32.mrf.mxu0
    %v1431 = vadd.f32 0.0, %v1430
    %1432 = vmatmul.bf16.gmra.mxu0 %v476
    %v1433 = vpop.f32.mrf.mxu0
    %v1434 = vadd.f32 0.0, %v1433
    %v1435 = vpop.f32.mrf.mxu0
    %v1436 = vadd.f32 0.0, %v1435
    %1437 = vmatmul.bf16.gmra.mxu0 %v478
    %v1438 = vpop.f32.mrf.mxu0
    %v1439 = vadd.f32 0.0, %v1438
    %v1440 = vpop.f32.mrf.mxu0
    %v1441 = vadd.f32 0.0, %v1440
    %1442 = vmatmul.bf16.gmra.mxu0 %v480
    %v1443 = vpop.f32.mrf.mxu0
    %v1444 = vadd.f32 0.0, %v1443
    %v1445 = vpop.f32.mrf.mxu0
    %v1446 = vadd.f32 0.0, %v1445
    %1447 = vmatmul.bf16.gmra.mxu0 %v482
    %v1448 = vpop.f32.mrf.mxu0
    %v1449 = vadd.f32 0.0, %v1448
    %v1450 = vpop.f32.mrf.mxu0
    %v1451 = vadd.f32 0.0, %v1450
    %1452 = vmatmul.bf16.gmra.mxu0 %v484
    %v1453 = vpop.f32.mrf.mxu0
    %v1454 = vadd.f32 0.0, %v1453
    %v1455 = vpop.f32.mrf.mxu0
    %v1456 = vadd.f32 0.0, %v1455
    %1457 = vmatmul.bf16.gmra.mxu0 %v486
    %v1458 = vpop.f32.mrf.mxu0
    %v1459 = vadd.f32 0.0, %v1458
    %v1460 = vpop.f32.mrf.mxu0
    %v1461 = vadd.f32 0.0, %v1460
    %1462 = vdwg.mxu0
    %1463 = vmatpush.bf16.msra.mxu0 %v775
    %1464 = vmatpush.bf16.msra.mxu0 %v771
    %1465 = vmatpush.bf16.msra.mxu0 %v767
    %1466 = vmatpush.bf16.msra.mxu0 %v763
    %1467 = vmatpush.bf16.msra.mxu0 %v759
    %1468 = vmatpush.bf16.msra.mxu0 %v755
    %1469 = vmatpush.bf16.msra.mxu0 %v751
    %1470 = vmatpush.bf16.msra.mxu0 %v747
    %1471 = vmatmul.bf16.gmra.mxu0 %v457
    %v1472 = vpop.f32.mrf.mxu0
    %v1473 = vadd.f32 %v1384, %v1472
    %v1474 = vpop.f32.mrf.mxu0
    %v1475 = vadd.f32 %v1386, %v1474
    %1476 = vmatmul.bf16.gmra.mxu0 %v459
    %v1477 = vpop.f32.mrf.mxu0
    %v1478 = vadd.f32 %v1389, %v1477
    %v1479 = vpop.f32.mrf.mxu0
    %v1480 = vadd.f32 %v1391, %v1479
    %1481 = vmatmul.bf16.gmra.mxu0 %v461
    %v1482 = vpop.f32.mrf.mxu0
    %v1483 = vadd.f32 %v1394, %v1482
    %v1484 = vpop.f32.mrf.mxu0
    %v1485 = vadd.f32 %v1396, %v1484
    %1486 = vmatmul.bf16.gmra.mxu0 %v463
    %v1487 = vpop.f32.mrf.mxu0
    %v1488 = vadd.f32 %v1399, %v1487
    %v1489 = vpop.f32.mrf.mxu0
    %v1490 = vadd.f32 %v1401, %v1489
    %1491 = vmatmul.bf16.gmra.mxu0 %v465
    %v1492 = vpop.f32.mrf.mxu0
    %v1493 = vadd.f32 %v1404, %v1492
    %v1494 = vpop.f32.mrf.mxu0
    %v1495 = vadd.f32 %v1406, %v1494
    %1496 = vmatmul.bf16.gmra.mxu0 %v467
    %v1497 = vpop.f32.mrf.mxu0
    %v1498 = vadd.f32 %v1409, %v1497
    %v1499 = vpop.f32.mrf.mxu0
    %v1500 = vadd.f32 %v1411, %v1499
    %1501 = vmatmul.bf16.gmra.mxu0 %v469
    %v1502 = vpop.f32.mrf.mxu0
    %v1503 = vadd.f32 %v1414, %v1502
    %v1504 = vpop.f32.mrf.mxu0
    %v1505 = vadd.f32 %v1416, %v1504
    %1506 = vmatmul.bf16.gmra.mxu0 %v471
    %v1507 = vpop.f32.mrf.mxu0
    %v1508 = vadd.f32 %v1419, %v1507
    %v1509 = vpop.f32.mrf.mxu0
    %v1510 = vadd.f32 %v1421, %v1509
    %1511 = vmatmul.bf16.gmra.mxu0 %v473
    %v1512 = vpop.f32.mrf.mxu0
    %v1513 = vadd.f32 %v1424, %v1512
    %v1514 = vpop.f32.mrf.mxu0
    %v1515 = vadd.f32 %v1426, %v1514
    %1516 = vmatmul.bf16.gmra.mxu0 %v475
    %v1517 = vpop.f32.mrf.mxu0
    %v1518 = vadd.f32 %v1429, %v1517
    %v1519 = vpop.f32.mrf.mxu0
    %v1520 = vadd.f32 %v1431, %v1519
    %1521 = vmatmul.bf16.gmra.mxu0 %v477
    %v1522 = vpop.f32.mrf.mxu0
    %v1523 = vadd.f32 %v1434, %v1522
    %v1524 = vpop.f32.mrf.mxu0
    %v1525 = vadd.f32 %v1436, %v1524
    %1526 = vmatmul.bf16.gmra.mxu0 %v479
    %v1527 = vpop.f32.mrf.mxu0
    %v1528 = vadd.f32 %v1439, %v1527
    %v1529 = vpop.f32.mrf.mxu0
    %v1530 = vadd.f32 %v1441, %v1529
    %1531 = vmatmul.bf16.gmra.mxu0 %v481
    %v1532 = vpop.f32.mrf.mxu0
    %v1533 = vadd.f32 %v1444, %v1532
    %v1534 = vpop.f32.mrf.mxu0
    %v1535 = vadd.f32 %v1446, %v1534
    %1536 = vmatmul.bf16.gmra.mxu0 %v483
    %v1537 = vpop.f32.mrf.mxu0
    %v1538 = vadd.f32 %v1449, %v1537
    %v1539 = vpop.f32.mrf.mxu0
    %v1540 = vadd.f32 %v1451, %v1539
    %1541 = vmatmul.bf16.gmra.mxu0 %v485
    %v1542 = vpop.f32.mrf.mxu0
    %v1543 = vadd.f32 %v1454, %v1542
    %v1544 = vpop.f32.mrf.mxu0
    %v1545 = vadd.f32 %v1456, %v1544
    %1546 = vmatmul.bf16.gmra.mxu0 %v487
    %v1547 = vpop.f32.mrf.mxu0
    %v1548 = vadd.f32 %v1459, %v1547
    %v1549 = vpop.f32.mrf.mxu0
    %v1550 = vadd.f32 %v1461, %v1549
    %1551 = vdwg.mxu0
    %v1552 = vadd.f32 %v939, %v941
    %v1553 = vadd.f32 %v1552, %v944
    %v1554 = vadd.f32 %v1553, %v946
    %v1555 = vadd.f32 %v1554, %v949
    %v1556 = vadd.f32 %v1555, %v951
    %v1557 = vadd.f32 %v1556, %v954
    %v1558 = vadd.f32 %v1557, %v956
    %v1559 = vadd.f32 %v1558, %v959
    %v1560 = vadd.f32 %v1559, %v961
    %v1561 = vadd.f32 %v1560, %v964
    %v1562 = vadd.f32 %v1561, %v966
    %v1563 = vadd.f32 %v1562, %v969
    %v1564 = vadd.f32 %v1563, %v971
    %v1565 = vadd.f32 %v1564, %v974
    %v1566 = vadd.f32 %v1565, %v976
    %v1567 = vadd.f32 %v1566, %v979
    %v1568 = vadd.f32 %v1567, %v981
    %v1569 = vadd.f32 %v1568, %v984
    %v1570 = vadd.f32 %v1569, %v986
    %v1571 = vadd.f32 %v1570, %v989
    %v1572 = vadd.f32 %v1571, %v991
    %v1573 = vadd.f32 %v1572, %v994
    %v1574 = vadd.f32 %v1573, %v996
    %v1575 = vadd.f32 %v1574, %v999
    %v1576 = vadd.f32 %v1575, %v1001
    %v1577 = vadd.f32 %v1576, %v1004
    %v1578 = vadd.f32 %v1577, %v1006
    %v1579 = vadd.f32 %v1578, %v1009
    %v1580 = vadd.f32 %v1579, %v1011
    %v1581 = vadd.f32 %v1580, %v1014
    %v1582 = vadd.f32 %v1581, %v1016
    %v1583 = vrot.slane %v1582, 4
    %v1584 = vadd.f32 %v1582, %v1583
    %v1585 = vrot.slane %v1584, 2
    %v1586 = vadd.f32 %v1584, %v1585
    %v1587 = vrot.slane %v1586, 1
    %v1588 = vadd.f32 %v1586, %v1587
    %v1589 = vadd.f32 %v1117, %v1119
    %v1590 = vadd.f32 %v1589, %v1122
    %v1591 = vadd.f32 %v1590, %v1124
    %v1592 = vadd.f32 %v1591, %v1127
    %v1593 = vadd.f32 %v1592, %v1129
    %v1594 = vadd.f32 %v1593, %v1132
    %v1595 = vadd.f32 %v1594, %v1134
    %v1596 = vadd.f32 %v1595, %v1137
    %v1597 = vadd.f32 %v1596, %v1139
    %v1598 = vadd.f32 %v1597, %v1142
    %v1599 = vadd.f32 %v1598, %v1144
    %v1600 = vadd.f32 %v1599, %v1147
    %v1601 = vadd.f32 %v1600, %v1149
    %v1602 = vadd.f32 %v1601, %v1152
    %v1603 = vadd.f32 %v1602, %v1154
    %v1604 = vadd.f32 %v1603, %v1157
    %v1605 = vadd.f32 %v1604, %v1159
    %v1606 = vadd.f32 %v1605, %v1162
    %v1607 = vadd.f32 %v1606, %v1164
    %v1608 = vadd.f32 %v1607, %v1167
    %v1609 = vadd.f32 %v1608, %v1169
    %v1610 = vadd.f32 %v1609, %v1172
    %v1611 = vadd.f32 %v1610, %v1174
    %v1612 = vadd.f32 %v1611, %v1177
    %v1613 = vadd.f32 %v1612, %v1179
    %v1614 = vadd.f32 %v1613, %v1182
    %v1615 = vadd.f32 %v1614, %v1184
    %v1616 = vadd.f32 %v1615, %v1187
    %v1617 = vadd.f32 %v1616, %v1189
    %v1618 = vadd.f32 %v1617, %v1192
    %v1619 = vadd.f32 %v1618, %v1194
    %v1620 = vrot.slane %v1619, 4
    %v1621 = vadd.f32 %v1619, %v1620
    %v1622 = vrot.slane %v1621, 2
    %v1623 = vadd.f32 %v1621, %v1622
    %v1624 = vrot.slane %v1623, 1
    %v1625 = vadd.f32 %v1623, %v1624
    %v1626 = vadd.f32 %v1295, %v1297
    %v1627 = vadd.f32 %v1626, %v1300
    %v1628 = vadd.f32 %v1627, %v1302
    %v1629 = vadd.f32 %v1628, %v1305
    %v1630 = vadd.f32 %v1629, %v1307
    %v1631 = vadd.f32 %v1630, %v1310
    %v1632 = vadd.f32 %v1631, %v1312
    %v1633 = vadd.f32 %v1632, %v1315
    %v1634 = vadd.f32 %v1633, %v1317
    %v1635 = vadd.f32 %v1634, %v1320
    %v1636 = vadd.f32 %v1635, %v1322
    %v1637 = vadd.f32 %v1636, %v1325
    %v1638 = vadd.f32 %v1637, %v1327
    %v1639 = vadd.f32 %v1638, %v1330
    %v1640 = vadd.f32 %v1639, %v1332
    %v1641 = vadd.f32 %v1640, %v1335
    %v1642 = vadd.f32 %v1641, %v1337
    %v1643 = vadd.f32 %v1642, %v1340
    %v1644 = vadd.f32 %v1643, %v1342
    %v1645 = vadd.f32 %v1644, %v1345
    %v1646 = vadd.f32 %v1645, %v1347
    %v1647 = vadd.f32 %v1646, %v1350
    %v1648 = vadd.f32 %v1647, %v1352
    %v1649 = vadd.f32 %v1648, %v1355
    %v1650 = vadd.f32 %v1649, %v1357
    %v1651 = vadd.f32 %v1650, %v1360
    %v1652 = vadd.f32 %v1651, %v1362
    %v1653 = vadd.f32 %v1652, %v1365
    %v1654 = vadd.f32 %v1653, %v1367
    %v1655 = vadd.f32 %v1654, %v1370
    %v1656 = vadd.f32 %v1655, %v1372
    %v1657 = vrot.slane %v1656, 4
    %v1658 = vadd.f32 %v1656, %v1657
    %v1659 = vrot.slane %v1658, 2
    %v1660 = vadd.f32 %v1658, %v1659
    %v1661 = vrot.slane %v1660, 1
    %v1662 = vadd.f32 %v1660, %v1661
    %v1663 = vadd.f32 %v1473, %v1475
    %v1664 = vadd.f32 %v1663, %v1478
    %v1665 = vadd.f32 %v1664, %v1480
    %v1666 = vadd.f32 %v1665, %v1483
    %v1667 = vadd.f32 %v1666, %v1485
    %v1668 = vadd.f32 %v1667, %v1488
    %v1669 = vadd.f32 %v1668, %v1490
    %v1670 = vadd.f32 %v1669, %v1493
    %v1671 = vadd.f32 %v1670, %v1495
    %v1672 = vadd.f32 %v1671, %v1498
    %v1673 = vadd.f32 %v1672, %v1500
    %v1674 = vadd.f32 %v1673, %v1503
    %v1675 = vadd.f32 %v1674, %v1505
    %v1676 = vadd.f32 %v1675, %v1508
    %v1677 = vadd.f32 %v1676, %v1510
    %v1678 = vadd.f32 %v1677, %v1513
    %v1679 = vadd.f32 %v1678, %v1515
    %v1680 = vadd.f32 %v1679, %v1518
    %v1681 = vadd.f32 %v1680, %v1520
    %v1682 = vadd.f32 %v1681, %v1523
    %v1683 = vadd.f32 %v1682, %v1525
    %v1684 = vadd.f32 %v1683, %v1528
    %v1685 = vadd.f32 %v1684, %v1530
    %v1686 = vadd.f32 %v1685, %v1533
    %v1687 = vadd.f32 %v1686, %v1535
    %v1688 = vadd.f32 %v1687, %v1538
    %v1689 = vadd.f32 %v1688, %v1540
    %v1690 = vadd.f32 %v1689, %v1543
    %v1691 = vadd.f32 %v1690, %v1545
    %v1692 = vadd.f32 %v1691, %v1548
    %v1693 = vadd.f32 %v1692, %v1550
    %v1694 = vrot.slane %v1693, 4
    %v1695 = vadd.f32 %v1693, %v1694
    %v1696 = vrot.slane %v1695, 2
    %v1697 = vadd.f32 %v1695, %v1696
    %v1698 = vrot.slane %v1697, 1
    %v1699 = vadd.f32 %v1697, %v1698
    %v1700 = vmul.f32 %v1588, 0.00390625
    %v1701 = vmul.f32 %v1625, 0.00390625
    %v1702 = vmul.f32 %v1662, 0.00390625
    %v1703 = vmul.f32 %v1699, 0.00390625
    %v1704 = vmul.f32 %v939, %v939
    %v1705 = vmul.f32 %v1117, %v1117
    %v1706 = vmul.f32 %v1295, %v1295
    %v1707 = vmul.f32 %v1473, %v1473
    %v1708 = vmul.f32 %v941, %v941
    %v1709 = vmul.f32 %v1119, %v1119
    %v1710 = vmul.f32 %v1297, %v1297
    %v1711 = vmul.f32 %v1475, %v1475
    %v1712 = vmul.f32 %v944, %v944
    %v1713 = vmul.f32 %v1122, %v1122
    %v1714 = vmul.f32 %v1300, %v1300
    %v1715 = vmul.f32 %v1478, %v1478
    %v1716 = vmul.f32 %v946, %v946
    %v1717 = vmul.f32 %v1124, %v1124
    %v1718 = vmul.f32 %v1302, %v1302
    %v1719 = vmul.f32 %v1480, %v1480
    %v1720 = vmul.f32 %v949, %v949
    %v1721 = vmul.f32 %v1127, %v1127
    %v1722 = vmul.f32 %v1305, %v1305
    %v1723 = vmul.f32 %v1483, %v1483
    %v1724 = vmul.f32 %v951, %v951
    %v1725 = vmul.f32 %v1129, %v1129
    %v1726 = vmul.f32 %v1307, %v1307
    %v1727 = vmul.f32 %v1485, %v1485
    %v1728 = vmul.f32 %v954, %v954
    %v1729 = vmul.f32 %v1132, %v1132
    %v1730 = vmul.f32 %v1310, %v1310
    %v1731 = vmul.f32 %v1488, %v1488
    %v1732 = vmul.f32 %v956, %v956
    %v1733 = vmul.f32 %v1134, %v1134
    %v1734 = vmul.f32 %v1312, %v1312
    %v1735 = vmul.f32 %v1490, %v1490
    %v1736 = vmul.f32 %v959, %v959
    %v1737 = vmul.f32 %v1137, %v1137
    %v1738 = vmul.f32 %v1315, %v1315
    %v1739 = vmul.f32 %v1493, %v1493
    %v1740 = vmul.f32 %v961, %v961
    %v1741 = vmul.f32 %v1139, %v1139
    %v1742 = vmul.f32 %v1317, %v1317
    %v1743 = vmul.f32 %v1495, %v1495
    %v1744 = vmul.f32 %v964, %v964
    %v1745 = vmul.f32 %v1142, %v1142
    %v1746 = vmul.f32 %v1320, %v1320
    %v1747 = vmul.f32 %v1498, %v1498
    %v1748 = vmul.f32 %v966, %v966
    %v1749 = vmul.f32 %v1144, %v1144
    %v1750 = vmul.f32 %v1322, %v1322
    %v1751 = vmul.f32 %v1500, %v1500
    %v1752 = vmul.f32 %v969, %v969
    %v1753 = vmul.f32 %v1147, %v1147
    %v1754 = vmul.f32 %v1325, %v1325
    %v1755 = vmul.f32 %v1503, %v1503
    %v1756 = vmul.f32 %v971, %v971
    %v1757 = vmul.f32 %v1149, %v1149
    %v1758 = vmul.f32 %v1327, %v1327
    %v1759 = vmul.f32 %v1505, %v1505
    %v1760 = vmul.f32 %v974, %v974
    %v1761 = vmul.f32 %v1152, %v1152
    %v1762 = vmul.f32 %v1330, %v1330
    %v1763 = vmul.f32 %v1508, %v1508
    %v1764 = vmul.f32 %v976, %v976
    %v1765 = vmul.f32 %v1154, %v1154
    %v1766 = vmul.f32 %v1332, %v1332
    %v1767 = vmul.f32 %v1510, %v1510
    %v1768 = vmul.f32 %v979, %v979
    %v1769 = vmul.f32 %v1157, %v1157
    %v1770 = vmul.f32 %v1335, %v1335
    %v1771 = vmul.f32 %v1513, %v1513
    %v1772 = vmul.f32 %v981, %v981
    %v1773 = vmul.f32 %v1159, %v1159
    %v1774 = vmul.f32 %v1337, %v1337
    %v1775 = vmul.f32 %v1515, %v1515
    %v1776 = vmul.f32 %v984, %v984
    %v1777 = vmul.f32 %v1162, %v1162
    %v1778 = vmul.f32 %v1340, %v1340
    %v1779 = vmul.f32 %v1518, %v1518
    %v1780 = vmul.f32 %v986, %v986
    %v1781 = vmul.f32 %v1164, %v1164
    %v1782 = vmul.f32 %v1342, %v1342
    %v1783 = vmul.f32 %v1520, %v1520
    %v1784 = vmul.f32 %v989, %v989
    %v1785 = vmul.f32 %v1167, %v1167
    %v1786 = vmul.f32 %v1345, %v1345
    %v1787 = vmul.f32 %v1523, %v1523
    %v1788 = vmul.f32 %v991, %v991
    %v1789 = vmul.f32 %v1169, %v1169
    %v1790 = vmul.f32 %v1347, %v1347
    %v1791 = vmul.f32 %v1525, %v1525
    %v1792 = vmul.f32 %v994, %v994
    %v1793 = vmul.f32 %v1172, %v1172
    %v1794 = vmul.f32 %v1350, %v1350
    %v1795 = vmul.f32 %v1528, %v1528
    %v1796 = vmul.f32 %v996, %v996
    %v1797 = vmul.f32 %v1174, %v1174
    %v1798 = vmul.f32 %v1352, %v1352
    %v1799 = vmul.f32 %v1530, %v1530
    %v1800 = vmul.f32 %v999, %v999
    %v1801 = vmul.f32 %v1177, %v1177
    %v1802 = vmul.f32 %v1355, %v1355
    %v1803 = vmul.f32 %v1533, %v1533
    %v1804 = vmul.f32 %v1001, %v1001
    %v1805 = vmul.f32 %v1179, %v1179
    %v1806 = vmul.f32 %v1357, %v1357
    %v1807 = vmul.f32 %v1535, %v1535
    %v1808 = vmul.f32 %v1004, %v1004
    %v1809 = vmul.f32 %v1182, %v1182
    %v1810 = vmul.f32 %v1360, %v1360
    %v1811 = vmul.f32 %v1538, %v1538
    %v1812 = vmul.f32 %v1006, %v1006
    %v1813 = vmul.f32 %v1184, %v1184
    %v1814 = vmul.f32 %v1362, %v1362
    %v1815 = vmul.f32 %v1540, %v1540
    %v1816 = vmul.f32 %v1009, %v1009
    %v1817 = vmul.f32 %v1187, %v1187
    %v1818 = vmul.f32 %v1365, %v1365
    %v1819 = vmul.f32 %v1543, %v1543
    %v1820 = vmul.f32 %v1011, %v1011
    %v1821 = vmul.f32 %v1189, %v1189
    %v1822 = vmul.f32 %v1367, %v1367
    %v1823 = vmul.f32 %v1545, %v1545
    %v1824 = vmul.f32 %v1014, %v1014
    %v1825 = vmul.f32 %v1192, %v1192
    %v1826 = vmul.f32 %v1370, %v1370
    %v1827 = vmul.f32 %v1548, %v1548
    %v1828 = vmul.f32 %v1016, %v1016
    %v1829 = vmul.f32 %v1194, %v1194
    %v1830 = vmul.f32 %v1372, %v1372
    %v1831 = vmul.f32 %v1550, %v1550
    %v1832 = vadd.f32 %v1704, %v1708
    %v1833 = vadd.f32 %v1832, %v1712
    %v1834 = vadd.f32 %v1833, %v1716
    %v1835 = vadd.f32 %v1834, %v1720
    %v1836 = vadd.f32 %v1835, %v1724
    %v1837 = vadd.f32 %v1836, %v1728
    %v1838 = vadd.f32 %v1837, %v1732
    %v1839 = vadd.f32 %v1838, %v1736
    %v1840 = vadd.f32 %v1839, %v1740
    %v1841 = vadd.f32 %v1840, %v1744
    %v1842 = vadd.f32 %v1841, %v1748
    %v1843 = vadd.f32 %v1842, %v1752
    %v1844 = vadd.f32 %v1843, %v1756
    %v1845 = vadd.f32 %v1844, %v1760
    %v1846 = vadd.f32 %v1845, %v1764
    %v1847 = vadd.f32 %v1846, %v1768
    %v1848 = vadd.f32 %v1847, %v1772
    %v1849 = vadd.f32 %v1848, %v1776
    %v1850 = vadd.f32 %v1849, %v1780
    %v1851 = vadd.f32 %v1850, %v1784
    %v1852 = vadd.f32 %v1851, %v1788
    %v1853 = vadd.f32 %v1852, %v1792
    %v1854 = vadd.f32 %v1853, %v1796
    %v1855 = vadd.f32 %v1854, %v1800
    %v1856 = vadd.f32 %v1855, %v1804
    %v1857 = vadd.f32 %v1856, %v1808
    %v1858 = vadd.f32 %v1857, %v1812
    %v1859 = vadd.f32 %v1858, %v1816
    %v1860 = vadd.f32 %v1859, %v1820
    %v1861 = vadd.f32 %v1860, %v1824
    %v1862 = vadd.f32 %v1861, %v1828
    %v1863 = vrot.slane %v1862, 4
    %v1864 = vadd.f32 %v1862, %v1863
    %v1865 = vrot.slane %v1864, 2
    %v1866 = vadd.f32 %v1864, %v1865
    %v1867 = vrot.slane %v1866, 1
    %v1868 = vadd.f32 %v1866, %v1867
    %v1869 = vadd.f32 %v1705, %v1709
    %v1870 = vadd.f32 %v1869, %v1713
    %v1871 = vadd.f32 %v1870, %v1717
    %v1872 = vadd.f32 %v1871, %v1721
    %v1873 = vadd.f32 %v1872, %v1725
    %v1874 = vadd.f32 %v1873, %v1729
    %v1875 = vadd.f32 %v1874, %v1733
    %v1876 = vadd.f32 %v1875, %v1737
    %v1877 = vadd.f32 %v1876, %v1741
    %v1878 = vadd.f32 %v1877, %v1745
    %v1879 = vadd.f32 %v1878, %v1749
    %v1880 = vadd.f32 %v1879, %v1753
    %v1881 = vadd.f32 %v1880, %v1757
    %v1882 = vadd.f32 %v1881, %v1761
    %v1883 = vadd.f32 %v1882, %v1765
    %v1884 = vadd.f32 %v1883, %v1769
    %v1885 = vadd.f32 %v1884, %v1773
    %v1886 = vadd.f32 %v1885, %v1777
    %v1887 = vadd.f32 %v1886, %v1781
    %v1888 = vadd.f32 %v1887, %v1785
    %v1889 = vadd.f32 %v1888, %v1789
    %v1890 = vadd.f32 %v1889, %v1793
    %v1891 = vadd.f32 %v1890, %v1797
    %v1892 = vadd.f32 %v1891, %v1801
    %v1893 = vadd.f32 %v1892, %v1805
    %v1894 = vadd.f32 %v1893, %v1809
    %v1895 = vadd.f32 %v1894, %v1813
    %v1896 = vadd.f32 %v1895, %v1817
    %v1897 = vadd.f32 %v1896, %v1821
    %v1898 = vadd.f32 %v1897, %v1825
    %v1899 = vadd.f32 %v1898, %v1829
    %v1900 = vrot.slane %v1899, 4
    %v1901 = vadd.f32 %v1899, %v1900
    %v1902 = vrot.slane %v1901, 2
    %v1903 = vadd.f32 %v1901, %v1902
    %v1904 = vrot.slane %v1903, 1
    %v1905 = vadd.f32 %v1903, %v1904
    %v1906 = vadd.f32 %v1706, %v1710
    %v1907 = vadd.f32 %v1906, %v1714
    %v1908 = vadd.f32 %v1907, %v1718
    %v1909 = vadd.f32 %v1908, %v1722
    %v1910 = vadd.f32 %v1909, %v1726
    %v1911 = vadd.f32 %v1910, %v1730
    %v1912 = vadd.f32 %v1911, %v1734
    %v1913 = vadd.f32 %v1912, %v1738
    %v1914 = vadd.f32 %v1913, %v1742
    %v1915 = vadd.f32 %v1914, %v1746
    %v1916 = vadd.f32 %v1915, %v1750
    %v1917 = vadd.f32 %v1916, %v1754
    %v1918 = vadd.f32 %v1917, %v1758
    %v1919 = vadd.f32 %v1918, %v1762
    %v1920 = vadd.f32 %v1919, %v1766
    %v1921 = vadd.f32 %v1920, %v1770
    %v1922 = vadd.f32 %v1921, %v1774
    %v1923 = vadd.f32 %v1922, %v1778
    %v1924 = vadd.f32 %v1923, %v1782
    %v1925 = vadd.f32 %v1924, %v1786
    %v1926 = vadd.f32 %v1925, %v1790
    %v1927 = vadd.f32 %v1926, %v1794
    %v1928 = vadd.f32 %v1927, %v1798
    %v1929 = vadd.f32 %v1928, %v1802
    %v1930 = vadd.f32 %v1929, %v1806
    %v1931 = vadd.f32 %v1930, %v1810
    %v1932 = vadd.f32 %v1931, %v1814
    %v1933 = vadd.f32 %v1932, %v1818
    %v1934 = vadd.f32 %v1933, %v1822
    %v1935 = vadd.f32 %v1934, %v1826
    %v1936 = vadd.f32 %v1935, %v1830
    %v1937 = vrot.slane %v1936, 4
    %v1938 = vadd.f32 %v1936, %v1937
    %v1939 = vrot.slane %v1938, 2
    %v1940 = vadd.f32 %v1938, %v1939
    %v1941 = vrot.slane %v1940, 1
    %v1942 = vadd.f32 %v1940, %v1941
    %v1943 = vadd.f32 %v1707, %v1711
    %v1944 = vadd.f32 %v1943, %v1715
    %v1945 = vadd.f32 %v1944, %v1719
    %v1946 = vadd.f32 %v1945, %v1723
    %v1947 = vadd.f32 %v1946, %v1727
    %v1948 = vadd.f32 %v1947, %v1731
    %v1949 = vadd.f32 %v1948, %v1735
    %v1950 = vadd.f32 %v1949, %v1739
    %v1951 = vadd.f32 %v1950, %v1743
    %v1952 = vadd.f32 %v1951, %v1747
    %v1953 = vadd.f32 %v1952, %v1751
    %v1954 = vadd.f32 %v1953, %v1755
    %v1955 = vadd.f32 %v1954, %v1759
    %v1956 = vadd.f32 %v1955, %v1763
    %v1957 = vadd.f32 %v1956, %v1767
    %v1958 = vadd.f32 %v1957, %v1771
    %v1959 = vadd.f32 %v1958, %v1775
    %v1960 = vadd.f32 %v1959, %v1779
    %v1961 = vadd.f32 %v1960, %v1783
    %v1962 = vadd.f32 %v1961, %v1787
    %v1963 = vadd.f32 %v1962, %v1791
    %v1964 = vadd.f32 %v1963, %v1795
    %v1965 = vadd.f32 %v1964, %v1799
    %v1966 = vadd.f32 %v1965, %v1803
    %v1967 = vadd.f32 %v1966, %v1807
    %v1968 = vadd.f32 %v1967, %v1811
    %v1969 = vadd.f32 %v1968, %v1815
    %v1970 = vadd.f32 %v1969, %v1819
    %v1971 = vadd.f32 %v1970, %v1823
    %v1972 = vadd.f32 %v1971, %v1827
    %v1973 = vadd.f32 %v1972, %v1831
    %v1974 = vrot.slane %v1973, 4
    %v1975 = vadd.f32 %v1973, %v1974
    %v1976 = vrot.slane %v1975, 2
    %v1977 = vadd.f32 %v1975, %v1976
    %v1978 = vrot.slane %v1977, 1
    %v1979 = vadd.f32 %v1977, %v1978
    %v1980 = vmul.f32 %v1868, 0.00390625
    %v1981 = vmul.f32 %v1905, 0.00390625
    %v1982 = vmul.f32 %v1942, 0.00390625
    %v1983 = vmul.f32 %v1979, 0.00390625
    %v1984 = vmul.f32 %v1700, %v1700
    %v1985 = vmul.f32 %v1701, %v1701
    %v1986 = vmul.f32 %v1702, %v1702
    %v1987 = vmul.f32 %v1703, %v1703
    %v1988 = vsub.f32 %v1980, %v1984
    %v1989 = vsub.f32 %v1981, %v1985
    %v1990 = vsub.f32 %v1982, %v1986
    %v1991 = vsub.f32 %v1983, %v1987
    %v1992 = vmax.f32 %v1988, 0.0
    %v1993 = vmax.f32 %v1989, 0.0
    %v1994 = vmax.f32 %v1990, 0.0
    %v1995 = vmax.f32 %v1991, 0.0
    %v1996 = vld [vmem:[#allocation11] ss:$8 sm:$0xf]
    %v1997 = vadd.f32 %v1992, 1e-05
    %v1998 = vadd.f32 %v1993, 1e-05
    %v1999 = vadd.f32 %v1994, 1e-05
    %v2000 = vadd.f32 %v1995, 1e-05
    %v2001 = vrsqrt.pop %v1997
    %v2002 = vmul.f32 %v2001, %v1997
    %v2003 = vmul.f32 %v2002, %v2001
    %v2004 = vmul.f32 0.5, %v2003
    %v2005 = vsub.f32 1.5, %v2004
    %v2006 = vmul.f32 %v2001, %v2005
    %vm2007 = vweird.f32 %v1997
    %vm2008 = vweird.f32 %v2001
    %vm2009 = vmor %vm2007, %vm2008
    %v2010 = vsel %vm2009, %v2001, %v2006
    %v2011 = vrsqrt.pop %v1998
    %v2012 = vmul.f32 %v2011, %v1998
    %v2013 = vmul.f32 %v2012, %v2011
    %v2014 = vmul.f32 0.5, %v2013
    %v2015 = vsub.f32 1.5, %v2014
    %v2016 = vmul.f32 %v2011, %v2015
    %vm2017 = vweird.f32 %v1998
    %vm2018 = vweird.f32 %v2011
    %vm2019 = vmor %vm2017, %vm2018
    %v2020 = vsel %vm2019, %v2011, %v2016
    %v2021 = vrsqrt.pop %v1999
    %v2022 = vmul.f32 %v2021, %v1999
    %v2023 = vmul.f32 %v2022, %v2021
    %v2024 = vmul.f32 0.5, %v2023
    %v2025 = vsub.f32 1.5, %v2024
    %v2026 = vmul.f32 %v2021, %v2025
    %vm2027 = vweird.f32 %v1999
    %vm2028 = vweird.f32 %v2021
    %vm2029 = vmor %vm2027, %vm2028
    %v2030 = vsel %vm2029, %v2021, %v2026
    %v2031 = vrsqrt.pop %v2000
    %v2032 = vmul.f32 %v2031, %v2000
    %v2033 = vmul.f32 %v2032, %v2031
    %v2034 = vmul.f32 0.5, %v2033
    %v2035 = vsub.f32 1.5, %v2034
    %v2036 = vmul.f32 %v2031, %v2035
    %vm2037 = vweird.f32 %v2000
    %vm2038 = vweird.f32 %v2031
    %vm2039 = vmor %vm2037, %vm2038
    %v2040 = vsel %vm2039, %v2031, %v2036
    %v2045 = vrot.slane %v2020, 7
    %v2046 = vrot.slane %v2030, 6
    %v2047 = vrot.slane %v2040, 5
    %vm2048 = vcmask 1040384
    %v2049 = vsel %vm2048, %v2010, %v2045
    %vm2050 = vcmask 1042434
    %v2051 = vsel %vm2050, %v2046, %v2047
    %vm2052 = vcmask 1041408
    %v2053 = vsel %vm2052, %v2049, %v2051
    %v2055 = vmul.f32 %v1996, %v2053
    %s2056 = scalar_lea.vmem [#allocation11], 1
    %v2057 = vld [vmem:[%s2056] ss:$8 sm:$0xf]
    %v2059 = vperm.slane %v2055, 0
    %v2060 = vperm.slane %v2055, 1
    %v2061 = vperm.slane %v2055, 2
    %v2062 = vperm.slane %v2055, 3
    %v2067 = vmul.f32 %v1700, %v2059
    %v2068 = vmul.f32 %v1701, %v2060
    %v2069 = vmul.f32 %v1702, %v2061
    %v2070 = vmul.f32 %v1703, %v2062
    %v2075 = vrot.slane %v2068, 7
    %v2076 = vrot.slane %v2069, 6
    %v2077 = vrot.slane %v2070, 5
    %v2078 = vsel %vm2048, %v2067, %v2075
    %v2079 = vsel %vm2050, %v2076, %v2077
    %v2080 = vsel %vm2052, %v2078, %v2079
    %v2082 = vsub.f32 %v2057, %v2080
    %v2083 = vmul.f32 %v939, %v2059
    %v2084 = vmul.f32 %v1117, %v2060
    %v2085 = vmul.f32 %v1295, %v2061
    %v2086 = vmul.f32 %v1473, %v2062
    %v2087 = vmul.f32 %v941, %v2059
    %v2088 = vmul.f32 %v1119, %v2060
    %v2089 = vmul.f32 %v1297, %v2061
    %v2090 = vmul.f32 %v1475, %v2062
    %v2091 = vmul.f32 %v944, %v2059
    %v2092 = vmul.f32 %v1122, %v2060
    %v2093 = vmul.f32 %v1300, %v2061
    %v2094 = vmul.f32 %v1478, %v2062
    %v2095 = vmul.f32 %v946, %v2059
    %v2096 = vmul.f32 %v1124, %v2060
    %v2097 = vmul.f32 %v1302, %v2061
    %v2098 = vmul.f32 %v1480, %v2062
    %v2099 = vmul.f32 %v949, %v2059
    %v2100 = vmul.f32 %v1127, %v2060
    %v2101 = vmul.f32 %v1305, %v2061
    %v2102 = vmul.f32 %v1483, %v2062
    %v2103 = vmul.f32 %v951, %v2059
    %v2104 = vmul.f32 %v1129, %v2060
    %v2105 = vmul.f32 %v1307, %v2061
    %v2106 = vmul.f32 %v1485, %v2062
    %v2107 = vmul.f32 %v954, %v2059
    %v2108 = vmul.f32 %v1132, %v2060
    %v2109 = vmul.f32 %v1310, %v2061
    %v2110 = vmul.f32 %v1488, %v2062
    %v2111 = vmul.f32 %v956, %v2059
    %v2112 = vmul.f32 %v1134, %v2060
    %v2113 = vmul.f32 %v1312, %v2061
    %v2114 = vmul.f32 %v1490, %v2062
    %v2115 = vmul.f32 %v959, %v2059
    %v2116 = vmul.f32 %v1137, %v2060
    %v2117 = vmul.f32 %v1315, %v2061
    %v2118 = vmul.f32 %v1493, %v2062
    %v2119 = vmul.f32 %v961, %v2059
    %v2120 = vmul.f32 %v1139, %v2060
    %v2121 = vmul.f32 %v1317, %v2061
    %v2122 = vmul.f32 %v1495, %v2062
    %v2123 = vmul.f32 %v964, %v2059
    %v2124 = vmul.f32 %v1142, %v2060
    %v2125 = vmul.f32 %v1320, %v2061
    %v2126 = vmul.f32 %v1498, %v2062
    %v2127 = vmul.f32 %v966, %v2059
    %v2128 = vmul.f32 %v1144, %v2060
    %v2129 = vmul.f32 %v1322, %v2061
    %v2130 = vmul.f32 %v1500, %v2062
    %v2131 = vmul.f32 %v969, %v2059
    %v2132 = vmul.f32 %v1147, %v2060
    %v2133 = vmul.f32 %v1325, %v2061
    %v2134 = vmul.f32 %v1503, %v2062
    %v2135 = vmul.f32 %v971, %v2059
    %v2136 = vmul.f32 %v1149, %v2060
    %v2137 = vmul.f32 %v1327, %v2061
    %v2138 = vmul.f32 %v1505, %v2062
    %v2139 = vmul.f32 %v974, %v2059
    %v2140 = vmul.f32 %v1152, %v2060
    %v2141 = vmul.f32 %v1330, %v2061
    %v2142 = vmul.f32 %v1508, %v2062
    %v2143 = vmul.f32 %v976, %v2059
    %v2144 = vmul.f32 %v1154, %v2060
    %v2145 = vmul.f32 %v1332, %v2061
    %v2146 = vmul.f32 %v1510, %v2062
    %v2147 = vmul.f32 %v979, %v2059
    %v2148 = vmul.f32 %v1157, %v2060
    %v2149 = vmul.f32 %v1335, %v2061
    %v2150 = vmul.f32 %v1513, %v2062
    %v2151 = vmul.f32 %v981, %v2059
    %v2152 = vmul.f32 %v1159, %v2060
    %v2153 = vmul.f32 %v1337, %v2061
    %v2154 = vmul.f32 %v1515, %v2062
    %v2155 = vmul.f32 %v984, %v2059
    %v2156 = vmul.f32 %v1162, %v2060
    %v2157 = vmul.f32 %v1340, %v2061
    %v2158 = vmul.f32 %v1518, %v2062
    %v2159 = vmul.f32 %v986, %v2059
    %v2160 = vmul.f32 %v1164, %v2060
    %v2161 = vmul.f32 %v1342, %v2061
    %v2162 = vmul.f32 %v1520, %v2062
    %v2163 = vmul.f32 %v989, %v2059
    %v2164 = vmul.f32 %v1167, %v2060
    %v2165 = vmul.f32 %v1345, %v2061
    %v2166 = vmul.f32 %v1523, %v2062
    %v2167 = vmul.f32 %v991, %v2059
    %v2168 = vmul.f32 %v1169, %v2060
    %v2169 = vmul.f32 %v1347, %v2061
    %v2170 = vmul.f32 %v1525, %v2062
    %v2171 = vmul.f32 %v994, %v2059
    %v2172 = vmul.f32 %v1172, %v2060
    %v2173 = vmul.f32 %v1350, %v2061
    %v2174 = vmul.f32 %v1528, %v2062
    %v2175 = vmul.f32 %v996, %v2059
    %v2176 = vmul.f32 %v1174, %v2060
    %v2177 = vmul.f32 %v1352, %v2061
    %v2178 = vmul.f32 %v1530, %v2062
    %v2179 = vmul.f32 %v999, %v2059
    %v2180 = vmul.f32 %v1177, %v2060
    %v2181 = vmul.f32 %v1355, %v2061
    %v2182 = vmul.f32 %v1533, %v2062
    %v2183 = vmul.f32 %v1001, %v2059
    %v2184 = vmul.f32 %v1179, %v2060
    %v2185 = vmul.f32 %v1357, %v2061
    %v2186 = vmul.f32 %v1535, %v2062
    %v2187 = vmul.f32 %v1004, %v2059
    %v2188 = vmul.f32 %v1182, %v2060
    %v2189 = vmul.f32 %v1360, %v2061
    %v2190 = vmul.f32 %v1538, %v2062
    %v2191 = vmul.f32 %v1006, %v2059
    %v2192 = vmul.f32 %v1184, %v2060
    %v2193 = vmul.f32 %v1362, %v2061
    %v2194 = vmul.f32 %v1540, %v2062
    %v2195 = vmul.f32 %v1009, %v2059
    %v2196 = vmul.f32 %v1187, %v2060
    %v2197 = vmul.f32 %v1365, %v2061
    %v2198 = vmul.f32 %v1543, %v2062
    %v2199 = vmul.f32 %v1011, %v2059
    %v2200 = vmul.f32 %v1189, %v2060
    %v2201 = vmul.f32 %v1367, %v2061
    %v2202 = vmul.f32 %v1545, %v2062
    %v2203 = vmul.f32 %v1014, %v2059
    %v2204 = vmul.f32 %v1192, %v2060
    %v2205 = vmul.f32 %v1370, %v2061
    %v2206 = vmul.f32 %v1548, %v2062
    %v2207 = vmul.f32 %v1016, %v2059
    %v2208 = vmul.f32 %v1194, %v2060
    %v2209 = vmul.f32 %v1372, %v2061
    %v2210 = vmul.f32 %v1550, %v2062
    %v2212 = vperm.slane %v2082, 0
    %v2213 = vperm.slane %v2082, 1
    %v2214 = vperm.slane %v2082, 2
    %v2215 = vperm.slane %v2082, 3
    %v2220 = vadd.f32 %v2083, %v2212
    %v2221 = vadd.f32 %v2084, %v2213
    %v2222 = vadd.f32 %v2085, %v2214
    %v2223 = vadd.f32 %v2086, %v2215
    %v2224 = vadd.f32 %v2087, %v2212
    %v2225 = vadd.f32 %v2088, %v2213
    %v2226 = vadd.f32 %v2089, %v2214
    %v2227 = vadd.f32 %v2090, %v2215
    %v2228 = vadd.f32 %v2091, %v2212
    %v2229 = vadd.f32 %v2092, %v2213
    %v2230 = vadd.f32 %v2093, %v2214
    %v2231 = vadd.f32 %v2094, %v2215
    %v2232 = vadd.f32 %v2095, %v2212
    %v2233 = vadd.f32 %v2096, %v2213
    %v2234 = vadd.f32 %v2097, %v2214
    %v2235 = vadd.f32 %v2098, %v2215
    %v2236 = vadd.f32 %v2099, %v2212
    %v2237 = vadd.f32 %v2100, %v2213
    %v2238 = vadd.f32 %v2101, %v2214
    %v2239 = vadd.f32 %v2102, %v2215
    %v2240 = vadd.f32 %v2103, %v2212
    %v2241 = vadd.f32 %v2104, %v2213
    %v2242 = vadd.f32 %v2105, %v2214
    %v2243 = vadd.f32 %v2106, %v2215
    %v2244 = vadd.f32 %v2107, %v2212
    %v2245 = vadd.f32 %v2108, %v2213
    %v2246 = vadd.f32 %v2109, %v2214
    %v2247 = vadd.f32 %v2110, %v2215
    %v2248 = vadd.f32 %v2111, %v2212
    %v2249 = vadd.f32 %v2112, %v2213
    %v2250 = vadd.f32 %v2113, %v2214
    %v2251 = vadd.f32 %v2114, %v2215
    %v2252 = vadd.f32 %v2115, %v2212
    %v2253 = vadd.f32 %v2116, %v2213
    %v2254 = vadd.f32 %v2117, %v2214
    %v2255 = vadd.f32 %v2118, %v2215
    %v2256 = vadd.f32 %v2119, %v2212
    %v2257 = vadd.f32 %v2120, %v2213
    %v2258 = vadd.f32 %v2121, %v2214
    %v2259 = vadd.f32 %v2122, %v2215
    %v2260 = vadd.f32 %v2123, %v2212
    %v2261 = vadd.f32 %v2124, %v2213
    %v2262 = vadd.f32 %v2125, %v2214
    %v2263 = vadd.f32 %v2126, %v2215
    %v2264 = vadd.f32 %v2127, %v2212
    %v2265 = vadd.f32 %v2128, %v2213
    %v2266 = vadd.f32 %v2129, %v2214
    %v2267 = vadd.f32 %v2130, %v2215
    %v2268 = vadd.f32 %v2131, %v2212
    %v2269 = vadd.f32 %v2132, %v2213
    %v2270 = vadd.f32 %v2133, %v2214
    %v2271 = vadd.f32 %v2134, %v2215
    %v2272 = vadd.f32 %v2135, %v2212
    %v2273 = vadd.f32 %v2136, %v2213
    %v2274 = vadd.f32 %v2137, %v2214
    %v2275 = vadd.f32 %v2138, %v2215
    %v2276 = vadd.f32 %v2139, %v2212
    %v2277 = vadd.f32 %v2140, %v2213
    %v2278 = vadd.f32 %v2141, %v2214
    %v2279 = vadd.f32 %v2142, %v2215
    %v2280 = vadd.f32 %v2143, %v2212
    %v2281 = vadd.f32 %v2144, %v2213
    %v2282 = vadd.f32 %v2145, %v2214
    %v2283 = vadd.f32 %v2146, %v2215
    %v2284 = vadd.f32 %v2147, %v2212
    %v2285 = vadd.f32 %v2148, %v2213
    %v2286 = vadd.f32 %v2149, %v2214
    %v2287 = vadd.f32 %v2150, %v2215
    %v2288 = vadd.f32 %v2151, %v2212
    %v2289 = vadd.f32 %v2152, %v2213
    %v2290 = vadd.f32 %v2153, %v2214
    %v2291 = vadd.f32 %v2154, %v2215
    %v2292 = vadd.f32 %v2155, %v2212
    %v2293 = vadd.f32 %v2156, %v2213
    %v2294 = vadd.f32 %v2157, %v2214
    %v2295 = vadd.f32 %v2158, %v2215
    %v2296 = vadd.f32 %v2159, %v2212
    %v2297 = vadd.f32 %v2160, %v2213
    %v2298 = vadd.f32 %v2161, %v2214
    %v2299 = vadd.f32 %v2162, %v2215
    %v2300 = vadd.f32 %v2163, %v2212
    %v2301 = vadd.f32 %v2164, %v2213
    %v2302 = vadd.f32 %v2165, %v2214
    %v2303 = vadd.f32 %v2166, %v2215
    %v2304 = vadd.f32 %v2167, %v2212
    %v2305 = vadd.f32 %v2168, %v2213
    %v2306 = vadd.f32 %v2169, %v2214
    %v2307 = vadd.f32 %v2170, %v2215
    %v2308 = vadd.f32 %v2171, %v2212
    %v2309 = vadd.f32 %v2172, %v2213
    %v2310 = vadd.f32 %v2173, %v2214
    %v2311 = vadd.f32 %v2174, %v2215
    %v2312 = vadd.f32 %v2175, %v2212
    %v2313 = vadd.f32 %v2176, %v2213
    %v2314 = vadd.f32 %v2177, %v2214
    %v2315 = vadd.f32 %v2178, %v2215
    %v2316 = vadd.f32 %v2179, %v2212
    %v2317 = vadd.f32 %v2180, %v2213
    %v2318 = vadd.f32 %v2181, %v2214
    %v2319 = vadd.f32 %v2182, %v2215
    %v2320 = vadd.f32 %v2183, %v2212
    %v2321 = vadd.f32 %v2184, %v2213
    %v2322 = vadd.f32 %v2185, %v2214
    %v2323 = vadd.f32 %v2186, %v2215
    %v2324 = vadd.f32 %v2187, %v2212
    %v2325 = vadd.f32 %v2188, %v2213
    %v2326 = vadd.f32 %v2189, %v2214
    %v2327 = vadd.f32 %v2190, %v2215
    %v2328 = vadd.f32 %v2191, %v2212
    %v2329 = vadd.f32 %v2192, %v2213
    %v2330 = vadd.f32 %v2193, %v2214
    %v2331 = vadd.f32 %v2194, %v2215
    %v2332 = vadd.f32 %v2195, %v2212
    %v2333 = vadd.f32 %v2196, %v2213
    %v2334 = vadd.f32 %v2197, %v2214
    %v2335 = vadd.f32 %v2198, %v2215
    %v2336 = vadd.f32 %v2199, %v2212
    %v2337 = vadd.f32 %v2200, %v2213
    %v2338 = vadd.f32 %v2201, %v2214
    %v2339 = vadd.f32 %v2202, %v2215
    %v2340 = vadd.f32 %v2203, %v2212
    %v2341 = vadd.f32 %v2204, %v2213
    %v2342 = vadd.f32 %v2205, %v2214
    %v2343 = vadd.f32 %v2206, %v2215
    %v2344 = vadd.f32 %v2207, %v2212
    %v2345 = vadd.f32 %v2208, %v2213
    %v2346 = vadd.f32 %v2209, %v2214
    %v2347 = vadd.f32 %v2210, %v2215
    %v2348 = vmax.f32 %v2220, 0.0
    %v2349 = vmax.f32 %v2221, 0.0
    %v2350 = vmax.f32 %v2222, 0.0
    %v2351 = vmax.f32 %v2223, 0.0
    %v2352 = vmax.f32 %v2224, 0.0
    %v2353 = vmax.f32 %v2225, 0.0
    %v2354 = vmax.f32 %v2226, 0.0
    %v2355 = vmax.f32 %v2227, 0.0
    %v2356 = vmax.f32 %v2228, 0.0
    %v2357 = vmax.f32 %v2229, 0.0
    %v2358 = vmax.f32 %v2230, 0.0
    %v2359 = vmax.f32 %v2231, 0.0
    %v2360 = vmax.f32 %v2232, 0.0
    %v2361 = vmax.f32 %v2233, 0.0
    %v2362 = vmax.f32 %v2234, 0.0
    %v2363 = vmax.f32 %v2235, 0.0
    %v2364 = vmax.f32 %v2236, 0.0
    %v2365 = vmax.f32 %v2237, 0.0
    %v2366 = vmax.f32 %v2238, 0.0
    %v2367 = vmax.f32 %v2239, 0.0
    %v2368 = vmax.f32 %v2240, 0.0
    %v2369 = vmax.f32 %v2241, 0.0
    %v2370 = vmax.f32 %v2242, 0.0
    %v2371 = vmax.f32 %v2243, 0.0
    %v2372 = vmax.f32 %v2244, 0.0
    %v2373 = vmax.f32 %v2245, 0.0
    %v2374 = vmax.f32 %v2246, 0.0
    %v2375 = vmax.f32 %v2247, 0.0
    %v2376 = vmax.f32 %v2248, 0.0
    %v2377 = vmax.f32 %v2249, 0.0
    %v2378 = vmax.f32 %v2250, 0.0
    %v2379 = vmax.f32 %v2251, 0.0
    %v2380 = vmax.f32 %v2252, 0.0
    %v2381 = vmax.f32 %v2253, 0.0
    %v2382 = vmax.f32 %v2254, 0.0
    %v2383 = vmax.f32 %v2255, 0.0
    %v2384 = vmax.f32 %v2256, 0.0
    %v2385 = vmax.f32 %v2257, 0.0
    %v2386 = vmax.f32 %v2258, 0.0
    %v2387 = vmax.f32 %v2259, 0.0
    %v2388 = vmax.f32 %v2260, 0.0
    %v2389 = vmax.f32 %v2261, 0.0
    %v2390 = vmax.f32 %v2262, 0.0
    %v2391 = vmax.f32 %v2263, 0.0
    %v2392 = vmax.f32 %v2264, 0.0
    %v2393 = vmax.f32 %v2265, 0.0
    %v2394 = vmax.f32 %v2266, 0.0
    %v2395 = vmax.f32 %v2267, 0.0
    %v2396 = vmax.f32 %v2268, 0.0
    %v2397 = vmax.f32 %v2269, 0.0
    %v2398 = vmax.f32 %v2270, 0.0
    %v2399 = vmax.f32 %v2271, 0.0
    %v2400 = vmax.f32 %v2272, 0.0
    %v2401 = vmax.f32 %v2273, 0.0
    %v2402 = vmax.f32 %v2274, 0.0
    %v2403 = vmax.f32 %v2275, 0.0
    %v2404 = vmax.f32 %v2276, 0.0
    %v2405 = vmax.f32 %v2277, 0.0
    %v2406 = vmax.f32 %v2278, 0.0
    %v2407 = vmax.f32 %v2279, 0.0
    %v2408 = vmax.f32 %v2280, 0.0
    %v2409 = vmax.f32 %v2281, 0.0
    %v2410 = vmax.f32 %v2282, 0.0
    %v2411 = vmax.f32 %v2283, 0.0
    %v2412 = vmax.f32 %v2284, 0.0
    %v2413 = vmax.f32 %v2285, 0.0
    %v2414 = vmax.f32 %v2286, 0.0
    %v2415 = vmax.f32 %v2287, 0.0
    %v2416 = vmax.f32 %v2288, 0.0
    %v2417 = vmax.f32 %v2289, 0.0
    %v2418 = vmax.f32 %v2290, 0.0
    %v2419 = vmax.f32 %v2291, 0.0
    %v2420 = vmax.f32 %v2292, 0.0
    %v2421 = vmax.f32 %v2293, 0.0
    %v2422 = vmax.f32 %v2294, 0.0
    %v2423 = vmax.f32 %v2295, 0.0
    %v2424 = vmax.f32 %v2296, 0.0
    %v2425 = vmax.f32 %v2297, 0.0
    %v2426 = vmax.f32 %v2298, 0.0
    %v2427 = vmax.f32 %v2299, 0.0
    %v2428 = vmax.f32 %v2300, 0.0
    %v2429 = vmax.f32 %v2301, 0.0
    %v2430 = vmax.f32 %v2302, 0.0
    %v2431 = vmax.f32 %v2303, 0.0
    %v2432 = vmax.f32 %v2304, 0.0
    %v2433 = vmax.f32 %v2305, 0.0
    %v2434 = vmax.f32 %v2306, 0.0
    %v2435 = vmax.f32 %v2307, 0.0
    %v2436 = vmax.f32 %v2308, 0.0
    %v2437 = vmax.f32 %v2309, 0.0
    %v2438 = vmax.f32 %v2310, 0.0
    %v2439 = vmax.f32 %v2311, 0.0
    %v2440 = vmax.f32 %v2312, 0.0
    %v2441 = vmax.f32 %v2313, 0.0
    %v2442 = vmax.f32 %v2314, 0.0
    %v2443 = vmax.f32 %v2315, 0.0
    %v2444 = vmax.f32 %v2316, 0.0
    %v2445 = vmax.f32 %v2317, 0.0
    %v2446 = vmax.f32 %v2318, 0.0
    %v2447 = vmax.f32 %v2319, 0.0
    %v2448 = vmax.f32 %v2320, 0.0
    %v2449 = vmax.f32 %v2321, 0.0
    %v2450 = vmax.f32 %v2322, 0.0
    %v2451 = vmax.f32 %v2323, 0.0
    %v2452 = vmax.f32 %v2324, 0.0
    %v2453 = vmax.f32 %v2325, 0.0
    %v2454 = vmax.f32 %v2326, 0.0
    %v2455 = vmax.f32 %v2327, 0.0
    %v2456 = vmax.f32 %v2328, 0.0
    %v2457 = vmax.f32 %v2329, 0.0
    %v2458 = vmax.f32 %v2330, 0.0
    %v2459 = vmax.f32 %v2331, 0.0
    %v2460 = vmax.f32 %v2332, 0.0
    %v2461 = vmax.f32 %v2333, 0.0
    %v2462 = vmax.f32 %v2334, 0.0
    %v2463 = vmax.f32 %v2335, 0.0
    %v2464 = vmax.f32 %v2336, 0.0
    %v2465 = vmax.f32 %v2337, 0.0
    %v2466 = vmax.f32 %v2338, 0.0
    %v2467 = vmax.f32 %v2339, 0.0
    %v2468 = vmax.f32 %v2340, 0.0
    %v2469 = vmax.f32 %v2341, 0.0
    %v2470 = vmax.f32 %v2342, 0.0
    %v2471 = vmax.f32 %v2343, 0.0
    %v2472 = vmax.f32 %v2344, 0.0
    %v2473 = vmax.f32 %v2345, 0.0
    %v2474 = vmax.f32 %v2346, 0.0
    %v2475 = vmax.f32 %v2347, 0.0
    %v2476 = vpack.c.bf16 %v2352, %v2348
    %v2477 = vpack.c.bf16 %v2353, %v2349
    %v2478 = vpack.c.bf16 %v2354, %v2350
    %v2479 = vpack.c.bf16 %v2355, %v2351
    %v2480 = vpack.c.bf16 %v2360, %v2356
    %v2481 = vpack.c.bf16 %v2361, %v2357
    %v2482 = vpack.c.bf16 %v2362, %v2358
    %v2483 = vpack.c.bf16 %v2363, %v2359
    %v2484 = vpack.c.bf16 %v2368, %v2364
    %v2485 = vpack.c.bf16 %v2369, %v2365
    %v2486 = vpack.c.bf16 %v2370, %v2366
    %v2487 = vpack.c.bf16 %v2371, %v2367
    %v2488 = vpack.c.bf16 %v2376, %v2372
    %v2489 = vpack.c.bf16 %v2377, %v2373
    %v2490 = vpack.c.bf16 %v2378, %v2374
    %v2491 = vpack.c.bf16 %v2379, %v2375
    %v2492 = vpack.c.bf16 %v2384, %v2380
    %v2493 = vpack.c.bf16 %v2385, %v2381
    %v2494 = vpack.c.bf16 %v2386, %v2382
    %v2495 = vpack.c.bf16 %v2387, %v2383
    %v2496 = vpack.c.bf16 %v2392, %v2388
    %v2497 = vpack.c.bf16 %v2393, %v2389
    %v2498 = vpack.c.bf16 %v2394, %v2390
    %v2499 = vpack.c.bf16 %v2395, %v2391
    %v2500 = vpack.c.bf16 %v2400, %v2396
    %v2501 = vpack.c.bf16 %v2401, %v2397
    %v2502 = vpack.c.bf16 %v2402, %v2398
    %v2503 = vpack.c.bf16 %v2403, %v2399
    %v2504 = vpack.c.bf16 %v2408, %v2404
    %v2505 = vpack.c.bf16 %v2409, %v2405
    %v2506 = vpack.c.bf16 %v2410, %v2406
    %v2507 = vpack.c.bf16 %v2411, %v2407
    %v2508 = vpack.c.bf16 %v2416, %v2412
    %v2509 = vpack.c.bf16 %v2417, %v2413
    %v2510 = vpack.c.bf16 %v2418, %v2414
    %v2511 = vpack.c.bf16 %v2419, %v2415
    %v2512 = vpack.c.bf16 %v2424, %v2420
    %v2513 = vpack.c.bf16 %v2425, %v2421
    %v2514 = vpack.c.bf16 %v2426, %v2422
    %v2515 = vpack.c.bf16 %v2427, %v2423
    %v2516 = vpack.c.bf16 %v2432, %v2428
    %v2517 = vpack.c.bf16 %v2433, %v2429
    %v2518 = vpack.c.bf16 %v2434, %v2430
    %v2519 = vpack.c.bf16 %v2435, %v2431
    %v2520 = vpack.c.bf16 %v2440, %v2436
    %v2521 = vpack.c.bf16 %v2441, %v2437
    %v2522 = vpack.c.bf16 %v2442, %v2438
    %v2523 = vpack.c.bf16 %v2443, %v2439
    %v2524 = vpack.c.bf16 %v2448, %v2444
    %v2525 = vpack.c.bf16 %v2449, %v2445
    %v2526 = vpack.c.bf16 %v2450, %v2446
    %v2527 = vpack.c.bf16 %v2451, %v2447
    %v2528 = vpack.c.bf16 %v2456, %v2452
    %v2529 = vpack.c.bf16 %v2457, %v2453
    %v2530 = vpack.c.bf16 %v2458, %v2454
    %v2531 = vpack.c.bf16 %v2459, %v2455
    %v2532 = vpack.c.bf16 %v2464, %v2460
    %v2533 = vpack.c.bf16 %v2465, %v2461
    %v2534 = vpack.c.bf16 %v2466, %v2462
    %v2535 = vpack.c.bf16 %v2467, %v2463
    %v2536 = vpack.c.bf16 %v2472, %v2468
    %v2537 = vpack.c.bf16 %v2473, %v2469
    %v2538 = vpack.c.bf16 %v2474, %v2470
    %v2539 = vpack.c.bf16 %v2475, %v2471
    %v2540 = vld [vmem:[%s2] sm:$0xff]
    %v2541 = vld [vmem:[%s2 + $0x8] sm:$0xff]
    %v2542 = vld [vmem:[%s2 + $0x10] sm:$0xff]
    %v2543 = vld [vmem:[%s2 + $0x18] sm:$0xff]
    %v2544 = vld [vmem:[%s2 + $0x20] sm:$0xff]
    %v2545 = vld [vmem:[%s2 + $0x28] sm:$0xff]
    %v2546 = vld [vmem:[%s2 + $0x30] sm:$0xff]
    %v2547 = vld [vmem:[%s2 + $0x38] sm:$0xff]
    %v2548 = vld [vmem:[%s2 + $0x40] sm:$0xff]
    %v2549 = vld [vmem:[%s2 + $0x48] sm:$0xff]
    %v2550 = vld [vmem:[%s2 + $0x50] sm:$0xff]
    %v2551 = vld [vmem:[%s2 + $0x58] sm:$0xff]
    %v2552 = vld [vmem:[%s2 + $0x60] sm:$0xff]
    %v2553 = vld [vmem:[%s2 + $0x68] sm:$0xff]
    %v2554 = vld [vmem:[%s2 + $0x70] sm:$0xff]
    %v2555 = vld [vmem:[%s2 + $0x78] sm:$0xff]
    %v2556 = vld [vmem:[%s2 + $0x80] sm:$0xff]
    %v2557 = vld [vmem:[%s2 + $0x88] sm:$0xff]
    %v2558 = vld [vmem:[%s2 + $0x90] sm:$0xff]
    %v2559 = vld [vmem:[%s2 + $0x98] sm:$0xff]
    %v2560 = vld [vmem:[%s2 + $0xa0] sm:$0xff]
    %v2561 = vld [vmem:[%s2 + $0xa8] sm:$0xff]
    %v2562 = vld [vmem:[%s2 + $0xb0] sm:$0xff]
    %v2563 = vld [vmem:[%s2 + $0xb8] sm:$0xff]
    %v2564 = vld [vmem:[%s2 + $0xc0] sm:$0xff]
    %v2565 = vld [vmem:[%s2 + $0xc8] sm:$0xff]
    %v2566 = vld [vmem:[%s2 + $0xd0] sm:$0xff]
    %v2567 = vld [vmem:[%s2 + $0xd8] sm:$0xff]
    %v2568 = vld [vmem:[%s2 + $0xe0] sm:$0xff]
    %v2569 = vld [vmem:[%s2 + $0xe8] sm:$0xff]
    %v2570 = vld [vmem:[%s2 + $0xf0] sm:$0xff]
    %v2571 = vld [vmem:[%s2 + $0xf8] sm:$0xff]
    %v2572 = vld [vmem:[%s2 + $0x100] sm:$0xff]
    %v2573 = vld [vmem:[%s2 + $0x108] sm:$0xff]
    %v2574 = vld [vmem:[%s2 + $0x110] sm:$0xff]
    %v2575 = vld [vmem:[%s2 + $0x118] sm:$0xff]
    %v2576 = vld [vmem:[%s2 + $0x120] sm:$0xff]
    %v2577 = vld [vmem:[%s2 + $0x128] sm:$0xff]
    %v2578 = vld [vmem:[%s2 + $0x130] sm:$0xff]
    %v2579 = vld [vmem:[%s2 + $0x138] sm:$0xff]
    %v2580 = vld [vmem:[%s2 + $0x140] sm:$0xff]
    %v2581 = vld [vmem:[%s2 + $0x148] sm:$0xff]
    %v2582 = vld [vmem:[%s2 + $0x150] sm:$0xff]
    %v2583 = vld [vmem:[%s2 + $0x158] sm:$0xff]
    %v2584 = vld [vmem:[%s2 + $0x160] sm:$0xff]
    %v2585 = vld [vmem:[%s2 + $0x168] sm:$0xff]
    %v2586 = vld [vmem:[%s2 + $0x170] sm:$0xff]
    %v2587 = vld [vmem:[%s2 + $0x178] sm:$0xff]
    %v2588 = vld [vmem:[%s2 + $0x180] sm:$0xff]
    %v2589 = vld [vmem:[%s2 + $0x188] sm:$0xff]
    %v2590 = vld [vmem:[%s2 + $0x190] sm:$0xff]
    %v2591 = vld [vmem:[%s2 + $0x198] sm:$0xff]
    %v2592 = vld [vmem:[%s2 + $0x1a0] sm:$0xff]
    %v2593 = vld [vmem:[%s2 + $0x1a8] sm:$0xff]
    %v2594 = vld [vmem:[%s2 + $0x1b0] sm:$0xff]
    %v2595 = vld [vmem:[%s2 + $0x1b8] sm:$0xff]
    %v2596 = vld [vmem:[%s2 + $0x1c0] sm:$0xff]
    %v2597 = vld [vmem:[%s2 + $0x1c8] sm:$0xff]
    %v2598 = vld [vmem:[%s2 + $0x1d0] sm:$0xff]
    %v2599 = vld [vmem:[%s2 + $0x1d8] sm:$0xff]
    %v2600 = vld [vmem:[%s2 + $0x1e0] sm:$0xff]
    %v2601 = vld [vmem:[%s2 + $0x1e8] sm:$0xff]
    %v2602 = vld [vmem:[%s2 + $0x1f0] sm:$0xff]
    %v2603 = vld [vmem:[%s2 + $0x1f8] sm:$0xff]
    %v2668 = vunpack.c.l.b16 %v2540
    %v2669 = vunpack.c.h.b16 %v2540
    %v2670 = vunpack.c.l.b16 %v2541
    %v2671 = vunpack.c.h.b16 %v2541
    %v2672 = vunpack.c.l.b16 %v2542
    %v2673 = vunpack.c.h.b16 %v2542
    %v2674 = vunpack.c.l.b16 %v2543
    %v2675 = vunpack.c.h.b16 %v2543
    %v2676 = vunpack.c.l.b16 %v2544
    %v2677 = vunpack.c.h.b16 %v2544
    %v2678 = vunpack.c.l.b16 %v2545
    %v2679 = vunpack.c.h.b16 %v2545
    %v2680 = vunpack.c.l.b16 %v2546
    %v2681 = vunpack.c.h.b16 %v2546
    %v2682 = vunpack.c.l.b16 %v2547
    %v2683 = vunpack.c.h.b16 %v2547
    %v2684 = vunpack.c.l.b16 %v2548
    %v2685 = vunpack.c.h.b16 %v2548
    %v2686 = vunpack.c.l.b16 %v2549
    %v2687 = vunpack.c.h.b16 %v2549
    %v2688 = vunpack.c.l.b16 %v2550
    %v2689 = vunpack.c.h.b16 %v2550
    %v2690 = vunpack.c.l.b16 %v2551
    %v2691 = vunpack.c.h.b16 %v2551
    %v2692 = vunpack.c.l.b16 %v2552
    %v2693 = vunpack.c.h.b16 %v2552
    %v2694 = vunpack.c.l.b16 %v2553
    %v2695 = vunpack.c.h.b16 %v2553
    %v2696 = vunpack.c.l.b16 %v2554
    %v2697 = vunpack.c.h.b16 %v2554
    %v2698 = vunpack.c.l.b16 %v2555
    %v2699 = vunpack.c.h.b16 %v2555
    %v2700 = vunpack.c.l.b16 %v2556
    %v2701 = vunpack.c.h.b16 %v2556
    %v2702 = vunpack.c.l.b16 %v2557
    %v2703 = vunpack.c.h.b16 %v2557
    %v2704 = vunpack.c.l.b16 %v2558
    %v2705 = vunpack.c.h.b16 %v2558
    %v2706 = vunpack.c.l.b16 %v2559
    %v2707 = vunpack.c.h.b16 %v2559
    %v2708 = vunpack.c.l.b16 %v2560
    %v2709 = vunpack.c.h.b16 %v2560
    %v2710 = vunpack.c.l.b16 %v2561
    %v2711 = vunpack.c.h.b16 %v2561
    %v2712 = vunpack.c.l.b16 %v2562
    %v2713 = vunpack.c.h.b16 %v2562
    %v2714 = vunpack.c.l.b16 %v2563
    %v2715 = vunpack.c.h.b16 %v2563
    %v2716 = vunpack.c.l.b16 %v2564
    %v2717 = vunpack.c.h.b16 %v2564
    %v2718 = vunpack.c.l.b16 %v2565
    %v2719 = vunpack.c.h.b16 %v2565
    %v2720 = vunpack.c.l.b16 %v2566
    %v2721 = vunpack.c.h.b16 %v2566
    %v2722 = vunpack.c.l.b16 %v2567
    %v2723 = vunpack.c.h.b16 %v2567
    %v2724 = vunpack.c.l.b16 %v2568
    %v2725 = vunpack.c.h.b16 %v2568
    %v2726 = vunpack.c.l.b16 %v2569
    %v2727 = vunpack.c.h.b16 %v2569
    %v2728 = vunpack.c.l.b16 %v2570
    %v2729 = vunpack.c.h.b16 %v2570
    %v2730 = vunpack.c.l.b16 %v2571
    %v2731 = vunpack.c.h.b16 %v2571
    %v2732 = vunpack.c.l.b16 %v2572
    %v2733 = vunpack.c.h.b16 %v2572
    %v2734 = vunpack.c.l.b16 %v2573
    %v2735 = vunpack.c.h.b16 %v2573
    %v2736 = vunpack.c.l.b16 %v2574
    %v2737 = vunpack.c.h.b16 %v2574
    %v2738 = vunpack.c.l.b16 %v2575
    %v2739 = vunpack.c.h.b16 %v2575
    %v2740 = vunpack.c.l.b16 %v2576
    %v2741 = vunpack.c.h.b16 %v2576
    %v2742 = vunpack.c.l.b16 %v2577
    %v2743 = vunpack.c.h.b16 %v2577
    %v2744 = vunpack.c.l.b16 %v2578
    %v2745 = vunpack.c.h.b16 %v2578
    %v2746 = vunpack.c.l.b16 %v2579
    %v2747 = vunpack.c.h.b16 %v2579
    %v2748 = vunpack.c.l.b16 %v2580
    %v2749 = vunpack.c.h.b16 %v2580
    %v2750 = vunpack.c.l.b16 %v2581
    %v2751 = vunpack.c.h.b16 %v2581
    %v2752 = vunpack.c.l.b16 %v2582
    %v2753 = vunpack.c.h.b16 %v2582
    %v2754 = vunpack.c.l.b16 %v2583
    %v2755 = vunpack.c.h.b16 %v2583
    %v2756 = vunpack.c.l.b16 %v2584
    %v2757 = vunpack.c.h.b16 %v2584
    %v2758 = vunpack.c.l.b16 %v2585
    %v2759 = vunpack.c.h.b16 %v2585
    %v2760 = vunpack.c.l.b16 %v2586
    %v2761 = vunpack.c.h.b16 %v2586
    %v2762 = vunpack.c.l.b16 %v2587
    %v2763 = vunpack.c.h.b16 %v2587
    %v2764 = vunpack.c.l.b16 %v2588
    %v2765 = vunpack.c.h.b16 %v2588
    %v2766 = vunpack.c.l.b16 %v2589
    %v2767 = vunpack.c.h.b16 %v2589
    %v2768 = vunpack.c.l.b16 %v2590
    %v2769 = vunpack.c.h.b16 %v2590
    %v2770 = vunpack.c.l.b16 %v2591
    %v2771 = vunpack.c.h.b16 %v2591
    %v2772 = vunpack.c.l.b16 %v2592
    %v2773 = vunpack.c.h.b16 %v2592
    %v2774 = vunpack.c.l.b16 %v2593
    %v2775 = vunpack.c.h.b16 %v2593
    %v2776 = vunpack.c.l.b16 %v2594
    %v2777 = vunpack.c.h.b16 %v2594
    %v2778 = vunpack.c.l.b16 %v2595
    %v2779 = vunpack.c.h.b16 %v2595
    %v2780 = vunpack.c.l.b16 %v2596
    %v2781 = vunpack.c.h.b16 %v2596
    %v2782 = vunpack.c.l.b16 %v2597
    %v2783 = vunpack.c.h.b16 %v2597
    %v2784 = vunpack.c.l.b16 %v2598
    %v2785 = vunpack.c.h.b16 %v2598
    %v2786 = vunpack.c.l.b16 %v2599
    %v2787 = vunpack.c.h.b16 %v2599
    %v2788 = vunpack.c.l.b16 %v2600
    %v2789 = vunpack.c.h.b16 %v2600
    %v2790 = vunpack.c.l.b16 %v2601
    %v2791 = vunpack.c.h.b16 %v2601
    %v2792 = vunpack.c.l.b16 %v2602
    %v2793 = vunpack.c.h.b16 %v2602
    %v2794 = vunpack.c.l.b16 %v2603
    %v2795 = vunpack.c.h.b16 %v2603
    %v2796 = vpack.c.b16 %v2670, %v2668
    %v2797 = vpack.c.b16 %v2671, %v2669
    %v2798 = vpack.c.b16 %v2674, %v2672
    %v2799 = vpack.c.b16 %v2675, %v2673
    %v2800 = vpack.c.b16 %v2678, %v2676
    %v2801 = vpack.c.b16 %v2679, %v2677
    %v2802 = vpack.c.b16 %v2682, %v2680
    %v2803 = vpack.c.b16 %v2683, %v2681
    %v2804 = vpack.c.b16 %v2686, %v2684
    %v2805 = vpack.c.b16 %v2687, %v2685
    %v2806 = vpack.c.b16 %v2690, %v2688
    %v2807 = vpack.c.b16 %v2691, %v2689
    %v2808 = vpack.c.b16 %v2694, %v2692
    %v2809 = vpack.c.b16 %v2695, %v2693
    %v2810 = vpack.c.b16 %v2698, %v2696
    %v2811 = vpack.c.b16 %v2699, %v2697
    %v2812 = vpack.c.b16 %v2702, %v2700
    %v2813 = vpack.c.b16 %v2703, %v2701
    %v2814 = vpack.c.b16 %v2706, %v2704
    %v2815 = vpack.c.b16 %v2707, %v2705
    %v2816 = vpack.c.b16 %v2710, %v2708
    %v2817 = vpack.c.b16 %v2711, %v2709
    %v2818 = vpack.c.b16 %v2714, %v2712
    %v2819 = vpack.c.b16 %v2715, %v2713
    %v2820 = vpack.c.b16 %v2718, %v2716
    %v2821 = vpack.c.b16 %v2719, %v2717
    %v2822 = vpack.c.b16 %v2722, %v2720
    %v2823 = vpack.c.b16 %v2723, %v2721
    %v2824 = vpack.c.b16 %v2726, %v2724
    %v2825 = vpack.c.b16 %v2727, %v2725
    %v2826 = vpack.c.b16 %v2730, %v2728
    %v2827 = vpack.c.b16 %v2731, %v2729
    %v2828 = vpack.c.b16 %v2734, %v2732
    %v2829 = vpack.c.b16 %v2735, %v2733
    %v2830 = vpack.c.b16 %v2738, %v2736
    %v2831 = vpack.c.b16 %v2739, %v2737
    %v2832 = vpack.c.b16 %v2742, %v2740
    %v2833 = vpack.c.b16 %v2743, %v2741
    %v2834 = vpack.c.b16 %v2746, %v2744
    %v2835 = vpack.c.b16 %v2747, %v2745
    %v2836 = vpack.c.b16 %v2750, %v2748
    %v2837 = vpack.c.b16 %v2751, %v2749
    %v2838 = vpack.c.b16 %v2754, %v2752
    %v2839 = vpack.c.b16 %v2755, %v2753
    %v2840 = vpack.c.b16 %v2758, %v2756
    %v2841 = vpack.c.b16 %v2759, %v2757
    %v2842 = vpack.c.b16 %v2762, %v2760
    %v2843 = vpack.c.b16 %v2763, %v2761
    %v2844 = vpack.c.b16 %v2766, %v2764
    %v2845 = vpack.c.b16 %v2767, %v2765
    %v2846 = vpack.c.b16 %v2770, %v2768
    %v2847 = vpack.c.b16 %v2771, %v2769
    %v2848 = vpack.c.b16 %v2774, %v2772
    %v2849 = vpack.c.b16 %v2775, %v2773
    %v2850 = vpack.c.b16 %v2778, %v2776
    %v2851 = vpack.c.b16 %v2779, %v2777
    %v2852 = vpack.c.b16 %v2782, %v2780
    %v2853 = vpack.c.b16 %v2783, %v2781
    %v2854 = vpack.c.b16 %v2786, %v2784
    %v2855 = vpack.c.b16 %v2787, %v2785
    %v2856 = vpack.c.b16 %v2790, %v2788
    %v2857 = vpack.c.b16 %v2791, %v2789
    %v2858 = vpack.c.b16 %v2794, %v2792
    %v2859 = vpack.c.b16 %v2795, %v2793
    %2924 = vmatpush.bf16.msra.mxu0 %v2810
    %2925 = vmatpush.bf16.msra.mxu0 %v2808
    %2926 = vmatpush.bf16.msra.mxu0 %v2806
    %2927 = vmatpush.bf16.msra.mxu0 %v2804
    %2928 = vmatpush.bf16.msra.mxu0 %v2802
    %2929 = vmatpush.bf16.msra.mxu0 %v2800
    %2930 = vmatpush.bf16.msra.mxu0 %v2798
    %2931 = vmatpush.bf16.msra.mxu0 %v2796
    %2932 = vmatmul.bf16.gmra.mxu0 %v2476
    %v2933 = vpop.f32.mrf.mxu0
    %v2934 = vadd.f32 0.0, %v2933
    %v2935 = vpop.f32.mrf.mxu0
    %v2936 = vadd.f32 0.0, %v2935
    %2937 = vmatmul.bf16.gmra.mxu0 %v2480
    %v2938 = vpop.f32.mrf.mxu0
    %v2939 = vadd.f32 0.0, %v2938
    %v2940 = vpop.f32.mrf.mxu0
    %v2941 = vadd.f32 0.0, %v2940
    %2942 = vmatmul.bf16.gmra.mxu0 %v2484
    %v2943 = vpop.f32.mrf.mxu0
    %v2944 = vadd.f32 0.0, %v2943
    %v2945 = vpop.f32.mrf.mxu0
    %v2946 = vadd.f32 0.0, %v2945
    %2947 = vmatmul.bf16.gmra.mxu0 %v2488
    %v2948 = vpop.f32.mrf.mxu0
    %v2949 = vadd.f32 0.0, %v2948
    %v2950 = vpop.f32.mrf.mxu0
    %v2951 = vadd.f32 0.0, %v2950
    %2952 = vmatmul.bf16.gmra.mxu0 %v2492
    %v2953 = vpop.f32.mrf.mxu0
    %v2954 = vadd.f32 0.0, %v2953
    %v2955 = vpop.f32.mrf.mxu0
    %v2956 = vadd.f32 0.0, %v2955
    %2957 = vmatmul.bf16.gmra.mxu0 %v2496
    %v2958 = vpop.f32.mrf.mxu0
    %v2959 = vadd.f32 0.0, %v2958
    %v2960 = vpop.f32.mrf.mxu0
    %v2961 = vadd.f32 0.0, %v2960
    %2962 = vmatmul.bf16.gmra.mxu0 %v2500
    %v2963 = vpop.f32.mrf.mxu0
    %v2964 = vadd.f32 0.0, %v2963
    %v2965 = vpop.f32.mrf.mxu0
    %v2966 = vadd.f32 0.0, %v2965
    %2967 = vmatmul.bf16.gmra.mxu0 %v2504
    %v2968 = vpop.f32.mrf.mxu0
    %v2969 = vadd.f32 0.0, %v2968
    %v2970 = vpop.f32.mrf.mxu0
    %v2971 = vadd.f32 0.0, %v2970
    %2972 = vmatmul.bf16.gmra.mxu0 %v2508
    %v2973 = vpop.f32.mrf.mxu0
    %v2974 = vadd.f32 0.0, %v2973
    %v2975 = vpop.f32.mrf.mxu0
    %v2976 = vadd.f32 0.0, %v2975
    %2977 = vmatmul.bf16.gmra.mxu0 %v2512
    %v2978 = vpop.f32.mrf.mxu0
    %v2979 = vadd.f32 0.0, %v2978
    %v2980 = vpop.f32.mrf.mxu0
    %v2981 = vadd.f32 0.0, %v2980
    %2982 = vmatmul.bf16.gmra.mxu0 %v2516
    %v2983 = vpop.f32.mrf.mxu0
    %v2984 = vadd.f32 0.0, %v2983
    %v2985 = vpop.f32.mrf.mxu0
    %v2986 = vadd.f32 0.0, %v2985
    %2987 = vmatmul.bf16.gmra.mxu0 %v2520
    %v2988 = vpop.f32.mrf.mxu0
    %v2989 = vadd.f32 0.0, %v2988
    %v2990 = vpop.f32.mrf.mxu0
    %v2991 = vadd.f32 0.0, %v2990
    %2992 = vmatmul.bf16.gmra.mxu0 %v2524
    %v2993 = vpop.f32.mrf.mxu0
    %v2994 = vadd.f32 0.0, %v2993
    %v2995 = vpop.f32.mrf.mxu0
    %v2996 = vadd.f32 0.0, %v2995
    %2997 = vmatmul.bf16.gmra.mxu0 %v2528
    %v2998 = vpop.f32.mrf.mxu0
    %v2999 = vadd.f32 0.0, %v2998
    %v3000 = vpop.f32.mrf.mxu0
    %v3001 = vadd.f32 0.0, %v3000
    %3002 = vmatmul.bf16.gmra.mxu0 %v2532
    %v3003 = vpop.f32.mrf.mxu0
    %v3004 = vadd.f32 0.0, %v3003
    %v3005 = vpop.f32.mrf.mxu0
    %v3006 = vadd.f32 0.0, %v3005
    %3007 = vmatmul.bf16.gmra.mxu0 %v2536
    %v3008 = vpop.f32.mrf.mxu0
    %v3009 = vadd.f32 0.0, %v3008
    %v3010 = vpop.f32.mrf.mxu0
    %v3011 = vadd.f32 0.0, %v3010
    %3012 = vdwg.mxu0
    %3013 = vmatpush.bf16.msra.mxu0 %v2826
    %3014 = vmatpush.bf16.msra.mxu0 %v2824
    %3015 = vmatpush.bf16.msra.mxu0 %v2822
    %3016 = vmatpush.bf16.msra.mxu0 %v2820
    %3017 = vmatpush.bf16.msra.mxu0 %v2818
    %3018 = vmatpush.bf16.msra.mxu0 %v2816
    %3019 = vmatpush.bf16.msra.mxu0 %v2814
    %3020 = vmatpush.bf16.msra.mxu0 %v2812
    %3021 = vmatmul.bf16.gmra.mxu0 %v2477
    %v3022 = vpop.f32.mrf.mxu0
    %v3023 = vadd.f32 %v2934, %v3022
    %v3024 = vpop.f32.mrf.mxu0
    %v3025 = vadd.f32 %v2936, %v3024
    %3026 = vmatmul.bf16.gmra.mxu0 %v2481
    %v3027 = vpop.f32.mrf.mxu0
    %v3028 = vadd.f32 %v2939, %v3027
    %v3029 = vpop.f32.mrf.mxu0
    %v3030 = vadd.f32 %v2941, %v3029
    %3031 = vmatmul.bf16.gmra.mxu0 %v2485
    %v3032 = vpop.f32.mrf.mxu0
    %v3033 = vadd.f32 %v2944, %v3032
    %v3034 = vpop.f32.mrf.mxu0
    %v3035 = vadd.f32 %v2946, %v3034
    %3036 = vmatmul.bf16.gmra.mxu0 %v2489
    %v3037 = vpop.f32.mrf.mxu0
    %v3038 = vadd.f32 %v2949, %v3037
    %v3039 = vpop.f32.mrf.mxu0
    %v3040 = vadd.f32 %v2951, %v3039
    %3041 = vmatmul.bf16.gmra.mxu0 %v2493
    %v3042 = vpop.f32.mrf.mxu0
    %v3043 = vadd.f32 %v2954, %v3042
    %v3044 = vpop.f32.mrf.mxu0
    %v3045 = vadd.f32 %v2956, %v3044
    %3046 = vmatmul.bf16.gmra.mxu0 %v2497
    %v3047 = vpop.f32.mrf.mxu0
    %v3048 = vadd.f32 %v2959, %v3047
    %v3049 = vpop.f32.mrf.mxu0
    %v3050 = vadd.f32 %v2961, %v3049
    %3051 = vmatmul.bf16.gmra.mxu0 %v2501
    %v3052 = vpop.f32.mrf.mxu0
    %v3053 = vadd.f32 %v2964, %v3052
    %v3054 = vpop.f32.mrf.mxu0
    %v3055 = vadd.f32 %v2966, %v3054
    %3056 = vmatmul.bf16.gmra.mxu0 %v2505
    %v3057 = vpop.f32.mrf.mxu0
    %v3058 = vadd.f32 %v2969, %v3057
    %v3059 = vpop.f32.mrf.mxu0
    %v3060 = vadd.f32 %v2971, %v3059
    %3061 = vmatmul.bf16.gmra.mxu0 %v2509
    %v3062 = vpop.f32.mrf.mxu0
    %v3063 = vadd.f32 %v2974, %v3062
    %v3064 = vpop.f32.mrf.mxu0
    %v3065 = vadd.f32 %v2976, %v3064
    %3066 = vmatmul.bf16.gmra.mxu0 %v2513
    %v3067 = vpop.f32.mrf.mxu0
    %v3068 = vadd.f32 %v2979, %v3067
    %v3069 = vpop.f32.mrf.mxu0
    %v3070 = vadd.f32 %v2981, %v3069
    %3071 = vmatmul.bf16.gmra.mxu0 %v2517
    %v3072 = vpop.f32.mrf.mxu0
    %v3073 = vadd.f32 %v2984, %v3072
    %v3074 = vpop.f32.mrf.mxu0
    %v3075 = vadd.f32 %v2986, %v3074
    %3076 = vmatmul.bf16.gmra.mxu0 %v2521
    %v3077 = vpop.f32.mrf.mxu0
    %v3078 = vadd.f32 %v2989, %v3077
    %v3079 = vpop.f32.mrf.mxu0
    %v3080 = vadd.f32 %v2991, %v3079
    %3081 = vmatmul.bf16.gmra.mxu0 %v2525
    %v3082 = vpop.f32.mrf.mxu0
    %v3083 = vadd.f32 %v2994, %v3082
    %v3084 = vpop.f32.mrf.mxu0
    %v3085 = vadd.f32 %v2996, %v3084
    %3086 = vmatmul.bf16.gmra.mxu0 %v2529
    %v3087 = vpop.f32.mrf.mxu0
    %v3088 = vadd.f32 %v2999, %v3087
    %v3089 = vpop.f32.mrf.mxu0
    %v3090 = vadd.f32 %v3001, %v3089
    %3091 = vmatmul.bf16.gmra.mxu0 %v2533
    %v3092 = vpop.f32.mrf.mxu0
    %v3093 = vadd.f32 %v3004, %v3092
    %v3094 = vpop.f32.mrf.mxu0
    %v3095 = vadd.f32 %v3006, %v3094
    %3096 = vmatmul.bf16.gmra.mxu0 %v2537
    %v3097 = vpop.f32.mrf.mxu0
    %v3098 = vadd.f32 %v3009, %v3097
    %v3099 = vpop.f32.mrf.mxu0
    %v3100 = vadd.f32 %v3011, %v3099
    %3101 = vdwg.mxu0
    %3102 = vmatpush.bf16.msra.mxu0 %v2842
    %3103 = vmatpush.bf16.msra.mxu0 %v2840
    %3104 = vmatpush.bf16.msra.mxu0 %v2838
    %3105 = vmatpush.bf16.msra.mxu0 %v2836
    %3106 = vmatpush.bf16.msra.mxu0 %v2834
    %3107 = vmatpush.bf16.msra.mxu0 %v2832
    %3108 = vmatpush.bf16.msra.mxu0 %v2830
    %3109 = vmatpush.bf16.msra.mxu0 %v2828
    %3110 = vmatmul.bf16.gmra.mxu0 %v2478
    %v3111 = vpop.f32.mrf.mxu0
    %v3112 = vadd.f32 %v3023, %v3111
    %v3113 = vpop.f32.mrf.mxu0
    %v3114 = vadd.f32 %v3025, %v3113
    %3115 = vmatmul.bf16.gmra.mxu0 %v2482
    %v3116 = vpop.f32.mrf.mxu0
    %v3117 = vadd.f32 %v3028, %v3116
    %v3118 = vpop.f32.mrf.mxu0
    %v3119 = vadd.f32 %v3030, %v3118
    %3120 = vmatmul.bf16.gmra.mxu0 %v2486
    %v3121 = vpop.f32.mrf.mxu0
    %v3122 = vadd.f32 %v3033, %v3121
    %v3123 = vpop.f32.mrf.mxu0
    %v3124 = vadd.f32 %v3035, %v3123
    %3125 = vmatmul.bf16.gmra.mxu0 %v2490
    %v3126 = vpop.f32.mrf.mxu0
    %v3127 = vadd.f32 %v3038, %v3126
    %v3128 = vpop.f32.mrf.mxu0
    %v3129 = vadd.f32 %v3040, %v3128
    %3130 = vmatmul.bf16.gmra.mxu0 %v2494
    %v3131 = vpop.f32.mrf.mxu0
    %v3132 = vadd.f32 %v3043, %v3131
    %v3133 = vpop.f32.mrf.mxu0
    %v3134 = vadd.f32 %v3045, %v3133
    %3135 = vmatmul.bf16.gmra.mxu0 %v2498
    %v3136 = vpop.f32.mrf.mxu0
    %v3137 = vadd.f32 %v3048, %v3136
    %v3138 = vpop.f32.mrf.mxu0
    %v3139 = vadd.f32 %v3050, %v3138
    %3140 = vmatmul.bf16.gmra.mxu0 %v2502
    %v3141 = vpop.f32.mrf.mxu0
    %v3142 = vadd.f32 %v3053, %v3141
    %v3143 = vpop.f32.mrf.mxu0
    %v3144 = vadd.f32 %v3055, %v3143
    %3145 = vmatmul.bf16.gmra.mxu0 %v2506
    %v3146 = vpop.f32.mrf.mxu0
    %v3147 = vadd.f32 %v3058, %v3146
    %v3148 = vpop.f32.mrf.mxu0
    %v3149 = vadd.f32 %v3060, %v3148
    %3150 = vmatmul.bf16.gmra.mxu0 %v2510
    %v3151 = vpop.f32.mrf.mxu0
    %v3152 = vadd.f32 %v3063, %v3151
    %v3153 = vpop.f32.mrf.mxu0
    %v3154 = vadd.f32 %v3065, %v3153
    %3155 = vmatmul.bf16.gmra.mxu0 %v2514
    %v3156 = vpop.f32.mrf.mxu0
    %v3157 = vadd.f32 %v3068, %v3156
    %v3158 = vpop.f32.mrf.mxu0
    %v3159 = vadd.f32 %v3070, %v3158
    %3160 = vmatmul.bf16.gmra.mxu0 %v2518
    %v3161 = vpop.f32.mrf.mxu0
    %v3162 = vadd.f32 %v3073, %v3161
    %v3163 = vpop.f32.mrf.mxu0
    %v3164 = vadd.f32 %v3075, %v3163
    %3165 = vmatmul.bf16.gmra.mxu0 %v2522
    %v3166 = vpop.f32.mrf.mxu0
    %v3167 = vadd.f32 %v3078, %v3166
    %v3168 = vpop.f32.mrf.mxu0
    %v3169 = vadd.f32 %v3080, %v3168
    %3170 = vmatmul.bf16.gmra.mxu0 %v2526
    %v3171 = vpop.f32.mrf.mxu0
    %v3172 = vadd.f32 %v3083, %v3171
    %v3173 = vpop.f32.mrf.mxu0
    %v3174 = vadd.f32 %v3085, %v3173
    %3175 = vmatmul.bf16.gmra.mxu0 %v2530
    %v3176 = vpop.f32.mrf.mxu0
    %v3177 = vadd.f32 %v3088, %v3176
    %v3178 = vpop.f32.mrf.mxu0
    %v3179 = vadd.f32 %v3090, %v3178
    %3180 = vmatmul.bf16.gmra.mxu0 %v2534
    %v3181 = vpop.f32.mrf.mxu0
    %v3182 = vadd.f32 %v3093, %v3181
    %v3183 = vpop.f32.mrf.mxu0
    %v3184 = vadd.f32 %v3095, %v3183
    %3185 = vmatmul.bf16.gmra.mxu0 %v2538
    %v3186 = vpop.f32.mrf.mxu0
    %v3187 = vadd.f32 %v3098, %v3186
    %v3188 = vpop.f32.mrf.mxu0
    %v3189 = vadd.f32 %v3100, %v3188
    %3190 = vdwg.mxu0
    %3191 = vmatpush.bf16.msra.mxu0 %v2858
    %3192 = vmatpush.bf16.msra.mxu0 %v2856
    %3193 = vmatpush.bf16.msra.mxu0 %v2854
    %3194 = vmatpush.bf16.msra.mxu0 %v2852
    %3195 = vmatpush.bf16.msra.mxu0 %v2850
    %3196 = vmatpush.bf16.msra.mxu0 %v2848
    %3197 = vmatpush.bf16.msra.mxu0 %v2846
    %3198 = vmatpush.bf16.msra.mxu0 %v2844
    %3199 = vmatmul.bf16.gmra.mxu0 %v2479
    %v3200 = vpop.f32.mrf.mxu0
    %v3201 = vadd.f32 %v3112, %v3200
    %v3202 = vpop.f32.mrf.mxu0
    %v3203 = vadd.f32 %v3114, %v3202
    %3204 = vmatmul.bf16.gmra.mxu0 %v2483
    %v3205 = vpop.f32.mrf.mxu0
    %v3206 = vadd.f32 %v3117, %v3205
    %v3207 = vpop.f32.mrf.mxu0
    %v3208 = vadd.f32 %v3119, %v3207
    %3209 = vmatmul.bf16.gmra.mxu0 %v2487
    %v3210 = vpop.f32.mrf.mxu0
    %v3211 = vadd.f32 %v3122, %v3210
    %v3212 = vpop.f32.mrf.mxu0
    %v3213 = vadd.f32 %v3124, %v3212
    %3214 = vmatmul.bf16.gmra.mxu0 %v2491
    %v3215 = vpop.f32.mrf.mxu0
    %v3216 = vadd.f32 %v3127, %v3215
    %v3217 = vpop.f32.mrf.mxu0
    %v3218 = vadd.f32 %v3129, %v3217
    %3219 = vmatmul.bf16.gmra.mxu0 %v2495
    %v3220 = vpop.f32.mrf.mxu0
    %v3221 = vadd.f32 %v3132, %v3220
    %v3222 = vpop.f32.mrf.mxu0
    %v3223 = vadd.f32 %v3134, %v3222
    %3224 = vmatmul.bf16.gmra.mxu0 %v2499
    %v3225 = vpop.f32.mrf.mxu0
    %v3226 = vadd.f32 %v3137, %v3225
    %v3227 = vpop.f32.mrf.mxu0
    %v3228 = vadd.f32 %v3139, %v3227
    %3229 = vmatmul.bf16.gmra.mxu0 %v2503
    %v3230 = vpop.f32.mrf.mxu0
    %v3231 = vadd.f32 %v3142, %v3230
    %v3232 = vpop.f32.mrf.mxu0
    %v3233 = vadd.f32 %v3144, %v3232
    %3234 = vmatmul.bf16.gmra.mxu0 %v2507
    %v3235 = vpop.f32.mrf.mxu0
    %v3236 = vadd.f32 %v3147, %v3235
    %v3237 = vpop.f32.mrf.mxu0
    %v3238 = vadd.f32 %v3149, %v3237
    %3239 = vmatmul.bf16.gmra.mxu0 %v2511
    %v3240 = vpop.f32.mrf.mxu0
    %v3241 = vadd.f32 %v3152, %v3240
    %v3242 = vpop.f32.mrf.mxu0
    %v3243 = vadd.f32 %v3154, %v3242
    %3244 = vmatmul.bf16.gmra.mxu0 %v2515
    %v3245 = vpop.f32.mrf.mxu0
    %v3246 = vadd.f32 %v3157, %v3245
    %v3247 = vpop.f32.mrf.mxu0
    %v3248 = vadd.f32 %v3159, %v3247
    %3249 = vmatmul.bf16.gmra.mxu0 %v2519
    %v3250 = vpop.f32.mrf.mxu0
    %v3251 = vadd.f32 %v3162, %v3250
    %v3252 = vpop.f32.mrf.mxu0
    %v3253 = vadd.f32 %v3164, %v3252
    %3254 = vmatmul.bf16.gmra.mxu0 %v2523
    %v3255 = vpop.f32.mrf.mxu0
    %v3256 = vadd.f32 %v3167, %v3255
    %v3257 = vpop.f32.mrf.mxu0
    %v3258 = vadd.f32 %v3169, %v3257
    %3259 = vmatmul.bf16.gmra.mxu0 %v2527
    %v3260 = vpop.f32.mrf.mxu0
    %v3261 = vadd.f32 %v3172, %v3260
    %v3262 = vpop.f32.mrf.mxu0
    %v3263 = vadd.f32 %v3174, %v3262
    %3264 = vmatmul.bf16.gmra.mxu0 %v2531
    %v3265 = vpop.f32.mrf.mxu0
    %v3266 = vadd.f32 %v3177, %v3265
    %v3267 = vpop.f32.mrf.mxu0
    %v3268 = vadd.f32 %v3179, %v3267
    %3269 = vmatmul.bf16.gmra.mxu0 %v2535
    %v3270 = vpop.f32.mrf.mxu0
    %v3271 = vadd.f32 %v3182, %v3270
    %v3272 = vpop.f32.mrf.mxu0
    %v3273 = vadd.f32 %v3184, %v3272
    %3274 = vmatmul.bf16.gmra.mxu0 %v2539
    %v3275 = vpop.f32.mrf.mxu0
    %v3276 = vadd.f32 %v3187, %v3275
    %v3277 = vpop.f32.mrf.mxu0
    %v3278 = vadd.f32 %v3189, %v3277
    %3279 = vdwg.mxu0
    %3280 = vmatpush.bf16.msra.mxu0 %v2811
    %3281 = vmatpush.bf16.msra.mxu0 %v2809
    %3282 = vmatpush.bf16.msra.mxu0 %v2807
    %3283 = vmatpush.bf16.msra.mxu0 %v2805
    %3284 = vmatpush.bf16.msra.mxu0 %v2803
    %3285 = vmatpush.bf16.msra.mxu0 %v2801
    %3286 = vmatpush.bf16.msra.mxu0 %v2799
    %3287 = vmatpush.bf16.msra.mxu0 %v2797
    %3288 = vmatmul.bf16.gmra.mxu0 %v2476
    %v3289 = vpop.f32.mrf.mxu0
    %v3290 = vadd.f32 0.0, %v3289
    %v3291 = vpop.f32.mrf.mxu0
    %v3292 = vadd.f32 0.0, %v3291
    %3293 = vmatmul.bf16.gmra.mxu0 %v2480
    %v3294 = vpop.f32.mrf.mxu0
    %v3295 = vadd.f32 0.0, %v3294
    %v3296 = vpop.f32.mrf.mxu0
    %v3297 = vadd.f32 0.0, %v3296
    %3298 = vmatmul.bf16.gmra.mxu0 %v2484
    %v3299 = vpop.f32.mrf.mxu0
    %v3300 = vadd.f32 0.0, %v3299
    %v3301 = vpop.f32.mrf.mxu0
    %v3302 = vadd.f32 0.0, %v3301
    %3303 = vmatmul.bf16.gmra.mxu0 %v2488
    %v3304 = vpop.f32.mrf.mxu0
    %v3305 = vadd.f32 0.0, %v3304
    %v3306 = vpop.f32.mrf.mxu0
    %v3307 = vadd.f32 0.0, %v3306
    %3308 = vmatmul.bf16.gmra.mxu0 %v2492
    %v3309 = vpop.f32.mrf.mxu0
    %v3310 = vadd.f32 0.0, %v3309
    %v3311 = vpop.f32.mrf.mxu0
    %v3312 = vadd.f32 0.0, %v3311
    %3313 = vmatmul.bf16.gmra.mxu0 %v2496
    %v3314 = vpop.f32.mrf.mxu0
    %v3315 = vadd.f32 0.0, %v3314
    %v3316 = vpop.f32.mrf.mxu0
    %v3317 = vadd.f32 0.0, %v3316
    %3318 = vmatmul.bf16.gmra.mxu0 %v2500
    %v3319 = vpop.f32.mrf.mxu0
    %v3320 = vadd.f32 0.0, %v3319
    %v3321 = vpop.f32.mrf.mxu0
    %v3322 = vadd.f32 0.0, %v3321
    %3323 = vmatmul.bf16.gmra.mxu0 %v2504
    %v3324 = vpop.f32.mrf.mxu0
    %v3325 = vadd.f32 0.0, %v3324
    %v3326 = vpop.f32.mrf.mxu0
    %v3327 = vadd.f32 0.0, %v3326
    %3328 = vmatmul.bf16.gmra.mxu0 %v2508
    %v3329 = vpop.f32.mrf.mxu0
    %v3330 = vadd.f32 0.0, %v3329
    %v3331 = vpop.f32.mrf.mxu0
    %v3332 = vadd.f32 0.0, %v3331
    %3333 = vmatmul.bf16.gmra.mxu0 %v2512
    %v3334 = vpop.f32.mrf.mxu0
    %v3335 = vadd.f32 0.0, %v3334
    %v3336 = vpop.f32.mrf.mxu0
    %v3337 = vadd.f32 0.0, %v3336
    %3338 = vmatmul.bf16.gmra.mxu0 %v2516
    %v3339 = vpop.f32.mrf.mxu0
    %v3340 = vadd.f32 0.0, %v3339
    %v3341 = vpop.f32.mrf.mxu0
    %v3342 = vadd.f32 0.0, %v3341
    %3343 = vmatmul.bf16.gmra.mxu0 %v2520
    %v3344 = vpop.f32.mrf.mxu0
    %v3345 = vadd.f32 0.0, %v3344
    %v3346 = vpop.f32.mrf.mxu0
    %v3347 = vadd.f32 0.0, %v3346
    %3348 = vmatmul.bf16.gmra.mxu0 %v2524
    %v3349 = vpop.f32.mrf.mxu0
    %v3350 = vadd.f32 0.0, %v3349
    %v3351 = vpop.f32.mrf.mxu0
    %v3352 = vadd.f32 0.0, %v3351
    %3353 = vmatmul.bf16.gmra.mxu0 %v2528
    %v3354 = vpop.f32.mrf.mxu0
    %v3355 = vadd.f32 0.0, %v3354
    %v3356 = vpop.f32.mrf.mxu0
    %v3357 = vadd.f32 0.0, %v3356
    %3358 = vmatmul.bf16.gmra.mxu0 %v2532
    %v3359 = vpop.f32.mrf.mxu0
    %v3360 = vadd.f32 0.0, %v3359
    %v3361 = vpop.f32.mrf.mxu0
    %v3362 = vadd.f32 0.0, %v3361
    %3363 = vmatmul.bf16.gmra.mxu0 %v2536
    %v3364 = vpop.f32.mrf.mxu0
    %v3365 = vadd.f32 0.0, %v3364
    %v3366 = vpop.f32.mrf.mxu0
    %v3367 = vadd.f32 0.0, %v3366
    %3368 = vdwg.mxu0
    %3369 = vmatpush.bf16.msra.mxu0 %v2827
    %3370 = vmatpush.bf16.msra.mxu0 %v2825
    %3371 = vmatpush.bf16.msra.mxu0 %v2823
    %3372 = vmatpush.bf16.msra.mxu0 %v2821
    %3373 = vmatpush.bf16.msra.mxu0 %v2819
    %3374 = vmatpush.bf16.msra.mxu0 %v2817
    %3375 = vmatpush.bf16.msra.mxu0 %v2815
    %3376 = vmatpush.bf16.msra.mxu0 %v2813
    %3377 = vmatmul.bf16.gmra.mxu0 %v2477
    %v3378 = vpop.f32.mrf.mxu0
    %v3379 = vadd.f32 %v3290, %v3378
    %v3380 = vpop.f32.mrf.mxu0
    %v3381 = vadd.f32 %v3292, %v3380
    %3382 = vmatmul.bf16.gmra.mxu0 %v2481
    %v3383 = vpop.f32.mrf.mxu0
    %v3384 = vadd.f32 %v3295, %v3383
    %v3385 = vpop.f32.mrf.mxu0
    %v3386 = vadd.f32 %v3297, %v3385
    %3387 = vmatmul.bf16.gmra.mxu0 %v2485
    %v3388 = vpop.f32.mrf.mxu0
    %v3389 = vadd.f32 %v3300, %v3388
    %v3390 = vpop.f32.mrf.mxu0
    %v3391 = vadd.f32 %v3302, %v3390
    %3392 = vmatmul.bf16.gmra.mxu0 %v2489
    %v3393 = vpop.f32.mrf.mxu0
    %v3394 = vadd.f32 %v3305, %v3393
    %v3395 = vpop.f32.mrf.mxu0
    %v3396 = vadd.f32 %v3307, %v3395
    %3397 = vmatmul.bf16.gmra.mxu0 %v2493
    %v3398 = vpop.f32.mrf.mxu0
    %v3399 = vadd.f32 %v3310, %v3398
    %v3400 = vpop.f32.mrf.mxu0
    %v3401 = vadd.f32 %v3312, %v3400
    %3402 = vmatmul.bf16.gmra.mxu0 %v2497
    %v3403 = vpop.f32.mrf.mxu0
    %v3404 = vadd.f32 %v3315, %v3403
    %v3405 = vpop.f32.mrf.mxu0
    %v3406 = vadd.f32 %v3317, %v3405
    %3407 = vmatmul.bf16.gmra.mxu0 %v2501
    %v3408 = vpop.f32.mrf.mxu0
    %v3409 = vadd.f32 %v3320, %v3408
    %v3410 = vpop.f32.mrf.mxu0
    %v3411 = vadd.f32 %v3322, %v3410
    %3412 = vmatmul.bf16.gmra.mxu0 %v2505
    %v3413 = vpop.f32.mrf.mxu0
    %v3414 = vadd.f32 %v3325, %v3413
    %v3415 = vpop.f32.mrf.mxu0
    %v3416 = vadd.f32 %v3327, %v3415
    %3417 = vmatmul.bf16.gmra.mxu0 %v2509
    %v3418 = vpop.f32.mrf.mxu0
    %v3419 = vadd.f32 %v3330, %v3418
    %v3420 = vpop.f32.mrf.mxu0
    %v3421 = vadd.f32 %v3332, %v3420
    %3422 = vmatmul.bf16.gmra.mxu0 %v2513
    %v3423 = vpop.f32.mrf.mxu0
    %v3424 = vadd.f32 %v3335, %v3423
    %v3425 = vpop.f32.mrf.mxu0
    %v3426 = vadd.f32 %v3337, %v3425
    %3427 = vmatmul.bf16.gmra.mxu0 %v2517
    %v3428 = vpop.f32.mrf.mxu0
    %v3429 = vadd.f32 %v3340, %v3428
    %v3430 = vpop.f32.mrf.mxu0
    %v3431 = vadd.f32 %v3342, %v3430
    %3432 = vmatmul.bf16.gmra.mxu0 %v2521
    %v3433 = vpop.f32.mrf.mxu0
    %v3434 = vadd.f32 %v3345, %v3433
    %v3435 = vpop.f32.mrf.mxu0
    %v3436 = vadd.f32 %v3347, %v3435
    %3437 = vmatmul.bf16.gmra.mxu0 %v2525
    %v3438 = vpop.f32.mrf.mxu0
    %v3439 = vadd.f32 %v3350, %v3438
    %v3440 = vpop.f32.mrf.mxu0
    %v3441 = vadd.f32 %v3352, %v3440
    %3442 = vmatmul.bf16.gmra.mxu0 %v2529
    %v3443 = vpop.f32.mrf.mxu0
    %v3444 = vadd.f32 %v3355, %v3443
    %v3445 = vpop.f32.mrf.mxu0
    %v3446 = vadd.f32 %v3357, %v3445
    %3447 = vmatmul.bf16.gmra.mxu0 %v2533
    %v3448 = vpop.f32.mrf.mxu0
    %v3449 = vadd.f32 %v3360, %v3448
    %v3450 = vpop.f32.mrf.mxu0
    %v3451 = vadd.f32 %v3362, %v3450
    %3452 = vmatmul.bf16.gmra.mxu0 %v2537
    %v3453 = vpop.f32.mrf.mxu0
    %v3454 = vadd.f32 %v3365, %v3453
    %v3455 = vpop.f32.mrf.mxu0
    %v3456 = vadd.f32 %v3367, %v3455
    %3457 = vdwg.mxu0
    %3458 = vmatpush.bf16.msra.mxu0 %v2843
    %3459 = vmatpush.bf16.msra.mxu0 %v2841
    %3460 = vmatpush.bf16.msra.mxu0 %v2839
    %3461 = vmatpush.bf16.msra.mxu0 %v2837
    %3462 = vmatpush.bf16.msra.mxu0 %v2835
    %3463 = vmatpush.bf16.msra.mxu0 %v2833
    %3464 = vmatpush.bf16.msra.mxu0 %v2831
    %3465 = vmatpush.bf16.msra.mxu0 %v2829
    %3466 = vmatmul.bf16.gmra.mxu0 %v2478
    %v3467 = vpop.f32.mrf.mxu0
    %v3468 = vadd.f32 %v3379, %v3467
    %v3469 = vpop.f32.mrf.mxu0
    %v3470 = vadd.f32 %v3381, %v3469
    %3471 = vmatmul.bf16.gmra.mxu0 %v2482
    %v3472 = vpop.f32.mrf.mxu0
    %v3473 = vadd.f32 %v3384, %v3472
    %v3474 = vpop.f32.mrf.mxu0
    %v3475 = vadd.f32 %v3386, %v3474
    %3476 = vmatmul.bf16.gmra.mxu0 %v2486
    %v3477 = vpop.f32.mrf.mxu0
    %v3478 = vadd.f32 %v3389, %v3477
    %v3479 = vpop.f32.mrf.mxu0
    %v3480 = vadd.f32 %v3391, %v3479
    %3481 = vmatmul.bf16.gmra.mxu0 %v2490
    %v3482 = vpop.f32.mrf.mxu0
    %v3483 = vadd.f32 %v3394, %v3482
    %v3484 = vpop.f32.mrf.mxu0
    %v3485 = vadd.f32 %v3396, %v3484
    %3486 = vmatmul.bf16.gmra.mxu0 %v2494
    %v3487 = vpop.f32.mrf.mxu0
    %v3488 = vadd.f32 %v3399, %v3487
    %v3489 = vpop.f32.mrf.mxu0
    %v3490 = vadd.f32 %v3401, %v3489
    %3491 = vmatmul.bf16.gmra.mxu0 %v2498
    %v3492 = vpop.f32.mrf.mxu0
    %v3493 = vadd.f32 %v3404, %v3492
    %v3494 = vpop.f32.mrf.mxu0
    %v3495 = vadd.f32 %v3406, %v3494
    %3496 = vmatmul.bf16.gmra.mxu0 %v2502
    %v3497 = vpop.f32.mrf.mxu0
    %v3498 = vadd.f32 %v3409, %v3497
    %v3499 = vpop.f32.mrf.mxu0
    %v3500 = vadd.f32 %v3411, %v3499
    %3501 = vmatmul.bf16.gmra.mxu0 %v2506
    %v3502 = vpop.f32.mrf.mxu0
    %v3503 = vadd.f32 %v3414, %v3502
    %v3504 = vpop.f32.mrf.mxu0
    %v3505 = vadd.f32 %v3416, %v3504
    %3506 = vmatmul.bf16.gmra.mxu0 %v2510
    %v3507 = vpop.f32.mrf.mxu0
    %v3508 = vadd.f32 %v3419, %v3507
    %v3509 = vpop.f32.mrf.mxu0
    %v3510 = vadd.f32 %v3421, %v3509
    %3511 = vmatmul.bf16.gmra.mxu0 %v2514
    %v3512 = vpop.f32.mrf.mxu0
    %v3513 = vadd.f32 %v3424, %v3512
    %v3514 = vpop.f32.mrf.mxu0
    %v3515 = vadd.f32 %v3426, %v3514
    %3516 = vmatmul.bf16.gmra.mxu0 %v2518
    %v3517 = vpop.f32.mrf.mxu0
    %v3518 = vadd.f32 %v3429, %v3517
    %v3519 = vpop.f32.mrf.mxu0
    %v3520 = vadd.f32 %v3431, %v3519
    %3521 = vmatmul.bf16.gmra.mxu0 %v2522
    %v3522 = vpop.f32.mrf.mxu0
    %v3523 = vadd.f32 %v3434, %v3522
    %v3524 = vpop.f32.mrf.mxu0
    %v3525 = vadd.f32 %v3436, %v3524
    %3526 = vmatmul.bf16.gmra.mxu0 %v2526
    %v3527 = vpop.f32.mrf.mxu0
    %v3528 = vadd.f32 %v3439, %v3527
    %v3529 = vpop.f32.mrf.mxu0
    %v3530 = vadd.f32 %v3441, %v3529
    %3531 = vmatmul.bf16.gmra.mxu0 %v2530
    %v3532 = vpop.f32.mrf.mxu0
    %v3533 = vadd.f32 %v3444, %v3532
    %v3534 = vpop.f32.mrf.mxu0
    %v3535 = vadd.f32 %v3446, %v3534
    %3536 = vmatmul.bf16.gmra.mxu0 %v2534
    %v3537 = vpop.f32.mrf.mxu0
    %v3538 = vadd.f32 %v3449, %v3537
    %v3539 = vpop.f32.mrf.mxu0
    %v3540 = vadd.f32 %v3451, %v3539
    %3541 = vmatmul.bf16.gmra.mxu0 %v2538
    %v3542 = vpop.f32.mrf.mxu0
    %v3543 = vadd.f32 %v3454, %v3542
    %v3544 = vpop.f32.mrf.mxu0
    %v3545 = vadd.f32 %v3456, %v3544
    %3546 = vdwg.mxu0
    %3547 = vmatpush.bf16.msra.mxu0 %v2859
    %3548 = vmatpush.bf16.msra.mxu0 %v2857
    %3549 = vmatpush.bf16.msra.mxu0 %v2855
    %3550 = vmatpush.bf16.msra.mxu0 %v2853
    %3551 = vmatpush.bf16.msra.mxu0 %v2851
    %3552 = vmatpush.bf16.msra.mxu0 %v2849
    %3553 = vmatpush.bf16.msra.mxu0 %v2847
    %3554 = vmatpush.bf16.msra.mxu0 %v2845
    %3555 = vmatmul.bf16.gmra.mxu0 %v2479
    %v3556 = vpop.f32.mrf.mxu0
    %v3557 = vadd.f32 %v3468, %v3556
    %v3558 = vpop.f32.mrf.mxu0
    %v3559 = vadd.f32 %v3470, %v3558
    %3560 = vmatmul.bf16.gmra.mxu0 %v2483
    %v3561 = vpop.f32.mrf.mxu0
    %v3562 = vadd.f32 %v3473, %v3561
    %v3563 = vpop.f32.mrf.mxu0
    %v3564 = vadd.f32 %v3475, %v3563
    %3565 = vmatmul.bf16.gmra.mxu0 %v2487
    %v3566 = vpop.f32.mrf.mxu0
    %v3567 = vadd.f32 %v3478, %v3566
    %v3568 = vpop.f32.mrf.mxu0
    %v3569 = vadd.f32 %v3480, %v3568
    %3570 = vmatmul.bf16.gmra.mxu0 %v2491
    %v3571 = vpop.f32.mrf.mxu0
    %v3572 = vadd.f32 %v3483, %v3571
    %v3573 = vpop.f32.mrf.mxu0
    %v3574 = vadd.f32 %v3485, %v3573
    %3575 = vmatmul.bf16.gmra.mxu0 %v2495
    %v3576 = vpop.f32.mrf.mxu0
    %v3577 = vadd.f32 %v3488, %v3576
    %v3578 = vpop.f32.mrf.mxu0
    %v3579 = vadd.f32 %v3490, %v3578
    %3580 = vmatmul.bf16.gmra.mxu0 %v2499
    %v3581 = vpop.f32.mrf.mxu0
    %v3582 = vadd.f32 %v3493, %v3581
    %v3583 = vpop.f32.mrf.mxu0
    %v3584 = vadd.f32 %v3495, %v3583
    %3585 = vmatmul.bf16.gmra.mxu0 %v2503
    %v3586 = vpop.f32.mrf.mxu0
    %v3587 = vadd.f32 %v3498, %v3586
    %v3588 = vpop.f32.mrf.mxu0
    %v3589 = vadd.f32 %v3500, %v3588
    %3590 = vmatmul.bf16.gmra.mxu0 %v2507
    %v3591 = vpop.f32.mrf.mxu0
    %v3592 = vadd.f32 %v3503, %v3591
    %v3593 = vpop.f32.mrf.mxu0
    %v3594 = vadd.f32 %v3505, %v3593
    %3595 = vmatmul.bf16.gmra.mxu0 %v2511
    %v3596 = vpop.f32.mrf.mxu0
    %v3597 = vadd.f32 %v3508, %v3596
    %v3598 = vpop.f32.mrf.mxu0
    %v3599 = vadd.f32 %v3510, %v3598
    %3600 = vmatmul.bf16.gmra.mxu0 %v2515
    %v3601 = vpop.f32.mrf.mxu0
    %v3602 = vadd.f32 %v3513, %v3601
    %v3603 = vpop.f32.mrf.mxu0
    %v3604 = vadd.f32 %v3515, %v3603
    %3605 = vmatmul.bf16.gmra.mxu0 %v2519
    %v3606 = vpop.f32.mrf.mxu0
    %v3607 = vadd.f32 %v3518, %v3606
    %v3608 = vpop.f32.mrf.mxu0
    %v3609 = vadd.f32 %v3520, %v3608
    %3610 = vmatmul.bf16.gmra.mxu0 %v2523
    %v3611 = vpop.f32.mrf.mxu0
    %v3612 = vadd.f32 %v3523, %v3611
    %v3613 = vpop.f32.mrf.mxu0
    %v3614 = vadd.f32 %v3525, %v3613
    %3615 = vmatmul.bf16.gmra.mxu0 %v2527
    %v3616 = vpop.f32.mrf.mxu0
    %v3617 = vadd.f32 %v3528, %v3616
    %v3618 = vpop.f32.mrf.mxu0
    %v3619 = vadd.f32 %v3530, %v3618
    %3620 = vmatmul.bf16.gmra.mxu0 %v2531
    %v3621 = vpop.f32.mrf.mxu0
    %v3622 = vadd.f32 %v3533, %v3621
    %v3623 = vpop.f32.mrf.mxu0
    %v3624 = vadd.f32 %v3535, %v3623
    %3625 = vmatmul.bf16.gmra.mxu0 %v2535
    %v3626 = vpop.f32.mrf.mxu0
    %v3627 = vadd.f32 %v3538, %v3626
    %v3628 = vpop.f32.mrf.mxu0
    %v3629 = vadd.f32 %v3540, %v3628
    %3630 = vmatmul.bf16.gmra.mxu0 %v2539
    %v3631 = vpop.f32.mrf.mxu0
    %v3632 = vadd.f32 %v3543, %v3631
    %v3633 = vpop.f32.mrf.mxu0
    %v3634 = vadd.f32 %v3545, %v3633
    %3635 = vdwg.mxu0
    %v3636 = vadd.f32 %v3201, %v3203
    %v3637 = vadd.f32 %v3636, %v3206
    %v3638 = vadd.f32 %v3637, %v3208
    %v3639 = vadd.f32 %v3638, %v3211
    %v3640 = vadd.f32 %v3639, %v3213
    %v3641 = vadd.f32 %v3640, %v3216
    %v3642 = vadd.f32 %v3641, %v3218
    %v3643 = vadd.f32 %v3642, %v3221
    %v3644 = vadd.f32 %v3643, %v3223
    %v3645 = vadd.f32 %v3644, %v3226
    %v3646 = vadd.f32 %v3645, %v3228
    %v3647 = vadd.f32 %v3646, %v3231
    %v3648 = vadd.f32 %v3647, %v3233
    %v3649 = vadd.f32 %v3648, %v3236
    %v3650 = vadd.f32 %v3649, %v3238
    %v3651 = vadd.f32 %v3650, %v3241
    %v3652 = vadd.f32 %v3651, %v3243
    %v3653 = vadd.f32 %v3652, %v3246
    %v3654 = vadd.f32 %v3653, %v3248
    %v3655 = vadd.f32 %v3654, %v3251
    %v3656 = vadd.f32 %v3655, %v3253
    %v3657 = vadd.f32 %v3656, %v3256
    %v3658 = vadd.f32 %v3657, %v3258
    %v3659 = vadd.f32 %v3658, %v3261
    %v3660 = vadd.f32 %v3659, %v3263
    %v3661 = vadd.f32 %v3660, %v3266
    %v3662 = vadd.f32 %v3661, %v3268
    %v3663 = vadd.f32 %v3662, %v3271
    %v3664 = vadd.f32 %v3663, %v3273
    %v3665 = vadd.f32 %v3664, %v3276
    %v3666 = vadd.f32 %v3665, %v3278
    %v3667 = vrot.slane %v3666, 4
    %v3668 = vadd.f32 %v3666, %v3667
    %v3669 = vrot.slane %v3668, 2
    %v3670 = vadd.f32 %v3668, %v3669
    %v3671 = vrot.slane %v3670, 1
    %v3672 = vadd.f32 %v3670, %v3671
    %v3673 = vadd.f32 %v3557, %v3559
    %v3674 = vadd.f32 %v3673, %v3562
    %v3675 = vadd.f32 %v3674, %v3564
    %v3676 = vadd.f32 %v3675, %v3567
    %v3677 = vadd.f32 %v3676, %v3569
    %v3678 = vadd.f32 %v3677, %v3572
    %v3679 = vadd.f32 %v3678, %v3574
    %v3680 = vadd.f32 %v3679, %v3577
    %v3681 = vadd.f32 %v3680, %v3579
    %v3682 = vadd.f32 %v3681, %v3582
    %v3683 = vadd.f32 %v3682, %v3584
    %v3684 = vadd.f32 %v3683, %v3587
    %v3685 = vadd.f32 %v3684, %v3589
    %v3686 = vadd.f32 %v3685, %v3592
    %v3687 = vadd.f32 %v3686, %v3594
    %v3688 = vadd.f32 %v3687, %v3597
    %v3689 = vadd.f32 %v3688, %v3599
    %v3690 = vadd.f32 %v3689, %v3602
    %v3691 = vadd.f32 %v3690, %v3604
    %v3692 = vadd.f32 %v3691, %v3607
    %v3693 = vadd.f32 %v3692, %v3609
    %v3694 = vadd.f32 %v3693, %v3612
    %v3695 = vadd.f32 %v3694, %v3614
    %v3696 = vadd.f32 %v3695, %v3617
    %v3697 = vadd.f32 %v3696, %v3619
    %v3698 = vadd.f32 %v3697, %v3622
    %v3699 = vadd.f32 %v3698, %v3624
    %v3700 = vadd.f32 %v3699, %v3627
    %v3701 = vadd.f32 %v3700, %v3629
    %v3702 = vadd.f32 %v3701, %v3632
    %v3703 = vadd.f32 %v3702, %v3634
    %v3704 = vrot.slane %v3703, 4
    %v3705 = vadd.f32 %v3703, %v3704
    %v3706 = vrot.slane %v3705, 2
    %v3707 = vadd.f32 %v3705, %v3706
    %v3708 = vrot.slane %v3707, 1
    %v3709 = vadd.f32 %v3707, %v3708
    %v3710 = vmul.f32 %v3672, 0.00390625
    %v3711 = vmul.f32 %v3709, 0.00390625
    %v3712 = vmul.f32 %v3201, %v3201
    %v3713 = vmul.f32 %v3557, %v3557
    %v3714 = vmul.f32 %v3203, %v3203
    %v3715 = vmul.f32 %v3559, %v3559
    %v3716 = vmul.f32 %v3206, %v3206
    %v3717 = vmul.f32 %v3562, %v3562
    %v3718 = vmul.f32 %v3208, %v3208
    %v3719 = vmul.f32 %v3564, %v3564
    %v3720 = vmul.f32 %v3211, %v3211
    %v3721 = vmul.f32 %v3567, %v3567
    %v3722 = vmul.f32 %v3213, %v3213
    %v3723 = vmul.f32 %v3569, %v3569
    %v3724 = vmul.f32 %v3216, %v3216
    %v3725 = vmul.f32 %v3572, %v3572
    %v3726 = vmul.f32 %v3218, %v3218
    %v3727 = vmul.f32 %v3574, %v3574
    %v3728 = vmul.f32 %v3221, %v3221
    %v3729 = vmul.f32 %v3577, %v3577
    %v3730 = vmul.f32 %v3223, %v3223
    %v3731 = vmul.f32 %v3579, %v3579
    %v3732 = vmul.f32 %v3226, %v3226
    %v3733 = vmul.f32 %v3582, %v3582
    %v3734 = vmul.f32 %v3228, %v3228
    %v3735 = vmul.f32 %v3584, %v3584
    %v3736 = vmul.f32 %v3231, %v3231
    %v3737 = vmul.f32 %v3587, %v3587
    %v3738 = vmul.f32 %v3233, %v3233
    %v3739 = vmul.f32 %v3589, %v3589
    %v3740 = vmul.f32 %v3236, %v3236
    %v3741 = vmul.f32 %v3592, %v3592
    %v3742 = vmul.f32 %v3238, %v3238
    %v3743 = vmul.f32 %v3594, %v3594
    %v3744 = vmul.f32 %v3241, %v3241
    %v3745 = vmul.f32 %v3597, %v3597
    %v3746 = vmul.f32 %v3243, %v3243
    %v3747 = vmul.f32 %v3599, %v3599
    %v3748 = vmul.f32 %v3246, %v3246
    %v3749 = vmul.f32 %v3602, %v3602
    %v3750 = vmul.f32 %v3248, %v3248
    %v3751 = vmul.f32 %v3604, %v3604
    %v3752 = vmul.f32 %v3251, %v3251
    %v3753 = vmul.f32 %v3607, %v3607
    %v3754 = vmul.f32 %v3253, %v3253
    %v3755 = vmul.f32 %v3609, %v3609
    %v3756 = vmul.f32 %v3256, %v3256
    %v3757 = vmul.f32 %v3612, %v3612
    %v3758 = vmul.f32 %v3258, %v3258
    %v3759 = vmul.f32 %v3614, %v3614
    %v3760 = vmul.f32 %v3261, %v3261
    %v3761 = vmul.f32 %v3617, %v3617
    %v3762 = vmul.f32 %v3263, %v3263
    %v3763 = vmul.f32 %v3619, %v3619
    %v3764 = vmul.f32 %v3266, %v3266
    %v3765 = vmul.f32 %v3622, %v3622
    %v3766 = vmul.f32 %v3268, %v3268
    %v3767 = vmul.f32 %v3624, %v3624
    %v3768 = vmul.f32 %v3271, %v3271
    %v3769 = vmul.f32 %v3627, %v3627
    %v3770 = vmul.f32 %v3273, %v3273
    %v3771 = vmul.f32 %v3629, %v3629
    %v3772 = vmul.f32 %v3276, %v3276
    %v3773 = vmul.f32 %v3632, %v3632
    %v3774 = vmul.f32 %v3278, %v3278
    %v3775 = vmul.f32 %v3634, %v3634
    %v3776 = vadd.f32 %v3712, %v3714
    %v3777 = vadd.f32 %v3776, %v3716
    %v3778 = vadd.f32 %v3777, %v3718
    %v3779 = vadd.f32 %v3778, %v3720
    %v3780 = vadd.f32 %v3779, %v3722
    %v3781 = vadd.f32 %v3780, %v3724
    %v3782 = vadd.f32 %v3781, %v3726
    %v3783 = vadd.f32 %v3782, %v3728
    %v3784 = vadd.f32 %v3783, %v3730
    %v3785 = vadd.f32 %v3784, %v3732
    %v3786 = vadd.f32 %v3785, %v3734
    %v3787 = vadd.f32 %v3786, %v3736
    %v3788 = vadd.f32 %v3787, %v3738
    %v3789 = vadd.f32 %v3788, %v3740
    %v3790 = vadd.f32 %v3789, %v3742
    %v3791 = vadd.f32 %v3790, %v3744
    %v3792 = vadd.f32 %v3791, %v3746
    %v3793 = vadd.f32 %v3792, %v3748
    %v3794 = vadd.f32 %v3793, %v3750
    %v3795 = vadd.f32 %v3794, %v3752
    %v3796 = vadd.f32 %v3795, %v3754
    %v3797 = vadd.f32 %v3796, %v3756
    %v3798 = vadd.f32 %v3797, %v3758
    %v3799 = vadd.f32 %v3798, %v3760
    %v3800 = vadd.f32 %v3799, %v3762
    %v3801 = vadd.f32 %v3800, %v3764
    %v3802 = vadd.f32 %v3801, %v3766
    %v3803 = vadd.f32 %v3802, %v3768
    %v3804 = vadd.f32 %v3803, %v3770
    %v3805 = vadd.f32 %v3804, %v3772
    %v3806 = vadd.f32 %v3805, %v3774
    %v3807 = vrot.slane %v3806, 4
    %v3808 = vadd.f32 %v3806, %v3807
    %v3809 = vrot.slane %v3808, 2
    %v3810 = vadd.f32 %v3808, %v3809
    %v3811 = vrot.slane %v3810, 1
    %v3812 = vadd.f32 %v3810, %v3811
    %v3813 = vadd.f32 %v3713, %v3715
    %v3814 = vadd.f32 %v3813, %v3717
    %v3815 = vadd.f32 %v3814, %v3719
    %v3816 = vadd.f32 %v3815, %v3721
    %v3817 = vadd.f32 %v3816, %v3723
    %v3818 = vadd.f32 %v3817, %v3725
    %v3819 = vadd.f32 %v3818, %v3727
    %v3820 = vadd.f32 %v3819, %v3729
    %v3821 = vadd.f32 %v3820, %v3731
    %v3822 = vadd.f32 %v3821, %v3733
    %v3823 = vadd.f32 %v3822, %v3735
    %v3824 = vadd.f32 %v3823, %v3737
    %v3825 = vadd.f32 %v3824, %v3739
    %v3826 = vadd.f32 %v3825, %v3741
    %v3827 = vadd.f32 %v3826, %v3743
    %v3828 = vadd.f32 %v3827, %v3745
    %v3829 = vadd.f32 %v3828, %v3747
    %v3830 = vadd.f32 %v3829, %v3749
    %v3831 = vadd.f32 %v3830, %v3751
    %v3832 = vadd.f32 %v3831, %v3753
    %v3833 = vadd.f32 %v3832, %v3755
    %v3834 = vadd.f32 %v3833, %v3757
    %v3835 = vadd.f32 %v3834, %v3759
    %v3836 = vadd.f32 %v3835, %v3761
    %v3837 = vadd.f32 %v3836, %v3763
    %v3838 = vadd.f32 %v3837, %v3765
    %v3839 = vadd.f32 %v3838, %v3767
    %v3840 = vadd.f32 %v3839, %v3769
    %v3841 = vadd.f32 %v3840, %v3771
    %v3842 = vadd.f32 %v3841, %v3773
    %v3843 = vadd.f32 %v3842, %v3775
    %v3844 = vrot.slane %v3843, 4
    %v3845 = vadd.f32 %v3843, %v3844
    %v3846 = vrot.slane %v3845, 2
    %v3847 = vadd.f32 %v3845, %v3846
    %v3848 = vrot.slane %v3847, 1
    %v3849 = vadd.f32 %v3847, %v3848
    %v3850 = vmul.f32 %v3812, 0.00390625
    %v3851 = vmul.f32 %v3849, 0.00390625
    %v3852 = vmul.f32 %v3710, %v3710
    %v3853 = vmul.f32 %v3711, %v3711
    %v3854 = vsub.f32 %v3850, %v3852
    %v3855 = vsub.f32 %v3851, %v3853
    %v3856 = vmax.f32 %v3854, 0.0
    %v3857 = vmax.f32 %v3855, 0.0
    %s3858 = scalar_lea.vmem [#allocation11], 2
    %v3859 = vld [vmem:[%s3858] ss:$8 sm:$0x3]
    %v3860 = vadd.f32 %v3856, 1e-05
    %v3861 = vadd.f32 %v3857, 1e-05
    %v3862 = vrsqrt.pop %v3860
    %v3863 = vmul.f32 %v3862, %v3860
    %v3864 = vmul.f32 %v3863, %v3862
    %v3865 = vmul.f32 0.5, %v3864
    %v3866 = vsub.f32 1.5, %v3865
    %v3867 = vmul.f32 %v3862, %v3866
    %vm3868 = vweird.f32 %v3860
    %vm3869 = vweird.f32 %v3862
    %vm3870 = vmor %vm3868, %vm3869
    %v3871 = vsel %vm3870, %v3862, %v3867
    %v3872 = vrsqrt.pop %v3861
    %v3873 = vmul.f32 %v3872, %v3861
    %v3874 = vmul.f32 %v3873, %v3872
    %v3875 = vmul.f32 0.5, %v3874
    %v3876 = vsub.f32 1.5, %v3875
    %v3877 = vmul.f32 %v3872, %v3876
    %vm3878 = vweird.f32 %v3861
    %vm3879 = vweird.f32 %v3872
    %vm3880 = vmor %vm3878, %vm3879
    %v3881 = vsel %vm3880, %v3872, %v3877
    %v3884 = vrot.slane %v3881, 7
    %v3885 = vsel %vm2048, %v3871, %v3884
    %v3887 = vmul.f32 %v3859, %v3885
    %s3888 = scalar_lea.vmem [#allocation11], 3
    %v3889 = vld [vmem:[%s3888] ss:$8 sm:$0x3]
    %v3891 = vperm.slane %v3887, 0
    %v3892 = vperm.slane %v3887, 1
    %v3895 = vmul.f32 %v3710, %v3891
    %v3896 = vmul.f32 %v3711, %v3892
    %v3899 = vrot.slane %v3896, 7
    %v3900 = vsel %vm2048, %v3895, %v3899
    %v3902 = vsub.f32 %v3889, %v3900
    %v3903 = vmul.f32 %v3201, %v3891
    %v3904 = vmul.f32 %v3557, %v3892
    %v3905 = vmul.f32 %v3203, %v3891
    %v3906 = vmul.f32 %v3559, %v3892
    %v3907 = vmul.f32 %v3206, %v3891
    %v3908 = vmul.f32 %v3562, %v3892
    %v3909 = vmul.f32 %v3208, %v3891
    %v3910 = vmul.f32 %v3564, %v3892
    %v3911 = vmul.f32 %v3211, %v3891
    %v3912 = vmul.f32 %v3567, %v3892
    %v3913 = vmul.f32 %v3213, %v3891
    %v3914 = vmul.f32 %v3569, %v3892
    %v3915 = vmul.f32 %v3216, %v3891
    %v3916 = vmul.f32 %v3572, %v3892
    %v3917 = vmul.f32 %v3218, %v3891
    %v3918 = vmul.f32 %v3574, %v3892
    %v3919 = vmul.f32 %v3221, %v3891
    %v3920 = vmul.f32 %v3577, %v3892
    %v3921 = vmul.f32 %v3223, %v3891
    %v3922 = vmul.f32 %v3579, %v3892
    %v3923 = vmul.f32 %v3226, %v3891
    %v3924 = vmul.f32 %v3582, %v3892
    %v3925 = vmul.f32 %v3228, %v3891
    %v3926 = vmul.f32 %v3584, %v3892
    %v3927 = vmul.f32 %v3231, %v3891
    %v3928 = vmul.f32 %v3587, %v3892
    %v3929 = vmul.f32 %v3233, %v3891
    %v3930 = vmul.f32 %v3589, %v3892
    %v3931 = vmul.f32 %v3236, %v3891
    %v3932 = vmul.f32 %v3592, %v3892
    %v3933 = vmul.f32 %v3238, %v3891
    %v3934 = vmul.f32 %v3594, %v3892
    %v3935 = vmul.f32 %v3241, %v3891
    %v3936 = vmul.f32 %v3597, %v3892
    %v3937 = vmul.f32 %v3243, %v3891
    %v3938 = vmul.f32 %v3599, %v3892
    %v3939 = vmul.f32 %v3246, %v3891
    %v3940 = vmul.f32 %v3602, %v3892
    %v3941 = vmul.f32 %v3248, %v3891
    %v3942 = vmul.f32 %v3604, %v3892
    %v3943 = vmul.f32 %v3251, %v3891
    %v3944 = vmul.f32 %v3607, %v3892
    %v3945 = vmul.f32 %v3253, %v3891
    %v3946 = vmul.f32 %v3609, %v3892
    %v3947 = vmul.f32 %v3256, %v3891
    %v3948 = vmul.f32 %v3612, %v3892
    %v3949 = vmul.f32 %v3258, %v3891
    %v3950 = vmul.f32 %v3614, %v3892
    %v3951 = vmul.f32 %v3261, %v3891
    %v3952 = vmul.f32 %v3617, %v3892
    %v3953 = vmul.f32 %v3263, %v3891
    %v3954 = vmul.f32 %v3619, %v3892
    %v3955 = vmul.f32 %v3266, %v3891
    %v3956 = vmul.f32 %v3622, %v3892
    %v3957 = vmul.f32 %v3268, %v3891
    %v3958 = vmul.f32 %v3624, %v3892
    %v3959 = vmul.f32 %v3271, %v3891
    %v3960 = vmul.f32 %v3627, %v3892
    %v3961 = vmul.f32 %v3273, %v3891
    %v3962 = vmul.f32 %v3629, %v3892
    %v3963 = vmul.f32 %v3276, %v3891
    %v3964 = vmul.f32 %v3632, %v3892
    %v3965 = vmul.f32 %v3278, %v3891
    %v3966 = vmul.f32 %v3634, %v3892
    %v3968 = vperm.slane %v3902, 0
    %v3969 = vperm.slane %v3902, 1
    %v3972 = vadd.f32 %v3903, %v3968
    %v3973 = vadd.f32 %v3904, %v3969
    %v3974 = vadd.f32 %v3905, %v3968
    %v3975 = vadd.f32 %v3906, %v3969
    %v3976 = vadd.f32 %v3907, %v3968
    %v3977 = vadd.f32 %v3908, %v3969
    %v3978 = vadd.f32 %v3909, %v3968
    %v3979 = vadd.f32 %v3910, %v3969
    %v3980 = vadd.f32 %v3911, %v3968
    %v3981 = vadd.f32 %v3912, %v3969
    %v3982 = vadd.f32 %v3913, %v3968
    %v3983 = vadd.f32 %v3914, %v3969
    %v3984 = vadd.f32 %v3915, %v3968
    %v3985 = vadd.f32 %v3916, %v3969
    %v3986 = vadd.f32 %v3917, %v3968
    %v3987 = vadd.f32 %v3918, %v3969
    %v3988 = vadd.f32 %v3919, %v3968
    %v3989 = vadd.f32 %v3920, %v3969
    %v3990 = vadd.f32 %v3921, %v3968
    %v3991 = vadd.f32 %v3922, %v3969
    %v3992 = vadd.f32 %v3923, %v3968
    %v3993 = vadd.f32 %v3924, %v3969
    %v3994 = vadd.f32 %v3925, %v3968
    %v3995 = vadd.f32 %v3926, %v3969
    %v3996 = vadd.f32 %v3927, %v3968
    %v3997 = vadd.f32 %v3928, %v3969
    %v3998 = vadd.f32 %v3929, %v3968
    %v3999 = vadd.f32 %v3930, %v3969
    %v4000 = vadd.f32 %v3931, %v3968
    %v4001 = vadd.f32 %v3932, %v3969
    %v4002 = vadd.f32 %v3933, %v3968
    %v4003 = vadd.f32 %v3934, %v3969
    %v4004 = vadd.f32 %v3935, %v3968
    %v4005 = vadd.f32 %v3936, %v3969
    %v4006 = vadd.f32 %v3937, %v3968
    %v4007 = vadd.f32 %v3938, %v3969
    %v4008 = vadd.f32 %v3939, %v3968
    %v4009 = vadd.f32 %v3940, %v3969
    %v4010 = vadd.f32 %v3941, %v3968
    %v4011 = vadd.f32 %v3942, %v3969
    %v4012 = vadd.f32 %v3943, %v3968
    %v4013 = vadd.f32 %v3944, %v3969
    %v4014 = vadd.f32 %v3945, %v3968
    %v4015 = vadd.f32 %v3946, %v3969
    %v4016 = vadd.f32 %v3947, %v3968
    %v4017 = vadd.f32 %v3948, %v3969
    %v4018 = vadd.f32 %v3949, %v3968
    %v4019 = vadd.f32 %v3950, %v3969
    %v4020 = vadd.f32 %v3951, %v3968
    %v4021 = vadd.f32 %v3952, %v3969
    %v4022 = vadd.f32 %v3953, %v3968
    %v4023 = vadd.f32 %v3954, %v3969
    %v4024 = vadd.f32 %v3955, %v3968
    %v4025 = vadd.f32 %v3956, %v3969
    %v4026 = vadd.f32 %v3957, %v3968
    %v4027 = vadd.f32 %v3958, %v3969
    %v4028 = vadd.f32 %v3959, %v3968
    %v4029 = vadd.f32 %v3960, %v3969
    %v4030 = vadd.f32 %v3961, %v3968
    %v4031 = vadd.f32 %v3962, %v3969
    %v4032 = vadd.f32 %v3963, %v3968
    %v4033 = vadd.f32 %v3964, %v3969
    %v4034 = vadd.f32 %v3965, %v3968
    %v4035 = vadd.f32 %v3966, %v3969
    %v4036 = vmax.f32 %v3972, 0.0
    %v4037 = vmax.f32 %v3973, 0.0
    %v4038 = vmax.f32 %v3974, 0.0
    %v4039 = vmax.f32 %v3975, 0.0
    %v4040 = vmax.f32 %v3976, 0.0
    %v4041 = vmax.f32 %v3977, 0.0
    %v4042 = vmax.f32 %v3978, 0.0
    %v4043 = vmax.f32 %v3979, 0.0
    %v4044 = vmax.f32 %v3980, 0.0
    %v4045 = vmax.f32 %v3981, 0.0
    %v4046 = vmax.f32 %v3982, 0.0
    %v4047 = vmax.f32 %v3983, 0.0
    %v4048 = vmax.f32 %v3984, 0.0
    %v4049 = vmax.f32 %v3985, 0.0
    %v4050 = vmax.f32 %v3986, 0.0
    %v4051 = vmax.f32 %v3987, 0.0
    %v4052 = vmax.f32 %v3988, 0.0
    %v4053 = vmax.f32 %v3989, 0.0
    %v4054 = vmax.f32 %v3990, 0.0
    %v4055 = vmax.f32 %v3991, 0.0
    %v4056 = vmax.f32 %v3992, 0.0
    %v4057 = vmax.f32 %v3993, 0.0
    %v4058 = vmax.f32 %v3994, 0.0
    %v4059 = vmax.f32 %v3995, 0.0
    %v4060 = vmax.f32 %v3996, 0.0
    %v4061 = vmax.f32 %v3997, 0.0
    %v4062 = vmax.f32 %v3998, 0.0
    %v4063 = vmax.f32 %v3999, 0.0
    %v4064 = vmax.f32 %v4000, 0.0
    %v4065 = vmax.f32 %v4001, 0.0
    %v4066 = vmax.f32 %v4002, 0.0
    %v4067 = vmax.f32 %v4003, 0.0
    %v4068 = vmax.f32 %v4004, 0.0
    %v4069 = vmax.f32 %v4005, 0.0
    %v4070 = vmax.f32 %v4006, 0.0
    %v4071 = vmax.f32 %v4007, 0.0
    %v4072 = vmax.f32 %v4008, 0.0
    %v4073 = vmax.f32 %v4009, 0.0
    %v4074 = vmax.f32 %v4010, 0.0
    %v4075 = vmax.f32 %v4011, 0.0
    %v4076 = vmax.f32 %v4012, 0.0
    %v4077 = vmax.f32 %v4013, 0.0
    %v4078 = vmax.f32 %v4014, 0.0
    %v4079 = vmax.f32 %v4015, 0.0
    %v4080 = vmax.f32 %v4016, 0.0
    %v4081 = vmax.f32 %v4017, 0.0
    %v4082 = vmax.f32 %v4018, 0.0
    %v4083 = vmax.f32 %v4019, 0.0
    %v4084 = vmax.f32 %v4020, 0.0
    %v4085 = vmax.f32 %v4021, 0.0
    %v4086 = vmax.f32 %v4022, 0.0
    %v4087 = vmax.f32 %v4023, 0.0
    %v4088 = vmax.f32 %v4024, 0.0
    %v4089 = vmax.f32 %v4025, 0.0
    %v4090 = vmax.f32 %v4026, 0.0
    %v4091 = vmax.f32 %v4027, 0.0
    %v4092 = vmax.f32 %v4028, 0.0
    %v4093 = vmax.f32 %v4029, 0.0
    %v4094 = vmax.f32 %v4030, 0.0
    %v4095 = vmax.f32 %v4031, 0.0
    %v4096 = vmax.f32 %v4032, 0.0
    %v4097 = vmax.f32 %v4033, 0.0
    %v4098 = vmax.f32 %v4034, 0.0
    %v4099 = vmax.f32 %v4035, 0.0
    %v4100 = vpack.c.bf16 %v4038, %v4036
    %v4101 = vpack.c.bf16 %v4039, %v4037
    %v4102 = vpack.c.bf16 %v4042, %v4040
    %v4103 = vpack.c.bf16 %v4043, %v4041
    %v4104 = vpack.c.bf16 %v4046, %v4044
    %v4105 = vpack.c.bf16 %v4047, %v4045
    %v4106 = vpack.c.bf16 %v4050, %v4048
    %v4107 = vpack.c.bf16 %v4051, %v4049
    %v4108 = vpack.c.bf16 %v4054, %v4052
    %v4109 = vpack.c.bf16 %v4055, %v4053
    %v4110 = vpack.c.bf16 %v4058, %v4056
    %v4111 = vpack.c.bf16 %v4059, %v4057
    %v4112 = vpack.c.bf16 %v4062, %v4060
    %v4113 = vpack.c.bf16 %v4063, %v4061
    %v4114 = vpack.c.bf16 %v4066, %v4064
    %v4115 = vpack.c.bf16 %v4067, %v4065
    %v4116 = vpack.c.bf16 %v4070, %v4068
    %v4117 = vpack.c.bf16 %v4071, %v4069
    %v4118 = vpack.c.bf16 %v4074, %v4072
    %v4119 = vpack.c.bf16 %v4075, %v4073
    %v4120 = vpack.c.bf16 %v4078, %v4076
    %v4121 = vpack.c.bf16 %v4079, %v4077
    %v4122 = vpack.c.bf16 %v4082, %v4080
    %v4123 = vpack.c.bf16 %v4083, %v4081
    %v4124 = vpack.c.bf16 %v4086, %v4084
    %v4125 = vpack.c.bf16 %v4087, %v4085
    %v4126 = vpack.c.bf16 %v4090, %v4088
    %v4127 = vpack.c.bf16 %v4091, %v4089
    %v4128 = vpack.c.bf16 %v4094, %v4092
    %v4129 = vpack.c.bf16 %v4095, %v4093
    %v4130 = vpack.c.bf16 %v4098, %v4096
    %v4131 = vpack.c.bf16 %v4099, %v4097
    %v4132 = vld [vmem:[#allocation6] sm:$0xf]
    %v4133 = vld [vmem:[#allocation6 + $0x4] sm:$0xf]
    %v4134 = vld [vmem:[#allocation6 + $0x8] sm:$0xf]
    %v4135 = vld [vmem:[#allocation6 + $0xc] sm:$0xf]
    %v4136 = vld [vmem:[#allocation6 + $0x10] sm:$0xf]
    %v4137 = vld [vmem:[#allocation6 + $0x14] sm:$0xf]
    %v4138 = vld [vmem:[#allocation6 + $0x18] sm:$0xf]
    %v4139 = vld [vmem:[#allocation6 + $0x1c] sm:$0xf]
    %v4140 = vld [vmem:[#allocation6 + $0x20] sm:$0xf]
    %v4141 = vld [vmem:[#allocation6 + $0x24] sm:$0xf]
    %v4142 = vld [vmem:[#allocation6 + $0x28] sm:$0xf]
    %v4143 = vld [vmem:[#allocation6 + $0x2c] sm:$0xf]
    %v4144 = vld [vmem:[#allocation6 + $0x30] sm:$0xf]
    %v4145 = vld [vmem:[#allocation6 + $0x34] sm:$0xf]
    %v4146 = vld [vmem:[#allocation6 + $0x38] sm:$0xf]
    %v4147 = vld [vmem:[#allocation6 + $0x3c] sm:$0xf]
    %v4148 = vld [vmem:[#allocation6 + $0x40] sm:$0xf]
    %v4149 = vld [vmem:[#allocation6 + $0x44] sm:$0xf]
    %v4150 = vld [vmem:[#allocation6 + $0x48] sm:$0xf]
    %v4151 = vld [vmem:[#allocation6 + $0x4c] sm:$0xf]
    %v4152 = vld [vmem:[#allocation6 + $0x50] sm:$0xf]
    %v4153 = vld [vmem:[#allocation6 + $0x54] sm:$0xf]
    %v4154 = vld [vmem:[#allocation6 + $0x58] sm:$0xf]
    %v4155 = vld [vmem:[#allocation6 + $0x5c] sm:$0xf]
    %v4156 = vld [vmem:[#allocation6 + $0x60] sm:$0xf]
    %v4157 = vld [vmem:[#allocation6 + $0x64] sm:$0xf]
    %v4158 = vld [vmem:[#allocation6 + $0x68] sm:$0xf]
    %v4159 = vld [vmem:[#allocation6 + $0x6c] sm:$0xf]
    %v4160 = vld [vmem:[#allocation6 + $0x70] sm:$0xf]
    %v4161 = vld [vmem:[#allocation6 + $0x74] sm:$0xf]
    %v4162 = vld [vmem:[#allocation6 + $0x78] sm:$0xf]
    %v4163 = vld [vmem:[#allocation6 + $0x7c] sm:$0xf]
    %v4196 = vunpack.c.l.b16 %v4132
    %v4197 = vunpack.c.l.b16 %v4133
    %v4198 = vunpack.c.l.b16 %v4134
    %v4199 = vunpack.c.l.b16 %v4135
    %v4200 = vunpack.c.l.b16 %v4136
    %v4201 = vunpack.c.l.b16 %v4137
    %v4202 = vunpack.c.l.b16 %v4138
    %v4203 = vunpack.c.l.b16 %v4139
    %v4204 = vunpack.c.l.b16 %v4140
    %v4205 = vunpack.c.l.b16 %v4141
    %v4206 = vunpack.c.l.b16 %v4142
    %v4207 = vunpack.c.l.b16 %v4143
    %v4208 = vunpack.c.l.b16 %v4144
    %v4209 = vunpack.c.l.b16 %v4145
    %v4210 = vunpack.c.l.b16 %v4146
    %v4211 = vunpack.c.l.b16 %v4147
    %v4212 = vunpack.c.l.b16 %v4148
    %v4213 = vunpack.c.l.b16 %v4149
    %v4214 = vunpack.c.l.b16 %v4150
    %v4215 = vunpack.c.l.b16 %v4151
    %v4216 = vunpack.c.l.b16 %v4152
    %v4217 = vunpack.c.l.b16 %v4153
    %v4218 = vunpack.c.l.b16 %v4154
    %v4219 = vunpack.c.l.b16 %v4155
    %v4220 = vunpack.c.l.b16 %v4156
    %v4221 = vunpack.c.l.b16 %v4157
    %v4222 = vunpack.c.l.b16 %v4158
    %v4223 = vunpack.c.l.b16 %v4159
    %v4224 = vunpack.c.l.b16 %v4160
    %v4225 = vunpack.c.l.b16 %v4161
    %v4226 = vunpack.c.l.b16 %v4162
    %v4227 = vunpack.c.l.b16 %v4163
    %v4228 = vpack.c.b16 %v4197, %v4196
    %v4229 = vpack.c.b16 %v4199, %v4198
    %v4230 = vpack.c.b16 %v4201, %v4200
    %v4231 = vpack.c.b16 %v4203, %v4202
    %v4232 = vpack.c.b16 %v4205, %v4204
    %v4233 = vpack.c.b16 %v4207, %v4206
    %v4234 = vpack.c.b16 %v4209, %v4208
    %v4235 = vpack.c.b16 %v4211, %v4210
    %v4236 = vpack.c.b16 %v4213, %v4212
    %v4237 = vpack.c.b16 %v4215, %v4214
    %v4238 = vpack.c.b16 %v4217, %v4216
    %v4239 = vpack.c.b16 %v4219, %v4218
    %v4240 = vpack.c.b16 %v4221, %v4220
    %v4241 = vpack.c.b16 %v4223, %v4222
    %v4242 = vpack.c.b16 %v4225, %v4224
    %v4243 = vpack.c.b16 %v4227, %v4226
    %4260 = vmatpush.bf16.msra.mxu0 %v4235
    %4261 = vmatpush.bf16.msra.mxu0 %v4234
    %4262 = vmatpush.bf16.msra.mxu0 %v4233
    %4263 = vmatpush.bf16.msra.mxu0 %v4232
    %4264 = vmatpush.bf16.msra.mxu0 %v4231
    %4265 = vmatpush.bf16.msra.mxu0 %v4230
    %4266 = vmatpush.bf16.msra.mxu0 %v4229
    %4267 = vmatpush.bf16.msra.mxu0 %v4228
    %4268 = vmatmul.bf16.gmra.mxu0 %v4100
    %v4269 = vpop.f32.mrf.mxu0
    %v4270 = vadd.f32 0.0, %v4269
    %v4271 = vpop.f32.mrf.mxu0
    %v4272 = vadd.f32 0.0, %v4271
    %4273 = vmatmul.bf16.gmra.mxu0 %v4102
    %v4274 = vpop.f32.mrf.mxu0
    %v4275 = vadd.f32 0.0, %v4274
    %v4276 = vpop.f32.mrf.mxu0
    %v4277 = vadd.f32 0.0, %v4276
    %4278 = vmatmul.bf16.gmra.mxu0 %v4104
    %v4279 = vpop.f32.mrf.mxu0
    %v4280 = vadd.f32 0.0, %v4279
    %v4281 = vpop.f32.mrf.mxu0
    %v4282 = vadd.f32 0.0, %v4281
    %4283 = vmatmul.bf16.gmra.mxu0 %v4106
    %v4284 = vpop.f32.mrf.mxu0
    %v4285 = vadd.f32 0.0, %v4284
    %v4286 = vpop.f32.mrf.mxu0
    %v4287 = vadd.f32 0.0, %v4286
    %4288 = vmatmul.bf16.gmra.mxu0 %v4108
    %v4289 = vpop.f32.mrf.mxu0
    %v4290 = vadd.f32 0.0, %v4289
    %v4291 = vpop.f32.mrf.mxu0
    %v4292 = vadd.f32 0.0, %v4291
    %4293 = vmatmul.bf16.gmra.mxu0 %v4110
    %v4294 = vpop.f32.mrf.mxu0
    %v4295 = vadd.f32 0.0, %v4294
    %v4296 = vpop.f32.mrf.mxu0
    %v4297 = vadd.f32 0.0, %v4296
    %4298 = vmatmul.bf16.gmra.mxu0 %v4112
    %v4299 = vpop.f32.mrf.mxu0
    %v4300 = vadd.f32 0.0, %v4299
    %v4301 = vpop.f32.mrf.mxu0
    %v4302 = vadd.f32 0.0, %v4301
    %4303 = vmatmul.bf16.gmra.mxu0 %v4114
    %v4304 = vpop.f32.mrf.mxu0
    %v4305 = vadd.f32 0.0, %v4304
    %v4306 = vpop.f32.mrf.mxu0
    %v4307 = vadd.f32 0.0, %v4306
    %4308 = vmatmul.bf16.gmra.mxu0 %v4116
    %v4309 = vpop.f32.mrf.mxu0
    %v4310 = vadd.f32 0.0, %v4309
    %v4311 = vpop.f32.mrf.mxu0
    %v4312 = vadd.f32 0.0, %v4311
    %4313 = vmatmul.bf16.gmra.mxu0 %v4118
    %v4314 = vpop.f32.mrf.mxu0
    %v4315 = vadd.f32 0.0, %v4314
    %v4316 = vpop.f32.mrf.mxu0
    %v4317 = vadd.f32 0.0, %v4316
    %4318 = vmatmul.bf16.gmra.mxu0 %v4120
    %v4319 = vpop.f32.mrf.mxu0
    %v4320 = vadd.f32 0.0, %v4319
    %v4321 = vpop.f32.mrf.mxu0
    %v4322 = vadd.f32 0.0, %v4321
    %4323 = vmatmul.bf16.gmra.mxu0 %v4122
    %v4324 = vpop.f32.mrf.mxu0
    %v4325 = vadd.f32 0.0, %v4324
    %v4326 = vpop.f32.mrf.mxu0
    %v4327 = vadd.f32 0.0, %v4326
    %4328 = vmatmul.bf16.gmra.mxu0 %v4124
    %v4329 = vpop.f32.mrf.mxu0
    %v4330 = vadd.f32 0.0, %v4329
    %v4331 = vpop.f32.mrf.mxu0
    %v4332 = vadd.f32 0.0, %v4331
    %4333 = vmatmul.bf16.gmra.mxu0 %v4126
    %v4334 = vpop.f32.mrf.mxu0
    %v4335 = vadd.f32 0.0, %v4334
    %v4336 = vpop.f32.mrf.mxu0
    %v4337 = vadd.f32 0.0, %v4336
    %4338 = vmatmul.bf16.gmra.mxu0 %v4128
    %v4339 = vpop.f32.mrf.mxu0
    %v4340 = vadd.f32 0.0, %v4339
    %v4341 = vpop.f32.mrf.mxu0
    %v4342 = vadd.f32 0.0, %v4341
    %4343 = vmatmul.bf16.gmra.mxu0 %v4130
    %v4344 = vpop.f32.mrf.mxu0
    %v4345 = vadd.f32 0.0, %v4344
    %v4346 = vpop.f32.mrf.mxu0
    %v4347 = vadd.f32 0.0, %v4346
    %4348 = vdwg.mxu0
    %4349 = vmatpush.bf16.msra.mxu0 %v4243
    %4350 = vmatpush.bf16.msra.mxu0 %v4242
    %4351 = vmatpush.bf16.msra.mxu0 %v4241
    %4352 = vmatpush.bf16.msra.mxu0 %v4240
    %4353 = vmatpush.bf16.msra.mxu0 %v4239
    %4354 = vmatpush.bf16.msra.mxu0 %v4238
    %4355 = vmatpush.bf16.msra.mxu0 %v4237
    %4356 = vmatpush.bf16.msra.mxu0 %v4236
    %4357 = vmatmul.bf16.gmra.mxu0 %v4101
    %v4358 = vpop.f32.mrf.mxu0
    %v4359 = vadd.f32 %v4270, %v4358
    %v4360 = vpop.f32.mrf.mxu0
    %v4361 = vadd.f32 %v4272, %v4360
    %4362 = vmatmul.bf16.gmra.mxu0 %v4103
    %v4363 = vpop.f32.mrf.mxu0
    %v4364 = vadd.f32 %v4275, %v4363
    %v4365 = vpop.f32.mrf.mxu0
    %v4366 = vadd.f32 %v4277, %v4365
    %4367 = vmatmul.bf16.gmra.mxu0 %v4105
    %v4368 = vpop.f32.mrf.mxu0
    %v4369 = vadd.f32 %v4280, %v4368
    %v4370 = vpop.f32.mrf.mxu0
    %v4371 = vadd.f32 %v4282, %v4370
    %4372 = vmatmul.bf16.gmra.mxu0 %v4107
    %v4373 = vpop.f32.mrf.mxu0
    %v4374 = vadd.f32 %v4285, %v4373
    %v4375 = vpop.f32.mrf.mxu0
    %v4376 = vadd.f32 %v4287, %v4375
    %4377 = vmatmul.bf16.gmra.mxu0 %v4109
    %v4378 = vpop.f32.mrf.mxu0
    %v4379 = vadd.f32 %v4290, %v4378
    %v4380 = vpop.f32.mrf.mxu0
    %v4381 = vadd.f32 %v4292, %v4380
    %4382 = vmatmul.bf16.gmra.mxu0 %v4111
    %v4383 = vpop.f32.mrf.mxu0
    %v4384 = vadd.f32 %v4295, %v4383
    %v4385 = vpop.f32.mrf.mxu0
    %v4386 = vadd.f32 %v4297, %v4385
    %4387 = vmatmul.bf16.gmra.mxu0 %v4113
    %v4388 = vpop.f32.mrf.mxu0
    %v4389 = vadd.f32 %v4300, %v4388
    %v4390 = vpop.f32.mrf.mxu0
    %v4391 = vadd.f32 %v4302, %v4390
    %4392 = vmatmul.bf16.gmra.mxu0 %v4115
    %v4393 = vpop.f32.mrf.mxu0
    %v4394 = vadd.f32 %v4305, %v4393
    %v4395 = vpop.f32.mrf.mxu0
    %v4396 = vadd.f32 %v4307, %v4395
    %4397 = vmatmul.bf16.gmra.mxu0 %v4117
    %v4398 = vpop.f32.mrf.mxu0
    %v4399 = vadd.f32 %v4310, %v4398
    %v4400 = vpop.f32.mrf.mxu0
    %v4401 = vadd.f32 %v4312, %v4400
    %4402 = vmatmul.bf16.gmra.mxu0 %v4119
    %v4403 = vpop.f32.mrf.mxu0
    %v4404 = vadd.f32 %v4315, %v4403
    %v4405 = vpop.f32.mrf.mxu0
    %v4406 = vadd.f32 %v4317, %v4405
    %4407 = vmatmul.bf16.gmra.mxu0 %v4121
    %v4408 = vpop.f32.mrf.mxu0
    %v4409 = vadd.f32 %v4320, %v4408
    %v4410 = vpop.f32.mrf.mxu0
    %v4411 = vadd.f32 %v4322, %v4410
    %4412 = vmatmul.bf16.gmra.mxu0 %v4123
    %v4413 = vpop.f32.mrf.mxu0
    %v4414 = vadd.f32 %v4325, %v4413
    %v4415 = vpop.f32.mrf.mxu0
    %v4416 = vadd.f32 %v4327, %v4415
    %4417 = vmatmul.bf16.gmra.mxu0 %v4125
    %v4418 = vpop.f32.mrf.mxu0
    %v4419 = vadd.f32 %v4330, %v4418
    %v4420 = vpop.f32.mrf.mxu0
    %v4421 = vadd.f32 %v4332, %v4420
    %4422 = vmatmul.bf16.gmra.mxu0 %v4127
    %v4423 = vpop.f32.mrf.mxu0
    %v4424 = vadd.f32 %v4335, %v4423
    %v4425 = vpop.f32.mrf.mxu0
    %v4426 = vadd.f32 %v4337, %v4425
    %4427 = vmatmul.bf16.gmra.mxu0 %v4129
    %v4428 = vpop.f32.mrf.mxu0
    %v4429 = vadd.f32 %v4340, %v4428
    %v4430 = vpop.f32.mrf.mxu0
    %v4431 = vadd.f32 %v4342, %v4430
    %4432 = vmatmul.bf16.gmra.mxu0 %v4131
    %v4433 = vpop.f32.mrf.mxu0
    %v4434 = vadd.f32 %v4345, %v4433
    %v4435 = vpop.f32.mrf.mxu0
    %v4436 = vadd.f32 %v4347, %v4435
    %4437 = vdwg.mxu0
    %v4438 = vadd.f32 %v4359, %v4361
    %v4439 = vadd.f32 %v4438, %v4364
    %v4440 = vadd.f32 %v4439, %v4366
    %v4441 = vadd.f32 %v4440, %v4369
    %v4442 = vadd.f32 %v4441, %v4371
    %v4443 = vadd.f32 %v4442, %v4374
    %v4444 = vadd.f32 %v4443, %v4376
    %v4445 = vadd.f32 %v4444, %v4379
    %v4446 = vadd.f32 %v4445, %v4381
    %v4447 = vadd.f32 %v4446, %v4384
    %v4448 = vadd.f32 %v4447, %v4386
    %v4449 = vadd.f32 %v4448, %v4389
    %v4450 = vadd.f32 %v4449, %v4391
    %v4451 = vadd.f32 %v4450, %v4394
    %v4452 = vadd.f32 %v4451, %v4396
    %v4453 = vadd.f32 %v4452, %v4399
    %v4454 = vadd.f32 %v4453, %v4401
    %v4455 = vadd.f32 %v4454, %v4404
    %v4456 = vadd.f32 %v4455, %v4406
    %v4457 = vadd.f32 %v4456, %v4409
    %v4458 = vadd.f32 %v4457, %v4411
    %v4459 = vadd.f32 %v4458, %v4414
    %v4460 = vadd.f32 %v4459, %v4416
    %v4461 = vadd.f32 %v4460, %v4419
    %v4462 = vadd.f32 %v4461, %v4421
    %v4463 = vadd.f32 %v4462, %v4424
    %v4464 = vadd.f32 %v4463, %v4426
    %v4465 = vadd.f32 %v4464, %v4429
    %v4466 = vadd.f32 %v4465, %v4431
    %v4467 = vadd.f32 %v4466, %v4434
    %v4468 = vadd.f32 %v4467, %v4436
    %v4469 = vrot.slane %v4468, 4
    %v4470 = vadd.f32 %v4468, %v4469
    %v4471 = vrot.slane %v4470, 2
    %v4472 = vadd.f32 %v4470, %v4471
    %v4473 = vrot.slane %v4472, 1
    %v4474 = vadd.f32 %v4472, %v4473
    %v4475 = vmul.f32 %v4474, 0.00390625
    %v4476 = vmul.f32 %v4359, %v4359
    %v4477 = vmul.f32 %v4361, %v4361
    %v4478 = vmul.f32 %v4364, %v4364
    %v4479 = vmul.f32 %v4366, %v4366
    %v4480 = vmul.f32 %v4369, %v4369
    %v4481 = vmul.f32 %v4371, %v4371
    %v4482 = vmul.f32 %v4374, %v4374
    %v4483 = vmul.f32 %v4376, %v4376
    %v4484 = vmul.f32 %v4379, %v4379
    %v4485 = vmul.f32 %v4381, %v4381
    %v4486 = vmul.f32 %v4384, %v4384
    %v4487 = vmul.f32 %v4386, %v4386
    %v4488 = vmul.f32 %v4389, %v4389
    %v4489 = vmul.f32 %v4391, %v4391
    %v4490 = vmul.f32 %v4394, %v4394
    %v4491 = vmul.f32 %v4396, %v4396
    %v4492 = vmul.f32 %v4399, %v4399
    %v4493 = vmul.f32 %v4401, %v4401
    %v4494 = vmul.f32 %v4404, %v4404
    %v4495 = vmul.f32 %v4406, %v4406
    %v4496 = vmul.f32 %v4409, %v4409
    %v4497 = vmul.f32 %v4411, %v4411
    %v4498 = vmul.f32 %v4414, %v4414
    %v4499 = vmul.f32 %v4416, %v4416
    %v4500 = vmul.f32 %v4419, %v4419
    %v4501 = vmul.f32 %v4421, %v4421
    %v4502 = vmul.f32 %v4424, %v4424
    %v4503 = vmul.f32 %v4426, %v4426
    %v4504 = vmul.f32 %v4429, %v4429
    %v4505 = vmul.f32 %v4431, %v4431
    %v4506 = vmul.f32 %v4434, %v4434
    %v4507 = vmul.f32 %v4436, %v4436
    %v4508 = vadd.f32 %v4476, %v4477
    %v4509 = vadd.f32 %v4508, %v4478
    %v4510 = vadd.f32 %v4509, %v4479
    %v4511 = vadd.f32 %v4510, %v4480
    %v4512 = vadd.f32 %v4511, %v4481
    %v4513 = vadd.f32 %v4512, %v4482
    %v4514 = vadd.f32 %v4513, %v4483
    %v4515 = vadd.f32 %v4514, %v4484
    %v4516 = vadd.f32 %v4515, %v4485
    %v4517 = vadd.f32 %v4516, %v4486
    %v4518 = vadd.f32 %v4517, %v4487
    %v4519 = vadd.f32 %v4518, %v4488
    %v4520 = vadd.f32 %v4519, %v4489
    %v4521 = vadd.f32 %v4520, %v4490
    %v4522 = vadd.f32 %v4521, %v4491
    %v4523 = vadd.f32 %v4522, %v4492
    %v4524 = vadd.f32 %v4523, %v4493
    %v4525 = vadd.f32 %v4524, %v4494
    %v4526 = vadd.f32 %v4525, %v4495
    %v4527 = vadd.f32 %v4526, %v4496
    %v4528 = vadd.f32 %v4527, %v4497
    %v4529 = vadd.f32 %v4528, %v4498
    %v4530 = vadd.f32 %v4529, %v4499
    %v4531 = vadd.f32 %v4530, %v4500
    %v4532 = vadd.f32 %v4531, %v4501
    %v4533 = vadd.f32 %v4532, %v4502
    %v4534 = vadd.f32 %v4533, %v4503
    %v4535 = vadd.f32 %v4534, %v4504
    %v4536 = vadd.f32 %v4535, %v4505
    %v4537 = vadd.f32 %v4536, %v4506
    %v4538 = vadd.f32 %v4537, %v4507
    %v4539 = vrot.slane %v4538, 4
    %v4540 = vadd.f32 %v4538, %v4539
    %v4541 = vrot.slane %v4540, 2
    %v4542 = vadd.f32 %v4540, %v4541
    %v4543 = vrot.slane %v4542, 1
    %v4544 = vadd.f32 %v4542, %v4543
    %v4545 = vmul.f32 %v4544, 0.00390625
    %v4546 = vmul.f32 %v4475, %v4475
    %v4547 = vsub.f32 %v4545, %v4546
    %v4548 = vmax.f32 %v4547, 0.0
    %v4549 = vld [vmem:[#allocation11 + $0x4] ss:$0 sm:$0xff]
    %v4550 = vadd.f32 %v4548, 1e-05
    %v4551 = vrsqrt.pop %v4550
    %v4552 = vmul.f32 %v4551, %v4550
    %v4553 = vmul.f32 %v4552, %v4551
    %v4554 = vmul.f32 0.5, %v4553
    %v4555 = vsub.f32 1.5, %v4554
    %v4556 = vmul.f32 %v4551, %v4555
    %vm4557 = vweird.f32 %v4550
    %vm4558 = vweird.f32 %v4551
    %vm4559 = vmor %vm4557, %vm4558
    %v4560 = vsel %vm4559, %v4551, %v4556
    %v4561 = vmul.f32 %v4549, %v4560
    %v4562 = vld [vmem:[#allocation11 + $0x5] ss:$0 sm:$0xff]
    %v4563 = vmul.f32 %v4475, %v4561
    %v4564 = vsub.f32 %v4562, %v4563
    %v4565 = vmul.f32 %v4359, %v4561
    %v4566 = vmul.f32 %v4361, %v4561
    %v4567 = vmul.f32 %v4364, %v4561
    %v4568 = vmul.f32 %v4366, %v4561
    %v4569 = vmul.f32 %v4369, %v4561
    %v4570 = vmul.f32 %v4371, %v4561
    %v4571 = vmul.f32 %v4374, %v4561
    %v4572 = vmul.f32 %v4376, %v4561
    %v4573 = vmul.f32 %v4379, %v4561
    %v4574 = vmul.f32 %v4381, %v4561
    %v4575 = vmul.f32 %v4384, %v4561
    %v4576 = vmul.f32 %v4386, %v4561
    %v4577 = vmul.f32 %v4389, %v4561
    %v4578 = vmul.f32 %v4391, %v4561
    %v4579 = vmul.f32 %v4394, %v4561
    %v4580 = vmul.f32 %v4396, %v4561
    %v4581 = vmul.f32 %v4399, %v4561
    %v4582 = vmul.f32 %v4401, %v4561
    %v4583 = vmul.f32 %v4404, %v4561
    %v4584 = vmul.f32 %v4406, %v4561
    %v4585 = vmul.f32 %v4409, %v4561
    %v4586 = vmul.f32 %v4411, %v4561
    %v4587 = vmul.f32 %v4414, %v4561
    %v4588 = vmul.f32 %v4416, %v4561
    %v4589 = vmul.f32 %v4419, %v4561
    %v4590 = vmul.f32 %v4421, %v4561
    %v4591 = vmul.f32 %v4424, %v4561
    %v4592 = vmul.f32 %v4426, %v4561
    %v4593 = vmul.f32 %v4429, %v4561
    %v4594 = vmul.f32 %v4431, %v4561
    %v4595 = vmul.f32 %v4434, %v4561
    %v4596 = vmul.f32 %v4436, %v4561
    %v4597 = vadd.f32 %v4565, %v4564
    %v4598 = vadd.f32 %v4566, %v4564
    %v4599 = vadd.f32 %v4567, %v4564
    %v4600 = vadd.f32 %v4568, %v4564
    %v4601 = vadd.f32 %v4569, %v4564
    %v4602 = vadd.f32 %v4570, %v4564
    %v4603 = vadd.f32 %v4571, %v4564
    %v4604 = vadd.f32 %v4572, %v4564
    %v4605 = vadd.f32 %v4573, %v4564
    %v4606 = vadd.f32 %v4574, %v4564
    %v4607 = vadd.f32 %v4575, %v4564
    %v4608 = vadd.f32 %v4576, %v4564
    %v4609 = vadd.f32 %v4577, %v4564
    %v4610 = vadd.f32 %v4578, %v4564
    %v4611 = vadd.f32 %v4579, %v4564
    %v4612 = vadd.f32 %v4580, %v4564
    %v4613 = vadd.f32 %v4581, %v4564
    %v4614 = vadd.f32 %v4582, %v4564
    %v4615 = vadd.f32 %v4583, %v4564
    %v4616 = vadd.f32 %v4584, %v4564
    %v4617 = vadd.f32 %v4585, %v4564
    %v4618 = vadd.f32 %v4586, %v4564
    %v4619 = vadd.f32 %v4587, %v4564
    %v4620 = vadd.f32 %v4588, %v4564
    %v4621 = vadd.f32 %v4589, %v4564
    %v4622 = vadd.f32 %v4590, %v4564
    %v4623 = vadd.f32 %v4591, %v4564
    %v4624 = vadd.f32 %v4592, %v4564
    %v4625 = vadd.f32 %v4593, %v4564
    %v4626 = vadd.f32 %v4594, %v4564
    %v4627 = vadd.f32 %v4595, %v4564
    %v4628 = vadd.f32 %v4596, %v4564
    %v4629 = vmax.f32 %v4597, 0.0
    %v4630 = vmax.f32 %v4598, 0.0
    %v4631 = vmax.f32 %v4599, 0.0
    %v4632 = vmax.f32 %v4600, 0.0
    %v4633 = vmax.f32 %v4601, 0.0
    %v4634 = vmax.f32 %v4602, 0.0
    %v4635 = vmax.f32 %v4603, 0.0
    %v4636 = vmax.f32 %v4604, 0.0
    %v4637 = vmax.f32 %v4605, 0.0
    %v4638 = vmax.f32 %v4606, 0.0
    %v4639 = vmax.f32 %v4607, 0.0
    %v4640 = vmax.f32 %v4608, 0.0
    %v4641 = vmax.f32 %v4609, 0.0
    %v4642 = vmax.f32 %v4610, 0.0
    %v4643 = vmax.f32 %v4611, 0.0
    %v4644 = vmax.f32 %v4612, 0.0
    %v4645 = vmax.f32 %v4613, 0.0
    %v4646 = vmax.f32 %v4614, 0.0
    %v4647 = vmax.f32 %v4615, 0.0
    %v4648 = vmax.f32 %v4616, 0.0
    %v4649 = vmax.f32 %v4617, 0.0
    %v4650 = vmax.f32 %v4618, 0.0
    %v4651 = vmax.f32 %v4619, 0.0
    %v4652 = vmax.f32 %v4620, 0.0
    %v4653 = vmax.f32 %v4621, 0.0
    %v4654 = vmax.f32 %v4622, 0.0
    %v4655 = vmax.f32 %v4623, 0.0
    %v4656 = vmax.f32 %v4624, 0.0
    %v4657 = vmax.f32 %v4625, 0.0
    %v4658 = vmax.f32 %v4626, 0.0
    %v4659 = vmax.f32 %v4627, 0.0
    %v4660 = vmax.f32 %v4628, 0.0
    %v4661 = vpack.c.bf16 %v4630, %v4629
    %v4662 = vpack.c.bf16 %v4632, %v4631
    %v4663 = vpack.c.bf16 %v4634, %v4633
    %v4664 = vpack.c.bf16 %v4636, %v4635
    %v4665 = vpack.c.bf16 %v4638, %v4637
    %v4666 = vpack.c.bf16 %v4640, %v4639
    %v4667 = vpack.c.bf16 %v4642, %v4641
    %v4668 = vpack.c.bf16 %v4644, %v4643
    %v4669 = vpack.c.bf16 %v4646, %v4645
    %v4670 = vpack.c.bf16 %v4648, %v4647
    %v4671 = vpack.c.bf16 %v4650, %v4649
    %v4672 = vpack.c.bf16 %v4652, %v4651
    %v4673 = vpack.c.bf16 %v4654, %v4653
    %v4674 = vpack.c.bf16 %v4656, %v4655
    %v4675 = vpack.c.bf16 %v4658, %v4657
    %v4676 = vpack.c.bf16 %v4660, %v4659
    %v4677 = vld [vmem:[#allocation8] sm:$0xf]
    %v4678 = vld [vmem:[#allocation8 + $0x4] sm:$0xf]
    %v4679 = vld [vmem:[#allocation8 + $0x8] sm:$0xf]
    %v4680 = vld [vmem:[#allocation8 + $0xc] sm:$0xf]
    %v4681 = vld [vmem:[#allocation8 + $0x10] sm:$0xf]
    %v4682 = vld [vmem:[#allocation8 + $0x14] sm:$0xf]
    %v4683 = vld [vmem:[#allocation8 + $0x18] sm:$0xf]
    %v4684 = vld [vmem:[#allocation8 + $0x1c] sm:$0xf]
    %v4685 = vld [vmem:[#allocation8 + $0x20] sm:$0xf]
    %v4686 = vld [vmem:[#allocation8 + $0x24] sm:$0xf]
    %v4687 = vld [vmem:[#allocation8 + $0x28] sm:$0xf]
    %v4688 = vld [vmem:[#allocation8 + $0x2c] sm:$0xf]
    %v4689 = vld [vmem:[#allocation8 + $0x30] sm:$0xf]
    %v4690 = vld [vmem:[#allocation8 + $0x34] sm:$0xf]
    %v4691 = vld [vmem:[#allocation8 + $0x38] sm:$0xf]
    %v4692 = vld [vmem:[#allocation8 + $0x3c] sm:$0xf]
    %v4693 = vld [vmem:[#allocation11 + $0x6] ss:$0 sm:$0xff]
    %v4710 = vunpack.c.l.b16 %v4677
    %v4711 = vunpack.c.l.b16 %v4678
    %v4712 = vunpack.c.l.b16 %v4679
    %v4713 = vunpack.c.l.b16 %v4680
    %v4714 = vunpack.c.l.b16 %v4681
    %v4715 = vunpack.c.l.b16 %v4682
    %v4716 = vunpack.c.l.b16 %v4683
    %v4717 = vunpack.c.l.b16 %v4684
    %v4718 = vunpack.c.l.b16 %v4685
    %v4719 = vunpack.c.l.b16 %v4686
    %v4720 = vunpack.c.l.b16 %v4687
    %v4721 = vunpack.c.l.b16 %v4688
    %v4722 = vunpack.c.l.b16 %v4689
    %v4723 = vunpack.c.l.b16 %v4690
    %v4724 = vunpack.c.l.b16 %v4691
    %v4725 = vunpack.c.l.b16 %v4692
    %v4726 = vpack.c.b16 %v4711, %v4710
    %v4727 = vpack.c.b16 %v4713, %v4712
    %v4728 = vpack.c.b16 %v4715, %v4714
    %v4729 = vpack.c.b16 %v4717, %v4716
    %v4730 = vpack.c.b16 %v4719, %v4718
    %v4731 = vpack.c.b16 %v4721, %v4720
    %v4732 = vpack.c.b16 %v4723, %v4722
    %v4733 = vpack.c.b16 %v4725, %v4724
    %4742 = vmatpush.bf16.msra.mxu0 %v4733
    %4743 = vmatpush.bf16.msra.mxu0 %v4732
    %4744 = vmatpush.bf16.msra.mxu0 %v4731
    %4745 = vmatpush.bf16.msra.mxu0 %v4730
    %4746 = vmatpush.bf16.msra.mxu0 %v4729
    %4747 = vmatpush.bf16.msra.mxu0 %v4728
    %4748 = vmatpush.bf16.msra.mxu0 %v4727
    %4749 = vmatpush.bf16.msra.mxu0 %v4726
    %4750 = vmatmul.bf16.gmra.mxu0 %v4661
    %v4751 = vpop.f32.mrf.mxu0
    %v4752 = vadd.f32 %v4693, %v4751
    %v4753 = vpop.f32.mrf.mxu0
    %v4754 = vadd.f32 %v4693, %v4753
    %4755 = vmatmul.bf16.gmra.mxu0 %v4662
    %v4756 = vpop.f32.mrf.mxu0
    %v4757 = vadd.f32 %v4693, %v4756
    %v4758 = vpop.f32.mrf.mxu0
    %v4759 = vadd.f32 %v4693, %v4758
    %4760 = vmatmul.bf16.gmra.mxu0 %v4663
    %v4761 = vpop.f32.mrf.mxu0
    %v4762 = vadd.f32 %v4693, %v4761
    %v4763 = vpop.f32.mrf.mxu0
    %v4764 = vadd.f32 %v4693, %v4763
    %4765 = vmatmul.bf16.gmra.mxu0 %v4664
    %v4766 = vpop.f32.mrf.mxu0
    %v4767 = vadd.f32 %v4693, %v4766
    %v4768 = vpop.f32.mrf.mxu0
    %v4769 = vadd.f32 %v4693, %v4768
    %4770 = vmatmul.bf16.gmra.mxu0 %v4665
    %v4771 = vpop.f32.mrf.mxu0
    %v4772 = vadd.f32 %v4693, %v4771
    %v4773 = vpop.f32.mrf.mxu0
    %v4774 = vadd.f32 %v4693, %v4773
    %4775 = vmatmul.bf16.gmra.mxu0 %v4666
    %v4776 = vpop.f32.mrf.mxu0
    %v4777 = vadd.f32 %v4693, %v4776
    %v4778 = vpop.f32.mrf.mxu0
    %v4779 = vadd.f32 %v4693, %v4778
    %4780 = vmatmul.bf16.gmra.mxu0 %v4667
    %v4781 = vpop.f32.mrf.mxu0
    %v4782 = vadd.f32 %v4693, %v4781
    %v4783 = vpop.f32.mrf.mxu0
    %v4784 = vadd.f32 %v4693, %v4783
    %4785 = vmatmul.bf16.gmra.mxu0 %v4668
    %v4786 = vpop.f32.mrf.mxu0
    %v4787 = vadd.f32 %v4693, %v4786
    %v4788 = vpop.f32.mrf.mxu0
    %v4789 = vadd.f32 %v4693, %v4788
    %4790 = vmatmul.bf16.gmra.mxu0 %v4669
    %v4791 = vpop.f32.mrf.mxu0
    %v4792 = vadd.f32 %v4693, %v4791
    %v4793 = vpop.f32.mrf.mxu0
    %v4794 = vadd.f32 %v4693, %v4793
    %4795 = vmatmul.bf16.gmra.mxu0 %v4670
    %v4796 = vpop.f32.mrf.mxu0
    %v4797 = vadd.f32 %v4693, %v4796
    %v4798 = vpop.f32.mrf.mxu0
    %v4799 = vadd.f32 %v4693, %v4798
    %4800 = vmatmul.bf16.gmra.mxu0 %v4671
    %v4801 = vpop.f32.mrf.mxu0
    %v4802 = vadd.f32 %v4693, %v4801
    %v4803 = vpop.f32.mrf.mxu0
    %v4804 = vadd.f32 %v4693, %v4803
    %4805 = vmatmul.bf16.gmra.mxu0 %v4672
    %v4806 = vpop.f32.mrf.mxu0
    %v4807 = vadd.f32 %v4693, %v4806
    %v4808 = vpop.f32.mrf.mxu0
    %v4809 = vadd.f32 %v4693, %v4808
    %4810 = vmatmul.bf16.gmra.mxu0 %v4673
    %v4811 = vpop.f32.mrf.mxu0
    %v4812 = vadd.f32 %v4693, %v4811
    %v4813 = vpop.f32.mrf.mxu0
    %v4814 = vadd.f32 %v4693, %v4813
    %4815 = vmatmul.bf16.gmra.mxu0 %v4674
    %v4816 = vpop.f32.mrf.mxu0
    %v4817 = vadd.f32 %v4693, %v4816
    %v4818 = vpop.f32.mrf.mxu0
    %v4819 = vadd.f32 %v4693, %v4818
    %4820 = vmatmul.bf16.gmra.mxu0 %v4675
    %v4821 = vpop.f32.mrf.mxu0
    %v4822 = vadd.f32 %v4693, %v4821
    %v4823 = vpop.f32.mrf.mxu0
    %v4824 = vadd.f32 %v4693, %v4823
    %4825 = vmatmul.bf16.gmra.mxu0 %v4676
    %v4826 = vpop.f32.mrf.mxu0
    %v4827 = vadd.f32 %v4693, %v4826
    %v4828 = vpop.f32.mrf.mxu0
    %v4829 = vadd.f32 %v4693, %v4828
    %4830 = vdwg.mxu0
    %v4831 = vpack.c.bf16 %v4754, %v4752
    %v4832 = vpack.c.bf16 %v4759, %v4757
    %v4833 = vpack.c.bf16 %v4764, %v4762
    %v4834 = vpack.c.bf16 %v4769, %v4767
    %v4835 = vpack.c.bf16 %v4774, %v4772
    %v4836 = vpack.c.bf16 %v4779, %v4777
    %v4837 = vpack.c.bf16 %v4784, %v4782
    %v4838 = vpack.c.bf16 %v4789, %v4787
    %v4839 = vpack.c.bf16 %v4794, %v4792
    %v4840 = vpack.c.bf16 %v4799, %v4797
    %v4841 = vpack.c.bf16 %v4804, %v4802
    %v4842 = vpack.c.bf16 %v4809, %v4807
    %v4843 = vpack.c.bf16 %v4814, %v4812
    %v4844 = vpack.c.bf16 %v4819, %v4817
    %v4845 = vpack.c.bf16 %v4824, %v4822
    %v4846 = vpack.c.bf16 %v4829, %v4827
    %v4847 = vld [vmem:[#allocation10] sm:$0xf]
    %v4848 = vld [vmem:[#allocation10 + $0x4] sm:$0xf]
    %v4849 = vld [vmem:[#allocation10 + $0x8] sm:$0xf]
    %v4850 = vld [vmem:[#allocation10 + $0xc] sm:$0xf]
    %v4851 = vld [vmem:[#allocation10 + $0x10] sm:$0xf]
    %v4852 = vld [vmem:[#allocation10 + $0x14] sm:$0xf]
    %v4853 = vld [vmem:[#allocation10 + $0x18] sm:$0xf]
    %v4854 = vld [vmem:[#allocation10 + $0x1c] sm:$0xf]
    %v4855 = vld [vmem:[#allocation10 + $0x20] sm:$0xf]
    %v4856 = vld [vmem:[#allocation10 + $0x24] sm:$0xf]
    %v4857 = vld [vmem:[#allocation10 + $0x28] sm:$0xf]
    %v4858 = vld [vmem:[#allocation10 + $0x2c] sm:$0xf]
    %v4859 = vld [vmem:[#allocation10 + $0x30] sm:$0xf]
    %v4860 = vld [vmem:[#allocation10 + $0x34] sm:$0xf]
    %v4861 = vld [vmem:[#allocation10 + $0x38] sm:$0xf]
    %v4862 = vld [vmem:[#allocation10 + $0x3c] sm:$0xf]
    %v4879 = vunpack.c.l.b16 %v4847
    %v4880 = vunpack.c.l.b16 %v4848
    %v4881 = vunpack.c.l.b16 %v4849
    %v4882 = vunpack.c.l.b16 %v4850
    %v4883 = vunpack.c.l.b16 %v4851
    %v4884 = vunpack.c.l.b16 %v4852
    %v4885 = vunpack.c.l.b16 %v4853
    %v4886 = vunpack.c.l.b16 %v4854
    %v4887 = vunpack.c.l.b16 %v4855
    %v4888 = vunpack.c.l.b16 %v4856
    %v4889 = vunpack.c.l.b16 %v4857
    %v4890 = vunpack.c.l.b16 %v4858
    %v4891 = vunpack.c.l.b16 %v4859
    %v4892 = vunpack.c.l.b16 %v4860
    %v4893 = vunpack.c.l.b16 %v4861
    %v4894 = vunpack.c.l.b16 %v4862
    %v4895 = vpack.c.b16 %v4880, %v4879
    %v4896 = vpack.c.b16 %v4882, %v4881
    %v4897 = vpack.c.b16 %v4884, %v4883
    %v4898 = vpack.c.b16 %v4886, %v4885
    %v4899 = vpack.c.b16 %v4888, %v4887
    %v4900 = vpack.c.b16 %v4890, %v4889
    %v4901 = vpack.c.b16 %v4892, %v4891
    %v4902 = vpack.c.b16 %v4894, %v4893
    %4911 = vmatpush.bf16.msra.mxu0 %v4902
    %4912 = vmatpush.bf16.msra.mxu0 %v4901
    %4913 = vmatpush.bf16.msra.mxu0 %v4900
    %4914 = vmatpush.bf16.msra.mxu0 %v4899
    %4915 = vmatpush.bf16.msra.mxu0 %v4898
    %4916 = vmatpush.bf16.msra.mxu0 %v4897
    %4917 = vmatpush.bf16.msra.mxu0 %v4896
    %4918 = vmatpush.bf16.msra.mxu0 %v4895
    %4919 = vmatmul.bf16.gmra.mxu0 %v4831
    %v4920 = vpop.f32.mrf.mxu0
    %v4921 = vadd.f32 0.0, %v4920
    %v4922 = vpop.f32.mrf.mxu0
    %v4923 = vadd.f32 0.0, %v4922
    %4924 = vmatmul.bf16.gmra.mxu0 %v4832
    %v4925 = vpop.f32.mrf.mxu0
    %v4926 = vadd.f32 0.0, %v4925
    %v4927 = vpop.f32.mrf.mxu0
    %v4928 = vadd.f32 0.0, %v4927
    %4929 = vmatmul.bf16.gmra.mxu0 %v4833
    %v4930 = vpop.f32.mrf.mxu0
    %v4931 = vadd.f32 0.0, %v4930
    %v4932 = vpop.f32.mrf.mxu0
    %v4933 = vadd.f32 0.0, %v4932
    %4934 = vmatmul.bf16.gmra.mxu0 %v4834
    %v4935 = vpop.f32.mrf.mxu0
    %v4936 = vadd.f32 0.0, %v4935
    %v4937 = vpop.f32.mrf.mxu0
    %v4938 = vadd.f32 0.0, %v4937
    %4939 = vmatmul.bf16.gmra.mxu0 %v4835
    %v4940 = vpop.f32.mrf.mxu0
    %v4941 = vadd.f32 0.0, %v4940
    %v4942 = vpop.f32.mrf.mxu0
    %v4943 = vadd.f32 0.0, %v4942
    %4944 = vmatmul.bf16.gmra.mxu0 %v4836
    %v4945 = vpop.f32.mrf.mxu0
    %v4946 = vadd.f32 0.0, %v4945
    %v4947 = vpop.f32.mrf.mxu0
    %v4948 = vadd.f32 0.0, %v4947
    %4949 = vmatmul.bf16.gmra.mxu0 %v4837
    %v4950 = vpop.f32.mrf.mxu0
    %v4951 = vadd.f32 0.0, %v4950
    %v4952 = vpop.f32.mrf.mxu0
    %v4953 = vadd.f32 0.0, %v4952
    %4954 = vmatmul.bf16.gmra.mxu0 %v4838
    %v4955 = vpop.f32.mrf.mxu0
    %v4956 = vadd.f32 0.0, %v4955
    %v4957 = vpop.f32.mrf.mxu0
    %v4958 = vadd.f32 0.0, %v4957
    %4959 = vmatmul.bf16.gmra.mxu0 %v4839
    %v4960 = vpop.f32.mrf.mxu0
    %v4961 = vadd.f32 0.0, %v4960
    %v4962 = vpop.f32.mrf.mxu0
    %v4963 = vadd.f32 0.0, %v4962
    %4964 = vmatmul.bf16.gmra.mxu0 %v4840
    %v4965 = vpop.f32.mrf.mxu0
    %v4966 = vadd.f32 0.0, %v4965
    %v4967 = vpop.f32.mrf.mxu0
    %v4968 = vadd.f32 0.0, %v4967
    %4969 = vmatmul.bf16.gmra.mxu0 %v4841
    %v4970 = vpop.f32.mrf.mxu0
    %v4971 = vadd.f32 0.0, %v4970
    %v4972 = vpop.f32.mrf.mxu0
    %v4973 = vadd.f32 0.0, %v4972
    %4974 = vmatmul.bf16.gmra.mxu0 %v4842
    %v4975 = vpop.f32.mrf.mxu0
    %v4976 = vadd.f32 0.0, %v4975
    %v4977 = vpop.f32.mrf.mxu0
    %v4978 = vadd.f32 0.0, %v4977
    %4979 = vmatmul.bf16.gmra.mxu0 %v4843
    %v4980 = vpop.f32.mrf.mxu0
    %v4981 = vadd.f32 0.0, %v4980
    %v4982 = vpop.f32.mrf.mxu0
    %v4983 = vadd.f32 0.0, %v4982
    %4984 = vmatmul.bf16.gmra.mxu0 %v4844
    %v4985 = vpop.f32.mrf.mxu0
    %v4986 = vadd.f32 0.0, %v4985
    %v4987 = vpop.f32.mrf.mxu0
    %v4988 = vadd.f32 0.0, %v4987
    %4989 = vmatmul.bf16.gmra.mxu0 %v4845
    %v4990 = vpop.f32.mrf.mxu0
    %v4991 = vadd.f32 0.0, %v4990
    %v4992 = vpop.f32.mrf.mxu0
    %v4993 = vadd.f32 0.0, %v4992
    %4994 = vmatmul.bf16.gmra.mxu0 %v4846
    %v4995 = vpop.f32.mrf.mxu0
    %v4996 = vadd.f32 0.0, %v4995
    %v4997 = vpop.f32.mrf.mxu0
    %v4998 = vadd.f32 0.0, %v4997
    %4999 = vdwg.mxu0
    %v5000 = vadd.f32 %v4921, %v4923
    %v5001 = vadd.f32 %v5000, %v4926
    %v5002 = vadd.f32 %v5001, %v4928
    %v5003 = vadd.f32 %v5002, %v4931
    %v5004 = vadd.f32 %v5003, %v4933
    %v5005 = vadd.f32 %v5004, %v4936
    %v5006 = vadd.f32 %v5005, %v4938
    %v5007 = vadd.f32 %v5006, %v4941
    %v5008 = vadd.f32 %v5007, %v4943
    %v5009 = vadd.f32 %v5008, %v4946
    %v5010 = vadd.f32 %v5009, %v4948
    %v5011 = vadd.f32 %v5010, %v4951
    %v5012 = vadd.f32 %v5011, %v4953
    %v5013 = vadd.f32 %v5012, %v4956
    %v5014 = vadd.f32 %v5013, %v4958
    %v5015 = vadd.f32 %v5014, %v4961
    %v5016 = vadd.f32 %v5015, %v4963
    %v5017 = vadd.f32 %v5016, %v4966
    %v5018 = vadd.f32 %v5017, %v4968
    %v5019 = vadd.f32 %v5018, %v4971
    %v5020 = vadd.f32 %v5019, %v4973
    %v5021 = vadd.f32 %v5020, %v4976
    %v5022 = vadd.f32 %v5021, %v4978
    %v5023 = vadd.f32 %v5022, %v4981
    %v5024 = vadd.f32 %v5023, %v4983
    %v5025 = vadd.f32 %v5024, %v4986
    %v5026 = vadd.f32 %v5025, %v4988
    %v5027 = vadd.f32 %v5026, %v4991
    %v5028 = vadd.f32 %v5027, %v4993
    %v5029 = vadd.f32 %v5028, %v4996
    %v5030 = vadd.f32 %v5029, %v4998
    %v5031 = vrot.slane %v5030, 4
    %v5032 = vadd.f32 %v5030, %v5031
    %v5033 = vrot.slane %v5032, 2
    %v5034 = vadd.f32 %v5032, %v5033
    %v5035 = vrot.slane %v5034, 1
    %v5036 = vadd.f32 %v5034, %v5035
    %v5037 = vmul.f32 %v5036, 0.00390625
    %v5038 = vmul.f32 %v4921, %v4921
    %v5039 = vmul.f32 %v4923, %v4923
    %v5040 = vmul.f32 %v4926, %v4926
    %v5041 = vmul.f32 %v4928, %v4928
    %v5042 = vmul.f32 %v4931, %v4931
    %v5043 = vmul.f32 %v4933, %v4933
    %v5044 = vmul.f32 %v4936, %v4936
    %v5045 = vmul.f32 %v4938, %v4938
    %v5046 = vmul.f32 %v4941, %v4941
    %v5047 = vmul.f32 %v4943, %v4943
    %v5048 = vmul.f32 %v4946, %v4946
    %v5049 = vmul.f32 %v4948, %v4948
    %v5050 = vmul.f32 %v4951, %v4951
    %v5051 = vmul.f32 %v4953, %v4953
    %v5052 = vmul.f32 %v4956, %v4956
    %v5053 = vmul.f32 %v4958, %v4958
    %v5054 = vmul.f32 %v4961, %v4961
    %v5055 = vmul.f32 %v4963, %v4963
    %v5056 = vmul.f32 %v4966, %v4966
    %v5057 = vmul.f32 %v4968, %v4968
    %v5058 = vmul.f32 %v4971, %v4971
    %v5059 = vmul.f32 %v4973, %v4973
    %v5060 = vmul.f32 %v4976, %v4976
    %v5061 = vmul.f32 %v4978, %v4978
    %v5062 = vmul.f32 %v4981, %v4981
    %v5063 = vmul.f32 %v4983, %v4983
    %v5064 = vmul.f32 %v4986, %v4986
    %v5065 = vmul.f32 %v4988, %v4988
    %v5066 = vmul.f32 %v4991, %v4991
    %v5067 = vmul.f32 %v4993, %v4993
    %v5068 = vmul.f32 %v4996, %v4996
    %v5069 = vmul.f32 %v4998, %v4998
    %v5070 = vadd.f32 %v5038, %v5039
    %v5071 = vadd.f32 %v5070, %v5040
    %v5072 = vadd.f32 %v5071, %v5041
    %v5073 = vadd.f32 %v5072, %v5042
    %v5074 = vadd.f32 %v5073, %v5043
    %v5075 = vadd.f32 %v5074, %v5044
    %v5076 = vadd.f32 %v5075, %v5045
    %v5077 = vadd.f32 %v5076, %v5046
    %v5078 = vadd.f32 %v5077, %v5047
    %v5079 = vadd.f32 %v5078, %v5048
    %v5080 = vadd.f32 %v5079, %v5049
    %v5081 = vadd.f32 %v5080, %v5050
    %v5082 = vadd.f32 %v5081, %v5051
    %v5083 = vadd.f32 %v5082, %v5052
    %v5084 = vadd.f32 %v5083, %v5053
    %v5085 = vadd.f32 %v5084, %v5054
    %v5086 = vadd.f32 %v5085, %v5055
    %v5087 = vadd.f32 %v5086, %v5056
    %v5088 = vadd.f32 %v5087, %v5057
    %v5089 = vadd.f32 %v5088, %v5058
    %v5090 = vadd.f32 %v5089, %v5059
    %v5091 = vadd.f32 %v5090, %v5060
    %v5092 = vadd.f32 %v5091, %v5061
    %v5093 = vadd.f32 %v5092, %v5062
    %v5094 = vadd.f32 %v5093, %v5063
    %v5095 = vadd.f32 %v5094, %v5064
    %v5096 = vadd.f32 %v5095, %v5065
    %v5097 = vadd.f32 %v5096, %v5066
    %v5098 = vadd.f32 %v5097, %v5067
    %v5099 = vadd.f32 %v5098, %v5068
    %v5100 = vadd.f32 %v5099, %v5069
    %v5101 = vrot.slane %v5100, 4
    %v5102 = vadd.f32 %v5100, %v5101
    %v5103 = vrot.slane %v5102, 2
    %v5104 = vadd.f32 %v5102, %v5103
    %v5105 = vrot.slane %v5104, 1
    %v5106 = vadd.f32 %v5104, %v5105
    %v5107 = vmul.f32 %v5106, 0.00390625
    %v5108 = vmul.f32 %v5037, %v5037
    %v5109 = vsub.f32 %v5107, %v5108
    %v5110 = vmax.f32 %v5109, 0.0
    %v5111 = vld [vmem:[#allocation11 + $0x7] ss:$0 sm:$0xff]
    %v5112 = vadd.f32 %v5110, 1e-05
    %v5113 = vrsqrt.pop %v5112
    %v5114 = vmul.f32 %v5113, %v5112
    %v5115 = vmul.f32 %v5114, %v5113
    %v5116 = vmul.f32 0.5, %v5115
    %v5117 = vsub.f32 1.5, %v5116
    %v5118 = vmul.f32 %v5113, %v5117
    %vm5119 = vweird.f32 %v5112
    %vm5120 = vweird.f32 %v5113
    %vm5121 = vmor %vm5119, %vm5120
    %v5122 = vsel %vm5121, %v5113, %v5118
    %v5123 = vmul.f32 %v5111, %v5122
    %v5124 = vld [vmem:[#allocation11 + $0x20] ss:$0 sm:$0xff]
    %v5125 = vmul.f32 %v5037, %v5123
    %v5126 = vsub.f32 %v5124, %v5125
    %v5127 = vmul.f32 %v4921, %v5123
    %v5128 = vmul.f32 %v4923, %v5123
    %v5129 = vmul.f32 %v4926, %v5123
    %v5130 = vmul.f32 %v4928, %v5123
    %v5131 = vmul.f32 %v4931, %v5123
    %v5132 = vmul.f32 %v4933, %v5123
    %v5133 = vmul.f32 %v4936, %v5123
    %v5134 = vmul.f32 %v4938, %v5123
    %v5135 = vmul.f32 %v4941, %v5123
    %v5136 = vmul.f32 %v4943, %v5123
    %v5137 = vmul.f32 %v4946, %v5123
    %v5138 = vmul.f32 %v4948, %v5123
    %v5139 = vmul.f32 %v4951, %v5123
    %v5140 = vmul.f32 %v4953, %v5123
    %v5141 = vmul.f32 %v4956, %v5123
    %v5142 = vmul.f32 %v4958, %v5123
    %v5143 = vmul.f32 %v4961, %v5123
    %v5144 = vmul.f32 %v4963, %v5123
    %v5145 = vmul.f32 %v4966, %v5123
    %v5146 = vmul.f32 %v4968, %v5123
    %v5147 = vmul.f32 %v4971, %v5123
    %v5148 = vmul.f32 %v4973, %v5123
    %v5149 = vmul.f32 %v4976, %v5123
    %v5150 = vmul.f32 %v4978, %v5123
    %v5151 = vmul.f32 %v4981, %v5123
    %v5152 = vmul.f32 %v4983, %v5123
    %v5153 = vmul.f32 %v4986, %v5123
    %v5154 = vmul.f32 %v4988, %v5123
    %v5155 = vmul.f32 %v4991, %v5123
    %v5156 = vmul.f32 %v4993, %v5123
    %v5157 = vmul.f32 %v4996, %v5123
    %v5158 = vmul.f32 %v4998, %v5123
    %v5159 = vadd.f32 %v5127, %v5126
    %v5160 = vadd.f32 %v5128, %v5126
    %v5161 = vadd.f32 %v5129, %v5126
    %v5162 = vadd.f32 %v5130, %v5126
    %v5163 = vadd.f32 %v5131, %v5126
    %v5164 = vadd.f32 %v5132, %v5126
    %v5165 = vadd.f32 %v5133, %v5126
    %v5166 = vadd.f32 %v5134, %v5126
    %v5167 = vadd.f32 %v5135, %v5126
    %v5168 = vadd.f32 %v5136, %v5126
    %v5169 = vadd.f32 %v5137, %v5126
    %v5170 = vadd.f32 %v5138, %v5126
    %v5171 = vadd.f32 %v5139, %v5126
    %v5172 = vadd.f32 %v5140, %v5126
    %v5173 = vadd.f32 %v5141, %v5126
    %v5174 = vadd.f32 %v5142, %v5126
    %v5175 = vadd.f32 %v5143, %v5126
    %v5176 = vadd.f32 %v5144, %v5126
    %v5177 = vadd.f32 %v5145, %v5126
    %v5178 = vadd.f32 %v5146, %v5126
    %v5179 = vadd.f32 %v5147, %v5126
    %v5180 = vadd.f32 %v5148, %v5126
    %v5181 = vadd.f32 %v5149, %v5126
    %v5182 = vadd.f32 %v5150, %v5126
    %v5183 = vadd.f32 %v5151, %v5126
    %v5184 = vadd.f32 %v5152, %v5126
    %v5185 = vadd.f32 %v5153, %v5126
    %v5186 = vadd.f32 %v5154, %v5126
    %v5187 = vadd.f32 %v5155, %v5126
    %v5188 = vadd.f32 %v5156, %v5126
    %v5189 = vadd.f32 %v5157, %v5126
    %v5190 = vadd.f32 %v5158, %v5126
    %v5191 = vmax.f32 %v5159, 0.0
    %v5192 = vmax.f32 %v5160, 0.0
    %v5193 = vmax.f32 %v5161, 0.0
    %v5194 = vmax.f32 %v5162, 0.0
    %v5195 = vmax.f32 %v5163, 0.0
    %v5196 = vmax.f32 %v5164, 0.0
    %v5197 = vmax.f32 %v5165, 0.0
    %v5198 = vmax.f32 %v5166, 0.0
    %v5199 = vmax.f32 %v5167, 0.0
    %v5200 = vmax.f32 %v5168, 0.0
    %v5201 = vmax.f32 %v5169, 0.0
    %v5202 = vmax.f32 %v5170, 0.0
    %v5203 = vmax.f32 %v5171, 0.0
    %v5204 = vmax.f32 %v5172, 0.0
    %v5205 = vmax.f32 %v5173, 0.0
    %v5206 = vmax.f32 %v5174, 0.0
    %v5207 = vmax.f32 %v5175, 0.0
    %v5208 = vmax.f32 %v5176, 0.0
    %v5209 = vmax.f32 %v5177, 0.0
    %v5210 = vmax.f32 %v5178, 0.0
    %v5211 = vmax.f32 %v5179, 0.0
    %v5212 = vmax.f32 %v5180, 0.0
    %v5213 = vmax.f32 %v5181, 0.0
    %v5214 = vmax.f32 %v5182, 0.0
    %v5215 = vmax.f32 %v5183, 0.0
    %v5216 = vmax.f32 %v5184, 0.0
    %v5217 = vmax.f32 %v5185, 0.0
    %v5218 = vmax.f32 %v5186, 0.0
    %v5219 = vmax.f32 %v5187, 0.0
    %v5220 = vmax.f32 %v5188, 0.0
    %v5221 = vmax.f32 %v5189, 0.0
    %v5222 = vmax.f32 %v5190, 0.0
    %v5223 = vpack.c.bf16 %v5192, %v5191
    %v5224 = vpack.c.bf16 %v5194, %v5193
    %v5225 = vpack.c.bf16 %v5196, %v5195
    %v5226 = vpack.c.bf16 %v5198, %v5197
    %v5227 = vpack.c.bf16 %v5200, %v5199
    %v5228 = vpack.c.bf16 %v5202, %v5201
    %v5229 = vpack.c.bf16 %v5204, %v5203
    %v5230 = vpack.c.bf16 %v5206, %v5205
    %v5231 = vpack.c.bf16 %v5208, %v5207
    %v5232 = vpack.c.bf16 %v5210, %v5209
    %v5233 = vpack.c.bf16 %v5212, %v5211
    %v5234 = vpack.c.bf16 %v5214, %v5213
    %v5235 = vpack.c.bf16 %v5216, %v5215
    %v5236 = vpack.c.bf16 %v5218, %v5217
    %v5237 = vpack.c.bf16 %v5220, %v5219
    %v5238 = vpack.c.bf16 %v5222, %v5221
    %s5239 = smul.u32 4, 16
    %s5240 = smul.u32 %s5239, 2
    %s5241 = sshll.u32 %s5240, 4
    %5242 = dma.done [#allocation5], %s5241
    %v5243 = vld [vmem:[#allocation2] sm:$0xff]
    %v5244 = vld [vmem:[#allocation2 + $0x8] sm:$0xff]
    %v5245 = vld [vmem:[#allocation2 + $0x10] sm:$0xff]
    %v5246 = vld [vmem:[#allocation2 + $0x18] sm:$0xff]
    %v5247 = vld [vmem:[#allocation2 + $0x20] sm:$0xff]
    %v5248 = vld [vmem:[#allocation2 + $0x28] sm:$0xff]
    %v5249 = vld [vmem:[#allocation2 + $0x30] sm:$0xff]
    %v5250 = vld [vmem:[#allocation2 + $0x38] sm:$0xff]
    %v5251 = vld [vmem:[#allocation2 + $0x40] sm:$0xff]
    %v5252 = vld [vmem:[#allocation2 + $0x48] sm:$0xff]
    %v5253 = vld [vmem:[#allocation2 + $0x50] sm:$0xff]
    %v5254 = vld [vmem:[#allocation2 + $0x58] sm:$0xff]
    %v5255 = vld [vmem:[#allocation2 + $0x60] sm:$0xff]
    %v5256 = vld [vmem:[#allocation2 + $0x68] sm:$0xff]
    %v5257 = vld [vmem:[#allocation2 + $0x70] sm:$0xff]
    %v5258 = vld [vmem:[#allocation2 + $0x78] sm:$0xff]
    %v5275 = vunpack.c.l.b16 %v5243
    %v5276 = vunpack.c.h.b16 %v5243
    %v5277 = vunpack.c.l.b16 %v5244
    %v5278 = vunpack.c.h.b16 %v5244
    %v5279 = vunpack.c.l.b16 %v5245
    %v5280 = vunpack.c.h.b16 %v5245
    %v5281 = vunpack.c.l.b16 %v5246
    %v5282 = vunpack.c.h.b16 %v5246
    %v5283 = vunpack.c.l.b16 %v5247
    %v5284 = vunpack.c.h.b16 %v5247
    %v5285 = vunpack.c.l.b16 %v5248
    %v5286 = vunpack.c.h.b16 %v5248
    %v5287 = vunpack.c.l.b16 %v5249
    %v5288 = vunpack.c.h.b16 %v5249
    %v5289 = vunpack.c.l.b16 %v5250
    %v5290 = vunpack.c.h.b16 %v5250
    %v5291 = vunpack.c.l.b16 %v5251
    %v5292 = vunpack.c.h.b16 %v5251
    %v5293 = vunpack.c.l.b16 %v5252
    %v5294 = vunpack.c.h.b16 %v5252
    %v5295 = vunpack.c.l.b16 %v5253
    %v5296 = vunpack.c.h.b16 %v5253
    %v5297 = vunpack.c.l.b16 %v5254
    %v5298 = vunpack.c.h.b16 %v5254
    %v5299 = vunpack.c.l.b16 %v5255
    %v5300 = vunpack.c.h.b16 %v5255
    %v5301 = vunpack.c.l.b16 %v5256
    %v5302 = vunpack.c.h.b16 %v5256
    %v5303 = vunpack.c.l.b16 %v5257
    %v5304 = vunpack.c.h.b16 %v5257
    %v5305 = vunpack.c.l.b16 %v5258
    %v5306 = vunpack.c.h.b16 %v5258
    %v5307 = vpack.c.b16 %v5277, %v5275
    %v5308 = vpack.c.b16 %v5278, %v5276
    %v5309 = vpack.c.b16 %v5281, %v5279
    %v5310 = vpack.c.b16 %v5282, %v5280
    %v5311 = vpack.c.b16 %v5285, %v5283
    %v5312 = vpack.c.b16 %v5286, %v5284
    %v5313 = vpack.c.b16 %v5289, %v5287
    %v5314 = vpack.c.b16 %v5290, %v5288
    %v5315 = vpack.c.b16 %v5293, %v5291
    %v5316 = vpack.c.b16 %v5294, %v5292
    %v5317 = vpack.c.b16 %v5297, %v5295
    %v5318 = vpack.c.b16 %v5298, %v5296
    %v5319 = vpack.c.b16 %v5301, %v5299
    %v5320 = vpack.c.b16 %v5302, %v5300
    %v5321 = vpack.c.b16 %v5305, %v5303
    %v5322 = vpack.c.b16 %v5306, %v5304
    %5339 = vmatpush.bf16.msra.mxu0 %v5321
    %5340 = vmatpush.bf16.msra.mxu0 %v5319
    %5341 = vmatpush.bf16.msra.mxu0 %v5317
    %5342 = vmatpush.bf16.msra.mxu0 %v5315
    %5343 = vmatpush.bf16.msra.mxu0 %v5313
    %5344 = vmatpush.bf16.msra.mxu0 %v5311
    %5345 = vmatpush.bf16.msra.mxu0 %v5309
    %5346 = vmatpush.bf16.msra.mxu0 %v5307
    %5347 = vmatmul.bf16.gmra.mxu0 %v5223
    %v5348 = vpop.f32.mrf.mxu0
    %v5349 = vadd.f32 0.0, %v5348
    %v5350 = vpop.f32.mrf.mxu0
    %v5351 = vadd.f32 0.0, %v5350
    %5352 = vmatmul.bf16.gmra.mxu0 %v5224
    %v5353 = vpop.f32.mrf.mxu0
    %v5354 = vadd.f32 0.0, %v5353
    %v5355 = vpop.f32.mrf.mxu0
    %v5356 = vadd.f32 0.0, %v5355
    %5357 = vmatmul.bf16.gmra.mxu0 %v5225
    %v5358 = vpop.f32.mrf.mxu0
    %v5359 = vadd.f32 0.0, %v5358
    %v5360 = vpop.f32.mrf.mxu0
    %v5361 = vadd.f32 0.0, %v5360
    %5362 = vmatmul.bf16.gmra.mxu0 %v5226
    %v5363 = vpop.f32.mrf.mxu0
    %v5364 = vadd.f32 0.0, %v5363
    %v5365 = vpop.f32.mrf.mxu0
    %v5366 = vadd.f32 0.0, %v5365
    %5367 = vmatmul.bf16.gmra.mxu0 %v5227
    %v5368 = vpop.f32.mrf.mxu0
    %v5369 = vadd.f32 0.0, %v5368
    %v5370 = vpop.f32.mrf.mxu0
    %v5371 = vadd.f32 0.0, %v5370
    %5372 = vmatmul.bf16.gmra.mxu0 %v5228
    %v5373 = vpop.f32.mrf.mxu0
    %v5374 = vadd.f32 0.0, %v5373
    %v5375 = vpop.f32.mrf.mxu0
    %v5376 = vadd.f32 0.0, %v5375
    %5377 = vmatmul.bf16.gmra.mxu0 %v5229
    %v5378 = vpop.f32.mrf.mxu0
    %v5379 = vadd.f32 0.0, %v5378
    %v5380 = vpop.f32.mrf.mxu0
    %v5381 = vadd.f32 0.0, %v5380
    %5382 = vmatmul.bf16.gmra.mxu0 %v5230
    %v5383 = vpop.f32.mrf.mxu0
    %v5384 = vadd.f32 0.0, %v5383
    %v5385 = vpop.f32.mrf.mxu0
    %v5386 = vadd.f32 0.0, %v5385
    %5387 = vmatmul.bf16.gmra.mxu0 %v5231
    %v5388 = vpop.f32.mrf.mxu0
    %v5389 = vadd.f32 0.0, %v5388
    %v5390 = vpop.f32.mrf.mxu0
    %v5391 = vadd.f32 0.0, %v5390
    %5392 = vmatmul.bf16.gmra.mxu0 %v5232
    %v5393 = vpop.f32.mrf.mxu0
    %v5394 = vadd.f32 0.0, %v5393
    %v5395 = vpop.f32.mrf.mxu0
    %v5396 = vadd.f32 0.0, %v5395
    %5397 = vmatmul.bf16.gmra.mxu0 %v5233
    %v5398 = vpop.f32.mrf.mxu0
    %v5399 = vadd.f32 0.0, %v5398
    %v5400 = vpop.f32.mrf.mxu0
    %v5401 = vadd.f32 0.0, %v5400
    %5402 = vmatmul.bf16.gmra.mxu0 %v5234
    %v5403 = vpop.f32.mrf.mxu0
    %v5404 = vadd.f32 0.0, %v5403
    %v5405 = vpop.f32.mrf.mxu0
    %v5406 = vadd.f32 0.0, %v5405
    %5407 = vmatmul.bf16.gmra.mxu0 %v5235
    %v5408 = vpop.f32.mrf.mxu0
    %v5409 = vadd.f32 0.0, %v5408
    %v5410 = vpop.f32.mrf.mxu0
    %v5411 = vadd.f32 0.0, %v5410
    %5412 = vmatmul.bf16.gmra.mxu0 %v5236
    %v5413 = vpop.f32.mrf.mxu0
    %v5414 = vadd.f32 0.0, %v5413
    %v5415 = vpop.f32.mrf.mxu0
    %v5416 = vadd.f32 0.0, %v5415
    %5417 = vmatmul.bf16.gmra.mxu0 %v5237
    %v5418 = vpop.f32.mrf.mxu0
    %v5419 = vadd.f32 0.0, %v5418
    %v5420 = vpop.f32.mrf.mxu0
    %v5421 = vadd.f32 0.0, %v5420
    %5422 = vmatmul.bf16.gmra.mxu0 %v5238
    %v5423 = vpop.f32.mrf.mxu0
    %v5424 = vadd.f32 0.0, %v5423
    %v5425 = vpop.f32.mrf.mxu0
    %v5426 = vadd.f32 0.0, %v5425
    %5427 = vdwg.mxu0
    %5428 = vmatpush.bf16.msra.mxu0 %v5322
    %5429 = vmatpush.bf16.msra.mxu0 %v5320
    %5430 = vmatpush.bf16.msra.mxu0 %v5318
    %5431 = vmatpush.bf16.msra.mxu0 %v5316
    %5432 = vmatpush.bf16.msra.mxu0 %v5314
    %5433 = vmatpush.bf16.msra.mxu0 %v5312
    %5434 = vmatpush.bf16.msra.mxu0 %v5310
    %5435 = vmatpush.bf16.msra.mxu0 %v5308
    %5436 = vmatmul.bf16.gmra.mxu0 %v5223
    %v5437 = vpop.f32.mrf.mxu0
    %v5438 = vadd.f32 0.0, %v5437
    %v5439 = vpop.f32.mrf.mxu0
    %v5440 = vadd.f32 0.0, %v5439
    %5441 = vmatmul.bf16.gmra.mxu0 %v5224
    %v5442 = vpop.f32.mrf.mxu0
    %v5443 = vadd.f32 0.0, %v5442
    %v5444 = vpop.f32.mrf.mxu0
    %v5445 = vadd.f32 0.0, %v5444
    %5446 = vmatmul.bf16.gmra.mxu0 %v5225
    %v5447 = vpop.f32.mrf.mxu0
    %v5448 = vadd.f32 0.0, %v5447
    %v5449 = vpop.f32.mrf.mxu0
    %v5450 = vadd.f32 0.0, %v5449
    %5451 = vmatmul.bf16.gmra.mxu0 %v5226
    %v5452 = vpop.f32.mrf.mxu0
    %v5453 = vadd.f32 0.0, %v5452
    %v5454 = vpop.f32.mrf.mxu0
    %v5455 = vadd.f32 0.0, %v5454
    %5456 = vmatmul.bf16.gmra.mxu0 %v5227
    %v5457 = vpop.f32.mrf.mxu0
    %v5458 = vadd.f32 0.0, %v5457
    %v5459 = vpop.f32.mrf.mxu0
    %v5460 = vadd.f32 0.0, %v5459
    %5461 = vmatmul.bf16.gmra.mxu0 %v5228
    %v5462 = vpop.f32.mrf.mxu0
    %v5463 = vadd.f32 0.0, %v5462
    %v5464 = vpop.f32.mrf.mxu0
    %v5465 = vadd.f32 0.0, %v5464
    %5466 = vmatmul.bf16.gmra.mxu0 %v5229
    %v5467 = vpop.f32.mrf.mxu0
    %v5468 = vadd.f32 0.0, %v5467
    %v5469 = vpop.f32.mrf.mxu0
    %v5470 = vadd.f32 0.0, %v5469
    %5471 = vmatmul.bf16.gmra.mxu0 %v5230
    %v5472 = vpop.f32.mrf.mxu0
    %v5473 = vadd.f32 0.0, %v5472
    %v5474 = vpop.f32.mrf.mxu0
    %v5475 = vadd.f32 0.0, %v5474
    %5476 = vmatmul.bf16.gmra.mxu0 %v5231
    %v5477 = vpop.f32.mrf.mxu0
    %v5478 = vadd.f32 0.0, %v5477
    %v5479 = vpop.f32.mrf.mxu0
    %v5480 = vadd.f32 0.0, %v5479
    %5481 = vmatmul.bf16.gmra.mxu0 %v5232
    %v5482 = vpop.f32.mrf.mxu0
    %v5483 = vadd.f32 0.0, %v5482
    %v5484 = vpop.f32.mrf.mxu0
    %v5485 = vadd.f32 0.0, %v5484
    %5486 = vmatmul.bf16.gmra.mxu0 %v5233
    %v5487 = vpop.f32.mrf.mxu0
    %v5488 = vadd.f32 0.0, %v5487
    %v5489 = vpop.f32.mrf.mxu0
    %v5490 = vadd.f32 0.0, %v5489
    %5491 = vmatmul.bf16.gmra.mxu0 %v5234
    %v5492 = vpop.f32.mrf.mxu0
    %v5493 = vadd.f32 0.0, %v5492
    %v5494 = vpop.f32.mrf.mxu0
    %v5495 = vadd.f32 0.0, %v5494
    %5496 = vmatmul.bf16.gmra.mxu0 %v5235
    %v5497 = vpop.f32.mrf.mxu0
    %v5498 = vadd.f32 0.0, %v5497
    %v5499 = vpop.f32.mrf.mxu0
    %v5500 = vadd.f32 0.0, %v5499
    %5501 = vmatmul.bf16.gmra.mxu0 %v5236
    %v5502 = vpop.f32.mrf.mxu0
    %v5503 = vadd.f32 0.0, %v5502
    %v5504 = vpop.f32.mrf.mxu0
    %v5505 = vadd.f32 0.0, %v5504
    %5506 = vmatmul.bf16.gmra.mxu0 %v5237
    %v5507 = vpop.f32.mrf.mxu0
    %v5508 = vadd.f32 0.0, %v5507
    %v5509 = vpop.f32.mrf.mxu0
    %v5510 = vadd.f32 0.0, %v5509
    %5511 = vmatmul.bf16.gmra.mxu0 %v5238
    %v5512 = vpop.f32.mrf.mxu0
    %v5513 = vadd.f32 0.0, %v5512
    %v5514 = vpop.f32.mrf.mxu0
    %v5515 = vadd.f32 0.0, %v5514
    %5516 = vdwg.mxu0
    %v5517 = vadd.f32 %v5349, %v5351
    %v5518 = vadd.f32 %v5517, %v5354
    %v5519 = vadd.f32 %v5518, %v5356
    %v5520 = vadd.f32 %v5519, %v5359
    %v5521 = vadd.f32 %v5520, %v5361
    %v5522 = vadd.f32 %v5521, %v5364
    %v5523 = vadd.f32 %v5522, %v5366
    %v5524 = vadd.f32 %v5523, %v5369
    %v5525 = vadd.f32 %v5524, %v5371
    %v5526 = vadd.f32 %v5525, %v5374
    %v5527 = vadd.f32 %v5526, %v5376
    %v5528 = vadd.f32 %v5527, %v5379
    %v5529 = vadd.f32 %v5528, %v5381
    %v5530 = vadd.f32 %v5529, %v5384
    %v5531 = vadd.f32 %v5530, %v5386
    %v5532 = vadd.f32 %v5531, %v5389
    %v5533 = vadd.f32 %v5532, %v5391
    %v5534 = vadd.f32 %v5533, %v5394
    %v5535 = vadd.f32 %v5534, %v5396
    %v5536 = vadd.f32 %v5535, %v5399
    %v5537 = vadd.f32 %v5536, %v5401
    %v5538 = vadd.f32 %v5537, %v5404
    %v5539 = vadd.f32 %v5538, %v5406
    %v5540 = vadd.f32 %v5539, %v5409
    %v5541 = vadd.f32 %v5540, %v5411
    %v5542 = vadd.f32 %v5541, %v5414
    %v5543 = vadd.f32 %v5542, %v5416
    %v5544 = vadd.f32 %v5543, %v5419
    %v5545 = vadd.f32 %v5544, %v5421
    %v5546 = vadd.f32 %v5545, %v5424
    %v5547 = vadd.f32 %v5546, %v5426
    %v5548 = vrot.slane %v5547, 4
    %v5549 = vadd.f32 %v5547, %v5548
    %v5550 = vrot.slane %v5549, 2
    %v5551 = vadd.f32 %v5549, %v5550
    %v5552 = vrot.slane %v5551, 1
    %v5553 = vadd.f32 %v5551, %v5552
    %v5554 = vadd.f32 %v5438, %v5440
    %v5555 = vadd.f32 %v5554, %v5443
    %v5556 = vadd.f32 %v5555, %v5445
    %v5557 = vadd.f32 %v5556, %v5448
    %v5558 = vadd.f32 %v5557, %v5450
    %v5559 = vadd.f32 %v5558, %v5453
    %v5560 = vadd.f32 %v5559, %v5455
    %v5561 = vadd.f32 %v5560, %v5458
    %v5562 = vadd.f32 %v5561, %v5460
    %v5563 = vadd.f32 %v5562, %v5463
    %v5564 = vadd.f32 %v5563, %v5465
    %v5565 = vadd.f32 %v5564, %v5468
    %v5566 = vadd.f32 %v5565, %v5470
    %v5567 = vadd.f32 %v5566, %v5473
    %v5568 = vadd.f32 %v5567, %v5475
    %v5569 = vadd.f32 %v5568, %v5478
    %v5570 = vadd.f32 %v5569, %v5480
    %v5571 = vadd.f32 %v5570, %v5483
    %v5572 = vadd.f32 %v5571, %v5485
    %v5573 = vadd.f32 %v5572, %v5488
    %v5574 = vadd.f32 %v5573, %v5490
    %v5575 = vadd.f32 %v5574, %v5493
    %v5576 = vadd.f32 %v5575, %v5495
    %v5577 = vadd.f32 %v5576, %v5498
    %v5578 = vadd.f32 %v5577, %v5500
    %v5579 = vadd.f32 %v5578, %v5503
    %v5580 = vadd.f32 %v5579, %v5505
    %v5581 = vadd.f32 %v5580, %v5508
    %v5582 = vadd.f32 %v5581, %v5510
    %v5583 = vadd.f32 %v5582, %v5513
    %v5584 = vadd.f32 %v5583, %v5515
    %v5585 = vrot.slane %v5584, 4
    %v5586 = vadd.f32 %v5584, %v5585
    %v5587 = vrot.slane %v5586, 2
    %v5588 = vadd.f32 %v5586, %v5587
    %v5589 = vrot.slane %v5588, 1
    %v5590 = vadd.f32 %v5588, %v5589
    %v5591 = vmul.f32 %v5553, 0.00390625
    %v5592 = vmul.f32 %v5590, 0.00390625
    %v5593 = vmul.f32 %v5349, %v5349
    %v5594 = vmul.f32 %v5438, %v5438
    %v5595 = vmul.f32 %v5351, %v5351
    %v5596 = vmul.f32 %v5440, %v5440
    %v5597 = vmul.f32 %v5354, %v5354
    %v5598 = vmul.f32 %v5443, %v5443
    %v5599 = vmul.f32 %v5356, %v5356
    %v5600 = vmul.f32 %v5445, %v5445
    %v5601 = vmul.f32 %v5359, %v5359
    %v5602 = vmul.f32 %v5448, %v5448
    %v5603 = vmul.f32 %v5361, %v5361
    %v5604 = vmul.f32 %v5450, %v5450
    %v5605 = vmul.f32 %v5364, %v5364
    %v5606 = vmul.f32 %v5453, %v5453
    %v5607 = vmul.f32 %v5366, %v5366
    %v5608 = vmul.f32 %v5455, %v5455
    %v5609 = vmul.f32 %v5369, %v5369
    %v5610 = vmul.f32 %v5458, %v5458
    %v5611 = vmul.f32 %v5371, %v5371
    %v5612 = vmul.f32 %v5460, %v5460
    %v5613 = vmul.f32 %v5374, %v5374
    %v5614 = vmul.f32 %v5463, %v5463
    %v5615 = vmul.f32 %v5376, %v5376
    %v5616 = vmul.f32 %v5465, %v5465
    %v5617 = vmul.f32 %v5379, %v5379
    %v5618 = vmul.f32 %v5468, %v5468
    %v5619 = vmul.f32 %v5381, %v5381
    %v5620 = vmul.f32 %v5470, %v5470
    %v5621 = vmul.f32 %v5384, %v5384
    %v5622 = vmul.f32 %v5473, %v5473
    %v5623 = vmul.f32 %v5386, %v5386
    %v5624 = vmul.f32 %v5475, %v5475
    %v5625 = vmul.f32 %v5389, %v5389
    %v5626 = vmul.f32 %v5478, %v5478
    %v5627 = vmul.f32 %v5391, %v5391
    %v5628 = vmul.f32 %v5480, %v5480
    %v5629 = vmul.f32 %v5394, %v5394
    %v5630 = vmul.f32 %v5483, %v5483
    %v5631 = vmul.f32 %v5396, %v5396
    %v5632 = vmul.f32 %v5485, %v5485
    %v5633 = vmul.f32 %v5399, %v5399
    %v5634 = vmul.f32 %v5488, %v5488
    %v5635 = vmul.f32 %v5401, %v5401
    %v5636 = vmul.f32 %v5490, %v5490
    %v5637 = vmul.f32 %v5404, %v5404
    %v5638 = vmul.f32 %v5493, %v5493
    %v5639 = vmul.f32 %v5406, %v5406
    %v5640 = vmul.f32 %v5495, %v5495
    %v5641 = vmul.f32 %v5409, %v5409
    %v5642 = vmul.f32 %v5498, %v5498
    %v5643 = vmul.f32 %v5411, %v5411
    %v5644 = vmul.f32 %v5500, %v5500
    %v5645 = vmul.f32 %v5414, %v5414
    %v5646 = vmul.f32 %v5503, %v5503
    %v5647 = vmul.f32 %v5416, %v5416
    %v5648 = vmul.f32 %v5505, %v5505
    %v5649 = vmul.f32 %v5419, %v5419
    %v5650 = vmul.f32 %v5508, %v5508
    %v5651 = vmul.f32 %v5421, %v5421
    %v5652 = vmul.f32 %v5510, %v5510
    %v5653 = vmul.f32 %v5424, %v5424
    %v5654 = vmul.f32 %v5513, %v5513
    %v5655 = vmul.f32 %v5426, %v5426
    %v5656 = vmul.f32 %v5515, %v5515
    %v5657 = vadd.f32 %v5593, %v5595
    %v5658 = vadd.f32 %v5657, %v5597
    %v5659 = vadd.f32 %v5658, %v5599
    %v5660 = vadd.f32 %v5659, %v5601
    %v5661 = vadd.f32 %v5660, %v5603
    %v5662 = vadd.f32 %v5661, %v5605
    %v5663 = vadd.f32 %v5662, %v5607
    %v5664 = vadd.f32 %v5663, %v5609
    %v5665 = vadd.f32 %v5664, %v5611
    %v5666 = vadd.f32 %v5665, %v5613
    %v5667 = vadd.f32 %v5666, %v5615
    %v5668 = vadd.f32 %v5667, %v5617
    %v5669 = vadd.f32 %v5668, %v5619
    %v5670 = vadd.f32 %v5669, %v5621
    %v5671 = vadd.f32 %v5670, %v5623
    %v5672 = vadd.f32 %v5671, %v5625
    %v5673 = vadd.f32 %v5672, %v5627
    %v5674 = vadd.f32 %v5673, %v5629
    %v5675 = vadd.f32 %v5674, %v5631
    %v5676 = vadd.f32 %v5675, %v5633
    %v5677 = vadd.f32 %v5676, %v5635
    %v5678 = vadd.f32 %v5677, %v5637
    %v5679 = vadd.f32 %v5678, %v5639
    %v5680 = vadd.f32 %v5679, %v5641
    %v5681 = vadd.f32 %v5680, %v5643
    %v5682 = vadd.f32 %v5681, %v5645
    %v5683 = vadd.f32 %v5682, %v5647
    %v5684 = vadd.f32 %v5683, %v5649
    %v5685 = vadd.f32 %v5684, %v5651
    %v5686 = vadd.f32 %v5685, %v5653
    %v5687 = vadd.f32 %v5686, %v5655
    %v5688 = vrot.slane %v5687, 4
    %v5689 = vadd.f32 %v5687, %v5688
    %v5690 = vrot.slane %v5689, 2
    %v5691 = vadd.f32 %v5689, %v5690
    %v5692 = vrot.slane %v5691, 1
    %v5693 = vadd.f32 %v5691, %v5692
    %v5694 = vadd.f32 %v5594, %v5596
    %v5695 = vadd.f32 %v5694, %v5598
    %v5696 = vadd.f32 %v5695, %v5600
    %v5697 = vadd.f32 %v5696, %v5602
    %v5698 = vadd.f32 %v5697, %v5604
    %v5699 = vadd.f32 %v5698, %v5606
    %v5700 = vadd.f32 %v5699, %v5608
    %v5701 = vadd.f32 %v5700, %v5610
    %v5702 = vadd.f32 %v5701, %v5612
    %v5703 = vadd.f32 %v5702, %v5614
    %v5704 = vadd.f32 %v5703, %v5616
    %v5705 = vadd.f32 %v5704, %v5618
    %v5706 = vadd.f32 %v5705, %v5620
    %v5707 = vadd.f32 %v5706, %v5622
    %v5708 = vadd.f32 %v5707, %v5624
    %v5709 = vadd.f32 %v5708, %v5626
    %v5710 = vadd.f32 %v5709, %v5628
    %v5711 = vadd.f32 %v5710, %v5630
    %v5712 = vadd.f32 %v5711, %v5632
    %v5713 = vadd.f32 %v5712, %v5634
    %v5714 = vadd.f32 %v5713, %v5636
    %v5715 = vadd.f32 %v5714, %v5638
    %v5716 = vadd.f32 %v5715, %v5640
    %v5717 = vadd.f32 %v5716, %v5642
    %v5718 = vadd.f32 %v5717, %v5644
    %v5719 = vadd.f32 %v5718, %v5646
    %v5720 = vadd.f32 %v5719, %v5648
    %v5721 = vadd.f32 %v5720, %v5650
    %v5722 = vadd.f32 %v5721, %v5652
    %v5723 = vadd.f32 %v5722, %v5654
    %v5724 = vadd.f32 %v5723, %v5656
    %v5725 = vrot.slane %v5724, 4
    %v5726 = vadd.f32 %v5724, %v5725
    %v5727 = vrot.slane %v5726, 2
    %v5728 = vadd.f32 %v5726, %v5727
    %v5729 = vrot.slane %v5728, 1
    %v5730 = vadd.f32 %v5728, %v5729
    %v5731 = vmul.f32 %v5693, 0.00390625
    %v5732 = vmul.f32 %v5730, 0.00390625
    %v5733 = vmul.f32 %v5591, %v5591
    %v5734 = vmul.f32 %v5592, %v5592
    %v5735 = vsub.f32 %v5731, %v5733
    %v5736 = vsub.f32 %v5732, %v5734
    %v5737 = vmax.f32 %v5735, 0.0
    %v5738 = vmax.f32 %v5736, 0.0
    %s5739 = scalar_lea.vmem [#allocation11], 33
    %v5740 = vld [vmem:[%s5739] ss:$8 sm:$0x3]
    %v5741 = vadd.f32 %v5737, 1e-05
    %v5742 = vadd.f32 %v5738, 1e-05
    %v5743 = vrsqrt.pop %v5741
    %v5744 = vmul.f32 %v5743, %v5741
    %v5745 = vmul.f32 %v5744, %v5743
    %v5746 = vmul.f32 0.5, %v5745
    %v5747 = vsub.f32 1.5, %v5746
    %v5748 = vmul.f32 %v5743, %v5747
    %vm5749 = vweird.f32 %v5741
    %vm5750 = vweird.f32 %v5743
    %vm5751 = vmor %vm5749, %vm5750
    %v5752 = vsel %vm5751, %v5743, %v5748
    %v5753 = vrsqrt.pop %v5742
    %v5754 = vmul.f32 %v5753, %v5742
    %v5755 = vmul.f32 %v5754, %v5753
    %v5756 = vmul.f32 0.5, %v5755
    %v5757 = vsub.f32 1.5, %v5756
    %v5758 = vmul.f32 %v5753, %v5757
    %vm5759 = vweird.f32 %v5742
    %vm5760 = vweird.f32 %v5753
    %vm5761 = vmor %vm5759, %vm5760
    %v5762 = vsel %vm5761, %v5753, %v5758
    %v5765 = vrot.slane %v5762, 7
    %v5766 = vsel %vm2048, %v5752, %v5765
    %v5768 = vmul.f32 %v5740, %v5766
    %s5769 = scalar_lea.vmem [#allocation11], 34
    %v5770 = vld [vmem:[%s5769] ss:$8 sm:$0x3]
    %v5772 = vperm.slane %v5768, 0
    %v5773 = vperm.slane %v5768, 1
    %v5776 = vmul.f32 %v5591, %v5772
    %v5777 = vmul.f32 %v5592, %v5773
    %v5780 = vrot.slane %v5777, 7
    %v5781 = vsel %vm2048, %v5776, %v5780
    %v5783 = vsub.f32 %v5770, %v5781
    %v5784 = vmul.f32 %v5349, %v5772
    %v5785 = vmul.f32 %v5438, %v5773
    %v5786 = vmul.f32 %v5351, %v5772
    %v5787 = vmul.f32 %v5440, %v5773
    %v5788 = vmul.f32 %v5354, %v5772
    %v5789 = vmul.f32 %v5443, %v5773
    %v5790 = vmul.f32 %v5356, %v5772
    %v5791 = vmul.f32 %v5445, %v5773
    %v5792 = vmul.f32 %v5359, %v5772
    %v5793 = vmul.f32 %v5448, %v5773
    %v5794 = vmul.f32 %v5361, %v5772
    %v5795 = vmul.f32 %v5450, %v5773
    %v5796 = vmul.f32 %v5364, %v5772
    %v5797 = vmul.f32 %v5453, %v5773
    %v5798 = vmul.f32 %v5366, %v5772
    %v5799 = vmul.f32 %v5455, %v5773
    %v5800 = vmul.f32 %v5369, %v5772
    %v5801 = vmul.f32 %v5458, %v5773
    %v5802 = vmul.f32 %v5371, %v5772
    %v5803 = vmul.f32 %v5460, %v5773
    %v5804 = vmul.f32 %v5374, %v5772
    %v5805 = vmul.f32 %v5463, %v5773
    %v5806 = vmul.f32 %v5376, %v5772
    %v5807 = vmul.f32 %v5465, %v5773
    %v5808 = vmul.f32 %v5379, %v5772
    %v5809 = vmul.f32 %v5468, %v5773
    %v5810 = vmul.f32 %v5381, %v5772
    %v5811 = vmul.f32 %v5470, %v5773
    %v5812 = vmul.f32 %v5384, %v5772
    %v5813 = vmul.f32 %v5473, %v5773
    %v5814 = vmul.f32 %v5386, %v5772
    %v5815 = vmul.f32 %v5475, %v5773
    %v5816 = vmul.f32 %v5389, %v5772
    %v5817 = vmul.f32 %v5478, %v5773
    %v5818 = vmul.f32 %v5391, %v5772
    %v5819 = vmul.f32 %v5480, %v5773
    %v5820 = vmul.f32 %v5394, %v5772
    %v5821 = vmul.f32 %v5483, %v5773
    %v5822 = vmul.f32 %v5396, %v5772
    %v5823 = vmul.f32 %v5485, %v5773
    %v5824 = vmul.f32 %v5399, %v5772
    %v5825 = vmul.f32 %v5488, %v5773
    %v5826 = vmul.f32 %v5401, %v5772
    %v5827 = vmul.f32 %v5490, %v5773
    %v5828 = vmul.f32 %v5404, %v5772
    %v5829 = vmul.f32 %v5493, %v5773
    %v5830 = vmul.f32 %v5406, %v5772
    %v5831 = vmul.f32 %v5495, %v5773
    %v5832 = vmul.f32 %v5409, %v5772
    %v5833 = vmul.f32 %v5498, %v5773
    %v5834 = vmul.f32 %v5411, %v5772
    %v5835 = vmul.f32 %v5500, %v5773
    %v5836 = vmul.f32 %v5414, %v5772
    %v5837 = vmul.f32 %v5503, %v5773
    %v5838 = vmul.f32 %v5416, %v5772
    %v5839 = vmul.f32 %v5505, %v5773
    %v5840 = vmul.f32 %v5419, %v5772
    %v5841 = vmul.f32 %v5508, %v5773
    %v5842 = vmul.f32 %v5421, %v5772
    %v5843 = vmul.f32 %v5510, %v5773
    %v5844 = vmul.f32 %v5424, %v5772
    %v5845 = vmul.f32 %v5513, %v5773
    %v5846 = vmul.f32 %v5426, %v5772
    %v5847 = vmul.f32 %v5515, %v5773
    %v5849 = vperm.slane %v5783, 0
    %v5850 = vperm.slane %v5783, 1
    %v5853 = vadd.f32 %v5784, %v5849
    %v5854 = vadd.f32 %v5785, %v5850
    %v5855 = vadd.f32 %v5786, %v5849
    %v5856 = vadd.f32 %v5787, %v5850
    %v5857 = vadd.f32 %v5788, %v5849
    %v5858 = vadd.f32 %v5789, %v5850
    %v5859 = vadd.f32 %v5790, %v5849
    %v5860 = vadd.f32 %v5791, %v5850
    %v5861 = vadd.f32 %v5792, %v5849
    %v5862 = vadd.f32 %v5793, %v5850
    %v5863 = vadd.f32 %v5794, %v5849
    %v5864 = vadd.f32 %v5795, %v5850
    %v5865 = vadd.f32 %v5796, %v5849
    %v5866 = vadd.f32 %v5797, %v5850
    %v5867 = vadd.f32 %v5798, %v5849
    %v5868 = vadd.f32 %v5799, %v5850
    %v5869 = vadd.f32 %v5800, %v5849
    %v5870 = vadd.f32 %v5801, %v5850
    %v5871 = vadd.f32 %v5802, %v5849
    %v5872 = vadd.f32 %v5803, %v5850
    %v5873 = vadd.f32 %v5804, %v5849
    %v5874 = vadd.f32 %v5805, %v5850
    %v5875 = vadd.f32 %v5806, %v5849
    %v5876 = vadd.f32 %v5807, %v5850
    %v5877 = vadd.f32 %v5808, %v5849
    %v5878 = vadd.f32 %v5809, %v5850
    %v5879 = vadd.f32 %v5810, %v5849
    %v5880 = vadd.f32 %v5811, %v5850
    %v5881 = vadd.f32 %v5812, %v5849
    %v5882 = vadd.f32 %v5813, %v5850
    %v5883 = vadd.f32 %v5814, %v5849
    %v5884 = vadd.f32 %v5815, %v5850
    %v5885 = vadd.f32 %v5816, %v5849
    %v5886 = vadd.f32 %v5817, %v5850
    %v5887 = vadd.f32 %v5818, %v5849
    %v5888 = vadd.f32 %v5819, %v5850
    %v5889 = vadd.f32 %v5820, %v5849
    %v5890 = vadd.f32 %v5821, %v5850
    %v5891 = vadd.f32 %v5822, %v5849
    %v5892 = vadd.f32 %v5823, %v5850
    %v5893 = vadd.f32 %v5824, %v5849
    %v5894 = vadd.f32 %v5825, %v5850
    %v5895 = vadd.f32 %v5826, %v5849
    %v5896 = vadd.f32 %v5827, %v5850
    %v5897 = vadd.f32 %v5828, %v5849
    %v5898 = vadd.f32 %v5829, %v5850
    %v5899 = vadd.f32 %v5830, %v5849
    %v5900 = vadd.f32 %v5831, %v5850
    %v5901 = vadd.f32 %v5832, %v5849
    %v5902 = vadd.f32 %v5833, %v5850
    %v5903 = vadd.f32 %v5834, %v5849
    %v5904 = vadd.f32 %v5835, %v5850
    %v5905 = vadd.f32 %v5836, %v5849
    %v5906 = vadd.f32 %v5837, %v5850
    %v5907 = vadd.f32 %v5838, %v5849
    %v5908 = vadd.f32 %v5839, %v5850
    %v5909 = vadd.f32 %v5840, %v5849
    %v5910 = vadd.f32 %v5841, %v5850
    %v5911 = vadd.f32 %v5842, %v5849
    %v5912 = vadd.f32 %v5843, %v5850
    %v5913 = vadd.f32 %v5844, %v5849
    %v5914 = vadd.f32 %v5845, %v5850
    %v5915 = vadd.f32 %v5846, %v5849
    %v5916 = vadd.f32 %v5847, %v5850
    %v5917 = vmax.f32 %v5853, 0.0
    %v5918 = vmax.f32 %v5854, 0.0
    %v5919 = vmax.f32 %v5855, 0.0
    %v5920 = vmax.f32 %v5856, 0.0
    %v5921 = vmax.f32 %v5857, 0.0
    %v5922 = vmax.f32 %v5858, 0.0
    %v5923 = vmax.f32 %v5859, 0.0
    %v5924 = vmax.f32 %v5860, 0.0
    %v5925 = vmax.f32 %v5861, 0.0
    %v5926 = vmax.f32 %v5862, 0.0
    %v5927 = vmax.f32 %v5863, 0.0
    %v5928 = vmax.f32 %v5864, 0.0
    %v5929 = vmax.f32 %v5865, 0.0
    %v5930 = vmax.f32 %v5866, 0.0
    %v5931 = vmax.f32 %v5867, 0.0
    %v5932 = vmax.f32 %v5868, 0.0
    %v5933 = vmax.f32 %v5869, 0.0
    %v5934 = vmax.f32 %v5870, 0.0
    %v5935 = vmax.f32 %v5871, 0.0
    %v5936 = vmax.f32 %v5872, 0.0
    %v5937 = vmax.f32 %v5873, 0.0
    %v5938 = vmax.f32 %v5874, 0.0
    %v5939 = vmax.f32 %v5875, 0.0
    %v5940 = vmax.f32 %v5876, 0.0
    %v5941 = vmax.f32 %v5877, 0.0
    %v5942 = vmax.f32 %v5878, 0.0
    %v5943 = vmax.f32 %v5879, 0.0
    %v5944 = vmax.f32 %v5880, 0.0
    %v5945 = vmax.f32 %v5881, 0.0
    %v5946 = vmax.f32 %v5882, 0.0
    %v5947 = vmax.f32 %v5883, 0.0
    %v5948 = vmax.f32 %v5884, 0.0
    %v5949 = vmax.f32 %v5885, 0.0
    %v5950 = vmax.f32 %v5886, 0.0
    %v5951 = vmax.f32 %v5887, 0.0
    %v5952 = vmax.f32 %v5888, 0.0
    %v5953 = vmax.f32 %v5889, 0.0
    %v5954 = vmax.f32 %v5890, 0.0
    %v5955 = vmax.f32 %v5891, 0.0
    %v5956 = vmax.f32 %v5892, 0.0
    %v5957 = vmax.f32 %v5893, 0.0
    %v5958 = vmax.f32 %v5894, 0.0
    %v5959 = vmax.f32 %v5895, 0.0
    %v5960 = vmax.f32 %v5896, 0.0
    %v5961 = vmax.f32 %v5897, 0.0
    %v5962 = vmax.f32 %v5898, 0.0
    %v5963 = vmax.f32 %v5899, 0.0
    %v5964 = vmax.f32 %v5900, 0.0
    %v5965 = vmax.f32 %v5901, 0.0
    %v5966 = vmax.f32 %v5902, 0.0
    %v5967 = vmax.f32 %v5903, 0.0
    %v5968 = vmax.f32 %v5904, 0.0
    %v5969 = vmax.f32 %v5905, 0.0
    %v5970 = vmax.f32 %v5906, 0.0
    %v5971 = vmax.f32 %v5907, 0.0
    %v5972 = vmax.f32 %v5908, 0.0
    %v5973 = vmax.f32 %v5909, 0.0
    %v5974 = vmax.f32 %v5910, 0.0
    %v5975 = vmax.f32 %v5911, 0.0
    %v5976 = vmax.f32 %v5912, 0.0
    %v5977 = vmax.f32 %v5913, 0.0
    %v5978 = vmax.f32 %v5914, 0.0
    %v5979 = vmax.f32 %v5915, 0.0
    %v5980 = vmax.f32 %v5916, 0.0
    %v5981 = vpack.c.bf16 %v5919, %v5917
    %v5982 = vpack.c.bf16 %v5920, %v5918
    %v5983 = vpack.c.bf16 %v5923, %v5921
    %v5984 = vpack.c.bf16 %v5924, %v5922
    %v5985 = vpack.c.bf16 %v5927, %v5925
    %v5986 = vpack.c.bf16 %v5928, %v5926
    %v5987 = vpack.c.bf16 %v5931, %v5929
    %v5988 = vpack.c.bf16 %v5932, %v5930
    %v5989 = vpack.c.bf16 %v5935, %v5933
    %v5990 = vpack.c.bf16 %v5936, %v5934
    %v5991 = vpack.c.bf16 %v5939, %v5937
    %v5992 = vpack.c.bf16 %v5940, %v5938
    %v5993 = vpack.c.bf16 %v5943, %v5941
    %v5994 = vpack.c.bf16 %v5944, %v5942
    %v5995 = vpack.c.bf16 %v5947, %v5945
    %v5996 = vpack.c.bf16 %v5948, %v5946
    %v5997 = vpack.c.bf16 %v5951, %v5949
    %v5998 = vpack.c.bf16 %v5952, %v5950
    %v5999 = vpack.c.bf16 %v5955, %v5953
    %v6000 = vpack.c.bf16 %v5956, %v5954
    %v6001 = vpack.c.bf16 %v5959, %v5957
    %v6002 = vpack.c.bf16 %v5960, %v5958
    %v6003 = vpack.c.bf16 %v5963, %v5961
    %v6004 = vpack.c.bf16 %v5964, %v5962
    %v6005 = vpack.c.bf16 %v5967, %v5965
    %v6006 = vpack.c.bf16 %v5968, %v5966
    %v6007 = vpack.c.bf16 %v5971, %v5969
    %v6008 = vpack.c.bf16 %v5972, %v5970
    %v6009 = vpack.c.bf16 %v5975, %v5973
    %v6010 = vpack.c.bf16 %v5976, %v5974
    %v6011 = vpack.c.bf16 %v5979, %v5977
    %v6012 = vpack.c.bf16 %v5980, %v5978
    %s6013 = smul.u32 4, 32
    %s6014 = smul.u32 %s6013, 4
    %s6015 = sshll.u32 %s6014, 4
    %6016 = dma.done %s105, %s6015
    %v6017 = vld [vmem:[#allocation3] sm:$0xff]
    %v6018 = vld [vmem:[#allocation3 + $0x8] sm:$0xff]
    %v6019 = vld [vmem:[#allocation3 + $0x10] sm:$0xff]
    %v6020 = vld [vmem:[#allocation3 + $0x18] sm:$0xff]
    %v6021 = vld [vmem:[#allocation3 + $0x20] sm:$0xff]
    %v6022 = vld [vmem:[#allocation3 + $0x28] sm:$0xff]
    %v6023 = vld [vmem:[#allocation3 + $0x30] sm:$0xff]
    %v6024 = vld [vmem:[#allocation3 + $0x38] sm:$0xff]
    %v6025 = vld [vmem:[#allocation3 + $0x40] sm:$0xff]
    %v6026 = vld [vmem:[#allocation3 + $0x48] sm:$0xff]
    %v6027 = vld [vmem:[#allocation3 + $0x50] sm:$0xff]
    %v6028 = vld [vmem:[#allocation3 + $0x58] sm:$0xff]
    %v6029 = vld [vmem:[#allocation3 + $0x60] sm:$0xff]
    %v6030 = vld [vmem:[#allocation3 + $0x68] sm:$0xff]
    %v6031 = vld [vmem:[#allocation3 + $0x70] sm:$0xff]
    %v6032 = vld [vmem:[#allocation3 + $0x78] sm:$0xff]
    %v6033 = vld [vmem:[#allocation3 + $0x80] sm:$0xff]
    %v6034 = vld [vmem:[#allocation3 + $0x88] sm:$0xff]
    %v6035 = vld [vmem:[#allocation3 + $0x90] sm:$0xff]
    %v6036 = vld [vmem:[#allocation3 + $0x98] sm:$0xff]
    %v6037 = vld [vmem:[#allocation3 + $0xa0] sm:$0xff]
    %v6038 = vld [vmem:[#allocation3 + $0xa8] sm:$0xff]
    %v6039 = vld [vmem:[#allocation3 + $0xb0] sm:$0xff]
    %v6040 = vld [vmem:[#allocation3 + $0xb8] sm:$0xff]
    %v6041 = vld [vmem:[#allocation3 + $0xc0] sm:$0xff]
    %v6042 = vld [vmem:[#allocation3 + $0xc8] sm:$0xff]
    %v6043 = vld [vmem:[#allocation3 + $0xd0] sm:$0xff]
    %v6044 = vld [vmem:[#allocation3 + $0xd8] sm:$0xff]
    %v6045 = vld [vmem:[#allocation3 + $0xe0] sm:$0xff]
    %v6046 = vld [vmem:[#allocation3 + $0xe8] sm:$0xff]
    %v6047 = vld [vmem:[#allocation3 + $0xf0] sm:$0xff]
    %v6048 = vld [vmem:[#allocation3 + $0xf8] sm:$0xff]
    %v6049 = vld [vmem:[#allocation3 + $0x100] sm:$0xff]
    %v6050 = vld [vmem:[#allocation3 + $0x108] sm:$0xff]
    %v6051 = vld [vmem:[#allocation3 + $0x110] sm:$0xff]
    %v6052 = vld [vmem:[#allocation3 + $0x118] sm:$0xff]
    %v6053 = vld [vmem:[#allocation3 + $0x120] sm:$0xff]
    %v6054 = vld [vmem:[#allocation3 + $0x128] sm:$0xff]
    %v6055 = vld [vmem:[#allocation3 + $0x130] sm:$0xff]
    %v6056 = vld [vmem:[#allocation3 + $0x138] sm:$0xff]
    %v6057 = vld [vmem:[#allocation3 + $0x140] sm:$0xff]
    %v6058 = vld [vmem:[#allocation3 + $0x148] sm:$0xff]
    %v6059 = vld [vmem:[#allocation3 + $0x150] sm:$0xff]
    %v6060 = vld [vmem:[#allocation3 + $0x158] sm:$0xff]
    %v6061 = vld [vmem:[#allocation3 + $0x160] sm:$0xff]
    %v6062 = vld [vmem:[#allocation3 + $0x168] sm:$0xff]
    %v6063 = vld [vmem:[#allocation3 + $0x170] sm:$0xff]
    %v6064 = vld [vmem:[#allocation3 + $0x178] sm:$0xff]
    %v6065 = vld [vmem:[#allocation3 + $0x180] sm:$0xff]
    %v6066 = vld [vmem:[#allocation3 + $0x188] sm:$0xff]
    %v6067 = vld [vmem:[#allocation3 + $0x190] sm:$0xff]
    %v6068 = vld [vmem:[#allocation3 + $0x198] sm:$0xff]
    %v6069 = vld [vmem:[#allocation3 + $0x1a0] sm:$0xff]
    %v6070 = vld [vmem:[#allocation3 + $0x1a8] sm:$0xff]
    %v6071 = vld [vmem:[#allocation3 + $0x1b0] sm:$0xff]
    %v6072 = vld [vmem:[#allocation3 + $0x1b8] sm:$0xff]
    %v6073 = vld [vmem:[#allocation3 + $0x1c0] sm:$0xff]
    %v6074 = vld [vmem:[#allocation3 + $0x1c8] sm:$0xff]
    %v6075 = vld [vmem:[#allocation3 + $0x1d0] sm:$0xff]
    %v6076 = vld [vmem:[#allocation3 + $0x1d8] sm:$0xff]
    %v6077 = vld [vmem:[#allocation3 + $0x1e0] sm:$0xff]
    %v6078 = vld [vmem:[#allocation3 + $0x1e8] sm:$0xff]
    %v6079 = vld [vmem:[#allocation3 + $0x1f0] sm:$0xff]
    %v6080 = vld [vmem:[#allocation3 + $0x1f8] sm:$0xff]
    %v6145 = vunpack.c.l.b16 %v6017
    %v6146 = vunpack.c.h.b16 %v6017
    %v6147 = vunpack.c.l.b16 %v6018
    %v6148 = vunpack.c.h.b16 %v6018
    %v6149 = vunpack.c.l.b16 %v6019
    %v6150 = vunpack.c.h.b16 %v6019
    %v6151 = vunpack.c.l.b16 %v6020
    %v6152 = vunpack.c.h.b16 %v6020
    %v6153 = vunpack.c.l.b16 %v6021
    %v6154 = vunpack.c.h.b16 %v6021
    %v6155 = vunpack.c.l.b16 %v6022
    %v6156 = vunpack.c.h.b16 %v6022
    %v6157 = vunpack.c.l.b16 %v6023
    %v6158 = vunpack.c.h.b16 %v6023
    %v6159 = vunpack.c.l.b16 %v6024
    %v6160 = vunpack.c.h.b16 %v6024
    %v6161 = vunpack.c.l.b16 %v6025
    %v6162 = vunpack.c.h.b16 %v6025
    %v6163 = vunpack.c.l.b16 %v6026
    %v6164 = vunpack.c.h.b16 %v6026
    %v6165 = vunpack.c.l.b16 %v6027
    %v6166 = vunpack.c.h.b16 %v6027
    %v6167 = vunpack.c.l.b16 %v6028
    %v6168 = vunpack.c.h.b16 %v6028
    %v6169 = vunpack.c.l.b16 %v6029
    %v6170 = vunpack.c.h.b16 %v6029
    %v6171 = vunpack.c.l.b16 %v6030
    %v6172 = vunpack.c.h.b16 %v6030
    %v6173 = vunpack.c.l.b16 %v6031
    %v6174 = vunpack.c.h.b16 %v6031
    %v6175 = vunpack.c.l.b16 %v6032
    %v6176 = vunpack.c.h.b16 %v6032
    %v6177 = vunpack.c.l.b16 %v6033
    %v6178 = vunpack.c.h.b16 %v6033
    %v6179 = vunpack.c.l.b16 %v6034
    %v6180 = vunpack.c.h.b16 %v6034
    %v6181 = vunpack.c.l.b16 %v6035
    %v6182 = vunpack.c.h.b16 %v6035
    %v6183 = vunpack.c.l.b16 %v6036
    %v6184 = vunpack.c.h.b16 %v6036
    %v6185 = vunpack.c.l.b16 %v6037
    %v6186 = vunpack.c.h.b16 %v6037
    %v6187 = vunpack.c.l.b16 %v6038
    %v6188 = vunpack.c.h.b16 %v6038
    %v6189 = vunpack.c.l.b16 %v6039
    %v6190 = vunpack.c.h.b16 %v6039
    %v6191 = vunpack.c.l.b16 %v6040
    %v6192 = vunpack.c.h.b16 %v6040
    %v6193 = vunpack.c.l.b16 %v6041
    %v6194 = vunpack.c.h.b16 %v6041
    %v6195 = vunpack.c.l.b16 %v6042
    %v6196 = vunpack.c.h.b16 %v6042
    %v6197 = vunpack.c.l.b16 %v6043
    %v6198 = vunpack.c.h.b16 %v6043
    %v6199 = vunpack.c.l.b16 %v6044
    %v6200 = vunpack.c.h.b16 %v6044
    %v6201 = vunpack.c.l.b16 %v6045
    %v6202 = vunpack.c.h.b16 %v6045
    %v6203 = vunpack.c.l.b16 %v6046
    %v6204 = vunpack.c.h.b16 %v6046
    %v6205 = vunpack.c.l.b16 %v6047
    %v6206 = vunpack.c.h.b16 %v6047
    %v6207 = vunpack.c.l.b16 %v6048
    %v6208 = vunpack.c.h.b16 %v6048
    %v6209 = vunpack.c.l.b16 %v6049
    %v6210 = vunpack.c.h.b16 %v6049
    %v6211 = vunpack.c.l.b16 %v6050
    %v6212 = vunpack.c.h.b16 %v6050
    %v6213 = vunpack.c.l.b16 %v6051
    %v6214 = vunpack.c.h.b16 %v6051
    %v6215 = vunpack.c.l.b16 %v6052
    %v6216 = vunpack.c.h.b16 %v6052
    %v6217 = vunpack.c.l.b16 %v6053
    %v6218 = vunpack.c.h.b16 %v6053
    %v6219 = vunpack.c.l.b16 %v6054
    %v6220 = vunpack.c.h.b16 %v6054
    %v6221 = vunpack.c.l.b16 %v6055
    %v6222 = vunpack.c.h.b16 %v6055
    %v6223 = vunpack.c.l.b16 %v6056
    %v6224 = vunpack.c.h.b16 %v6056
    %v6225 = vunpack.c.l.b16 %v6057
    %v6226 = vunpack.c.h.b16 %v6057
    %v6227 = vunpack.c.l.b16 %v6058
    %v6228 = vunpack.c.h.b16 %v6058
    %v6229 = vunpack.c.l.b16 %v6059
    %v6230 = vunpack.c.h.b16 %v6059
    %v6231 = vunpack.c.l.b16 %v6060
    %v6232 = vunpack.c.h.b16 %v6060
    %v6233 = vunpack.c.l.b16 %v6061
    %v6234 = vunpack.c.h.b16 %v6061
    %v6235 = vunpack.c.l.b16 %v6062
    %v6236 = vunpack.c.h.b16 %v6062
    %v6237 = vunpack.c.l.b16 %v6063
    %v6238 = vunpack.c.h.b16 %v6063
    %v6239 = vunpack.c.l.b16 %v6064
    %v6240 = vunpack.c.h.b16 %v6064
    %v6241 = vunpack.c.l.b16 %v6065
    %v6242 = vunpack.c.h.b16 %v6065
    %v6243 = vunpack.c.l.b16 %v6066
    %v6244 = vunpack.c.h.b16 %v6066
    %v6245 = vunpack.c.l.b16 %v6067
    %v6246 = vunpack.c.h.b16 %v6067
    %v6247 = vunpack.c.l.b16 %v6068
    %v6248 = vunpack.c.h.b16 %v6068
    %v6249 = vunpack.c.l.b16 %v6069
    %v6250 = vunpack.c.h.b16 %v6069
    %v6251 = vunpack.c.l.b16 %v6070
    %v6252 = vunpack.c.h.b16 %v6070
    %v6253 = vunpack.c.l.b16 %v6071
    %v6254 = vunpack.c.h.b16 %v6071
    %v6255 = vunpack.c.l.b16 %v6072
    %v6256 = vunpack.c.h.b16 %v6072
    %v6257 = vunpack.c.l.b16 %v6073
    %v6258 = vunpack.c.h.b16 %v6073
    %v6259 = vunpack.c.l.b16 %v6074
    %v6260 = vunpack.c.h.b16 %v6074
    %v6261 = vunpack.c.l.b16 %v6075
    %v6262 = vunpack.c.h.b16 %v6075
    %v6263 = vunpack.c.l.b16 %v6076
    %v6264 = vunpack.c.h.b16 %v6076
    %v6265 = vunpack.c.l.b16 %v6077
    %v6266 = vunpack.c.h.b16 %v6077
    %v6267 = vunpack.c.l.b16 %v6078
    %v6268 = vunpack.c.h.b16 %v6078
    %v6269 = vunpack.c.l.b16 %v6079
    %v6270 = vunpack.c.h.b16 %v6079
    %v6271 = vunpack.c.l.b16 %v6080
    %v6272 = vunpack.c.h.b16 %v6080
    %v6273 = vpack.c.b16 %v6149, %v6145
    %v6274 = vpack.c.b16 %v6150, %v6146
    %v6275 = vpack.c.b16 %v6151, %v6147
    %v6276 = vpack.c.b16 %v6152, %v6148
    %v6277 = vpack.c.b16 %v6157, %v6153
    %v6278 = vpack.c.b16 %v6158, %v6154
    %v6279 = vpack.c.b16 %v6159, %v6155
    %v6280 = vpack.c.b16 %v6160, %v6156
    %v6281 = vpack.c.b16 %v6165, %v6161
    %v6282 = vpack.c.b16 %v6166, %v6162
    %v6283 = vpack.c.b16 %v6167, %v6163
    %v6284 = vpack.c.b16 %v6168, %v6164
    %v6285 = vpack.c.b16 %v6173, %v6169
    %v6286 = vpack.c.b16 %v6174, %v6170
    %v6287 = vpack.c.b16 %v6175, %v6171
    %v6288 = vpack.c.b16 %v6176, %v6172
    %v6289 = vpack.c.b16 %v6181, %v6177
    %v6290 = vpack.c.b16 %v6182, %v6178
    %v6291 = vpack.c.b16 %v6183, %v6179
    %v6292 = vpack.c.b16 %v6184, %v6180
    %v6293 = vpack.c.b16 %v6189, %v6185
    %v6294 = vpack.c.b16 %v6190, %v6186
    %v6295 = vpack.c.b16 %v6191, %v6187
    %v6296 = vpack.c.b16 %v6192, %v6188
    %v6297 = vpack.c.b16 %v6197, %v6193
    %v6298 = vpack.c.b16 %v6198, %v6194
    %v6299 = vpack.c.b16 %v6199, %v6195
    %v6300 = vpack.c.b16 %v6200, %v6196
    %v6301 = vpack.c.b16 %v6205, %v6201
    %v6302 = vpack.c.b16 %v6206, %v6202
    %v6303 = vpack.c.b16 %v6207, %v6203
    %v6304 = vpack.c.b16 %v6208, %v6204
    %v6305 = vpack.c.b16 %v6213, %v6209
    %v6306 = vpack.c.b16 %v6214, %v6210
    %v6307 = vpack.c.b16 %v6215, %v6211
    %v6308 = vpack.c.b16 %v6216, %v6212
    %v6309 = vpack.c.b16 %v6221, %v6217
    %v6310 = vpack.c.b16 %v6222, %v6218
    %v6311 = vpack.c.b16 %v6223, %v6219
    %v6312 = vpack.c.b16 %v6224, %v6220
    %v6313 = vpack.c.b16 %v6229, %v6225
    %v6314 = vpack.c.b16 %v6230, %v6226
    %v6315 = vpack.c.b16 %v6231, %v6227
    %v6316 = vpack.c.b16 %v6232, %v6228
    %v6317 = vpack.c.b16 %v6237, %v6233
    %v6318 = vpack.c.b16 %v6238, %v6234
    %v6319 = vpack.c.b16 %v6239, %v6235
    %v6320 = vpack.c.b16 %v6240, %v6236
    %v6321 = vpack.c.b16 %v6245, %v6241
    %v6322 = vpack.c.b16 %v6246, %v6242
    %v6323 = vpack.c.b16 %v6247, %v6243
    %v6324 = vpack.c.b16 %v6248, %v6244
    %v6325 = vpack.c.b16 %v6253, %v6249
    %v6326 = vpack.c.b16 %v6254, %v6250
    %v6327 = vpack.c.b16 %v6255, %v6251
    %v6328 = vpack.c.b16 %v6256, %v6252
    %v6329 = vpack.c.b16 %v6261, %v6257
    %v6330 = vpack.c.b16 %v6262, %v6258
    %v6331 = vpack.c.b16 %v6263, %v6259
    %v6332 = vpack.c.b16 %v6264, %v6260
    %v6333 = vpack.c.b16 %v6269, %v6265
    %v6334 = vpack.c.b16 %v6270, %v6266
    %v6335 = vpack.c.b16 %v6271, %v6267
    %v6336 = vpack.c.b16 %v6272, %v6268
    %6401 = vmatpush.bf16.msra.mxu0 %v6301
    %6402 = vmatpush.bf16.msra.mxu0 %v6297
    %6403 = vmatpush.bf16.msra.mxu0 %v6293
    %6404 = vmatpush.bf16.msra.mxu0 %v6289
    %6405 = vmatpush.bf16.msra.mxu0 %v6285
    %6406 = vmatpush.bf16.msra.mxu0 %v6281
    %6407 = vmatpush.bf16.msra.mxu0 %v6277
    %6408 = vmatpush.bf16.msra.mxu0 %v6273
    %6409 = vmatmul.bf16.gmra.mxu0 %v5981
    %v6410 = vpop.f32.mrf.mxu0
    %v6411 = vadd.f32 0.0, %v6410
    %v6412 = vpop.f32.mrf.mxu0
    %v6413 = vadd.f32 0.0, %v6412
    %6414 = vmatmul.bf16.gmra.mxu0 %v5983
    %v6415 = vpop.f32.mrf.mxu0
    %v6416 = vadd.f32 0.0, %v6415
    %v6417 = vpop.f32.mrf.mxu0
    %v6418 = vadd.f32 0.0, %v6417
    %6419 = vmatmul.bf16.gmra.mxu0 %v5985
    %v6420 = vpop.f32.mrf.mxu0
    %v6421 = vadd.f32 0.0, %v6420
    %v6422 = vpop.f32.mrf.mxu0
    %v6423 = vadd.f32 0.0, %v6422
    %6424 = vmatmul.bf16.gmra.mxu0 %v5987
    %v6425 = vpop.f32.mrf.mxu0
    %v6426 = vadd.f32 0.0, %v6425
    %v6427 = vpop.f32.mrf.mxu0
    %v6428 = vadd.f32 0.0, %v6427
    %6429 = vmatmul.bf16.gmra.mxu0 %v5989
    %v6430 = vpop.f32.mrf.mxu0
    %v6431 = vadd.f32 0.0, %v6430
    %v6432 = vpop.f32.mrf.mxu0
    %v6433 = vadd.f32 0.0, %v6432
    %6434 = vmatmul.bf16.gmra.mxu0 %v5991
    %v6435 = vpop.f32.mrf.mxu0
    %v6436 = vadd.f32 0.0, %v6435
    %v6437 = vpop.f32.mrf.mxu0
    %v6438 = vadd.f32 0.0, %v6437
    %6439 = vmatmul.bf16.gmra.mxu0 %v5993
    %v6440 = vpop.f32.mrf.mxu0
    %v6441 = vadd.f32 0.0, %v6440
    %v6442 = vpop.f32.mrf.mxu0
    %v6443 = vadd.f32 0.0, %v6442
    %6444 = vmatmul.bf16.gmra.mxu0 %v5995
    %v6445 = vpop.f32.mrf.mxu0
    %v6446 = vadd.f32 0.0, %v6445
    %v6447 = vpop.f32.mrf.mxu0
    %v6448 = vadd.f32 0.0, %v6447
    %6449 = vmatmul.bf16.gmra.mxu0 %v5997
    %v6450 = vpop.f32.mrf.mxu0
    %v6451 = vadd.f32 0.0, %v6450
    %v6452 = vpop.f32.mrf.mxu0
    %v6453 = vadd.f32 0.0, %v6452
    %6454 = vmatmul.bf16.gmra.mxu0 %v5999
    %v6455 = vpop.f32.mrf.mxu0
    %v6456 = vadd.f32 0.0, %v6455
    %v6457 = vpop.f32.mrf.mxu0
    %v6458 = vadd.f32 0.0, %v6457
    %6459 = vmatmul.bf16.gmra.mxu0 %v6001
    %v6460 = vpop.f32.mrf.mxu0
    %v6461 = vadd.f32 0.0, %v6460
    %v6462 = vpop.f32.mrf.mxu0
    %v6463 = vadd.f32 0.0, %v6462
    %6464 = vmatmul.bf16.gmra.mxu0 %v6003
    %v6465 = vpop.f32.mrf.mxu0
    %v6466 = vadd.f32 0.0, %v6465
    %v6467 = vpop.f32.mrf.mxu0
    %v6468 = vadd.f32 0.0, %v6467
    %6469 = vmatmul.bf16.gmra.mxu0 %v6005
    %v6470 = vpop.f32.mrf.mxu0
    %v6471 = vadd.f32 0.0, %v6470
    %v6472 = vpop.f32.mrf.mxu0
    %v6473 = vadd.f32 0.0, %v6472
    %6474 = vmatmul.bf16.gmra.mxu0 %v6007
    %v6475 = vpop.f32.mrf.mxu0
    %v6476 = vadd.f32 0.0, %v6475
    %v6477 = vpop.f32.mrf.mxu0
    %v6478 = vadd.f32 0.0, %v6477
    %6479 = vmatmul.bf16.gmra.mxu0 %v6009
    %v6480 = vpop.f32.mrf.mxu0
    %v6481 = vadd.f32 0.0, %v6480
    %v6482 = vpop.f32.mrf.mxu0
    %v6483 = vadd.f32 0.0, %v6482
    %6484 = vmatmul.bf16.gmra.mxu0 %v6011
    %v6485 = vpop.f32.mrf.mxu0
    %v6486 = vadd.f32 0.0, %v6485
    %v6487 = vpop.f32.mrf.mxu0
    %v6488 = vadd.f32 0.0, %v6487
    %6489 = vdwg.mxu0
    %6490 = vmatpush.bf16.msra.mxu0 %v6333
    %6491 = vmatpush.bf16.msra.mxu0 %v6329
    %6492 = vmatpush.bf16.msra.mxu0 %v6325
    %6493 = vmatpush.bf16.msra.mxu0 %v6321
    %6494 = vmatpush.bf16.msra.mxu0 %v6317
    %6495 = vmatpush.bf16.msra.mxu0 %v6313
    %6496 = vmatpush.bf16.msra.mxu0 %v6309
    %6497 = vmatpush.bf16.msra.mxu0 %v6305
    %6498 = vmatmul.bf16.gmra.mxu0 %v5982
    %v6499 = vpop.f32.mrf.mxu0
    %v6500 = vadd.f32 %v6411, %v6499
    %v6501 = vpop.f32.mrf.mxu0
    %v6502 = vadd.f32 %v6413, %v6501
    %6503 = vmatmul.bf16.gmra.mxu0 %v5984
    %v6504 = vpop.f32.mrf.mxu0
    %v6505 = vadd.f32 %v6416, %v6504
    %v6506 = vpop.f32.mrf.mxu0
    %v6507 = vadd.f32 %v6418, %v6506
    %6508 = vmatmul.bf16.gmra.mxu0 %v5986
    %v6509 = vpop.f32.mrf.mxu0
    %v6510 = vadd.f32 %v6421, %v6509
    %v6511 = vpop.f32.mrf.mxu0
    %v6512 = vadd.f32 %v6423, %v6511
    %6513 = vmatmul.bf16.gmra.mxu0 %v5988
    %v6514 = vpop.f32.mrf.mxu0
    %v6515 = vadd.f32 %v6426, %v6514
    %v6516 = vpop.f32.mrf.mxu0
    %v6517 = vadd.f32 %v6428, %v6516
    %6518 = vmatmul.bf16.gmra.mxu0 %v5990
    %v6519 = vpop.f32.mrf.mxu0
    %v6520 = vadd.f32 %v6431, %v6519
    %v6521 = vpop.f32.mrf.mxu0
    %v6522 = vadd.f32 %v6433, %v6521
    %6523 = vmatmul.bf16.gmra.mxu0 %v5992
    %v6524 = vpop.f32.mrf.mxu0
    %v6525 = vadd.f32 %v6436, %v6524
    %v6526 = vpop.f32.mrf.mxu0
    %v6527 = vadd.f32 %v6438, %v6526
    %6528 = vmatmul.bf16.gmra.mxu0 %v5994
    %v6529 = vpop.f32.mrf.mxu0
    %v6530 = vadd.f32 %v6441, %v6529
    %v6531 = vpop.f32.mrf.mxu0
    %v6532 = vadd.f32 %v6443, %v6531
    %6533 = vmatmul.bf16.gmra.mxu0 %v5996
    %v6534 = vpop.f32.mrf.mxu0
    %v6535 = vadd.f32 %v6446, %v6534
    %v6536 = vpop.f32.mrf.mxu0
    %v6537 = vadd.f32 %v6448, %v6536
    %6538 = vmatmul.bf16.gmra.mxu0 %v5998
    %v6539 = vpop.f32.mrf.mxu0
    %v6540 = vadd.f32 %v6451, %v6539
    %v6541 = vpop.f32.mrf.mxu0
    %v6542 = vadd.f32 %v6453, %v6541
    %6543 = vmatmul.bf16.gmra.mxu0 %v6000
    %v6544 = vpop.f32.mrf.mxu0
    %v6545 = vadd.f32 %v6456, %v6544
    %v6546 = vpop.f32.mrf.mxu0
    %v6547 = vadd.f32 %v6458, %v6546
    %6548 = vmatmul.bf16.gmra.mxu0 %v6002
    %v6549 = vpop.f32.mrf.mxu0
    %v6550 = vadd.f32 %v6461, %v6549
    %v6551 = vpop.f32.mrf.mxu0
    %v6552 = vadd.f32 %v6463, %v6551
    %6553 = vmatmul.bf16.gmra.mxu0 %v6004
    %v6554 = vpop.f32.mrf.mxu0
    %v6555 = vadd.f32 %v6466, %v6554
    %v6556 = vpop.f32.mrf.mxu0
    %v6557 = vadd.f32 %v6468, %v6556
    %6558 = vmatmul.bf16.gmra.mxu0 %v6006
    %v6559 = vpop.f32.mrf.mxu0
    %v6560 = vadd.f32 %v6471, %v6559
    %v6561 = vpop.f32.mrf.mxu0
    %v6562 = vadd.f32 %v6473, %v6561
    %6563 = vmatmul.bf16.gmra.mxu0 %v6008
    %v6564 = vpop.f32.mrf.mxu0
    %v6565 = vadd.f32 %v6476, %v6564
    %v6566 = vpop.f32.mrf.mxu0
    %v6567 = vadd.f32 %v6478, %v6566
    %6568 = vmatmul.bf16.gmra.mxu0 %v6010
    %v6569 = vpop.f32.mrf.mxu0
    %v6570 = vadd.f32 %v6481, %v6569
    %v6571 = vpop.f32.mrf.mxu0
    %v6572 = vadd.f32 %v6483, %v6571
    %6573 = vmatmul.bf16.gmra.mxu0 %v6012
    %v6574 = vpop.f32.mrf.mxu0
    %v6575 = vadd.f32 %v6486, %v6574
    %v6576 = vpop.f32.mrf.mxu0
    %v6577 = vadd.f32 %v6488, %v6576
    %6578 = vdwg.mxu0
    %6579 = vmatpush.bf16.msra.mxu0 %v6302
    %6580 = vmatpush.bf16.msra.mxu0 %v6298
    %6581 = vmatpush.bf16.msra.mxu0 %v6294
    %6582 = vmatpush.bf16.msra.mxu0 %v6290
    %6583 = vmatpush.bf16.msra.mxu0 %v6286
    %6584 = vmatpush.bf16.msra.mxu0 %v6282
    %6585 = vmatpush.bf16.msra.mxu0 %v6278
    %6586 = vmatpush.bf16.msra.mxu0 %v6274
    %6587 = vmatmul.bf16.gmra.mxu0 %v5981
    %v6588 = vpop.f32.mrf.mxu0
    %v6589 = vadd.f32 0.0, %v6588
    %v6590 = vpop.f32.mrf.mxu0
    %v6591 = vadd.f32 0.0, %v6590
    %6592 = vmatmul.bf16.gmra.mxu0 %v5983
    %v6593 = vpop.f32.mrf.mxu0
    %v6594 = vadd.f32 0.0, %v6593
    %v6595 = vpop.f32.mrf.mxu0
    %v6596 = vadd.f32 0.0, %v6595
    %6597 = vmatmul.bf16.gmra.mxu0 %v5985
    %v6598 = vpop.f32.mrf.mxu0
    %v6599 = vadd.f32 0.0, %v6598
    %v6600 = vpop.f32.mrf.mxu0
    %v6601 = vadd.f32 0.0, %v6600
    %6602 = vmatmul.bf16.gmra.mxu0 %v5987
    %v6603 = vpop.f32.mrf.mxu0
    %v6604 = vadd.f32 0.0, %v6603
    %v6605 = vpop.f32.mrf.mxu0
    %v6606 = vadd.f32 0.0, %v6605
    %6607 = vmatmul.bf16.gmra.mxu0 %v5989
    %v6608 = vpop.f32.mrf.mxu0
    %v6609 = vadd.f32 0.0, %v6608
    %v6610 = vpop.f32.mrf.mxu0
    %v6611 = vadd.f32 0.0, %v6610
    %6612 = vmatmul.bf16.gmra.mxu0 %v5991
    %v6613 = vpop.f32.mrf.mxu0
    %v6614 = vadd.f32 0.0, %v6613
    %v6615 = vpop.f32.mrf.mxu0
    %v6616 = vadd.f32 0.0, %v6615
    %6617 = vmatmul.bf16.gmra.mxu0 %v5993
    %v6618 = vpop.f32.mrf.mxu0
    %v6619 = vadd.f32 0.0, %v6618
    %v6620 = vpop.f32.mrf.mxu0
    %v6621 = vadd.f32 0.0, %v6620
    %6622 = vmatmul.bf16.gmra.mxu0 %v5995
    %v6623 = vpop.f32.mrf.mxu0
    %v6624 = vadd.f32 0.0, %v6623
    %v6625 = vpop.f32.mrf.mxu0
    %v6626 = vadd.f32 0.0, %v6625
    %6627 = vmatmul.bf16.gmra.mxu0 %v5997
    %v6628 = vpop.f32.mrf.mxu0
    %v6629 = vadd.f32 0.0, %v6628
    %v6630 = vpop.f32.mrf.mxu0
    %v6631 = vadd.f32 0.0, %v6630
    %6632 = vmatmul.bf16.gmra.mxu0 %v5999
    %v6633 = vpop.f32.mrf.mxu0
    %v6634 = vadd.f32 0.0, %v6633
    %v6635 = vpop.f32.mrf.mxu0
    %v6636 = vadd.f32 0.0, %v6635
    %6637 = vmatmul.bf16.gmra.mxu0 %v6001
    %v6638 = vpop.f32.mrf.mxu0
    %v6639 = vadd.f32 0.0, %v6638
    %v6640 = vpop.f32.mrf.mxu0
    %v6641 = vadd.f32 0.0, %v6640
    %6642 = vmatmul.bf16.gmra.mxu0 %v6003
    %v6643 = vpop.f32.mrf.mxu0
    %v6644 = vadd.f32 0.0, %v6643
    %v6645 = vpop.f32.mrf.mxu0
    %v6646 = vadd.f32 0.0, %v6645
    %6647 = vmatmul.bf16.gmra.mxu0 %v6005
    %v6648 = vpop.f32.mrf.mxu0
    %v6649 = vadd.f32 0.0, %v6648
    %v6650 = vpop.f32.mrf.mxu0
    %v6651 = vadd.f32 0.0, %v6650
    %6652 = vmatmul.bf16.gmra.mxu0 %v6007
    %v6653 = vpop.f32.mrf.mxu0
    %v6654 = vadd.f32 0.0, %v6653
    %v6655 = vpop.f32.mrf.mxu0
    %v6656 = vadd.f32 0.0, %v6655
    %6657 = vmatmul.bf16.gmra.mxu0 %v6009
    %v6658 = vpop.f32.mrf.mxu0
    %v6659 = vadd.f32 0.0, %v6658
    %v6660 = vpop.f32.mrf.mxu0
    %v6661 = vadd.f32 0.0, %v6660
    %6662 = vmatmul.bf16.gmra.mxu0 %v6011
    %v6663 = vpop.f32.mrf.mxu0
    %v6664 = vadd.f32 0.0, %v6663
    %v6665 = vpop.f32.mrf.mxu0
    %v6666 = vadd.f32 0.0, %v6665
    %6667 = vdwg.mxu0
    %6668 = vmatpush.bf16.msra.mxu0 %v6334
    %6669 = vmatpush.bf16.msra.mxu0 %v6330
    %6670 = vmatpush.bf16.msra.mxu0 %v6326
    %6671 = vmatpush.bf16.msra.mxu0 %v6322
    %6672 = vmatpush.bf16.msra.mxu0 %v6318
    %6673 = vmatpush.bf16.msra.mxu0 %v6314
    %6674 = vmatpush.bf16.msra.mxu0 %v6310
    %6675 = vmatpush.bf16.msra.mxu0 %v6306
    %6676 = vmatmul.bf16.gmra.mxu0 %v5982
    %v6677 = vpop.f32.mrf.mxu0
    %v6678 = vadd.f32 %v6589, %v6677
    %v6679 = vpop.f32.mrf.mxu0
    %v6680 = vadd.f32 %v6591, %v6679
    %6681 = vmatmul.bf16.gmra.mxu0 %v5984
    %v6682 = vpop.f32.mrf.mxu0
    %v6683 = vadd.f32 %v6594, %v6682
    %v6684 = vpop.f32.mrf.mxu0
    %v6685 = vadd.f32 %v6596, %v6684
    %6686 = vmatmul.bf16.gmra.mxu0 %v5986
    %v6687 = vpop.f32.mrf.mxu0
    %v6688 = vadd.f32 %v6599, %v6687
    %v6689 = vpop.f32.mrf.mxu0
    %v6690 = vadd.f32 %v6601, %v6689
    %6691 = vmatmul.bf16.gmra.mxu0 %v5988
    %v6692 = vpop.f32.mrf.mxu0
    %v6693 = vadd.f32 %v6604, %v6692
    %v6694 = vpop.f32.mrf.mxu0
    %v6695 = vadd.f32 %v6606, %v6694
    %6696 = vmatmul.bf16.gmra.mxu0 %v5990
    %v6697 = vpop.f32.mrf.mxu0
    %v6698 = vadd.f32 %v6609, %v6697
    %v6699 = vpop.f32.mrf.mxu0
    %v6700 = vadd.f32 %v6611, %v6699
    %6701 = vmatmul.bf16.gmra.mxu0 %v5992
    %v6702 = vpop.f32.mrf.mxu0
    %v6703 = vadd.f32 %v6614, %v6702
    %v6704 = vpop.f32.mrf.mxu0
    %v6705 = vadd.f32 %v6616, %v6704
    %6706 = vmatmul.bf16.gmra.mxu0 %v5994
    %v6707 = vpop.f32.mrf.mxu0
    %v6708 = vadd.f32 %v6619, %v6707
    %v6709 = vpop.f32.mrf.mxu0
    %v6710 = vadd.f32 %v6621, %v6709
    %6711 = vmatmul.bf16.gmra.mxu0 %v5996
    %v6712 = vpop.f32.mrf.mxu0
    %v6713 = vadd.f32 %v6624, %v6712
    %v6714 = vpop.f32.mrf.mxu0
    %v6715 = vadd.f32 %v6626, %v6714
    %6716 = vmatmul.bf16.gmra.mxu0 %v5998
    %v6717 = vpop.f32.mrf.mxu0
    %v6718 = vadd.f32 %v6629, %v6717
    %v6719 = vpop.f32.mrf.mxu0
    %v6720 = vadd.f32 %v6631, %v6719
    %6721 = vmatmul.bf16.gmra.mxu0 %v6000
    %v6722 = vpop.f32.mrf.mxu0
    %v6723 = vadd.f32 %v6634, %v6722
    %v6724 = vpop.f32.mrf.mxu0
    %v6725 = vadd.f32 %v6636, %v6724
    %6726 = vmatmul.bf16.gmra.mxu0 %v6002
    %v6727 = vpop.f32.mrf.mxu0
    %v6728 = vadd.f32 %v6639, %v6727
    %v6729 = vpop.f32.mrf.mxu0
    %v6730 = vadd.f32 %v6641, %v6729
    %6731 = vmatmul.bf16.gmra.mxu0 %v6004
    %v6732 = vpop.f32.mrf.mxu0
    %v6733 = vadd.f32 %v6644, %v6732
    %v6734 = vpop.f32.mrf.mxu0
    %v6735 = vadd.f32 %v6646, %v6734
    %6736 = vmatmul.bf16.gmra.mxu0 %v6006
    %v6737 = vpop.f32.mrf.mxu0
    %v6738 = vadd.f32 %v6649, %v6737
    %v6739 = vpop.f32.mrf.mxu0
    %v6740 = vadd.f32 %v6651, %v6739
    %6741 = vmatmul.bf16.gmra.mxu0 %v6008
    %v6742 = vpop.f32.mrf.mxu0
    %v6743 = vadd.f32 %v6654, %v6742
    %v6744 = vpop.f32.mrf.mxu0
    %v6745 = vadd.f32 %v6656, %v6744
    %6746 = vmatmul.bf16.gmra.mxu0 %v6010
    %v6747 = vpop.f32.mrf.mxu0
    %v6748 = vadd.f32 %v6659, %v6747
    %v6749 = vpop.f32.mrf.mxu0
    %v6750 = vadd.f32 %v6661, %v6749
    %6751 = vmatmul.bf16.gmra.mxu0 %v6012
    %v6752 = vpop.f32.mrf.mxu0
    %v6753 = vadd.f32 %v6664, %v6752
    %v6754 = vpop.f32.mrf.mxu0
    %v6755 = vadd.f32 %v6666, %v6754
    %6756 = vdwg.mxu0
    %6757 = vmatpush.bf16.msra.mxu0 %v6303
    %6758 = vmatpush.bf16.msra.mxu0 %v6299
    %6759 = vmatpush.bf16.msra.mxu0 %v6295
    %6760 = vmatpush.bf16.msra.mxu0 %v6291
    %6761 = vmatpush.bf16.msra.mxu0 %v6287
    %6762 = vmatpush.bf16.msra.mxu0 %v6283
    %6763 = vmatpush.bf16.msra.mxu0 %v6279
    %6764 = vmatpush.bf16.msra.mxu0 %v6275
    %6765 = vmatmul.bf16.gmra.mxu0 %v5981
    %v6766 = vpop.f32.mrf.mxu0
    %v6767 = vadd.f32 0.0, %v6766
    %v6768 = vpop.f32.mrf.mxu0
    %v6769 = vadd.f32 0.0, %v6768
    %6770 = vmatmul.bf16.gmra.mxu0 %v5983
    %v6771 = vpop.f32.mrf.mxu0
    %v6772 = vadd.f32 0.0, %v6771
    %v6773 = vpop.f32.mrf.mxu0
    %v6774 = vadd.f32 0.0, %v6773
    %6775 = vmatmul.bf16.gmra.mxu0 %v5985
    %v6776 = vpop.f32.mrf.mxu0
    %v6777 = vadd.f32 0.0, %v6776
    %v6778 = vpop.f32.mrf.mxu0
    %v6779 = vadd.f32 0.0, %v6778
    %6780 = vmatmul.bf16.gmra.mxu0 %v5987
    %v6781 = vpop.f32.mrf.mxu0
    %v6782 = vadd.f32 0.0, %v6781
    %v6783 = vpop.f32.mrf.mxu0
    %v6784 = vadd.f32 0.0, %v6783
    %6785 = vmatmul.bf16.gmra.mxu0 %v5989
    %v6786 = vpop.f32.mrf.mxu0
    %v6787 = vadd.f32 0.0, %v6786
    %v6788 = vpop.f32.mrf.mxu0
    %v6789 = vadd.f32 0.0, %v6788
    %6790 = vmatmul.bf16.gmra.mxu0 %v5991
    %v6791 = vpop.f32.mrf.mxu0
    %v6792 = vadd.f32 0.0, %v6791
    %v6793 = vpop.f32.mrf.mxu0
    %v6794 = vadd.f32 0.0, %v6793
    %6795 = vmatmul.bf16.gmra.mxu0 %v5993
    %v6796 = vpop.f32.mrf.mxu0
    %v6797 = vadd.f32 0.0, %v6796
    %v6798 = vpop.f32.mrf.mxu0
    %v6799 = vadd.f32 0.0, %v6798
    %6800 = vmatmul.bf16.gmra.mxu0 %v5995
    %v6801 = vpop.f32.mrf.mxu0
    %v6802 = vadd.f32 0.0, %v6801
    %v6803 = vpop.f32.mrf.mxu0
    %v6804 = vadd.f32 0.0, %v6803
    %6805 = vmatmul.bf16.gmra.mxu0 %v5997
    %v6806 = vpop.f32.mrf.mxu0
    %v6807 = vadd.f32 0.0, %v6806
    %v6808 = vpop.f32.mrf.mxu0
    %v6809 = vadd.f32 0.0, %v6808
    %6810 = vmatmul.bf16.gmra.mxu0 %v5999
    %v6811 = vpop.f32.mrf.mxu0
    %v6812 = vadd.f32 0.0, %v6811
    %v6813 = vpop.f32.mrf.mxu0
    %v6814 = vadd.f32 0.0, %v6813
    %6815 = vmatmul.bf16.gmra.mxu0 %v6001
    %v6816 = vpop.f32.mrf.mxu0
    %v6817 = vadd.f32 0.0, %v6816
    %v6818 = vpop.f32.mrf.mxu0
    %v6819 = vadd.f32 0.0, %v6818
    %6820 = vmatmul.bf16.gmra.mxu0 %v6003
    %v6821 = vpop.f32.mrf.mxu0
    %v6822 = vadd.f32 0.0, %v6821
    %v6823 = vpop.f32.mrf.mxu0
    %v6824 = vadd.f32 0.0, %v6823
    %6825 = vmatmul.bf16.gmra.mxu0 %v6005
    %v6826 = vpop.f32.mrf.mxu0
    %v6827 = vadd.f32 0.0, %v6826
    %v6828 = vpop.f32.mrf.mxu0
    %v6829 = vadd.f32 0.0, %v6828
    %6830 = vmatmul.bf16.gmra.mxu0 %v6007
    %v6831 = vpop.f32.mrf.mxu0
    %v6832 = vadd.f32 0.0, %v6831
    %v6833 = vpop.f32.mrf.mxu0
    %v6834 = vadd.f32 0.0, %v6833
    %6835 = vmatmul.bf16.gmra.mxu0 %v6009
    %v6836 = vpop.f32.mrf.mxu0
    %v6837 = vadd.f32 0.0, %v6836
    %v6838 = vpop.f32.mrf.mxu0
    %v6839 = vadd.f32 0.0, %v6838
    %6840 = vmatmul.bf16.gmra.mxu0 %v6011
    %v6841 = vpop.f32.mrf.mxu0
    %v6842 = vadd.f32 0.0, %v6841
    %v6843 = vpop.f32.mrf.mxu0
    %v6844 = vadd.f32 0.0, %v6843
    %6845 = vdwg.mxu0
    %6846 = vmatpush.bf16.msra.mxu0 %v6335
    %6847 = vmatpush.bf16.msra.mxu0 %v6331
    %6848 = vmatpush.bf16.msra.mxu0 %v6327
    %6849 = vmatpush.bf16.msra.mxu0 %v6323
    %6850 = vmatpush.bf16.msra.mxu0 %v6319
    %6851 = vmatpush.bf16.msra.mxu0 %v6315
    %6852 = vmatpush.bf16.msra.mxu0 %v6311
    %6853 = vmatpush.bf16.msra.mxu0 %v6307
    %6854 = vmatmul.bf16.gmra.mxu0 %v5982
    %v6855 = vpop.f32.mrf.mxu0
    %v6856 = vadd.f32 %v6767, %v6855
    %v6857 = vpop.f32.mrf.mxu0
    %v6858 = vadd.f32 %v6769, %v6857
    %6859 = vmatmul.bf16.gmra.mxu0 %v5984
    %v6860 = vpop.f32.mrf.mxu0
    %v6861 = vadd.f32 %v6772, %v6860
    %v6862 = vpop.f32.mrf.mxu0
    %v6863 = vadd.f32 %v6774, %v6862
    %6864 = vmatmul.bf16.gmra.mxu0 %v5986
    %v6865 = vpop.f32.mrf.mxu0
    %v6866 = vadd.f32 %v6777, %v6865
    %v6867 = vpop.f32.mrf.mxu0
    %v6868 = vadd.f32 %v6779, %v6867
    %6869 = vmatmul.bf16.gmra.mxu0 %v5988
    %v6870 = vpop.f32.mrf.mxu0
    %v6871 = vadd.f32 %v6782, %v6870
    %v6872 = vpop.f32.mrf.mxu0
    %v6873 = vadd.f32 %v6784, %v6872
    %6874 = vmatmul.bf16.gmra.mxu0 %v5990
    %v6875 = vpop.f32.mrf.mxu0
    %v6876 = vadd.f32 %v6787, %v6875
    %v6877 = vpop.f32.mrf.mxu0
    %v6878 = vadd.f32 %v6789, %v6877
    %6879 = vmatmul.bf16.gmra.mxu0 %v5992
    %v6880 = vpop.f32.mrf.mxu0
    %v6881 = vadd.f32 %v6792, %v6880
    %v6882 = vpop.f32.mrf.mxu0
    %v6883 = vadd.f32 %v6794, %v6882
    %6884 = vmatmul.bf16.gmra.mxu0 %v5994
    %v6885 = vpop.f32.mrf.mxu0
    %v6886 = vadd.f32 %v6797, %v6885
    %v6887 = vpop.f32.mrf.mxu0
    %v6888 = vadd.f32 %v6799, %v6887
    %6889 = vmatmul.bf16.gmra.mxu0 %v5996
    %v6890 = vpop.f32.mrf.mxu0
    %v6891 = vadd.f32 %v6802, %v6890
    %v6892 = vpop.f32.mrf.mxu0
    %v6893 = vadd.f32 %v6804, %v6892
    %6894 = vmatmul.bf16.gmra.mxu0 %v5998
    %v6895 = vpop.f32.mrf.mxu0
    %v6896 = vadd.f32 %v6807, %v6895
    %v6897 = vpop.f32.mrf.mxu0
    %v6898 = vadd.f32 %v6809, %v6897
    %6899 = vmatmul.bf16.gmra.mxu0 %v6000
    %v6900 = vpop.f32.mrf.mxu0
    %v6901 = vadd.f32 %v6812, %v6900
    %v6902 = vpop.f32.mrf.mxu0
    %v6903 = vadd.f32 %v6814, %v6902
    %6904 = vmatmul.bf16.gmra.mxu0 %v6002
    %v6905 = vpop.f32.mrf.mxu0
    %v6906 = vadd.f32 %v6817, %v6905
    %v6907 = vpop.f32.mrf.mxu0
    %v6908 = vadd.f32 %v6819, %v6907
    %6909 = vmatmul.bf16.gmra.mxu0 %v6004
    %v6910 = vpop.f32.mrf.mxu0
    %v6911 = vadd.f32 %v6822, %v6910
    %v6912 = vpop.f32.mrf.mxu0
    %v6913 = vadd.f32 %v6824, %v6912
    %6914 = vmatmul.bf16.gmra.mxu0 %v6006
    %v6915 = vpop.f32.mrf.mxu0
    %v6916 = vadd.f32 %v6827, %v6915
    %v6917 = vpop.f32.mrf.mxu0
    %v6918 = vadd.f32 %v6829, %v6917
    %6919 = vmatmul.bf16.gmra.mxu0 %v6008
    %v6920 = vpop.f32.mrf.mxu0
    %v6921 = vadd.f32 %v6832, %v6920
    %v6922 = vpop.f32.mrf.mxu0
    %v6923 = vadd.f32 %v6834, %v6922
    %6924 = vmatmul.bf16.gmra.mxu0 %v6010
    %v6925 = vpop.f32.mrf.mxu0
    %v6926 = vadd.f32 %v6837, %v6925
    %v6927 = vpop.f32.mrf.mxu0
    %v6928 = vadd.f32 %v6839, %v6927
    %6929 = vmatmul.bf16.gmra.mxu0 %v6012
    %v6930 = vpop.f32.mrf.mxu0
    %v6931 = vadd.f32 %v6842, %v6930
    %v6932 = vpop.f32.mrf.mxu0
    %v6933 = vadd.f32 %v6844, %v6932
    %6934 = vdwg.mxu0
    %6935 = vmatpush.bf16.msra.mxu0 %v6304
    %6936 = vmatpush.bf16.msra.mxu0 %v6300
    %6937 = vmatpush.bf16.msra.mxu0 %v6296
    %6938 = vmatpush.bf16.msra.mxu0 %v6292
    %6939 = vmatpush.bf16.msra.mxu0 %v6288
    %6940 = vmatpush.bf16.msra.mxu0 %v6284
    %6941 = vmatpush.bf16.msra.mxu0 %v6280
    %6942 = vmatpush.bf16.msra.mxu0 %v6276
    %6943 = vmatmul.bf16.gmra.mxu0 %v5981
    %v6944 = vpop.f32.mrf.mxu0
    %v6945 = vadd.f32 0.0, %v6944
    %v6946 = vpop.f32.mrf.mxu0
    %v6947 = vadd.f32 0.0, %v6946
    %6948 = vmatmul.bf16.gmra.mxu0 %v5983
    %v6949 = vpop.f32.mrf.mxu0
    %v6950 = vadd.f32 0.0, %v6949
    %v6951 = vpop.f32.mrf.mxu0
    %v6952 = vadd.f32 0.0, %v6951
    %6953 = vmatmul.bf16.gmra.mxu0 %v5985
    %v6954 = vpop.f32.mrf.mxu0
    %v6955 = vadd.f32 0.0, %v6954
    %v6956 = vpop.f32.mrf.mxu0
    %v6957 = vadd.f32 0.0, %v6956
    %6958 = vmatmul.bf16.gmra.mxu0 %v5987
    %v6959 = vpop.f32.mrf.mxu0
    %v6960 = vadd.f32 0.0, %v6959
    %v6961 = vpop.f32.mrf.mxu0
    %v6962 = vadd.f32 0.0, %v6961
    %6963 = vmatmul.bf16.gmra.mxu0 %v5989
    %v6964 = vpop.f32.mrf.mxu0
    %v6965 = vadd.f32 0.0, %v6964
    %v6966 = vpop.f32.mrf.mxu0
    %v6967 = vadd.f32 0.0, %v6966
    %6968 = vmatmul.bf16.gmra.mxu0 %v5991
    %v6969 = vpop.f32.mrf.mxu0
    %v6970 = vadd.f32 0.0, %v6969
    %v6971 = vpop.f32.mrf.mxu0
    %v6972 = vadd.f32 0.0, %v6971
    %6973 = vmatmul.bf16.gmra.mxu0 %v5993
    %v6974 = vpop.f32.mrf.mxu0
    %v6975 = vadd.f32 0.0, %v6974
    %v6976 = vpop.f32.mrf.mxu0
    %v6977 = vadd.f32 0.0, %v6976
    %6978 = vmatmul.bf16.gmra.mxu0 %v5995
    %v6979 = vpop.f32.mrf.mxu0
    %v6980 = vadd.f32 0.0, %v6979
    %v6981 = vpop.f32.mrf.mxu0
    %v6982 = vadd.f32 0.0, %v6981
    %6983 = vmatmul.bf16.gmra.mxu0 %v5997
    %v6984 = vpop.f32.mrf.mxu0
    %v6985 = vadd.f32 0.0, %v6984
    %v6986 = vpop.f32.mrf.mxu0
    %v6987 = vadd.f32 0.0, %v6986
    %6988 = vmatmul.bf16.gmra.mxu0 %v5999
    %v6989 = vpop.f32.mrf.mxu0
    %v6990 = vadd.f32 0.0, %v6989
    %v6991 = vpop.f32.mrf.mxu0
    %v6992 = vadd.f32 0.0, %v6991
    %6993 = vmatmul.bf16.gmra.mxu0 %v6001
    %v6994 = vpop.f32.mrf.mxu0
    %v6995 = vadd.f32 0.0, %v6994
    %v6996 = vpop.f32.mrf.mxu0
    %v6997 = vadd.f32 0.0, %v6996
    %6998 = vmatmul.bf16.gmra.mxu0 %v6003
    %v6999 = vpop.f32.mrf.mxu0
    %v7000 = vadd.f32 0.0, %v6999
    %v7001 = vpop.f32.mrf.mxu0
    %v7002 = vadd.f32 0.0, %v7001
    %7003 = vmatmul.bf16.gmra.mxu0 %v6005
    %v7004 = vpop.f32.mrf.mxu0
    %v7005 = vadd.f32 0.0, %v7004
    %v7006 = vpop.f32.mrf.mxu0
    %v7007 = vadd.f32 0.0, %v7006
    %7008 = vmatmul.bf16.gmra.mxu0 %v6007
    %v7009 = vpop.f32.mrf.mxu0
    %v7010 = vadd.f32 0.0, %v7009
    %v7011 = vpop.f32.mrf.mxu0
    %v7012 = vadd.f32 0.0, %v7011
    %7013 = vmatmul.bf16.gmra.mxu0 %v6009
    %v7014 = vpop.f32.mrf.mxu0
    %v7015 = vadd.f32 0.0, %v7014
    %v7016 = vpop.f32.mrf.mxu0
    %v7017 = vadd.f32 0.0, %v7016
    %7018 = vmatmul.bf16.gmra.mxu0 %v6011
    %v7019 = vpop.f32.mrf.mxu0
    %v7020 = vadd.f32 0.0, %v7019
    %v7021 = vpop.f32.mrf.mxu0
    %v7022 = vadd.f32 0.0, %v7021
    %7023 = vdwg.mxu0
    %7024 = vmatpush.bf16.msra.mxu0 %v6336
    %7025 = vmatpush.bf16.msra.mxu0 %v6332
    %7026 = vmatpush.bf16.msra.mxu0 %v6328
    %7027 = vmatpush.bf16.msra.mxu0 %v6324
    %7028 = vmatpush.bf16.msra.mxu0 %v6320
    %7029 = vmatpush.bf16.msra.mxu0 %v6316
    %7030 = vmatpush.bf16.msra.mxu0 %v6312
    %7031 = vmatpush.bf16.msra.mxu0 %v6308
    %7032 = vmatmul.bf16.gmra.mxu0 %v5982
    %v7033 = vpop.f32.mrf.mxu0
    %v7034 = vadd.f32 %v6945, %v7033
    %v7035 = vpop.f32.mrf.mxu0
    %v7036 = vadd.f32 %v6947, %v7035
    %7037 = vmatmul.bf16.gmra.mxu0 %v5984
    %v7038 = vpop.f32.mrf.mxu0
    %v7039 = vadd.f32 %v6950, %v7038
    %v7040 = vpop.f32.mrf.mxu0
    %v7041 = vadd.f32 %v6952, %v7040
    %7042 = vmatmul.bf16.gmra.mxu0 %v5986
    %v7043 = vpop.f32.mrf.mxu0
    %v7044 = vadd.f32 %v6955, %v7043
    %v7045 = vpop.f32.mrf.mxu0
    %v7046 = vadd.f32 %v6957, %v7045
    %7047 = vmatmul.bf16.gmra.mxu0 %v5988
    %v7048 = vpop.f32.mrf.mxu0
    %v7049 = vadd.f32 %v6960, %v7048
    %v7050 = vpop.f32.mrf.mxu0
    %v7051 = vadd.f32 %v6962, %v7050
    %7052 = vmatmul.bf16.gmra.mxu0 %v5990
    %v7053 = vpop.f32.mrf.mxu0
    %v7054 = vadd.f32 %v6965, %v7053
    %v7055 = vpop.f32.mrf.mxu0
    %v7056 = vadd.f32 %v6967, %v7055
    %7057 = vmatmul.bf16.gmra.mxu0 %v5992
    %v7058 = vpop.f32.mrf.mxu0
    %v7059 = vadd.f32 %v6970, %v7058
    %v7060 = vpop.f32.mrf.mxu0
    %v7061 = vadd.f32 %v6972, %v7060
    %7062 = vmatmul.bf16.gmra.mxu0 %v5994
    %v7063 = vpop.f32.mrf.mxu0
    %v7064 = vadd.f32 %v6975, %v7063
    %v7065 = vpop.f32.mrf.mxu0
    %v7066 = vadd.f32 %v6977, %v7065
    %7067 = vmatmul.bf16.gmra.mxu0 %v5996
    %v7068 = vpop.f32.mrf.mxu0
    %v7069 = vadd.f32 %v6980, %v7068
    %v7070 = vpop.f32.mrf.mxu0
    %v7071 = vadd.f32 %v6982, %v7070
    %7072 = vmatmul.bf16.gmra.mxu0 %v5998
    %v7073 = vpop.f32.mrf.mxu0
    %v7074 = vadd.f32 %v6985, %v7073
    %v7075 = vpop.f32.mrf.mxu0
    %v7076 = vadd.f32 %v6987, %v7075
    %7077 = vmatmul.bf16.gmra.mxu0 %v6000
    %v7078 = vpop.f32.mrf.mxu0
    %v7079 = vadd.f32 %v6990, %v7078
    %v7080 = vpop.f32.mrf.mxu0
    %v7081 = vadd.f32 %v6992, %v7080
    %7082 = vmatmul.bf16.gmra.mxu0 %v6002
    %v7083 = vpop.f32.mrf.mxu0
    %v7084 = vadd.f32 %v6995, %v7083
    %v7085 = vpop.f32.mrf.mxu0
    %v7086 = vadd.f32 %v6997, %v7085
    %7087 = vmatmul.bf16.gmra.mxu0 %v6004
    %v7088 = vpop.f32.mrf.mxu0
    %v7089 = vadd.f32 %v7000, %v7088
    %v7090 = vpop.f32.mrf.mxu0
    %v7091 = vadd.f32 %v7002, %v7090
    %7092 = vmatmul.bf16.gmra.mxu0 %v6006
    %v7093 = vpop.f32.mrf.mxu0
    %v7094 = vadd.f32 %v7005, %v7093
    %v7095 = vpop.f32.mrf.mxu0
    %v7096 = vadd.f32 %v7007, %v7095
    %7097 = vmatmul.bf16.gmra.mxu0 %v6008
    %v7098 = vpop.f32.mrf.mxu0
    %v7099 = vadd.f32 %v7010, %v7098
    %v7100 = vpop.f32.mrf.mxu0
    %v7101 = vadd.f32 %v7012, %v7100
    %7102 = vmatmul.bf16.gmra.mxu0 %v6010
    %v7103 = vpop.f32.mrf.mxu0
    %v7104 = vadd.f32 %v7015, %v7103
    %v7105 = vpop.f32.mrf.mxu0
    %v7106 = vadd.f32 %v7017, %v7105
    %7107 = vmatmul.bf16.gmra.mxu0 %v6012
    %v7108 = vpop.f32.mrf.mxu0
    %v7109 = vadd.f32 %v7020, %v7108
    %v7110 = vpop.f32.mrf.mxu0
    %v7111 = vadd.f32 %v7022, %v7110
    %7112 = vdwg.mxu0
    %v7113 = vadd.f32 %v6500, %v6502
    %v7114 = vadd.f32 %v7113, %v6505
    %v7115 = vadd.f32 %v7114, %v6507
    %v7116 = vadd.f32 %v7115, %v6510
    %v7117 = vadd.f32 %v7116, %v6512
    %v7118 = vadd.f32 %v7117, %v6515
    %v7119 = vadd.f32 %v7118, %v6517
    %v7120 = vadd.f32 %v7119, %v6520
    %v7121 = vadd.f32 %v7120, %v6522
    %v7122 = vadd.f32 %v7121, %v6525
    %v7123 = vadd.f32 %v7122, %v6527
    %v7124 = vadd.f32 %v7123, %v6530
    %v7125 = vadd.f32 %v7124, %v6532
    %v7126 = vadd.f32 %v7125, %v6535
    %v7127 = vadd.f32 %v7126, %v6537
    %v7128 = vadd.f32 %v7127, %v6540
    %v7129 = vadd.f32 %v7128, %v6542
    %v7130 = vadd.f32 %v7129, %v6545
    %v7131 = vadd.f32 %v7130, %v6547
    %v7132 = vadd.f32 %v7131, %v6550
    %v7133 = vadd.f32 %v7132, %v6552
    %v7134 = vadd.f32 %v7133, %v6555
    %v7135 = vadd.f32 %v7134, %v6557
    %v7136 = vadd.f32 %v7135, %v6560
    %v7137 = vadd.f32 %v7136, %v6562
    %v7138 = vadd.f32 %v7137, %v6565
    %v7139 = vadd.f32 %v7138, %v6567
    %v7140 = vadd.f32 %v7139, %v6570
    %v7141 = vadd.f32 %v7140, %v6572
    %v7142 = vadd.f32 %v7141, %v6575
    %v7143 = vadd.f32 %v7142, %v6577
    %v7144 = vrot.slane %v7143, 4
    %v7145 = vadd.f32 %v7143, %v7144
    %v7146 = vrot.slane %v7145, 2
    %v7147 = vadd.f32 %v7145, %v7146
    %v7148 = vrot.slane %v7147, 1
    %v7149 = vadd.f32 %v7147, %v7148
    %v7150 = vadd.f32 %v6678, %v6680
    %v7151 = vadd.f32 %v7150, %v6683
    %v7152 = vadd.f32 %v7151, %v6685
    %v7153 = vadd.f32 %v7152, %v6688
    %v7154 = vadd.f32 %v7153, %v6690
    %v7155 = vadd.f32 %v7154, %v6693
    %v7156 = vadd.f32 %v7155, %v6695
    %v7157 = vadd.f32 %v7156, %v6698
    %v7158 = vadd.f32 %v7157, %v6700
    %v7159 = vadd.f32 %v7158, %v6703
    %v7160 = vadd.f32 %v7159, %v6705
    %v7161 = vadd.f32 %v7160, %v6708
    %v7162 = vadd.f32 %v7161, %v6710
    %v7163 = vadd.f32 %v7162, %v6713
    %v7164 = vadd.f32 %v7163, %v6715
    %v7165 = vadd.f32 %v7164, %v6718
    %v7166 = vadd.f32 %v7165, %v6720
    %v7167 = vadd.f32 %v7166, %v6723
    %v7168 = vadd.f32 %v7167, %v6725
    %v7169 = vadd.f32 %v7168, %v6728
    %v7170 = vadd.f32 %v7169, %v6730
    %v7171 = vadd.f32 %v7170, %v6733
    %v7172 = vadd.f32 %v7171, %v6735
    %v7173 = vadd.f32 %v7172, %v6738
    %v7174 = vadd.f32 %v7173, %v6740
    %v7175 = vadd.f32 %v7174, %v6743
    %v7176 = vadd.f32 %v7175, %v6745
    %v7177 = vadd.f32 %v7176, %v6748
    %v7178 = vadd.f32 %v7177, %v6750
    %v7179 = vadd.f32 %v7178, %v6753
    %v7180 = vadd.f32 %v7179, %v6755
    %v7181 = vrot.slane %v7180, 4
    %v7182 = vadd.f32 %v7180, %v7181
    %v7183 = vrot.slane %v7182, 2
    %v7184 = vadd.f32 %v7182, %v7183
    %v7185 = vrot.slane %v7184, 1
    %v7186 = vadd.f32 %v7184, %v7185
    %v7187 = vadd.f32 %v6856, %v6858
    %v7188 = vadd.f32 %v7187, %v6861
    %v7189 = vadd.f32 %v7188, %v6863
    %v7190 = vadd.f32 %v7189, %v6866
    %v7191 = vadd.f32 %v7190, %v6868
    %v7192 = vadd.f32 %v7191, %v6871
    %v7193 = vadd.f32 %v7192, %v6873
    %v7194 = vadd.f32 %v7193, %v6876
    %v7195 = vadd.f32 %v7194, %v6878
    %v7196 = vadd.f32 %v7195, %v6881
    %v7197 = vadd.f32 %v7196, %v6883
    %v7198 = vadd.f32 %v7197, %v6886
    %v7199 = vadd.f32 %v7198, %v6888
    %v7200 = vadd.f32 %v7199, %v6891
    %v7201 = vadd.f32 %v7200, %v6893
    %v7202 = vadd.f32 %v7201, %v6896
    %v7203 = vadd.f32 %v7202, %v6898
    %v7204 = vadd.f32 %v7203, %v6901
    %v7205 = vadd.f32 %v7204, %v6903
    %v7206 = vadd.f32 %v7205, %v6906
    %v7207 = vadd.f32 %v7206, %v6908
    %v7208 = vadd.f32 %v7207, %v6911
    %v7209 = vadd.f32 %v7208, %v6913
    %v7210 = vadd.f32 %v7209, %v6916
    %v7211 = vadd.f32 %v7210, %v6918
    %v7212 = vadd.f32 %v7211, %v6921
    %v7213 = vadd.f32 %v7212, %v6923
    %v7214 = vadd.f32 %v7213, %v6926
    %v7215 = vadd.f32 %v7214, %v6928
    %v7216 = vadd.f32 %v7215, %v6931
    %v7217 = vadd.f32 %v7216, %v6933
    %v7218 = vrot.slane %v7217, 4
    %v7219 = vadd.f32 %v7217, %v7218
    %v7220 = vrot.slane %v7219, 2
    %v7221 = vadd.f32 %v7219, %v7220
    %v7222 = vrot.slane %v7221, 1
    %v7223 = vadd.f32 %v7221, %v7222
    %v7224 = vadd.f32 %v7034, %v7036
    %v7225 = vadd.f32 %v7224, %v7039
    %v7226 = vadd.f32 %v7225, %v7041
    %v7227 = vadd.f32 %v7226, %v7044
    %v7228 = vadd.f32 %v7227, %v7046
    %v7229 = vadd.f32 %v7228, %v7049
    %v7230 = vadd.f32 %v7229, %v7051
    %v7231 = vadd.f32 %v7230, %v7054
    %v7232 = vadd.f32 %v7231, %v7056
    %v7233 = vadd.f32 %v7232, %v7059
    %v7234 = vadd.f32 %v7233, %v7061
    %v7235 = vadd.f32 %v7234, %v7064
    %v7236 = vadd.f32 %v7235, %v7066
    %v7237 = vadd.f32 %v7236, %v7069
    %v7238 = vadd.f32 %v7237, %v7071
    %v7239 = vadd.f32 %v7238, %v7074
    %v7240 = vadd.f32 %v7239, %v7076
    %v7241 = vadd.f32 %v7240, %v7079
    %v7242 = vadd.f32 %v7241, %v7081
    %v7243 = vadd.f32 %v7242, %v7084
    %v7244 = vadd.f32 %v7243, %v7086
    %v7245 = vadd.f32 %v7244, %v7089
    %v7246 = vadd.f32 %v7245, %v7091
    %v7247 = vadd.f32 %v7246, %v7094
    %v7248 = vadd.f32 %v7247, %v7096
    %v7249 = vadd.f32 %v7248, %v7099
    %v7250 = vadd.f32 %v7249, %v7101
    %v7251 = vadd.f32 %v7250, %v7104
    %v7252 = vadd.f32 %v7251, %v7106
    %v7253 = vadd.f32 %v7252, %v7109
    %v7254 = vadd.f32 %v7253, %v7111
    %v7255 = vrot.slane %v7254, 4
    %v7256 = vadd.f32 %v7254, %v7255
    %v7257 = vrot.slane %v7256, 2
    %v7258 = vadd.f32 %v7256, %v7257
    %v7259 = vrot.slane %v7258, 1
    %v7260 = vadd.f32 %v7258, %v7259
    %v7261 = vmul.f32 %v7149, 0.00390625
    %v7262 = vmul.f32 %v7186, 0.00390625
    %v7263 = vmul.f32 %v7223, 0.00390625
    %v7264 = vmul.f32 %v7260, 0.00390625
    %v7265 = vmul.f32 %v6500, %v6500
    %v7266 = vmul.f32 %v6678, %v6678
    %v7267 = vmul.f32 %v6856, %v6856
    %v7268 = vmul.f32 %v7034, %v7034
    %v7269 = vmul.f32 %v6502, %v6502
    %v7270 = vmul.f32 %v6680, %v6680
    %v7271 = vmul.f32 %v6858, %v6858
    %v7272 = vmul.f32 %v7036, %v7036
    %v7273 = vmul.f32 %v6505, %v6505
    %v7274 = vmul.f32 %v6683, %v6683
    %v7275 = vmul.f32 %v6861, %v6861
    %v7276 = vmul.f32 %v7039, %v7039
    %v7277 = vmul.f32 %v6507, %v6507
    %v7278 = vmul.f32 %v6685, %v6685
    %v7279 = vmul.f32 %v6863, %v6863
    %v7280 = vmul.f32 %v7041, %v7041
    %v7281 = vmul.f32 %v6510, %v6510
    %v7282 = vmul.f32 %v6688, %v6688
    %v7283 = vmul.f32 %v6866, %v6866
    %v7284 = vmul.f32 %v7044, %v7044
    %v7285 = vmul.f32 %v6512, %v6512
    %v7286 = vmul.f32 %v6690, %v6690
    %v7287 = vmul.f32 %v6868, %v6868
    %v7288 = vmul.f32 %v7046, %v7046
    %v7289 = vmul.f32 %v6515, %v6515
    %v7290 = vmul.f32 %v6693, %v6693
    %v7291 = vmul.f32 %v6871, %v6871
    %v7292 = vmul.f32 %v7049, %v7049
    %v7293 = vmul.f32 %v6517, %v6517
    %v7294 = vmul.f32 %v6695, %v6695
    %v7295 = vmul.f32 %v6873, %v6873
    %v7296 = vmul.f32 %v7051, %v7051
    %v7297 = vmul.f32 %v6520, %v6520
    %v7298 = vmul.f32 %v6698, %v6698
    %v7299 = vmul.f32 %v6876, %v6876
    %v7300 = vmul.f32 %v7054, %v7054
    %v7301 = vmul.f32 %v6522, %v6522
    %v7302 = vmul.f32 %v6700, %v6700
    %v7303 = vmul.f32 %v6878, %v6878
    %v7304 = vmul.f32 %v7056, %v7056
    %v7305 = vmul.f32 %v6525, %v6525
    %v7306 = vmul.f32 %v6703, %v6703
    %v7307 = vmul.f32 %v6881, %v6881
    %v7308 = vmul.f32 %v7059, %v7059
    %v7309 = vmul.f32 %v6527, %v6527
    %v7310 = vmul.f32 %v6705, %v6705
    %v7311 = vmul.f32 %v6883, %v6883
    %v7312 = vmul.f32 %v7061, %v7061
    %v7313 = vmul.f32 %v6530, %v6530
    %v7314 = vmul.f32 %v6708, %v6708
    %v7315 = vmul.f32 %v6886, %v6886
    %v7316 = vmul.f32 %v7064, %v7064
    %v7317 = vmul.f32 %v6532, %v6532
    %v7318 = vmul.f32 %v6710, %v6710
    %v7319 = vmul.f32 %v6888, %v6888
    %v7320 = vmul.f32 %v7066, %v7066
    %v7321 = vmul.f32 %v6535, %v6535
    %v7322 = vmul.f32 %v6713, %v6713
    %v7323 = vmul.f32 %v6891, %v6891
    %v7324 = vmul.f32 %v7069, %v7069
    %v7325 = vmul.f32 %v6537, %v6537
    %v7326 = vmul.f32 %v6715, %v6715
    %v7327 = vmul.f32 %v6893, %v6893
    %v7328 = vmul.f32 %v7071, %v7071
    %v7329 = vmul.f32 %v6540, %v6540
    %v7330 = vmul.f32 %v6718, %v6718
    %v7331 = vmul.f32 %v6896, %v6896
    %v7332 = vmul.f32 %v7074, %v7074
    %v7333 = vmul.f32 %v6542, %v6542
    %v7334 = vmul.f32 %v6720, %v6720
    %v7335 = vmul.f32 %v6898, %v6898
    %v7336 = vmul.f32 %v7076, %v7076
    %v7337 = vmul.f32 %v6545, %v6545
    %v7338 = vmul.f32 %v6723, %v6723
    %v7339 = vmul.f32 %v6901, %v6901
    %v7340 = vmul.f32 %v7079, %v7079
    %v7341 = vmul.f32 %v6547, %v6547
    %v7342 = vmul.f32 %v6725, %v6725
    %v7343 = vmul.f32 %v6903, %v6903
    %v7344 = vmul.f32 %v7081, %v7081
    %v7345 = vmul.f32 %v6550, %v6550
    %v7346 = vmul.f32 %v6728, %v6728
    %v7347 = vmul.f32 %v6906, %v6906
    %v7348 = vmul.f32 %v7084, %v7084
    %v7349 = vmul.f32 %v6552, %v6552
    %v7350 = vmul.f32 %v6730, %v6730
    %v7351 = vmul.f32 %v6908, %v6908
    %v7352 = vmul.f32 %v7086, %v7086
    %v7353 = vmul.f32 %v6555, %v6555
    %v7354 = vmul.f32 %v6733, %v6733
    %v7355 = vmul.f32 %v6911, %v6911
    %v7356 = vmul.f32 %v7089, %v7089
    %v7357 = vmul.f32 %v6557, %v6557
    %v7358 = vmul.f32 %v6735, %v6735
    %v7359 = vmul.f32 %v6913, %v6913
    %v7360 = vmul.f32 %v7091, %v7091
    %v7361 = vmul.f32 %v6560, %v6560
    %v7362 = vmul.f32 %v6738, %v6738
    %v7363 = vmul.f32 %v6916, %v6916
    %v7364 = vmul.f32 %v7094, %v7094
    %v7365 = vmul.f32 %v6562, %v6562
    %v7366 = vmul.f32 %v6740, %v6740
    %v7367 = vmul.f32 %v6918, %v6918
    %v7368 = vmul.f32 %v7096, %v7096
    %v7369 = vmul.f32 %v6565, %v6565
    %v7370 = vmul.f32 %v6743, %v6743
    %v7371 = vmul.f32 %v6921, %v6921
    %v7372 = vmul.f32 %v7099, %v7099
    %v7373 = vmul.f32 %v6567, %v6567
    %v7374 = vmul.f32 %v6745, %v6745
    %v7375 = vmul.f32 %v6923, %v6923
    %v7376 = vmul.f32 %v7101, %v7101
    %v7377 = vmul.f32 %v6570, %v6570
    %v7378 = vmul.f32 %v6748, %v6748
    %v7379 = vmul.f32 %v6926, %v6926
    %v7380 = vmul.f32 %v7104, %v7104
    %v7381 = vmul.f32 %v6572, %v6572
    %v7382 = vmul.f32 %v6750, %v6750
    %v7383 = vmul.f32 %v6928, %v6928
    %v7384 = vmul.f32 %v7106, %v7106
    %v7385 = vmul.f32 %v6575, %v6575
    %v7386 = vmul.f32 %v6753, %v6753
    %v7387 = vmul.f32 %v6931, %v6931
    %v7388 = vmul.f32 %v7109, %v7109
    %v7389 = vmul.f32 %v6577, %v6577
    %v7390 = vmul.f32 %v6755, %v6755
    %v7391 = vmul.f32 %v6933, %v6933
    %v7392 = vmul.f32 %v7111, %v7111
    %v7393 = vadd.f32 %v7265, %v7269
    %v7394 = vadd.f32 %v7393, %v7273
    %v7395 = vadd.f32 %v7394, %v7277
    %v7396 = vadd.f32 %v7395, %v7281
    %v7397 = vadd.f32 %v7396, %v7285
    %v7398 = vadd.f32 %v7397, %v7289
    %v7399 = vadd.f32 %v7398, %v7293
    %v7400 = vadd.f32 %v7399, %v7297
    %v7401 = vadd.f32 %v7400, %v7301
    %v7402 = vadd.f32 %v7401, %v7305
    %v7403 = vadd.f32 %v7402, %v7309
    %v7404 = vadd.f32 %v7403, %v7313
    %v7405 = vadd.f32 %v7404, %v7317
    %v7406 = vadd.f32 %v7405, %v7321
    %v7407 = vadd.f32 %v7406, %v7325
    %v7408 = vadd.f32 %v7407, %v7329
    %v7409 = vadd.f32 %v7408, %v7333
    %v7410 = vadd.f32 %v7409, %v7337
    %v7411 = vadd.f32 %v7410, %v7341
    %v7412 = vadd.f32 %v7411, %v7345
    %v7413 = vadd.f32 %v7412, %v7349
    %v7414 = vadd.f32 %v7413, %v7353
    %v7415 = vadd.f32 %v7414, %v7357
    %v7416 = vadd.f32 %v7415, %v7361
    %v7417 = vadd.f32 %v7416, %v7365
    %v7418 = vadd.f32 %v7417, %v7369
    %v7419 = vadd.f32 %v7418, %v7373
    %v7420 = vadd.f32 %v7419, %v7377
    %v7421 = vadd.f32 %v7420, %v7381
    %v7422 = vadd.f32 %v7421, %v7385
    %v7423 = vadd.f32 %v7422, %v7389
    %v7424 = vrot.slane %v7423, 4
    %v7425 = vadd.f32 %v7423, %v7424
    %v7426 = vrot.slane %v7425, 2
    %v7427 = vadd.f32 %v7425, %v7426
    %v7428 = vrot.slane %v7427, 1
    %v7429 = vadd.f32 %v7427, %v7428
    %v7430 = vadd.f32 %v7266, %v7270
    %v7431 = vadd.f32 %v7430, %v7274
    %v7432 = vadd.f32 %v7431, %v7278
    %v7433 = vadd.f32 %v7432, %v7282
    %v7434 = vadd.f32 %v7433, %v7286
    %v7435 = vadd.f32 %v7434, %v7290
    %v7436 = vadd.f32 %v7435, %v7294
    %v7437 = vadd.f32 %v7436, %v7298
    %v7438 = vadd.f32 %v7437, %v7302
    %v7439 = vadd.f32 %v7438, %v7306
    %v7440 = vadd.f32 %v7439, %v7310
    %v7441 = vadd.f32 %v7440, %v7314
    %v7442 = vadd.f32 %v7441, %v7318
    %v7443 = vadd.f32 %v7442, %v7322
    %v7444 = vadd.f32 %v7443, %v7326
    %v7445 = vadd.f32 %v7444, %v7330
    %v7446 = vadd.f32 %v7445, %v7334
    %v7447 = vadd.f32 %v7446, %v7338
    %v7448 = vadd.f32 %v7447, %v7342
    %v7449 = vadd.f32 %v7448, %v7346
    %v7450 = vadd.f32 %v7449, %v7350
    %v7451 = vadd.f32 %v7450, %v7354
    %v7452 = vadd.f32 %v7451, %v7358
    %v7453 = vadd.f32 %v7452, %v7362
    %v7454 = vadd.f32 %v7453, %v7366
    %v7455 = vadd.f32 %v7454, %v7370
    %v7456 = vadd.f32 %v7455, %v7374
    %v7457 = vadd.f32 %v7456, %v7378
    %v7458 = vadd.f32 %v7457, %v7382
    %v7459 = vadd.f32 %v7458, %v7386
    %v7460 = vadd.f32 %v7459, %v7390
    %v7461 = vrot.slane %v7460, 4
    %v7462 = vadd.f32 %v7460, %v7461
    %v7463 = vrot.slane %v7462, 2
    %v7464 = vadd.f32 %v7462, %v7463
    %v7465 = vrot.slane %v7464, 1
    %v7466 = vadd.f32 %v7464, %v7465
    %v7467 = vadd.f32 %v7267, %v7271
    %v7468 = vadd.f32 %v7467, %v7275
    %v7469 = vadd.f32 %v7468, %v7279
    %v7470 = vadd.f32 %v7469, %v7283
    %v7471 = vadd.f32 %v7470, %v7287
    %v7472 = vadd.f32 %v7471, %v7291
    %v7473 = vadd.f32 %v7472, %v7295
    %v7474 = vadd.f32 %v7473, %v7299
    %v7475 = vadd.f32 %v7474, %v7303
    %v7476 = vadd.f32 %v7475, %v7307
    %v7477 = vadd.f32 %v7476, %v7311
    %v7478 = vadd.f32 %v7477, %v7315
    %v7479 = vadd.f32 %v7478, %v7319
    %v7480 = vadd.f32 %v7479, %v7323
    %v7481 = vadd.f32 %v7480, %v7327
    %v7482 = vadd.f32 %v7481, %v7331
    %v7483 = vadd.f32 %v7482, %v7335
    %v7484 = vadd.f32 %v7483, %v7339
    %v7485 = vadd.f32 %v7484, %v7343
    %v7486 = vadd.f32 %v7485, %v7347
    %v7487 = vadd.f32 %v7486, %v7351
    %v7488 = vadd.f32 %v7487, %v7355
    %v7489 = vadd.f32 %v7488, %v7359
    %v7490 = vadd.f32 %v7489, %v7363
    %v7491 = vadd.f32 %v7490, %v7367
    %v7492 = vadd.f32 %v7491, %v7371
    %v7493 = vadd.f32 %v7492, %v7375
    %v7494 = vadd.f32 %v7493, %v7379
    %v7495 = vadd.f32 %v7494, %v7383
    %v7496 = vadd.f32 %v7495, %v7387
    %v7497 = vadd.f32 %v7496, %v7391
    %v7498 = vrot.slane %v7497, 4
    %v7499 = vadd.f32 %v7497, %v7498
    %v7500 = vrot.slane %v7499, 2
    %v7501 = vadd.f32 %v7499, %v7500
    %v7502 = vrot.slane %v7501, 1
    %v7503 = vadd.f32 %v7501, %v7502
    %v7504 = vadd.f32 %v7268, %v7272
    %v7505 = vadd.f32 %v7504, %v7276
    %v7506 = vadd.f32 %v7505, %v7280
    %v7507 = vadd.f32 %v7506, %v7284
    %v7508 = vadd.f32 %v7507, %v7288
    %v7509 = vadd.f32 %v7508, %v7292
    %v7510 = vadd.f32 %v7509, %v7296
    %v7511 = vadd.f32 %v7510, %v7300
    %v7512 = vadd.f32 %v7511, %v7304
    %v7513 = vadd.f32 %v7512, %v7308
    %v7514 = vadd.f32 %v7513, %v7312
    %v7515 = vadd.f32 %v7514, %v7316
    %v7516 = vadd.f32 %v7515, %v7320
    %v7517 = vadd.f32 %v7516, %v7324
    %v7518 = vadd.f32 %v7517, %v7328
    %v7519 = vadd.f32 %v7518, %v7332
    %v7520 = vadd.f32 %v7519, %v7336
    %v7521 = vadd.f32 %v7520, %v7340
    %v7522 = vadd.f32 %v7521, %v7344
    %v7523 = vadd.f32 %v7522, %v7348
    %v7524 = vadd.f32 %v7523, %v7352
    %v7525 = vadd.f32 %v7524, %v7356
    %v7526 = vadd.f32 %v7525, %v7360
    %v7527 = vadd.f32 %v7526, %v7364
    %v7528 = vadd.f32 %v7527, %v7368
    %v7529 = vadd.f32 %v7528, %v7372
    %v7530 = vadd.f32 %v7529, %v7376
    %v7531 = vadd.f32 %v7530, %v7380
    %v7532 = vadd.f32 %v7531, %v7384
    %v7533 = vadd.f32 %v7532, %v7388
    %v7534 = vadd.f32 %v7533, %v7392
    %v7535 = vrot.slane %v7534, 4
    %v7536 = vadd.f32 %v7534, %v7535
    %v7537 = vrot.slane %v7536, 2
    %v7538 = vadd.f32 %v7536, %v7537
    %v7539 = vrot.slane %v7538, 1
    %v7540 = vadd.f32 %v7538, %v7539
    %v7541 = vmul.f32 %v7429, 0.00390625
    %v7542 = vmul.f32 %v7466, 0.00390625
    %v7543 = vmul.f32 %v7503, 0.00390625
    %v7544 = vmul.f32 %v7540, 0.00390625
    %v7545 = vmul.f32 %v7261, %v7261
    %v7546 = vmul.f32 %v7262, %v7262
    %v7547 = vmul.f32 %v7263, %v7263
    %v7548 = vmul.f32 %v7264, %v7264
    %v7549 = vsub.f32 %v7541, %v7545
    %v7550 = vsub.f32 %v7542, %v7546
    %v7551 = vsub.f32 %v7543, %v7547
    %v7552 = vsub.f32 %v7544, %v7548
    %v7553 = vmax.f32 %v7549, 0.0
    %v7554 = vmax.f32 %v7550, 0.0
    %v7555 = vmax.f32 %v7551, 0.0
    %v7556 = vmax.f32 %v7552, 0.0
    %s7557 = scalar_lea.vmem [#allocation11], 35
    %v7558 = vld [vmem:[%s7557] ss:$8 sm:$0xf]
    %v7559 = vadd.f32 %v7553, 1e-05
    %v7560 = vadd.f32 %v7554, 1e-05
    %v7561 = vadd.f32 %v7555, 1e-05
    %v7562 = vadd.f32 %v7556, 1e-05
    %v7563 = vrsqrt.pop %v7559
    %v7564 = vmul.f32 %v7563, %v7559
    %v7565 = vmul.f32 %v7564, %v7563
    %v7566 = vmul.f32 0.5, %v7565
    %v7567 = vsub.f32 1.5, %v7566
    %v7568 = vmul.f32 %v7563, %v7567
    %vm7569 = vweird.f32 %v7559
    %vm7570 = vweird.f32 %v7563
    %vm7571 = vmor %vm7569, %vm7570
    %v7572 = vsel %vm7571, %v7563, %v7568
    %v7573 = vrsqrt.pop %v7560
    %v7574 = vmul.f32 %v7573, %v7560
    %v7575 = vmul.f32 %v7574, %v7573
    %v7576 = vmul.f32 0.5, %v7575
    %v7577 = vsub.f32 1.5, %v7576
    %v7578 = vmul.f32 %v7573, %v7577
    %vm7579 = vweird.f32 %v7560
    %vm7580 = vweird.f32 %v7573
    %vm7581 = vmor %vm7579, %vm7580
    %v7582 = vsel %vm7581, %v7573, %v7578
    %v7583 = vrsqrt.pop %v7561
    %v7584 = vmul.f32 %v7583, %v7561
    %v7585 = vmul.f32 %v7584, %v7583
    %v7586 = vmul.f32 0.5, %v7585
    %v7587 = vsub.f32 1.5, %v7586
    %v7588 = vmul.f32 %v7583, %v7587
    %vm7589 = vweird.f32 %v7561
    %vm7590 = vweird.f32 %v7583
    %vm7591 = vmor %vm7589, %vm7590
    %v7592 = vsel %vm7591, %v7583, %v7588
    %v7593 = vrsqrt.pop %v7562
    %v7594 = vmul.f32 %v7593, %v7562
    %v7595 = vmul.f32 %v7594, %v7593
    %v7596 = vmul.f32 0.5, %v7595
    %v7597 = vsub.f32 1.5, %v7596
    %v7598 = vmul.f32 %v7593, %v7597
    %vm7599 = vweird.f32 %v7562
    %vm7600 = vweird.f32 %v7593
    %vm7601 = vmor %vm7599, %vm7600
    %v7602 = vsel %vm7601, %v7593, %v7598
    %v7607 = vrot.slane %v7582, 7
    %v7608 = vrot.slane %v7592, 6
    %v7609 = vrot.slane %v7602, 5
    %v7610 = vsel %vm2048, %v7572, %v7607
    %v7611 = vsel %vm2050, %v7608, %v7609
    %v7612 = vsel %vm2052, %v7610, %v7611
    %v7614 = vmul.f32 %v7558, %v7612
    %s7615 = scalar_lea.vmem [#allocation11], 36
    %v7616 = vld [vmem:[%s7615] ss:$8 sm:$0xf]
    %v7618 = vperm.slane %v7614, 0
    %v7619 = vperm.slane %v7614, 1
    %v7620 = vperm.slane %v7614, 2
    %v7621 = vperm.slane %v7614, 3
    %v7626 = vmul.f32 %v7261, %v7618
    %v7627 = vmul.f32 %v7262, %v7619
    %v7628 = vmul.f32 %v7263, %v7620
    %v7629 = vmul.f32 %v7264, %v7621
    %v7634 = vrot.slane %v7627, 7
    %v7635 = vrot.slane %v7628, 6
    %v7636 = vrot.slane %v7629, 5
    %v7637 = vsel %vm2048, %v7626, %v7634
    %v7638 = vsel %vm2050, %v7635, %v7636
    %v7639 = vsel %vm2052, %v7637, %v7638
    %v7641 = vsub.f32 %v7616, %v7639
    %v7642 = vmul.f32 %v6500, %v7618
    %v7643 = vmul.f32 %v6678, %v7619
    %v7644 = vmul.f32 %v6856, %v7620
    %v7645 = vmul.f32 %v7034, %v7621
    %v7646 = vmul.f32 %v6502, %v7618
    %v7647 = vmul.f32 %v6680, %v7619
    %v7648 = vmul.f32 %v6858, %v7620
    %v7649 = vmul.f32 %v7036, %v7621
    %v7650 = vmul.f32 %v6505, %v7618
    %v7651 = vmul.f32 %v6683, %v7619
    %v7652 = vmul.f32 %v6861, %v7620
    %v7653 = vmul.f32 %v7039, %v7621
    %v7654 = vmul.f32 %v6507, %v7618
    %v7655 = vmul.f32 %v6685, %v7619
    %v7656 = vmul.f32 %v6863, %v7620
    %v7657 = vmul.f32 %v7041, %v7621
    %v7658 = vmul.f32 %v6510, %v7618
    %v7659 = vmul.f32 %v6688, %v7619
    %v7660 = vmul.f32 %v6866, %v7620
    %v7661 = vmul.f32 %v7044, %v7621
    %v7662 = vmul.f32 %v6512, %v7618
    %v7663 = vmul.f32 %v6690, %v7619
    %v7664 = vmul.f32 %v6868, %v7620
    %v7665 = vmul.f32 %v7046, %v7621
    %v7666 = vmul.f32 %v6515, %v7618
    %v7667 = vmul.f32 %v6693, %v7619
    %v7668 = vmul.f32 %v6871, %v7620
    %v7669 = vmul.f32 %v7049, %v7621
    %v7670 = vmul.f32 %v6517, %v7618
    %v7671 = vmul.f32 %v6695, %v7619
    %v7672 = vmul.f32 %v6873, %v7620
    %v7673 = vmul.f32 %v7051, %v7621
    %v7674 = vmul.f32 %v6520, %v7618
    %v7675 = vmul.f32 %v6698, %v7619
    %v7676 = vmul.f32 %v6876, %v7620
    %v7677 = vmul.f32 %v7054, %v7621
    %v7678 = vmul.f32 %v6522, %v7618
    %v7679 = vmul.f32 %v6700, %v7619
    %v7680 = vmul.f32 %v6878, %v7620
    %v7681 = vmul.f32 %v7056, %v7621
    %v7682 = vmul.f32 %v6525, %v7618
    %v7683 = vmul.f32 %v6703, %v7619
    %v7684 = vmul.f32 %v6881, %v7620
    %v7685 = vmul.f32 %v7059, %v7621
    %v7686 = vmul.f32 %v6527, %v7618
    %v7687 = vmul.f32 %v6705, %v7619
    %v7688 = vmul.f32 %v6883, %v7620
    %v7689 = vmul.f32 %v7061, %v7621
    %v7690 = vmul.f32 %v6530, %v7618
    %v7691 = vmul.f32 %v6708, %v7619
    %v7692 = vmul.f32 %v6886, %v7620
    %v7693 = vmul.f32 %v7064, %v7621
    %v7694 = vmul.f32 %v6532, %v7618
    %v7695 = vmul.f32 %v6710, %v7619
    %v7696 = vmul.f32 %v6888, %v7620
    %v7697 = vmul.f32 %v7066, %v7621
    %v7698 = vmul.f32 %v6535, %v7618
    %v7699 = vmul.f32 %v6713, %v7619
    %v7700 = vmul.f32 %v6891, %v7620
    %v7701 = vmul.f32 %v7069, %v7621
    %v7702 = vmul.f32 %v6537, %v7618
    %v7703 = vmul.f32 %v6715, %v7619
    %v7704 = vmul.f32 %v6893, %v7620
    %v7705 = vmul.f32 %v7071, %v7621
    %v7706 = vmul.f32 %v6540, %v7618
    %v7707 = vmul.f32 %v6718, %v7619
    %v7708 = vmul.f32 %v6896, %v7620
    %v7709 = vmul.f32 %v7074, %v7621
    %v7710 = vmul.f32 %v6542, %v7618
    %v7711 = vmul.f32 %v6720, %v7619
    %v7712 = vmul.f32 %v6898, %v7620
    %v7713 = vmul.f32 %v7076, %v7621
    %v7714 = vmul.f32 %v6545, %v7618
    %v7715 = vmul.f32 %v6723, %v7619
    %v7716 = vmul.f32 %v6901, %v7620
    %v7717 = vmul.f32 %v7079, %v7621
    %v7718 = vmul.f32 %v6547, %v7618
    %v7719 = vmul.f32 %v6725, %v7619
    %v7720 = vmul.f32 %v6903, %v7620
    %v7721 = vmul.f32 %v7081, %v7621
    %v7722 = vmul.f32 %v6550, %v7618
    %v7723 = vmul.f32 %v6728, %v7619
    %v7724 = vmul.f32 %v6906, %v7620
    %v7725 = vmul.f32 %v7084, %v7621
    %v7726 = vmul.f32 %v6552, %v7618
    %v7727 = vmul.f32 %v6730, %v7619
    %v7728 = vmul.f32 %v6908, %v7620
    %v7729 = vmul.f32 %v7086, %v7621
    %v7730 = vmul.f32 %v6555, %v7618
    %v7731 = vmul.f32 %v6733, %v7619
    %v7732 = vmul.f32 %v6911, %v7620
    %v7733 = vmul.f32 %v7089, %v7621
    %v7734 = vmul.f32 %v6557, %v7618
    %v7735 = vmul.f32 %v6735, %v7619
    %v7736 = vmul.f32 %v6913, %v7620
    %v7737 = vmul.f32 %v7091, %v7621
    %v7738 = vmul.f32 %v6560, %v7618
    %v7739 = vmul.f32 %v6738, %v7619
    %v7740 = vmul.f32 %v6916, %v7620
    %v7741 = vmul.f32 %v7094, %v7621
    %v7742 = vmul.f32 %v6562, %v7618
    %v7743 = vmul.f32 %v6740, %v7619
    %v7744 = vmul.f32 %v6918, %v7620
    %v7745 = vmul.f32 %v7096, %v7621
    %v7746 = vmul.f32 %v6565, %v7618
    %v7747 = vmul.f32 %v6743, %v7619
    %v7748 = vmul.f32 %v6921, %v7620
    %v7749 = vmul.f32 %v7099, %v7621
    %v7750 = vmul.f32 %v6567, %v7618
    %v7751 = vmul.f32 %v6745, %v7619
    %v7752 = vmul.f32 %v6923, %v7620
    %v7753 = vmul.f32 %v7101, %v7621
    %v7754 = vmul.f32 %v6570, %v7618
    %v7755 = vmul.f32 %v6748, %v7619
    %v7756 = vmul.f32 %v6926, %v7620
    %v7757 = vmul.f32 %v7104, %v7621
    %v7758 = vmul.f32 %v6572, %v7618
    %v7759 = vmul.f32 %v6750, %v7619
    %v7760 = vmul.f32 %v6928, %v7620
    %v7761 = vmul.f32 %v7106, %v7621
    %v7762 = vmul.f32 %v6575, %v7618
    %v7763 = vmul.f32 %v6753, %v7619
    %v7764 = vmul.f32 %v6931, %v7620
    %v7765 = vmul.f32 %v7109, %v7621
    %v7766 = vmul.f32 %v6577, %v7618
    %v7767 = vmul.f32 %v6755, %v7619
    %v7768 = vmul.f32 %v6933, %v7620
    %v7769 = vmul.f32 %v7111, %v7621
    %v7771 = vperm.slane %v7641, 0
    %v7772 = vperm.slane %v7641, 1
    %v7773 = vperm.slane %v7641, 2
    %v7774 = vperm.slane %v7641, 3
    %v7779 = vadd.f32 %v7642, %v7771
    %v7780 = vadd.f32 %v7643, %v7772
    %v7781 = vadd.f32 %v7644, %v7773
    %v7782 = vadd.f32 %v7645, %v7774
    %v7783 = vadd.f32 %v7646, %v7771
    %v7784 = vadd.f32 %v7647, %v7772
    %v7785 = vadd.f32 %v7648, %v7773
    %v7786 = vadd.f32 %v7649, %v7774
    %v7787 = vadd.f32 %v7650, %v7771
    %v7788 = vadd.f32 %v7651, %v7772
    %v7789 = vadd.f32 %v7652, %v7773
    %v7790 = vadd.f32 %v7653, %v7774
    %v7791 = vadd.f32 %v7654, %v7771
    %v7792 = vadd.f32 %v7655, %v7772
    %v7793 = vadd.f32 %v7656, %v7773
    %v7794 = vadd.f32 %v7657, %v7774
    %v7795 = vadd.f32 %v7658, %v7771
    %v7796 = vadd.f32 %v7659, %v7772
    %v7797 = vadd.f32 %v7660, %v7773
    %v7798 = vadd.f32 %v7661, %v7774
    %v7799 = vadd.f32 %v7662, %v7771
    %v7800 = vadd.f32 %v7663, %v7772
    %v7801 = vadd.f32 %v7664, %v7773
    %v7802 = vadd.f32 %v7665, %v7774
    %v7803 = vadd.f32 %v7666, %v7771
    %v7804 = vadd.f32 %v7667, %v7772
    %v7805 = vadd.f32 %v7668, %v7773
    %v7806 = vadd.f32 %v7669, %v7774
    %v7807 = vadd.f32 %v7670, %v7771
    %v7808 = vadd.f32 %v7671, %v7772
    %v7809 = vadd.f32 %v7672, %v7773
    %v7810 = vadd.f32 %v7673, %v7774
    %v7811 = vadd.f32 %v7674, %v7771
    %v7812 = vadd.f32 %v7675, %v7772
    %v7813 = vadd.f32 %v7676, %v7773
    %v7814 = vadd.f32 %v7677, %v7774
    %v7815 = vadd.f32 %v7678, %v7771
    %v7816 = vadd.f32 %v7679, %v7772
    %v7817 = vadd.f32 %v7680, %v7773
    %v7818 = vadd.f32 %v7681, %v7774
    %v7819 = vadd.f32 %v7682, %v7771
    %v7820 = vadd.f32 %v7683, %v7772
    %v7821 = vadd.f32 %v7684, %v7773
    %v7822 = vadd.f32 %v7685, %v7774
    %v7823 = vadd.f32 %v7686, %v7771
    %v7824 = vadd.f32 %v7687, %v7772
    %v7825 = vadd.f32 %v7688, %v7773
    %v7826 = vadd.f32 %v7689, %v7774
    %v7827 = vadd.f32 %v7690, %v7771
    %v7828 = vadd.f32 %v7691, %v7772
    %v7829 = vadd.f32 %v7692, %v7773
    %v7830 = vadd.f32 %v7693, %v7774
    %v7831 = vadd.f32 %v7694, %v7771
    %v7832 = vadd.f32 %v7695, %v7772
    %v7833 = vadd.f32 %v7696, %v7773
    %v7834 = vadd.f32 %v7697, %v7774
    %v7835 = vadd.f32 %v7698, %v7771
    %v7836 = vadd.f32 %v7699, %v7772
    %v7837 = vadd.f32 %v7700, %v7773
    %v7838 = vadd.f32 %v7701, %v7774
    %v7839 = vadd.f32 %v7702, %v7771
    %v7840 = vadd.f32 %v7703, %v7772
    %v7841 = vadd.f32 %v7704, %v7773
    %v7842 = vadd.f32 %v7705, %v7774
    %v7843 = vadd.f32 %v7706, %v7771
    %v7844 = vadd.f32 %v7707, %v7772
    %v7845 = vadd.f32 %v7708, %v7773
    %v7846 = vadd.f32 %v7709, %v7774
    %v7847 = vadd.f32 %v7710, %v7771
    %v7848 = vadd.f32 %v7711, %v7772
    %v7849 = vadd.f32 %v7712, %v7773
    %v7850 = vadd.f32 %v7713, %v7774
    %v7851 = vadd.f32 %v7714, %v7771
    %v7852 = vadd.f32 %v7715, %v7772
    %v7853 = vadd.f32 %v7716, %v7773
    %v7854 = vadd.f32 %v7717, %v7774
    %v7855 = vadd.f32 %v7718, %v7771
    %v7856 = vadd.f32 %v7719, %v7772
    %v7857 = vadd.f32 %v7720, %v7773
    %v7858 = vadd.f32 %v7721, %v7774
    %v7859 = vadd.f32 %v7722, %v7771
    %v7860 = vadd.f32 %v7723, %v7772
    %v7861 = vadd.f32 %v7724, %v7773
    %v7862 = vadd.f32 %v7725, %v7774
    %v7863 = vadd.f32 %v7726, %v7771
    %v7864 = vadd.f32 %v7727, %v7772
    %v7865 = vadd.f32 %v7728, %v7773
    %v7866 = vadd.f32 %v7729, %v7774
    %v7867 = vadd.f32 %v7730, %v7771
    %v7868 = vadd.f32 %v7731, %v7772
    %v7869 = vadd.f32 %v7732, %v7773
    %v7870 = vadd.f32 %v7733, %v7774
    %v7871 = vadd.f32 %v7734, %v7771
    %v7872 = vadd.f32 %v7735, %v7772
    %v7873 = vadd.f32 %v7736, %v7773
    %v7874 = vadd.f32 %v7737, %v7774
    %v7875 = vadd.f32 %v7738, %v7771
    %v7876 = vadd.f32 %v7739, %v7772
    %v7877 = vadd.f32 %v7740, %v7773
    %v7878 = vadd.f32 %v7741, %v7774
    %v7879 = vadd.f32 %v7742, %v7771
    %v7880 = vadd.f32 %v7743, %v7772
    %v7881 = vadd.f32 %v7744, %v7773
    %v7882 = vadd.f32 %v7745, %v7774
    %v7883 = vadd.f32 %v7746, %v7771
    %v7884 = vadd.f32 %v7747, %v7772
    %v7885 = vadd.f32 %v7748, %v7773
    %v7886 = vadd.f32 %v7749, %v7774
    %v7887 = vadd.f32 %v7750, %v7771
    %v7888 = vadd.f32 %v7751, %v7772
    %v7889 = vadd.f32 %v7752, %v7773
    %v7890 = vadd.f32 %v7753, %v7774
    %v7891 = vadd.f32 %v7754, %v7771
    %v7892 = vadd.f32 %v7755, %v7772
    %v7893 = vadd.f32 %v7756, %v7773
    %v7894 = vadd.f32 %v7757, %v7774
    %v7895 = vadd.f32 %v7758, %v7771
    %v7896 = vadd.f32 %v7759, %v7772
    %v7897 = vadd.f32 %v7760, %v7773
    %v7898 = vadd.f32 %v7761, %v7774
    %v7899 = vadd.f32 %v7762, %v7771
    %v7900 = vadd.f32 %v7763, %v7772
    %v7901 = vadd.f32 %v7764, %v7773
    %v7902 = vadd.f32 %v7765, %v7774
    %v7903 = vadd.f32 %v7766, %v7771
    %v7904 = vadd.f32 %v7767, %v7772
    %v7905 = vadd.f32 %v7768, %v7773
    %v7906 = vadd.f32 %v7769, %v7774
    %v7907 = vmax.f32 %v7779, 0.0
    %v7908 = vmax.f32 %v7780, 0.0
    %v7909 = vmax.f32 %v7781, 0.0
    %v7910 = vmax.f32 %v7782, 0.0
    %v7911 = vmax.f32 %v7783, 0.0
    %v7912 = vmax.f32 %v7784, 0.0
    %v7913 = vmax.f32 %v7785, 0.0
    %v7914 = vmax.f32 %v7786, 0.0
    %v7915 = vmax.f32 %v7787, 0.0
    %v7916 = vmax.f32 %v7788, 0.0
    %v7917 = vmax.f32 %v7789, 0.0
    %v7918 = vmax.f32 %v7790, 0.0
    %v7919 = vmax.f32 %v7791, 0.0
    %v7920 = vmax.f32 %v7792, 0.0
    %v7921 = vmax.f32 %v7793, 0.0
    %v7922 = vmax.f32 %v7794, 0.0
    %v7923 = vmax.f32 %v7795, 0.0
    %v7924 = vmax.f32 %v7796, 0.0
    %v7925 = vmax.f32 %v7797, 0.0
    %v7926 = vmax.f32 %v7798, 0.0
    %v7927 = vmax.f32 %v7799, 0.0
    %v7928 = vmax.f32 %v7800, 0.0
    %v7929 = vmax.f32 %v7801, 0.0
    %v7930 = vmax.f32 %v7802, 0.0
    %v7931 = vmax.f32 %v7803, 0.0
    %v7932 = vmax.f32 %v7804, 0.0
    %v7933 = vmax.f32 %v7805, 0.0
    %v7934 = vmax.f32 %v7806, 0.0
    %v7935 = vmax.f32 %v7807, 0.0
    %v7936 = vmax.f32 %v7808, 0.0
    %v7937 = vmax.f32 %v7809, 0.0
    %v7938 = vmax.f32 %v7810, 0.0
    %v7939 = vmax.f32 %v7811, 0.0
    %v7940 = vmax.f32 %v7812, 0.0
    %v7941 = vmax.f32 %v7813, 0.0
    %v7942 = vmax.f32 %v7814, 0.0
    %v7943 = vmax.f32 %v7815, 0.0
    %v7944 = vmax.f32 %v7816, 0.0
    %v7945 = vmax.f32 %v7817, 0.0
    %v7946 = vmax.f32 %v7818, 0.0
    %v7947 = vmax.f32 %v7819, 0.0
    %v7948 = vmax.f32 %v7820, 0.0
    %v7949 = vmax.f32 %v7821, 0.0
    %v7950 = vmax.f32 %v7822, 0.0
    %v7951 = vmax.f32 %v7823, 0.0
    %v7952 = vmax.f32 %v7824, 0.0
    %v7953 = vmax.f32 %v7825, 0.0
    %v7954 = vmax.f32 %v7826, 0.0
    %v7955 = vmax.f32 %v7827, 0.0
    %v7956 = vmax.f32 %v7828, 0.0
    %v7957 = vmax.f32 %v7829, 0.0
    %v7958 = vmax.f32 %v7830, 0.0
    %v7959 = vmax.f32 %v7831, 0.0
    %v7960 = vmax.f32 %v7832, 0.0
    %v7961 = vmax.f32 %v7833, 0.0
    %v7962 = vmax.f32 %v7834, 0.0
    %v7963 = vmax.f32 %v7835, 0.0
    %v7964 = vmax.f32 %v7836, 0.0
    %v7965 = vmax.f32 %v7837, 0.0
    %v7966 = vmax.f32 %v7838, 0.0
    %v7967 = vmax.f32 %v7839, 0.0
    %v7968 = vmax.f32 %v7840, 0.0
    %v7969 = vmax.f32 %v7841, 0.0
    %v7970 = vmax.f32 %v7842, 0.0
    %v7971 = vmax.f32 %v7843, 0.0
    %v7972 = vmax.f32 %v7844, 0.0
    %v7973 = vmax.f32 %v7845, 0.0
    %v7974 = vmax.f32 %v7846, 0.0
    %v7975 = vmax.f32 %v7847, 0.0
    %v7976 = vmax.f32 %v7848, 0.0
    %v7977 = vmax.f32 %v7849, 0.0
    %v7978 = vmax.f32 %v7850, 0.0
    %v7979 = vmax.f32 %v7851, 0.0
    %v7980 = vmax.f32 %v7852, 0.0
    %v7981 = vmax.f32 %v7853, 0.0
    %v7982 = vmax.f32 %v7854, 0.0
    %v7983 = vmax.f32 %v7855, 0.0
    %v7984 = vmax.f32 %v7856, 0.0
    %v7985 = vmax.f32 %v7857, 0.0
    %v7986 = vmax.f32 %v7858, 0.0
    %v7987 = vmax.f32 %v7859, 0.0
    %v7988 = vmax.f32 %v7860, 0.0
    %v7989 = vmax.f32 %v7861, 0.0
    %v7990 = vmax.f32 %v7862, 0.0
    %v7991 = vmax.f32 %v7863, 0.0
    %v7992 = vmax.f32 %v7864, 0.0
    %v7993 = vmax.f32 %v7865, 0.0
    %v7994 = vmax.f32 %v7866, 0.0
    %v7995 = vmax.f32 %v7867, 0.0
    %v7996 = vmax.f32 %v7868, 0.0
    %v7997 = vmax.f32 %v7869, 0.0
    %v7998 = vmax.f32 %v7870, 0.0
    %v7999 = vmax.f32 %v7871, 0.0
    %v8000 = vmax.f32 %v7872, 0.0
    %v8001 = vmax.f32 %v7873, 0.0
    %v8002 = vmax.f32 %v7874, 0.0
    %v8003 = vmax.f32 %v7875, 0.0
    %v8004 = vmax.f32 %v7876, 0.0
    %v8005 = vmax.f32 %v7877, 0.0
    %v8006 = vmax.f32 %v7878, 0.0
    %v8007 = vmax.f32 %v7879, 0.0
    %v8008 = vmax.f32 %v7880, 0.0
    %v8009 = vmax.f32 %v7881, 0.0
    %v8010 = vmax.f32 %v7882, 0.0
    %v8011 = vmax.f32 %v7883, 0.0
    %v8012 = vmax.f32 %v7884, 0.0
    %v8013 = vmax.f32 %v7885, 0.0
    %v8014 = vmax.f32 %v7886, 0.0
    %v8015 = vmax.f32 %v7887, 0.0
    %v8016 = vmax.f32 %v7888, 0.0
    %v8017 = vmax.f32 %v7889, 0.0
    %v8018 = vmax.f32 %v7890, 0.0
    %v8019 = vmax.f32 %v7891, 0.0
    %v8020 = vmax.f32 %v7892, 0.0
    %v8021 = vmax.f32 %v7893, 0.0
    %v8022 = vmax.f32 %v7894, 0.0
    %v8023 = vmax.f32 %v7895, 0.0
    %v8024 = vmax.f32 %v7896, 0.0
    %v8025 = vmax.f32 %v7897, 0.0
    %v8026 = vmax.f32 %v7898, 0.0
    %v8027 = vmax.f32 %v7899, 0.0
    %v8028 = vmax.f32 %v7900, 0.0
    %v8029 = vmax.f32 %v7901, 0.0
    %v8030 = vmax.f32 %v7902, 0.0
    %v8031 = vmax.f32 %v7903, 0.0
    %v8032 = vmax.f32 %v7904, 0.0
    %v8033 = vmax.f32 %v7905, 0.0
    %v8034 = vmax.f32 %v7906, 0.0
    %v8035 = vpack.c.bf16 %v7911, %v7907
    %v8036 = vpack.c.bf16 %v7912, %v7908
    %v8037 = vpack.c.bf16 %v7913, %v7909
    %v8038 = vpack.c.bf16 %v7914, %v7910
    %v8039 = vpack.c.bf16 %v7919, %v7915
    %v8040 = vpack.c.bf16 %v7920, %v7916
    %v8041 = vpack.c.bf16 %v7921, %v7917
    %v8042 = vpack.c.bf16 %v7922, %v7918
    %v8043 = vpack.c.bf16 %v7927, %v7923
    %v8044 = vpack.c.bf16 %v7928, %v7924
    %v8045 = vpack.c.bf16 %v7929, %v7925
    %v8046 = vpack.c.bf16 %v7930, %v7926
    %v8047 = vpack.c.bf16 %v7935, %v7931
    %v8048 = vpack.c.bf16 %v7936, %v7932
    %v8049 = vpack.c.bf16 %v7937, %v7933
    %v8050 = vpack.c.bf16 %v7938, %v7934
    %v8051 = vpack.c.bf16 %v7943, %v7939
    %v8052 = vpack.c.bf16 %v7944, %v7940
    %v8053 = vpack.c.bf16 %v7945, %v7941
    %v8054 = vpack.c.bf16 %v7946, %v7942
    %v8055 = vpack.c.bf16 %v7951, %v7947
    %v8056 = vpack.c.bf16 %v7952, %v7948
    %v8057 = vpack.c.bf16 %v7953, %v7949
    %v8058 = vpack.c.bf16 %v7954, %v7950
    %v8059 = vpack.c.bf16 %v7959, %v7955
    %v8060 = vpack.c.bf16 %v7960, %v7956
    %v8061 = vpack.c.bf16 %v7961, %v7957
    %v8062 = vpack.c.bf16 %v7962, %v7958
    %v8063 = vpack.c.bf16 %v7967, %v7963
    %v8064 = vpack.c.bf16 %v7968, %v7964
    %v8065 = vpack.c.bf16 %v7969, %v7965
    %v8066 = vpack.c.bf16 %v7970, %v7966
    %v8067 = vpack.c.bf16 %v7975, %v7971
    %v8068 = vpack.c.bf16 %v7976, %v7972
    %v8069 = vpack.c.bf16 %v7977, %v7973
    %v8070 = vpack.c.bf16 %v7978, %v7974
    %v8071 = vpack.c.bf16 %v7983, %v7979
    %v8072 = vpack.c.bf16 %v7984, %v7980
    %v8073 = vpack.c.bf16 %v7985, %v7981
    %v8074 = vpack.c.bf16 %v7986, %v7982
    %v8075 = vpack.c.bf16 %v7991, %v7987
    %v8076 = vpack.c.bf16 %v7992, %v7988
    %v8077 = vpack.c.bf16 %v7993, %v7989
    %v8078 = vpack.c.bf16 %v7994, %v7990
    %v8079 = vpack.c.bf16 %v7999, %v7995
    %v8080 = vpack.c.bf16 %v8000, %v7996
    %v8081 = vpack.c.bf16 %v8001, %v7997
    %v8082 = vpack.c.bf16 %v8002, %v7998
    %v8083 = vpack.c.bf16 %v8007, %v8003
    %v8084 = vpack.c.bf16 %v8008, %v8004
    %v8085 = vpack.c.bf16 %v8009, %v8005
    %v8086 = vpack.c.bf16 %v8010, %v8006
    %v8087 = vpack.c.bf16 %v8015, %v8011
    %v8088 = vpack.c.bf16 %v8016, %v8012
    %v8089 = vpack.c.bf16 %v8017, %v8013
    %v8090 = vpack.c.bf16 %v8018, %v8014
    %v8091 = vpack.c.bf16 %v8023, %v8019
    %v8092 = vpack.c.bf16 %v8024, %v8020
    %v8093 = vpack.c.bf16 %v8025, %v8021
    %v8094 = vpack.c.bf16 %v8026, %v8022
    %v8095 = vpack.c.bf16 %v8031, %v8027
    %v8096 = vpack.c.bf16 %v8032, %v8028
    %v8097 = vpack.c.bf16 %v8033, %v8029
    %v8098 = vpack.c.bf16 %v8034, %v8030
    %s8099 = smul.u32 4, 64
    %s8100 = smul.u32 %s8099, 2
    %s8101 = sshll.u32 %s8100, 4
    %8102 = dma.done %s250, %s8101
    %v8103 = vld [vmem:[#allocation4] sm:$0xff]
    %v8104 = vld [vmem:[#allocation4 + $0x8] sm:$0xff]
    %v8105 = vld [vmem:[#allocation4 + $0x10] sm:$0xff]
    %v8106 = vld [vmem:[#allocation4 + $0x18] sm:$0xff]
    %v8107 = vld [vmem:[#allocation4 + $0x20] sm:$0xff]
    %v8108 = vld [vmem:[#allocation4 + $0x28] sm:$0xff]
    %v8109 = vld [vmem:[#allocation4 + $0x30] sm:$0xff]
    %v8110 = vld [vmem:[#allocation4 + $0x38] sm:$0xff]
    %v8111 = vld [vmem:[#allocation4 + $0x40] sm:$0xff]
    %v8112 = vld [vmem:[#allocation4 + $0x48] sm:$0xff]
    %v8113 = vld [vmem:[#allocation4 + $0x50] sm:$0xff]
    %v8114 = vld [vmem:[#allocation4 + $0x58] sm:$0xff]
    %v8115 = vld [vmem:[#allocation4 + $0x60] sm:$0xff]
    %v8116 = vld [vmem:[#allocation4 + $0x68] sm:$0xff]
    %v8117 = vld [vmem:[#allocation4 + $0x70] sm:$0xff]
    %v8118 = vld [vmem:[#allocation4 + $0x78] sm:$0xff]
    %v8119 = vld [vmem:[#allocation4 + $0x80] sm:$0xff]
    %v8120 = vld [vmem:[#allocation4 + $0x88] sm:$0xff]
    %v8121 = vld [vmem:[#allocation4 + $0x90] sm:$0xff]
    %v8122 = vld [vmem:[#allocation4 + $0x98] sm:$0xff]
    %v8123 = vld [vmem:[#allocation4 + $0xa0] sm:$0xff]
    %v8124 = vld [vmem:[#allocation4 + $0xa8] sm:$0xff]
    %v8125 = vld [vmem:[#allocation4 + $0xb0] sm:$0xff]
    %v8126 = vld [vmem:[#allocation4 + $0xb8] sm:$0xff]
    %v8127 = vld [vmem:[#allocation4 + $0xc0] sm:$0xff]
    %v8128 = vld [vmem:[#allocation4 + $0xc8] sm:$0xff]
    %v8129 = vld [vmem:[#allocation4 + $0xd0] sm:$0xff]
    %v8130 = vld [vmem:[#allocation4 + $0xd8] sm:$0xff]
    %v8131 = vld [vmem:[#allocation4 + $0xe0] sm:$0xff]
    %v8132 = vld [vmem:[#allocation4 + $0xe8] sm:$0xff]
    %v8133 = vld [vmem:[#allocation4 + $0xf0] sm:$0xff]
    %v8134 = vld [vmem:[#allocation4 + $0xf8] sm:$0xff]
    %v8135 = vld [vmem:[#allocation4 + $0x100] sm:$0xff]
    %v8136 = vld [vmem:[#allocation4 + $0x108] sm:$0xff]
    %v8137 = vld [vmem:[#allocation4 + $0x110] sm:$0xff]
    %v8138 = vld [vmem:[#allocation4 + $0x118] sm:$0xff]
    %v8139 = vld [vmem:[#allocation4 + $0x120] sm:$0xff]
    %v8140 = vld [vmem:[#allocation4 + $0x128] sm:$0xff]
    %v8141 = vld [vmem:[#allocation4 + $0x130] sm:$0xff]
    %v8142 = vld [vmem:[#allocation4 + $0x138] sm:$0xff]
    %v8143 = vld [vmem:[#allocation4 + $0x140] sm:$0xff]
    %v8144 = vld [vmem:[#allocation4 + $0x148] sm:$0xff]
    %v8145 = vld [vmem:[#allocation4 + $0x150] sm:$0xff]
    %v8146 = vld [vmem:[#allocation4 + $0x158] sm:$0xff]
    %v8147 = vld [vmem:[#allocation4 + $0x160] sm:$0xff]
    %v8148 = vld [vmem:[#allocation4 + $0x168] sm:$0xff]
    %v8149 = vld [vmem:[#allocation4 + $0x170] sm:$0xff]
    %v8150 = vld [vmem:[#allocation4 + $0x178] sm:$0xff]
    %v8151 = vld [vmem:[#allocation4 + $0x180] sm:$0xff]
    %v8152 = vld [vmem:[#allocation4 + $0x188] sm:$0xff]
    %v8153 = vld [vmem:[#allocation4 + $0x190] sm:$0xff]
    %v8154 = vld [vmem:[#allocation4 + $0x198] sm:$0xff]
    %v8155 = vld [vmem:[#allocation4 + $0x1a0] sm:$0xff]
    %v8156 = vld [vmem:[#allocation4 + $0x1a8] sm:$0xff]
    %v8157 = vld [vmem:[#allocation4 + $0x1b0] sm:$0xff]
    %v8158 = vld [vmem:[#allocation4 + $0x1b8] sm:$0xff]
    %v8159 = vld [vmem:[#allocation4 + $0x1c0] sm:$0xff]
    %v8160 = vld [vmem:[#allocation4 + $0x1c8] sm:$0xff]
    %v8161 = vld [vmem:[#allocation4 + $0x1d0] sm:$0xff]
    %v8162 = vld [vmem:[#allocation4 + $0x1d8] sm:$0xff]
    %v8163 = vld [vmem:[#allocation4 + $0x1e0] sm:$0xff]
    %v8164 = vld [vmem:[#allocation4 + $0x1e8] sm:$0xff]
    %v8165 = vld [vmem:[#allocation4 + $0x1f0] sm:$0xff]
    %v8166 = vld [vmem:[#allocation4 + $0x1f8] sm:$0xff]
    %s8167 = scalar_lea.vmem [#allocation11], 37
    %v8168 = vld [vmem:[%s8167] ss:$8 sm:$0x3]
    %v8170 = vperm.slane %v8168, 0
    %v8171 = vperm.slane %v8168, 1
    %v8238 = vunpack.c.l.b16 %v8103
    %v8239 = vunpack.c.h.b16 %v8103
    %v8240 = vunpack.c.l.b16 %v8104
    %v8241 = vunpack.c.h.b16 %v8104
    %v8242 = vunpack.c.l.b16 %v8105
    %v8243 = vunpack.c.h.b16 %v8105
    %v8244 = vunpack.c.l.b16 %v8106
    %v8245 = vunpack.c.h.b16 %v8106
    %v8246 = vunpack.c.l.b16 %v8107
    %v8247 = vunpack.c.h.b16 %v8107
    %v8248 = vunpack.c.l.b16 %v8108
    %v8249 = vunpack.c.h.b16 %v8108
    %v8250 = vunpack.c.l.b16 %v8109
    %v8251 = vunpack.c.h.b16 %v8109
    %v8252 = vunpack.c.l.b16 %v8110
    %v8253 = vunpack.c.h.b16 %v8110
    %v8254 = vunpack.c.l.b16 %v8111
    %v8255 = vunpack.c.h.b16 %v8111
    %v8256 = vunpack.c.l.b16 %v8112
    %v8257 = vunpack.c.h.b16 %v8112
    %v8258 = vunpack.c.l.b16 %v8113
    %v8259 = vunpack.c.h.b16 %v8113
    %v8260 = vunpack.c.l.b16 %v8114
    %v8261 = vunpack.c.h.b16 %v8114
    %v8262 = vunpack.c.l.b16 %v8115
    %v8263 = vunpack.c.h.b16 %v8115
    %v8264 = vunpack.c.l.b16 %v8116
    %v8265 = vunpack.c.h.b16 %v8116
    %v8266 = vunpack.c.l.b16 %v8117
    %v8267 = vunpack.c.h.b16 %v8117
    %v8268 = vunpack.c.l.b16 %v8118
    %v8269 = vunpack.c.h.b16 %v8118
    %v8270 = vunpack.c.l.b16 %v8119
    %v8271 = vunpack.c.h.b16 %v8119
    %v8272 = vunpack.c.l.b16 %v8120
    %v8273 = vunpack.c.h.b16 %v8120
    %v8274 = vunpack.c.l.b16 %v8121
    %v8275 = vunpack.c.h.b16 %v8121
    %v8276 = vunpack.c.l.b16 %v8122
    %v8277 = vunpack.c.h.b16 %v8122
    %v8278 = vunpack.c.l.b16 %v8123
    %v8279 = vunpack.c.h.b16 %v8123
    %v8280 = vunpack.c.l.b16 %v8124
    %v8281 = vunpack.c.h.b16 %v8124
    %v8282 = vunpack.c.l.b16 %v8125
    %v8283 = vunpack.c.h.b16 %v8125
    %v8284 = vunpack.c.l.b16 %v8126
    %v8285 = vunpack.c.h.b16 %v8126
    %v8286 = vunpack.c.l.b16 %v8127
    %v8287 = vunpack.c.h.b16 %v8127
    %v8288 = vunpack.c.l.b16 %v8128
    %v8289 = vunpack.c.h.b16 %v8128
    %v8290 = vunpack.c.l.b16 %v8129
    %v8291 = vunpack.c.h.b16 %v8129
    %v8292 = vunpack.c.l.b16 %v8130
    %v8293 = vunpack.c.h.b16 %v8130
    %v8294 = vunpack.c.l.b16 %v8131
    %v8295 = vunpack.c.h.b16 %v8131
    %v8296 = vunpack.c.l.b16 %v8132
    %v8297 = vunpack.c.h.b16 %v8132
    %v8298 = vunpack.c.l.b16 %v8133
    %v8299 = vunpack.c.h.b16 %v8133
    %v8300 = vunpack.c.l.b16 %v8134
    %v8301 = vunpack.c.h.b16 %v8134
    %v8302 = vunpack.c.l.b16 %v8135
    %v8303 = vunpack.c.h.b16 %v8135
    %v8304 = vunpack.c.l.b16 %v8136
    %v8305 = vunpack.c.h.b16 %v8136
    %v8306 = vunpack.c.l.b16 %v8137
    %v8307 = vunpack.c.h.b16 %v8137
    %v8308 = vunpack.c.l.b16 %v8138
    %v8309 = vunpack.c.h.b16 %v8138
    %v8310 = vunpack.c.l.b16 %v8139
    %v8311 = vunpack.c.h.b16 %v8139
    %v8312 = vunpack.c.l.b16 %v8140
    %v8313 = vunpack.c.h.b16 %v8140
    %v8314 = vunpack.c.l.b16 %v8141
    %v8315 = vunpack.c.h.b16 %v8141
    %v8316 = vunpack.c.l.b16 %v8142
    %v8317 = vunpack.c.h.b16 %v8142
    %v8318 = vunpack.c.l.b16 %v8143
    %v8319 = vunpack.c.h.b16 %v8143
    %v8320 = vunpack.c.l.b16 %v8144
    %v8321 = vunpack.c.h.b16 %v8144
    %v8322 = vunpack.c.l.b16 %v8145
    %v8323 = vunpack.c.h.b16 %v8145
    %v8324 = vunpack.c.l.b16 %v8146
    %v8325 = vunpack.c.h.b16 %v8146
    %v8326 = vunpack.c.l.b16 %v8147
    %v8327 = vunpack.c.h.b16 %v8147
    %v8328 = vunpack.c.l.b16 %v8148
    %v8329 = vunpack.c.h.b16 %v8148
    %v8330 = vunpack.c.l.b16 %v8149
    %v8331 = vunpack.c.h.b16 %v8149
    %v8332 = vunpack.c.l.b16 %v8150
    %v8333 = vunpack.c.h.b16 %v8150
    %v8334 = vunpack.c.l.b16 %v8151
    %v8335 = vunpack.c.h.b16 %v8151
    %v8336 = vunpack.c.l.b16 %v8152
    %v8337 = vunpack.c.h.b16 %v8152
    %v8338 = vunpack.c.l.b16 %v8153
    %v8339 = vunpack.c.h.b16 %v8153
    %v8340 = vunpack.c.l.b16 %v8154
    %v8341 = vunpack.c.h.b16 %v8154
    %v8342 = vunpack.c.l.b16 %v8155
    %v8343 = vunpack.c.h.b16 %v8155
    %v8344 = vunpack.c.l.b16 %v8156
    %v8345 = vunpack.c.h.b16 %v8156
    %v8346 = vunpack.c.l.b16 %v8157
    %v8347 = vunpack.c.h.b16 %v8157
    %v8348 = vunpack.c.l.b16 %v8158
    %v8349 = vunpack.c.h.b16 %v8158
    %v8350 = vunpack.c.l.b16 %v8159
    %v8351 = vunpack.c.h.b16 %v8159
    %v8352 = vunpack.c.l.b16 %v8160
    %v8353 = vunpack.c.h.b16 %v8160
    %v8354 = vunpack.c.l.b16 %v8161
    %v8355 = vunpack.c.h.b16 %v8161
    %v8356 = vunpack.c.l.b16 %v8162
    %v8357 = vunpack.c.h.b16 %v8162
    %v8358 = vunpack.c.l.b16 %v8163
    %v8359 = vunpack.c.h.b16 %v8163
    %v8360 = vunpack.c.l.b16 %v8164
    %v8361 = vunpack.c.h.b16 %v8164
    %v8362 = vunpack.c.l.b16 %v8165
    %v8363 = vunpack.c.h.b16 %v8165
    %v8364 = vunpack.c.l.b16 %v8166
    %v8365 = vunpack.c.h.b16 %v8166
    %v8366 = vpack.c.b16 %v8240, %v8238
    %v8367 = vpack.c.b16 %v8241, %v8239
    %v8368 = vpack.c.b16 %v8244, %v8242
    %v8369 = vpack.c.b16 %v8245, %v8243
    %v8370 = vpack.c.b16 %v8248, %v8246
    %v8371 = vpack.c.b16 %v8249, %v8247
    %v8372 = vpack.c.b16 %v8252, %v8250
    %v8373 = vpack.c.b16 %v8253, %v8251
    %v8374 = vpack.c.b16 %v8256, %v8254
    %v8375 = vpack.c.b16 %v8257, %v8255
    %v8376 = vpack.c.b16 %v8260, %v8258
    %v8377 = vpack.c.b16 %v8261, %v8259
    %v8378 = vpack.c.b16 %v8264, %v8262
    %v8379 = vpack.c.b16 %v8265, %v8263
    %v8380 = vpack.c.b16 %v8268, %v8266
    %v8381 = vpack.c.b16 %v8269, %v8267
    %v8382 = vpack.c.b16 %v8272, %v8270
    %v8383 = vpack.c.b16 %v8273, %v8271
    %v8384 = vpack.c.b16 %v8276, %v8274
    %v8385 = vpack.c.b16 %v8277, %v8275
    %v8386 = vpack.c.b16 %v8280, %v8278
    %v8387 = vpack.c.b16 %v8281, %v8279
    %v8388 = vpack.c.b16 %v8284, %v8282
    %v8389 = vpack.c.b16 %v8285, %v8283
    %v8390 = vpack.c.b16 %v8288, %v8286
    %v8391 = vpack.c.b16 %v8289, %v8287
    %v8392 = vpack.c.b16 %v8292, %v8290
    %v8393 = vpack.c.b16 %v8293, %v8291
    %v8394 = vpack.c.b16 %v8296, %v8294
    %v8395 = vpack.c.b16 %v8297, %v8295
    %v8396 = vpack.c.b16 %v8300, %v8298
    %v8397 = vpack.c.b16 %v8301, %v8299
    %v8398 = vpack.c.b16 %v8304, %v8302
    %v8399 = vpack.c.b16 %v8305, %v8303
    %v8400 = vpack.c.b16 %v8308, %v8306
    %v8401 = vpack.c.b16 %v8309, %v8307
    %v8402 = vpack.c.b16 %v8312, %v8310
    %v8403 = vpack.c.b16 %v8313, %v8311
    %v8404 = vpack.c.b16 %v8316, %v8314
    %v8405 = vpack.c.b16 %v8317, %v8315
    %v8406 = vpack.c.b16 %v8320, %v8318
    %v8407 = vpack.c.b16 %v8321, %v8319
    %v8408 = vpack.c.b16 %v8324, %v8322
    %v8409 = vpack.c.b16 %v8325, %v8323
    %v8410 = vpack.c.b16 %v8328, %v8326
    %v8411 = vpack.c.b16 %v8329, %v8327
    %v8412 = vpack.c.b16 %v8332, %v8330
    %v8413 = vpack.c.b16 %v8333, %v8331
    %v8414 = vpack.c.b16 %v8336, %v8334
    %v8415 = vpack.c.b16 %v8337, %v8335
    %v8416 = vpack.c.b16 %v8340, %v8338
    %v8417 = vpack.c.b16 %v8341, %v8339
    %v8418 = vpack.c.b16 %v8344, %v8342
    %v8419 = vpack.c.b16 %v8345, %v8343
    %v8420 = vpack.c.b16 %v8348, %v8346
    %v8421 = vpack.c.b16 %v8349, %v8347
    %v8422 = vpack.c.b16 %v8352, %v8350
    %v8423 = vpack.c.b16 %v8353, %v8351
    %v8424 = vpack.c.b16 %v8356, %v8354
    %v8425 = vpack.c.b16 %v8357, %v8355
    %v8426 = vpack.c.b16 %v8360, %v8358
    %v8427 = vpack.c.b16 %v8361, %v8359
    %v8428 = vpack.c.b16 %v8364, %v8362
    %v8429 = vpack.c.b16 %v8365, %v8363
    %8494 = vmatpush.bf16.msra.mxu0 %v8380
    %8495 = vmatpush.bf16.msra.mxu0 %v8378
    %8496 = vmatpush.bf16.msra.mxu0 %v8376
    %8497 = vmatpush.bf16.msra.mxu0 %v8374
    %8498 = vmatpush.bf16.msra.mxu0 %v8372
    %8499 = vmatpush.bf16.msra.mxu0 %v8370
    %8500 = vmatpush.bf16.msra.mxu0 %v8368
    %8501 = vmatpush.bf16.msra.mxu0 %v8366
    %8502 = vmatmul.bf16.gmra.mxu0 %v8035
    %v8503 = vpop.f32.mrf.mxu0
    %v8504 = vadd.f32 %v8170, %v8503
    %v8505 = vpop.f32.mrf.mxu0
    %v8506 = vadd.f32 %v8170, %v8505
    %8507 = vmatmul.bf16.gmra.mxu0 %v8039
    %v8508 = vpop.f32.mrf.mxu0
    %v8509 = vadd.f32 %v8170, %v8508
    %v8510 = vpop.f32.mrf.mxu0
    %v8511 = vadd.f32 %v8170, %v8510
    %8512 = vmatmul.bf16.gmra.mxu0 %v8043
    %v8513 = vpop.f32.mrf.mxu0
    %v8514 = vadd.f32 %v8170, %v8513
    %v8515 = vpop.f32.mrf.mxu0
    %v8516 = vadd.f32 %v8170, %v8515
    %8517 = vmatmul.bf16.gmra.mxu0 %v8047
    %v8518 = vpop.f32.mrf.mxu0
    %v8519 = vadd.f32 %v8170, %v8518
    %v8520 = vpop.f32.mrf.mxu0
    %v8521 = vadd.f32 %v8170, %v8520
    %8522 = vmatmul.bf16.gmra.mxu0 %v8051
    %v8523 = vpop.f32.mrf.mxu0
    %v8524 = vadd.f32 %v8170, %v8523
    %v8525 = vpop.f32.mrf.mxu0
    %v8526 = vadd.f32 %v8170, %v8525
    %8527 = vmatmul.bf16.gmra.mxu0 %v8055
    %v8528 = vpop.f32.mrf.mxu0
    %v8529 = vadd.f32 %v8170, %v8528
    %v8530 = vpop.f32.mrf.mxu0
    %v8531 = vadd.f32 %v8170, %v8530
    %8532 = vmatmul.bf16.gmra.mxu0 %v8059
    %v8533 = vpop.f32.mrf.mxu0
    %v8534 = vadd.f32 %v8170, %v8533
    %v8535 = vpop.f32.mrf.mxu0
    %v8536 = vadd.f32 %v8170, %v8535
    %8537 = vmatmul.bf16.gmra.mxu0 %v8063
    %v8538 = vpop.f32.mrf.mxu0
    %v8539 = vadd.f32 %v8170, %v8538
    %v8540 = vpop.f32.mrf.mxu0
    %v8541 = vadd.f32 %v8170, %v8540
    %8542 = vmatmul.bf16.gmra.mxu0 %v8067
    %v8543 = vpop.f32.mrf.mxu0
    %v8544 = vadd.f32 %v8170, %v8543
    %v8545 = vpop.f32.mrf.mxu0
    %v8546 = vadd.f32 %v8170, %v8545
    %8547 = vmatmul.bf16.gmra.mxu0 %v8071
    %v8548 = vpop.f32.mrf.mxu0
    %v8549 = vadd.f32 %v8170, %v8548
    %v8550 = vpop.f32.mrf.mxu0
    %v8551 = vadd.f32 %v8170, %v8550
    %8552 = vmatmul.bf16.gmra.mxu0 %v8075
    %v8553 = vpop.f32.mrf.mxu0
    %v8554 = vadd.f32 %v8170, %v8553
    %v8555 = vpop.f32.mrf.mxu0
    %v8556 = vadd.f32 %v8170, %v8555
    %8557 = vmatmul.bf16.gmra.mxu0 %v8079
    %v8558 = vpop.f32.mrf.mxu0
    %v8559 = vadd.f32 %v8170, %v8558
    %v8560 = vpop.f32.mrf.mxu0
    %v8561 = vadd.f32 %v8170, %v8560
    %8562 = vmatmul.bf16.gmra.mxu0 %v8083
    %v8563 = vpop.f32.mrf.mxu0
    %v8564 = vadd.f32 %v8170, %v8563
    %v8565 = vpop.f32.mrf.mxu0
    %v8566 = vadd.f32 %v8170, %v8565
    %8567 = vmatmul.bf16.gmra.mxu0 %v8087
    %v8568 = vpop.f32.mrf.mxu0
    %v8569 = vadd.f32 %v8170, %v8568
    %v8570 = vpop.f32.mrf.mxu0
    %v8571 = vadd.f32 %v8170, %v8570
    %8572 = vmatmul.bf16.gmra.mxu0 %v8091
    %v8573 = vpop.f32.mrf.mxu0
    %v8574 = vadd.f32 %v8170, %v8573
    %v8575 = vpop.f32.mrf.mxu0
    %v8576 = vadd.f32 %v8170, %v8575
    %8577 = vmatmul.bf16.gmra.mxu0 %v8095
    %v8578 = vpop.f32.mrf.mxu0
    %v8579 = vadd.f32 %v8170, %v8578
    %v8580 = vpop.f32.mrf.mxu0
    %v8581 = vadd.f32 %v8170, %v8580
    %8582 = vdwg.mxu0
    %8583 = vmatpush.bf16.msra.mxu0 %v8396
    %8584 = vmatpush.bf16.msra.mxu0 %v8394
    %8585 = vmatpush.bf16.msra.mxu0 %v8392
    %8586 = vmatpush.bf16.msra.mxu0 %v8390
    %8587 = vmatpush.bf16.msra.mxu0 %v8388
    %8588 = vmatpush.bf16.msra.mxu0 %v8386
    %8589 = vmatpush.bf16.msra.mxu0 %v8384
    %8590 = vmatpush.bf16.msra.mxu0 %v8382
    %8591 = vmatmul.bf16.gmra.mxu0 %v8036
    %v8592 = vpop.f32.mrf.mxu0
    %v8593 = vadd.f32 %v8504, %v8592
    %v8594 = vpop.f32.mrf.mxu0
    %v8595 = vadd.f32 %v8506, %v8594
    %8596 = vmatmul.bf16.gmra.mxu0 %v8040
    %v8597 = vpop.f32.mrf.mxu0
    %v8598 = vadd.f32 %v8509, %v8597
    %v8599 = vpop.f32.mrf.mxu0
    %v8600 = vadd.f32 %v8511, %v8599
    %8601 = vmatmul.bf16.gmra.mxu0 %v8044
    %v8602 = vpop.f32.mrf.mxu0
    %v8603 = vadd.f32 %v8514, %v8602
    %v8604 = vpop.f32.mrf.mxu0
    %v8605 = vadd.f32 %v8516, %v8604
    %8606 = vmatmul.bf16.gmra.mxu0 %v8048
    %v8607 = vpop.f32.mrf.mxu0
    %v8608 = vadd.f32 %v8519, %v8607
    %v8609 = vpop.f32.mrf.mxu0
    %v8610 = vadd.f32 %v8521, %v8609
    %8611 = vmatmul.bf16.gmra.mxu0 %v8052
    %v8612 = vpop.f32.mrf.mxu0
    %v8613 = vadd.f32 %v8524, %v8612
    %v8614 = vpop.f32.mrf.mxu0
    %v8615 = vadd.f32 %v8526, %v8614
    %8616 = vmatmul.bf16.gmra.mxu0 %v8056
    %v8617 = vpop.f32.mrf.mxu0
    %v8618 = vadd.f32 %v8529, %v8617
    %v8619 = vpop.f32.mrf.mxu0
    %v8620 = vadd.f32 %v8531, %v8619
    %8621 = vmatmul.bf16.gmra.mxu0 %v8060
    %v8622 = vpop.f32.mrf.mxu0
    %v8623 = vadd.f32 %v8534, %v8622
    %v8624 = vpop.f32.mrf.mxu0
    %v8625 = vadd.f32 %v8536, %v8624
    %8626 = vmatmul.bf16.gmra.mxu0 %v8064
    %v8627 = vpop.f32.mrf.mxu0
    %v8628 = vadd.f32 %v8539, %v8627
    %v8629 = vpop.f32.mrf.mxu0
    %v8630 = vadd.f32 %v8541, %v8629
    %8631 = vmatmul.bf16.gmra.mxu0 %v8068
    %v8632 = vpop.f32.mrf.mxu0
    %v8633 = vadd.f32 %v8544, %v8632
    %v8634 = vpop.f32.mrf.mxu0
    %v8635 = vadd.f32 %v8546, %v8634
    %8636 = vmatmul.bf16.gmra.mxu0 %v8072
    %v8637 = vpop.f32.mrf.mxu0
    %v8638 = vadd.f32 %v8549, %v8637
    %v8639 = vpop.f32.mrf.mxu0
    %v8640 = vadd.f32 %v8551, %v8639
    %8641 = vmatmul.bf16.gmra.mxu0 %v8076
    %v8642 = vpop.f32.mrf.mxu0
    %v8643 = vadd.f32 %v8554, %v8642
    %v8644 = vpop.f32.mrf.mxu0
    %v8645 = vadd.f32 %v8556, %v8644
    %8646 = vmatmul.bf16.gmra.mxu0 %v8080
    %v8647 = vpop.f32.mrf.mxu0
    %v8648 = vadd.f32 %v8559, %v8647
    %v8649 = vpop.f32.mrf.mxu0
    %v8650 = vadd.f32 %v8561, %v8649
    %8651 = vmatmul.bf16.gmra.mxu0 %v8084
    %v8652 = vpop.f32.mrf.mxu0
    %v8653 = vadd.f32 %v8564, %v8652
    %v8654 = vpop.f32.mrf.mxu0
    %v8655 = vadd.f32 %v8566, %v8654
    %8656 = vmatmul.bf16.gmra.mxu0 %v8088
    %v8657 = vpop.f32.mrf.mxu0
    %v8658 = vadd.f32 %v8569, %v8657
    %v8659 = vpop.f32.mrf.mxu0
    %v8660 = vadd.f32 %v8571, %v8659
    %8661 = vmatmul.bf16.gmra.mxu0 %v8092
    %v8662 = vpop.f32.mrf.mxu0
    %v8663 = vadd.f32 %v8574, %v8662
    %v8664 = vpop.f32.mrf.mxu0
    %v8665 = vadd.f32 %v8576, %v8664
    %8666 = vmatmul.bf16.gmra.mxu0 %v8096
    %v8667 = vpop.f32.mrf.mxu0
    %v8668 = vadd.f32 %v8579, %v8667
    %v8669 = vpop.f32.mrf.mxu0
    %v8670 = vadd.f32 %v8581, %v8669
    %8671 = vdwg.mxu0
    %8672 = vmatpush.bf16.msra.mxu0 %v8412
    %8673 = vmatpush.bf16.msra.mxu0 %v8410
    %8674 = vmatpush.bf16.msra.mxu0 %v8408
    %8675 = vmatpush.bf16.msra.mxu0 %v8406
    %8676 = vmatpush.bf16.msra.mxu0 %v8404
    %8677 = vmatpush.bf16.msra.mxu0 %v8402
    %8678 = vmatpush.bf16.msra.mxu0 %v8400
    %8679 = vmatpush.bf16.msra.mxu0 %v8398
    %8680 = vmatmul.bf16.gmra.mxu0 %v8037
    %v8681 = vpop.f32.mrf.mxu0
    %v8682 = vadd.f32 %v8593, %v8681
    %v8683 = vpop.f32.mrf.mxu0
    %v8684 = vadd.f32 %v8595, %v8683
    %8685 = vmatmul.bf16.gmra.mxu0 %v8041
    %v8686 = vpop.f32.mrf.mxu0
    %v8687 = vadd.f32 %v8598, %v8686
    %v8688 = vpop.f32.mrf.mxu0
    %v8689 = vadd.f32 %v8600, %v8688
    %8690 = vmatmul.bf16.gmra.mxu0 %v8045
    %v8691 = vpop.f32.mrf.mxu0
    %v8692 = vadd.f32 %v8603, %v8691
    %v8693 = vpop.f32.mrf.mxu0
    %v8694 = vadd.f32 %v8605, %v8693
    %8695 = vmatmul.bf16.gmra.mxu0 %v8049
    %v8696 = vpop.f32.mrf.mxu0
    %v8697 = vadd.f32 %v8608, %v8696
    %v8698 = vpop.f32.mrf.mxu0
    %v8699 = vadd.f32 %v8610, %v8698
    %8700 = vmatmul.bf16.gmra.mxu0 %v8053
    %v8701 = vpop.f32.mrf.mxu0
    %v8702 = vadd.f32 %v8613, %v8701
    %v8703 = vpop.f32.mrf.mxu0
    %v8704 = vadd.f32 %v8615, %v8703
    %8705 = vmatmul.bf16.gmra.mxu0 %v8057
    %v8706 = vpop.f32.mrf.mxu0
    %v8707 = vadd.f32 %v8618, %v8706
    %v8708 = vpop.f32.mrf.mxu0
    %v8709 = vadd.f32 %v8620, %v8708
    %8710 = vmatmul.bf16.gmra.mxu0 %v8061
    %v8711 = vpop.f32.mrf.mxu0
    %v8712 = vadd.f32 %v8623, %v8711
    %v8713 = vpop.f32.mrf.mxu0
    %v8714 = vadd.f32 %v8625, %v8713
    %8715 = vmatmul.bf16.gmra.mxu0 %v8065
    %v8716 = vpop.f32.mrf.mxu0
    %v8717 = vadd.f32 %v8628, %v8716
    %v8718 = vpop.f32.mrf.mxu0
    %v8719 = vadd.f32 %v8630, %v8718
    %8720 = vmatmul.bf16.gmra.mxu0 %v8069
    %v8721 = vpop.f32.mrf.mxu0
    %v8722 = vadd.f32 %v8633, %v8721
    %v8723 = vpop.f32.mrf.mxu0
    %v8724 = vadd.f32 %v8635, %v8723
    %8725 = vmatmul.bf16.gmra.mxu0 %v8073
    %v8726 = vpop.f32.mrf.mxu0
    %v8727 = vadd.f32 %v8638, %v8726
    %v8728 = vpop.f32.mrf.mxu0
    %v8729 = vadd.f32 %v8640, %v8728
    %8730 = vmatmul.bf16.gmra.mxu0 %v8077
    %v8731 = vpop.f32.mrf.mxu0
    %v8732 = vadd.f32 %v8643, %v8731
    %v8733 = vpop.f32.mrf.mxu0
    %v8734 = vadd.f32 %v8645, %v8733
    %8735 = vmatmul.bf16.gmra.mxu0 %v8081
    %v8736 = vpop.f32.mrf.mxu0
    %v8737 = vadd.f32 %v8648, %v8736
    %v8738 = vpop.f32.mrf.mxu0
    %v8739 = vadd.f32 %v8650, %v8738
    %8740 = vmatmul.bf16.gmra.mxu0 %v8085
    %v8741 = vpop.f32.mrf.mxu0
    %v8742 = vadd.f32 %v8653, %v8741
    %v8743 = vpop.f32.mrf.mxu0
    %v8744 = vadd.f32 %v8655, %v8743
    %8745 = vmatmul.bf16.gmra.mxu0 %v8089
    %v8746 = vpop.f32.mrf.mxu0
    %v8747 = vadd.f32 %v8658, %v8746
    %v8748 = vpop.f32.mrf.mxu0
    %v8749 = vadd.f32 %v8660, %v8748
    %8750 = vmatmul.bf16.gmra.mxu0 %v8093
    %v8751 = vpop.f32.mrf.mxu0
    %v8752 = vadd.f32 %v8663, %v8751
    %v8753 = vpop.f32.mrf.mxu0
    %v8754 = vadd.f32 %v8665, %v8753
    %8755 = vmatmul.bf16.gmra.mxu0 %v8097
    %v8756 = vpop.f32.mrf.mxu0
    %v8757 = vadd.f32 %v8668, %v8756
    %v8758 = vpop.f32.mrf.mxu0
    %v8759 = vadd.f32 %v8670, %v8758
    %8760 = vdwg.mxu0
    %8761 = vmatpush.bf16.msra.mxu0 %v8428
    %8762 = vmatpush.bf16.msra.mxu0 %v8426
    %8763 = vmatpush.bf16.msra.mxu0 %v8424
    %8764 = vmatpush.bf16.msra.mxu0 %v8422
    %8765 = vmatpush.bf16.msra.mxu0 %v8420
    %8766 = vmatpush.bf16.msra.mxu0 %v8418
    %8767 = vmatpush.bf16.msra.mxu0 %v8416
    %8768 = vmatpush.bf16.msra.mxu0 %v8414
    %8769 = vmatmul.bf16.gmra.mxu0 %v8038
    %v8770 = vpop.f32.mrf.mxu0
    %v8771 = vadd.f32 %v8682, %v8770
    %v8772 = vpop.f32.mrf.mxu0
    %v8773 = vadd.f32 %v8684, %v8772
    %8774 = vmatmul.bf16.gmra.mxu0 %v8042
    %v8775 = vpop.f32.mrf.mxu0
    %v8776 = vadd.f32 %v8687, %v8775
    %v8777 = vpop.f32.mrf.mxu0
    %v8778 = vadd.f32 %v8689, %v8777
    %8779 = vmatmul.bf16.gmra.mxu0 %v8046
    %v8780 = vpop.f32.mrf.mxu0
    %v8781 = vadd.f32 %v8692, %v8780
    %v8782 = vpop.f32.mrf.mxu0
    %v8783 = vadd.f32 %v8694, %v8782
    %8784 = vmatmul.bf16.gmra.mxu0 %v8050
    %v8785 = vpop.f32.mrf.mxu0
    %v8786 = vadd.f32 %v8697, %v8785
    %v8787 = vpop.f32.mrf.mxu0
    %v8788 = vadd.f32 %v8699, %v8787
    %8789 = vmatmul.bf16.gmra.mxu0 %v8054
    %v8790 = vpop.f32.mrf.mxu0
    %v8791 = vadd.f32 %v8702, %v8790
    %v8792 = vpop.f32.mrf.mxu0
    %v8793 = vadd.f32 %v8704, %v8792
    %8794 = vmatmul.bf16.gmra.mxu0 %v8058
    %v8795 = vpop.f32.mrf.mxu0
    %v8796 = vadd.f32 %v8707, %v8795
    %v8797 = vpop.f32.mrf.mxu0
    %v8798 = vadd.f32 %v8709, %v8797
    %8799 = vmatmul.bf16.gmra.mxu0 %v8062
    %v8800 = vpop.f32.mrf.mxu0
    %v8801 = vadd.f32 %v8712, %v8800
    %v8802 = vpop.f32.mrf.mxu0
    %v8803 = vadd.f32 %v8714, %v8802
    %8804 = vmatmul.bf16.gmra.mxu0 %v8066
    %v8805 = vpop.f32.mrf.mxu0
    %v8806 = vadd.f32 %v8717, %v8805
    %v8807 = vpop.f32.mrf.mxu0
    %v8808 = vadd.f32 %v8719, %v8807
    %8809 = vmatmul.bf16.gmra.mxu0 %v8070
    %v8810 = vpop.f32.mrf.mxu0
    %v8811 = vadd.f32 %v8722, %v8810
    %v8812 = vpop.f32.mrf.mxu0
    %v8813 = vadd.f32 %v8724, %v8812
    %8814 = vmatmul.bf16.gmra.mxu0 %v8074
    %v8815 = vpop.f32.mrf.mxu0
    %v8816 = vadd.f32 %v8727, %v8815
    %v8817 = vpop.f32.mrf.mxu0
    %v8818 = vadd.f32 %v8729, %v8817
    %8819 = vmatmul.bf16.gmra.mxu0 %v8078
    %v8820 = vpop.f32.mrf.mxu0
    %v8821 = vadd.f32 %v8732, %v8820
    %v8822 = vpop.f32.mrf.mxu0
    %v8823 = vadd.f32 %v8734, %v8822
    %8824 = vmatmul.bf16.gmra.mxu0 %v8082
    %v8825 = vpop.f32.mrf.mxu0
    %v8826 = vadd.f32 %v8737, %v8825
    %v8827 = vpop.f32.mrf.mxu0
    %v8828 = vadd.f32 %v8739, %v8827
    %8829 = vmatmul.bf16.gmra.mxu0 %v8086
    %v8830 = vpop.f32.mrf.mxu0
    %v8831 = vadd.f32 %v8742, %v8830
    %v8832 = vpop.f32.mrf.mxu0
    %v8833 = vadd.f32 %v8744, %v8832
    %8834 = vmatmul.bf16.gmra.mxu0 %v8090
    %v8835 = vpop.f32.mrf.mxu0
    %v8836 = vadd.f32 %v8747, %v8835
    %v8837 = vpop.f32.mrf.mxu0
    %v8838 = vadd.f32 %v8749, %v8837
    %8839 = vmatmul.bf16.gmra.mxu0 %v8094
    %v8840 = vpop.f32.mrf.mxu0
    %v8841 = vadd.f32 %v8752, %v8840
    %v8842 = vpop.f32.mrf.mxu0
    %v8843 = vadd.f32 %v8754, %v8842
    %8844 = vmatmul.bf16.gmra.mxu0 %v8098
    %v8845 = vpop.f32.mrf.mxu0
    %v8846 = vadd.f32 %v8757, %v8845
    %v8847 = vpop.f32.mrf.mxu0
    %v8848 = vadd.f32 %v8759, %v8847
    %8849 = vdwg.mxu0
    %8850 = vmatpush.bf16.msra.mxu0 %v8381
    %8851 = vmatpush.bf16.msra.mxu0 %v8379
    %8852 = vmatpush.bf16.msra.mxu0 %v8377
    %8853 = vmatpush.bf16.msra.mxu0 %v8375
    %8854 = vmatpush.bf16.msra.mxu0 %v8373
    %8855 = vmatpush.bf16.msra.mxu0 %v8371
    %8856 = vmatpush.bf16.msra.mxu0 %v8369
    %8857 = vmatpush.bf16.msra.mxu0 %v8367
    %8858 = vmatmul.bf16.gmra.mxu0 %v8035
    %v8859 = vpop.f32.mrf.mxu0
    %v8860 = vadd.f32 %v8171, %v8859
    %v8861 = vpop.f32.mrf.mxu0
    %v8862 = vadd.f32 %v8171, %v8861
    %8863 = vmatmul.bf16.gmra.mxu0 %v8039
    %v8864 = vpop.f32.mrf.mxu0
    %v8865 = vadd.f32 %v8171, %v8864
    %v8866 = vpop.f32.mrf.mxu0
    %v8867 = vadd.f32 %v8171, %v8866
    %8868 = vmatmul.bf16.gmra.mxu0 %v8043
    %v8869 = vpop.f32.mrf.mxu0
    %v8870 = vadd.f32 %v8171, %v8869
    %v8871 = vpop.f32.mrf.mxu0
    %v8872 = vadd.f32 %v8171, %v8871
    %8873 = vmatmul.bf16.gmra.mxu0 %v8047
    %v8874 = vpop.f32.mrf.mxu0
    %v8875 = vadd.f32 %v8171, %v8874
    %v8876 = vpop.f32.mrf.mxu0
    %v8877 = vadd.f32 %v8171, %v8876
    %8878 = vmatmul.bf16.gmra.mxu0 %v8051
    %v8879 = vpop.f32.mrf.mxu0
    %v8880 = vadd.f32 %v8171, %v8879
    %v8881 = vpop.f32.mrf.mxu0
    %v8882 = vadd.f32 %v8171, %v8881
    %8883 = vmatmul.bf16.gmra.mxu0 %v8055
    %v8884 = vpop.f32.mrf.mxu0
    %v8885 = vadd.f32 %v8171, %v8884
    %v8886 = vpop.f32.mrf.mxu0
    %v8887 = vadd.f32 %v8171, %v8886
    %8888 = vmatmul.bf16.gmra.mxu0 %v8059
    %v8889 = vpop.f32.mrf.mxu0
    %v8890 = vadd.f32 %v8171, %v8889
    %v8891 = vpop.f32.mrf.mxu0
    %v8892 = vadd.f32 %v8171, %v8891
    %8893 = vmatmul.bf16.gmra.mxu0 %v8063
    %v8894 = vpop.f32.mrf.mxu0
    %v8895 = vadd.f32 %v8171, %v8894
    %v8896 = vpop.f32.mrf.mxu0
    %v8897 = vadd.f32 %v8171, %v8896
    %8898 = vmatmul.bf16.gmra.mxu0 %v8067
    %v8899 = vpop.f32.mrf.mxu0
    %v8900 = vadd.f32 %v8171, %v8899
    %v8901 = vpop.f32.mrf.mxu0
    %v8902 = vadd.f32 %v8171, %v8901
    %8903 = vmatmul.bf16.gmra.mxu0 %v8071
    %v8904 = vpop.f32.mrf.mxu0
    %v8905 = vadd.f32 %v8171, %v8904
    %v8906 = vpop.f32.mrf.mxu0
    %v8907 = vadd.f32 %v8171, %v8906
    %8908 = vmatmul.bf16.gmra.mxu0 %v8075
    %v8909 = vpop.f32.mrf.mxu0
    %v8910 = vadd.f32 %v8171, %v8909
    %v8911 = vpop.f32.mrf.mxu0
    %v8912 = vadd.f32 %v8171, %v8911
    %8913 = vmatmul.bf16.gmra.mxu0 %v8079
    %v8914 = vpop.f32.mrf.mxu0
    %v8915 = vadd.f32 %v8171, %v8914
    %v8916 = vpop.f32.mrf.mxu0
    %v8917 = vadd.f32 %v8171, %v8916
    %8918 = vmatmul.bf16.gmra.mxu0 %v8083
    %v8919 = vpop.f32.mrf.mxu0
    %v8920 = vadd.f32 %v8171, %v8919
    %v8921 = vpop.f32.mrf.mxu0
    %v8922 = vadd.f32 %v8171, %v8921
    %8923 = vmatmul.bf16.gmra.mxu0 %v8087
    %v8924 = vpop.f32.mrf.mxu0
    %v8925 = vadd.f32 %v8171, %v8924
    %v8926 = vpop.f32.mrf.mxu0
    %v8927 = vadd.f32 %v8171, %v8926
    %8928 = vmatmul.bf16.gmra.mxu0 %v8091
    %v8929 = vpop.f32.mrf.mxu0
    %v8930 = vadd.f32 %v8171, %v8929
    %v8931 = vpop.f32.mrf.mxu0
    %v8932 = vadd.f32 %v8171, %v8931
    %8933 = vmatmul.bf16.gmra.mxu0 %v8095
    %v8934 = vpop.f32.mrf.mxu0
    %v8935 = vadd.f32 %v8171, %v8934
    %v8936 = vpop.f32.mrf.mxu0
    %v8937 = vadd.f32 %v8171, %v8936
    %8938 = vdwg.mxu0
    %8939 = vmatpush.bf16.msra.mxu0 %v8397
    %8940 = vmatpush.bf16.msra.mxu0 %v8395
    %8941 = vmatpush.bf16.msra.mxu0 %v8393
    %8942 = vmatpush.bf16.msra.mxu0 %v8391
    %8943 = vmatpush.bf16.msra.mxu0 %v8389
    %8944 = vmatpush.bf16.msra.mxu0 %v8387
    %8945 = vmatpush.bf16.msra.mxu0 %v8385
    %8946 = vmatpush.bf16.msra.mxu0 %v8383
    %8947 = vmatmul.bf16.gmra.mxu0 %v8036
    %v8948 = vpop.f32.mrf.mxu0
    %v8949 = vadd.f32 %v8860, %v8948
    %v8950 = vpop.f32.mrf.mxu0
    %v8951 = vadd.f32 %v8862, %v8950
    %8952 = vmatmul.bf16.gmra.mxu0 %v8040
    %v8953 = vpop.f32.mrf.mxu0
    %v8954 = vadd.f32 %v8865, %v8953
    %v8955 = vpop.f32.mrf.mxu0
    %v8956 = vadd.f32 %v8867, %v8955
    %8957 = vmatmul.bf16.gmra.mxu0 %v8044
    %v8958 = vpop.f32.mrf.mxu0
    %v8959 = vadd.f32 %v8870, %v8958
    %v8960 = vpop.f32.mrf.mxu0
    %v8961 = vadd.f32 %v8872, %v8960
    %8962 = vmatmul.bf16.gmra.mxu0 %v8048
    %v8963 = vpop.f32.mrf.mxu0
    %v8964 = vadd.f32 %v8875, %v8963
    %v8965 = vpop.f32.mrf.mxu0
    %v8966 = vadd.f32 %v8877, %v8965
    %8967 = vmatmul.bf16.gmra.mxu0 %v8052
    %v8968 = vpop.f32.mrf.mxu0
    %v8969 = vadd.f32 %v8880, %v8968
    %v8970 = vpop.f32.mrf.mxu0
    %v8971 = vadd.f32 %v8882, %v8970
    %8972 = vmatmul.bf16.gmra.mxu0 %v8056
    %v8973 = vpop.f32.mrf.mxu0
    %v8974 = vadd.f32 %v8885, %v8973
    %v8975 = vpop.f32.mrf.mxu0
    %v8976 = vadd.f32 %v8887, %v8975
    %8977 = vmatmul.bf16.gmra.mxu0 %v8060
    %v8978 = vpop.f32.mrf.mxu0
    %v8979 = vadd.f32 %v8890, %v8978
    %v8980 = vpop.f32.mrf.mxu0
    %v8981 = vadd.f32 %v8892, %v8980
    %8982 = vmatmul.bf16.gmra.mxu0 %v8064
    %v8983 = vpop.f32.mrf.mxu0
    %v8984 = vadd.f32 %v8895, %v8983
    %v8985 = vpop.f32.mrf.mxu0
    %v8986 = vadd.f32 %v8897, %v8985
    %8987 = vmatmul.bf16.gmra.mxu0 %v8068
    %v8988 = vpop.f32.mrf.mxu0
    %v8989 = vadd.f32 %v8900, %v8988
    %v8990 = vpop.f32.mrf.mxu0
    %v8991 = vadd.f32 %v8902, %v8990
    %8992 = vmatmul.bf16.gmra.mxu0 %v8072
    %v8993 = vpop.f32.mrf.mxu0
    %v8994 = vadd.f32 %v8905, %v8993
    %v8995 = vpop.f32.mrf.mxu0
    %v8996 = vadd.f32 %v8907, %v8995
    %8997 = vmatmul.bf16.gmra.mxu0 %v8076
    %v8998 = vpop.f32.mrf.mxu0
    %v8999 = vadd.f32 %v8910, %v8998
    %v9000 = vpop.f32.mrf.mxu0
    %v9001 = vadd.f32 %v8912, %v9000
    %9002 = vmatmul.bf16.gmra.mxu0 %v8080
    %v9003 = vpop.f32.mrf.mxu0
    %v9004 = vadd.f32 %v8915, %v9003
    %v9005 = vpop.f32.mrf.mxu0
    %v9006 = vadd.f32 %v8917, %v9005
    %9007 = vmatmul.bf16.gmra.mxu0 %v8084
    %v9008 = vpop.f32.mrf.mxu0
    %v9009 = vadd.f32 %v8920, %v9008
    %v9010 = vpop.f32.mrf.mxu0
    %v9011 = vadd.f32 %v8922, %v9010
    %9012 = vmatmul.bf16.gmra.mxu0 %v8088
    %v9013 = vpop.f32.mrf.mxu0
    %v9014 = vadd.f32 %v8925, %v9013
    %v9015 = vpop.f32.mrf.mxu0
    %v9016 = vadd.f32 %v8927, %v9015
    %9017 = vmatmul.bf16.gmra.mxu0 %v8092
    %v9018 = vpop.f32.mrf.mxu0
    %v9019 = vadd.f32 %v8930, %v9018
    %v9020 = vpop.f32.mrf.mxu0
    %v9021 = vadd.f32 %v8932, %v9020
    %9022 = vmatmul.bf16.gmra.mxu0 %v8096
    %v9023 = vpop.f32.mrf.mxu0
    %v9024 = vadd.f32 %v8935, %v9023
    %v9025 = vpop.f32.mrf.mxu0
    %v9026 = vadd.f32 %v8937, %v9025
    %9027 = vdwg.mxu0
    %9028 = vmatpush.bf16.msra.mxu0 %v8413
    %9029 = vmatpush.bf16.msra.mxu0 %v8411
    %9030 = vmatpush.bf16.msra.mxu0 %v8409
    %9031 = vmatpush.bf16.msra.mxu0 %v8407
    %9032 = vmatpush.bf16.msra.mxu0 %v8405
    %9033 = vmatpush.bf16.msra.mxu0 %v8403
    %9034 = vmatpush.bf16.msra.mxu0 %v8401
    %9035 = vmatpush.bf16.msra.mxu0 %v8399
    %9036 = vmatmul.bf16.gmra.mxu0 %v8037
    %v9037 = vpop.f32.mrf.mxu0
    %v9038 = vadd.f32 %v8949, %v9037
    %v9039 = vpop.f32.mrf.mxu0
    %v9040 = vadd.f32 %v8951, %v9039
    %9041 = vmatmul.bf16.gmra.mxu0 %v8041
    %v9042 = vpop.f32.mrf.mxu0
    %v9043 = vadd.f32 %v8954, %v9042
    %v9044 = vpop.f32.mrf.mxu0
    %v9045 = vadd.f32 %v8956, %v9044
    %9046 = vmatmul.bf16.gmra.mxu0 %v8045
    %v9047 = vpop.f32.mrf.mxu0
    %v9048 = vadd.f32 %v8959, %v9047
    %v9049 = vpop.f32.mrf.mxu0
    %v9050 = vadd.f32 %v8961, %v9049
    %9051 = vmatmul.bf16.gmra.mxu0 %v8049
    %v9052 = vpop.f32.mrf.mxu0
    %v9053 = vadd.f32 %v8964, %v9052
    %v9054 = vpop.f32.mrf.mxu0
    %v9055 = vadd.f32 %v8966, %v9054
    %9056 = vmatmul.bf16.gmra.mxu0 %v8053
    %v9057 = vpop.f32.mrf.mxu0
    %v9058 = vadd.f32 %v8969, %v9057
    %v9059 = vpop.f32.mrf.mxu0
    %v9060 = vadd.f32 %v8971, %v9059
    %9061 = vmatmul.bf16.gmra.mxu0 %v8057
    %v9062 = vpop.f32.mrf.mxu0
    %v9063 = vadd.f32 %v8974, %v9062
    %v9064 = vpop.f32.mrf.mxu0
    %v9065 = vadd.f32 %v8976, %v9064
    %9066 = vmatmul.bf16.gmra.mxu0 %v8061
    %v9067 = vpop.f32.mrf.mxu0
    %v9068 = vadd.f32 %v8979, %v9067
    %v9069 = vpop.f32.mrf.mxu0
    %v9070 = vadd.f32 %v8981, %v9069
    %9071 = vmatmul.bf16.gmra.mxu0 %v8065
    %v9072 = vpop.f32.mrf.mxu0
    %v9073 = vadd.f32 %v8984, %v9072
    %v9074 = vpop.f32.mrf.mxu0
    %v9075 = vadd.f32 %v8986, %v9074
    %9076 = vmatmul.bf16.gmra.mxu0 %v8069
    %v9077 = vpop.f32.mrf.mxu0
    %v9078 = vadd.f32 %v8989, %v9077
    %v9079 = vpop.f32.mrf.mxu0
    %v9080 = vadd.f32 %v8991, %v9079
    %9081 = vmatmul.bf16.gmra.mxu0 %v8073
    %v9082 = vpop.f32.mrf.mxu0
    %v9083 = vadd.f32 %v8994, %v9082
    %v9084 = vpop.f32.mrf.mxu0
    %v9085 = vadd.f32 %v8996, %v9084
    %9086 = vmatmul.bf16.gmra.mxu0 %v8077
    %v9087 = vpop.f32.mrf.mxu0
    %v9088 = vadd.f32 %v8999, %v9087
    %v9089 = vpop.f32.mrf.mxu0
    %v9090 = vadd.f32 %v9001, %v9089
    %9091 = vmatmul.bf16.gmra.mxu0 %v8081
    %v9092 = vpop.f32.mrf.mxu0
    %v9093 = vadd.f32 %v9004, %v9092
    %v9094 = vpop.f32.mrf.mxu0
    %v9095 = vadd.f32 %v9006, %v9094
    %9096 = vmatmul.bf16.gmra.mxu0 %v8085
    %v9097 = vpop.f32.mrf.mxu0
    %v9098 = vadd.f32 %v9009, %v9097
    %v9099 = vpop.f32.mrf.mxu0
    %v9100 = vadd.f32 %v9011, %v9099
    %9101 = vmatmul.bf16.gmra.mxu0 %v8089
    %v9102 = vpop.f32.mrf.mxu0
    %v9103 = vadd.f32 %v9014, %v9102
    %v9104 = vpop.f32.mrf.mxu0
    %v9105 = vadd.f32 %v9016, %v9104
    %9106 = vmatmul.bf16.gmra.mxu0 %v8093
    %v9107 = vpop.f32.mrf.mxu0
    %v9108 = vadd.f32 %v9019, %v9107
    %v9109 = vpop.f32.mrf.mxu0
    %v9110 = vadd.f32 %v9021, %v9109
    %9111 = vmatmul.bf16.gmra.mxu0 %v8097
    %v9112 = vpop.f32.mrf.mxu0
    %v9113 = vadd.f32 %v9024, %v9112
    %v9114 = vpop.f32.mrf.mxu0
    %v9115 = vadd.f32 %v9026, %v9114
    %9116 = vdwg.mxu0
    %9117 = vmatpush.bf16.msra.mxu0 %v8429
    %9118 = vmatpush.bf16.msra.mxu0 %v8427
    %9119 = vmatpush.bf16.msra.mxu0 %v8425
    %9120 = vmatpush.bf16.msra.mxu0 %v8423
    %9121 = vmatpush.bf16.msra.mxu0 %v8421
    %9122 = vmatpush.bf16.msra.mxu0 %v8419
    %9123 = vmatpush.bf16.msra.mxu0 %v8417
    %9124 = vmatpush.bf16.msra.mxu0 %v8415
    %9125 = vmatmul.bf16.gmra.mxu0 %v8038
    %v9126 = vpop.f32.mrf.mxu0
    %v9127 = vadd.f32 %v9038, %v9126
    %v9128 = vpop.f32.mrf.mxu0
    %v9129 = vadd.f32 %v9040, %v9128
    %9130 = vmatmul.bf16.gmra.mxu0 %v8042
    %v9131 = vpop.f32.mrf.mxu0
    %v9132 = vadd.f32 %v9043, %v9131
    %v9133 = vpop.f32.mrf.mxu0
    %v9134 = vadd.f32 %v9045, %v9133
    %9135 = vmatmul.bf16.gmra.mxu0 %v8046
    %v9136 = vpop.f32.mrf.mxu0
    %v9137 = vadd.f32 %v9048, %v9136
    %v9138 = vpop.f32.mrf.mxu0
    %v9139 = vadd.f32 %v9050, %v9138
    %9140 = vmatmul.bf16.gmra.mxu0 %v8050
    %v9141 = vpop.f32.mrf.mxu0
    %v9142 = vadd.f32 %v9053, %v9141
    %v9143 = vpop.f32.mrf.mxu0
    %v9144 = vadd.f32 %v9055, %v9143
    %9145 = vmatmul.bf16.gmra.mxu0 %v8054
    %v9146 = vpop.f32.mrf.mxu0
    %v9147 = vadd.f32 %v9058, %v9146
    %v9148 = vpop.f32.mrf.mxu0
    %v9149 = vadd.f32 %v9060, %v9148
    %9150 = vmatmul.bf16.gmra.mxu0 %v8058
    %v9151 = vpop.f32.mrf.mxu0
    %v9152 = vadd.f32 %v9063, %v9151
    %v9153 = vpop.f32.mrf.mxu0
    %v9154 = vadd.f32 %v9065, %v9153
    %9155 = vmatmul.bf16.gmra.mxu0 %v8062
    %v9156 = vpop.f32.mrf.mxu0
    %v9157 = vadd.f32 %v9068, %v9156
    %v9158 = vpop.f32.mrf.mxu0
    %v9159 = vadd.f32 %v9070, %v9158
    %9160 = vmatmul.bf16.gmra.mxu0 %v8066
    %v9161 = vpop.f32.mrf.mxu0
    %v9162 = vadd.f32 %v9073, %v9161
    %v9163 = vpop.f32.mrf.mxu0
    %v9164 = vadd.f32 %v9075, %v9163
    %9165 = vmatmul.bf16.gmra.mxu0 %v8070
    %v9166 = vpop.f32.mrf.mxu0
    %v9167 = vadd.f32 %v9078, %v9166
    %v9168 = vpop.f32.mrf.mxu0
    %v9169 = vadd.f32 %v9080, %v9168
    %9170 = vmatmul.bf16.gmra.mxu0 %v8074
    %v9171 = vpop.f32.mrf.mxu0
    %v9172 = vadd.f32 %v9083, %v9171
    %v9173 = vpop.f32.mrf.mxu0
    %v9174 = vadd.f32 %v9085, %v9173
    %9175 = vmatmul.bf16.gmra.mxu0 %v8078
    %v9176 = vpop.f32.mrf.mxu0
    %v9177 = vadd.f32 %v9088, %v9176
    %v9178 = vpop.f32.mrf.mxu0
    %v9179 = vadd.f32 %v9090, %v9178
    %9180 = vmatmul.bf16.gmra.mxu0 %v8082
    %v9181 = vpop.f32.mrf.mxu0
    %v9182 = vadd.f32 %v9093, %v9181
    %v9183 = vpop.f32.mrf.mxu0
    %v9184 = vadd.f32 %v9095, %v9183
    %9185 = vmatmul.bf16.gmra.mxu0 %v8086
    %v9186 = vpop.f32.mrf.mxu0
    %v9187 = vadd.f32 %v9098, %v9186
    %v9188 = vpop.f32.mrf.mxu0
    %v9189 = vadd.f32 %v9100, %v9188
    %9190 = vmatmul.bf16.gmra.mxu0 %v8090
    %v9191 = vpop.f32.mrf.mxu0
    %v9192 = vadd.f32 %v9103, %v9191
    %v9193 = vpop.f32.mrf.mxu0
    %v9194 = vadd.f32 %v9105, %v9193
    %9195 = vmatmul.bf16.gmra.mxu0 %v8094
    %v9196 = vpop.f32.mrf.mxu0
    %v9197 = vadd.f32 %v9108, %v9196
    %v9198 = vpop.f32.mrf.mxu0
    %v9199 = vadd.f32 %v9110, %v9198
    %9200 = vmatmul.bf16.gmra.mxu0 %v8098
    %v9201 = vpop.f32.mrf.mxu0
    %v9202 = vadd.f32 %v9113, %v9201
    %v9203 = vpop.f32.mrf.mxu0
    %v9204 = vadd.f32 %v9115, %v9203
    %9205 = vdwg.mxu0
    %v9206 = vxor.u32 %v8771, 2147483648
    %v9207 = vxor.u32 %v9127, 2147483648
    %v9208 = vxor.u32 %v8773, 2147483648
    %v9209 = vxor.u32 %v9129, 2147483648
    %v9210 = vxor.u32 %v8776, 2147483648
    %v9211 = vxor.u32 %v9132, 2147483648
    %v9212 = vxor.u32 %v8778, 2147483648
    %v9213 = vxor.u32 %v9134, 2147483648
    %v9214 = vxor.u32 %v8781, 2147483648
    %v9215 = vxor.u32 %v9137, 2147483648
    %v9216 = vxor.u32 %v8783, 2147483648
    %v9217 = vxor.u32 %v9139, 2147483648
    %v9218 = vxor.u32 %v8786, 2147483648
    %v9219 = vxor.u32 %v9142, 2147483648
    %v9220 = vxor.u32 %v8788, 2147483648
    %v9221 = vxor.u32 %v9144, 2147483648
    %v9222 = vxor.u32 %v8791, 2147483648
    %v9223 = vxor.u32 %v9147, 2147483648
    %v9224 = vxor.u32 %v8793, 2147483648
    %v9225 = vxor.u32 %v9149, 2147483648
    %v9226 = vxor.u32 %v8796, 2147483648
    %v9227 = vxor.u32 %v9152, 2147483648
    %v9228 = vxor.u32 %v8798, 2147483648
    %v9229 = vxor.u32 %v9154, 2147483648
    %v9230 = vxor.u32 %v8801, 2147483648
    %v9231 = vxor.u32 %v9157, 2147483648
    %v9232 = vxor.u32 %v8803, 2147483648
    %v9233 = vxor.u32 %v9159, 2147483648
    %v9234 = vxor.u32 %v8806, 2147483648
    %v9235 = vxor.u32 %v9162, 2147483648
    %v9236 = vxor.u32 %v8808, 2147483648
    %v9237 = vxor.u32 %v9164, 2147483648
    %v9238 = vxor.u32 %v8811, 2147483648
    %v9239 = vxor.u32 %v9167, 2147483648
    %v9240 = vxor.u32 %v8813, 2147483648
    %v9241 = vxor.u32 %v9169, 2147483648
    %v9242 = vxor.u32 %v8816, 2147483648
    %v9243 = vxor.u32 %v9172, 2147483648
    %v9244 = vxor.u32 %v8818, 2147483648
    %v9245 = vxor.u32 %v9174, 2147483648
    %v9246 = vxor.u32 %v8821, 2147483648
    %v9247 = vxor.u32 %v9177, 2147483648
    %v9248 = vxor.u32 %v8823, 2147483648
    %v9249 = vxor.u32 %v9179, 2147483648
    %v9250 = vxor.u32 %v8826, 2147483648
    %v9251 = vxor.u32 %v9182, 2147483648
    %v9252 = vxor.u32 %v8828, 2147483648
    %v9253 = vxor.u32 %v9184, 2147483648
    %v9254 = vxor.u32 %v8831, 2147483648
    %v9255 = vxor.u32 %v9187, 2147483648
    %v9256 = vxor.u32 %v8833, 2147483648
    %v9257 = vxor.u32 %v9189, 2147483648
    %v9258 = vxor.u32 %v8836, 2147483648
    %v9259 = vxor.u32 %v9192, 2147483648
    %v9260 = vxor.u32 %v8838, 2147483648
    %v9261 = vxor.u32 %v9194, 2147483648
    %v9262 = vxor.u32 %v8841, 2147483648
    %v9263 = vxor.u32 %v9197, 2147483648
    %v9264 = vxor.u32 %v8843, 2147483648
    %v9265 = vxor.u32 %v9199, 2147483648
    %v9266 = vxor.u32 %v8846, 2147483648
    %v9267 = vxor.u32 %v9202, 2147483648
    %v9268 = vxor.u32 %v8848, 2147483648
    %v9269 = vxor.u32 %v9204, 2147483648
    %v9270 = vmul.f32 %v9206, 1.442695
    %v9271 = vpow.pop %v9270
    %v9272 = vmul.f32 %v9207, 1.442695
    %v9273 = vpow.pop %v9272
    %v9274 = vmul.f32 %v9208, 1.442695
    %v9275 = vpow.pop %v9274
    %v9276 = vmul.f32 %v9209, 1.442695
    %v9277 = vpow.pop %v9276
    %v9278 = vmul.f32 %v9210, 1.442695
    %v9279 = vpow.pop %v9278
    %v9280 = vmul.f32 %v9211, 1.442695
    %v9281 = vpow.pop %v9280
    %v9282 = vmul.f32 %v9212, 1.442695
    %v9283 = vpow.pop %v9282
    %v9284 = vmul.f32 %v9213, 1.442695
    %v9285 = vpow.pop %v9284
    %v9286 = vmul.f32 %v9214, 1.442695
    %v9287 = vpow.pop %v9286
    %v9288 = vmul.f32 %v9215, 1.442695
    %v9289 = vpow.pop %v9288
    %v9290 = vmul.f32 %v9216, 1.442695
    %v9291 = vpow.pop %v9290
    %v9292 = vmul.f32 %v9217, 1.442695
    %v9293 = vpow.pop %v9292
    %v9294 = vmul.f32 %v9218, 1.442695
    %v9295 = vpow.pop %v9294
    %v9296 = vmul.f32 %v9219, 1.442695
    %v9297 = vpow.pop %v9296
    %v9298 = vmul.f32 %v9220, 1.442695
    %v9299 = vpow.pop %v9298
    %v9300 = vmul.f32 %v9221, 1.442695
    %v9301 = vpow.pop %v9300
    %v9302 = vmul.f32 %v9222, 1.442695
    %v9303 = vpow.pop %v9302
    %v9304 = vmul.f32 %v9223, 1.442695
    %v9305 = vpow.pop %v9304
    %v9306 = vmul.f32 %v9224, 1.442695
    %v9307 = vpow.pop %v9306
    %v9308 = vmul.f32 %v9225, 1.442695
    %v9309 = vpow.pop %v9308
    %v9310 = vmul.f32 %v9226, 1.442695
    %v9311 = vpow.pop %v9310
    %v9312 = vmul.f32 %v9227, 1.442695
    %v9313 = vpow.pop %v9312
    %v9314 = vmul.f32 %v9228, 1.442695
    %v9315 = vpow.pop %v9314
    %v9316 = vmul.f32 %v9229, 1.442695
    %v9317 = vpow.pop %v9316
    %v9318 = vmul.f32 %v9230, 1.442695
    %v9319 = vpow.pop %v9318
    %v9320 = vmul.f32 %v9231, 1.442695
    %v9321 = vpow.pop %v9320
    %v9322 = vmul.f32 %v9232, 1.442695
    %v9323 = vpow.pop %v9322
    %v9324 = vmul.f32 %v9233, 1.442695
    %v9325 = vpow.pop %v9324
    %v9326 = vmul.f32 %v9234, 1.442695
    %v9327 = vpow.pop %v9326
    %v9328 = vmul.f32 %v9235, 1.442695
    %v9329 = vpow.pop %v9328
    %v9330 = vmul.f32 %v9236, 1.442695
    %v9331 = vpow.pop %v9330
    %v9332 = vmul.f32 %v9237, 1.442695
    %v9333 = vpow.pop %v9332
    %v9334 = vmul.f32 %v9238, 1.442695
    %v9335 = vpow.pop %v9334
    %v9336 = vmul.f32 %v9239, 1.442695
    %v9337 = vpow.pop %v9336
    %v9338 = vmul.f32 %v9240, 1.442695
    %v9339 = vpow.pop %v9338
    %v9340 = vmul.f32 %v9241, 1.442695
    %v9341 = vpow.pop %v9340
    %v9342 = vmul.f32 %v9242, 1.442695
    %v9343 = vpow.pop %v9342
    %v9344 = vmul.f32 %v9243, 1.442695
    %v9345 = vpow.pop %v9344
    %v9346 = vmul.f32 %v9244, 1.442695
    %v9347 = vpow.pop %v9346
    %v9348 = vmul.f32 %v9245, 1.442695
    %v9349 = vpow.pop %v9348
    %v9350 = vmul.f32 %v9246, 1.442695
    %v9351 = vpow.pop %v9350
    %v9352 = vmul.f32 %v9247, 1.442695
    %v9353 = vpow.pop %v9352
    %v9354 = vmul.f32 %v9248, 1.442695
    %v9355 = vpow.pop %v9354
    %v9356 = vmul.f32 %v9249, 1.442695
    %v9357 = vpow.pop %v9356
    %v9358 = vmul.f32 %v9250, 1.442695
    %v9359 = vpow.pop %v9358
    %v9360 = vmul.f32 %v9251, 1.442695
    %v9361 = vpow.pop %v9360
    %v9362 = vmul.f32 %v9252, 1.442695
    %v9363 = vpow.pop %v9362
    %v9364 = vmul.f32 %v9253, 1.442695
    %v9365 = vpow.pop %v9364
    %v9366 = vmul.f32 %v9254, 1.442695
    %v9367 = vpow.pop %v9366
    %v9368 = vmul.f32 %v9255, 1.442695
    %v9369 = vpow.pop %v9368
    %v9370 = vmul.f32 %v9256, 1.442695
    %v9371 = vpow.pop %v9370
    %v9372 = vmul.f32 %v9257, 1.442695
    %v9373 = vpow.pop %v9372
    %v9374 = vmul.f32 %v9258, 1.442695
    %v9375 = vpow.pop %v9374
    %v9376 = vmul.f32 %v9259, 1.442695
    %v9377 = vpow.pop %v9376
    %v9378 = vmul.f32 %v9260, 1.442695
    %v9379 = vpow.pop %v9378
    %v9380 = vmul.f32 %v9261, 1.442695
    %v9381 = vpow.pop %v9380
    %v9382 = vmul.f32 %v9262, 1.442695
    %v9383 = vpow.pop %v9382
    %v9384 = vmul.f32 %v9263, 1.442695
    %v9385 = vpow.pop %v9384
    %v9386 = vmul.f32 %v9264, 1.442695
    %v9387 = vpow.pop %v9386
    %v9388 = vmul.f32 %v9265, 1.442695
    %v9389 = vpow.pop %v9388
    %v9390 = vmul.f32 %v9266, 1.442695
    %v9391 = vpow.pop %v9390
    %v9392 = vmul.f32 %v9267, 1.442695
    %v9393 = vpow.pop %v9392
    %v9394 = vmul.f32 %v9268, 1.442695
    %v9395 = vpow.pop %v9394
    %v9396 = vmul.f32 %v9269, 1.442695
    %v9397 = vpow.pop %v9396
    %v9398 = vadd.f32 %v9271, 1.0
    %v9399 = vadd.f32 %v9273, 1.0
    %v9400 = vadd.f32 %v9275, 1.0
    %v9401 = vadd.f32 %v9277, 1.0
    %v9402 = vadd.f32 %v9279, 1.0
    %v9403 = vadd.f32 %v9281, 1.0
    %v9404 = vadd.f32 %v9283, 1.0
    %v9405 = vadd.f32 %v9285, 1.0
    %v9406 = vadd.f32 %v9287, 1.0
    %v9407 = vadd.f32 %v9289, 1.0
    %v9408 = vadd.f32 %v9291, 1.0
    %v9409 = vadd.f32 %v9293, 1.0
    %v9410 = vadd.f32 %v9295, 1.0
    %v9411 = vadd.f32 %v9297, 1.0
    %v9412 = vadd.f32 %v9299, 1.0
    %v9413 = vadd.f32 %v9301, 1.0
    %v9414 = vadd.f32 %v9303, 1.0
    %v9415 = vadd.f32 %v9305, 1.0
    %v9416 = vadd.f32 %v9307, 1.0
    %v9417 = vadd.f32 %v9309, 1.0
    %v9418 = vadd.f32 %v9311, 1.0
    %v9419 = vadd.f32 %v9313, 1.0
    %v9420 = vadd.f32 %v9315, 1.0
    %v9421 = vadd.f32 %v9317, 1.0
    %v9422 = vadd.f32 %v9319, 1.0
    %v9423 = vadd.f32 %v9321, 1.0
    %v9424 = vadd.f32 %v9323, 1.0
    %v9425 = vadd.f32 %v9325, 1.0
    %v9426 = vadd.f32 %v9327, 1.0
    %v9427 = vadd.f32 %v9329, 1.0
    %v9428 = vadd.f32 %v9331, 1.0
    %v9429 = vadd.f32 %v9333, 1.0
    %v9430 = vadd.f32 %v9335, 1.0
    %v9431 = vadd.f32 %v9337, 1.0
    %v9432 = vadd.f32 %v9339, 1.0
    %v9433 = vadd.f32 %v9341, 1.0
    %v9434 = vadd.f32 %v9343, 1.0
    %v9435 = vadd.f32 %v9345, 1.0
    %v9436 = vadd.f32 %v9347, 1.0
    %v9437 = vadd.f32 %v9349, 1.0
    %v9438 = vadd.f32 %v9351, 1.0
    %v9439 = vadd.f32 %v9353, 1.0
    %v9440 = vadd.f32 %v9355, 1.0
    %v9441 = vadd.f32 %v9357, 1.0
    %v9442 = vadd.f32 %v9359, 1.0
    %v9443 = vadd.f32 %v9361, 1.0
    %v9444 = vadd.f32 %v9363, 1.0
    %v9445 = vadd.f32 %v9365, 1.0
    %v9446 = vadd.f32 %v9367, 1.0
    %v9447 = vadd.f32 %v9369, 1.0
    %v9448 = vadd.f32 %v9371, 1.0
    %v9449 = vadd.f32 %v9373, 1.0
    %v9450 = vadd.f32 %v9375, 1.0
    %v9451 = vadd.f32 %v9377, 1.0
    %v9452 = vadd.f32 %v9379, 1.0
    %v9453 = vadd.f32 %v9381, 1.0
    %v9454 = vadd.f32 %v9383, 1.0
    %v9455 = vadd.f32 %v9385, 1.0
    %v9456 = vadd.f32 %v9387, 1.0
    %v9457 = vadd.f32 %v9389, 1.0
    %v9458 = vadd.f32 %v9391, 1.0
    %v9459 = vadd.f32 %v9393, 1.0
    %v9460 = vadd.f32 %v9395, 1.0
    %v9461 = vadd.f32 %v9397, 1.0
    %v9462 = vrcp.pop %v9398
    %v9463 = vmul.f32 %v9398, %v9462
    %v9464 = vsub.f32 1.0, %v9463
    %v9465 = vmul.f32 %v9462, %v9464
    %v9466 = vadd.f32 %v9462, %v9465
    %vm9467 = vweird.f32 %v9398
    %vm9468 = vweird.f32 %v9462
    %vm9469 = vmor %vm9467, %vm9468
    %v9470 = vsel %vm9469, %v9462, %v9466
    %v9471 = vand.u32 2147483647, %v9398
    %vm9472 = vcmp.eq.f32.partialorder %v9471, 8.507059e+37
    %v9473 = vand.u32 %v9398, 2147483648
    %v9474 = vor.u32 1.1754944e-38, %v9473
    %v9475 = vsel %vm9472, %v9474, %v9470
    %v9476 = vmul.f32 1.0, %v9475
    %v9477 = vrcp.pop %v9399
    %v9478 = vmul.f32 %v9399, %v9477
    %v9479 = vsub.f32 1.0, %v9478
    %v9480 = vmul.f32 %v9477, %v9479
    %v9481 = vadd.f32 %v9477, %v9480
    %vm9482 = vweird.f32 %v9399
    %vm9483 = vweird.f32 %v9477
    %vm9484 = vmor %vm9482, %vm9483
    %v9485 = vsel %vm9484, %v9477, %v9481
    %v9486 = vand.u32 2147483647, %v9399
    %vm9487 = vcmp.eq.f32.partialorder %v9486, 8.507059e+37
    %v9488 = vand.u32 %v9399, 2147483648
    %v9489 = vor.u32 1.1754944e-38, %v9488
    %v9490 = vsel %vm9487, %v9489, %v9485
    %v9491 = vmul.f32 1.0, %v9490
    %v9492 = vrcp.pop %v9400
    %v9493 = vmul.f32 %v9400, %v9492
    %v9494 = vsub.f32 1.0, %v9493
    %v9495 = vmul.f32 %v9492, %v9494
    %v9496 = vadd.f32 %v9492, %v9495
    %vm9497 = vweird.f32 %v9400
    %vm9498 = vweird.f32 %v9492
    %vm9499 = vmor %vm9497, %vm9498
    %v9500 = vsel %vm9499, %v9492, %v9496
    %v9501 = vand.u32 2147483647, %v9400
    %vm9502 = vcmp.eq.f32.partialorder %v9501, 8.507059e+37
    %v9503 = vand.u32 %v9400, 2147483648
    %v9504 = vor.u32 1.1754944e-38, %v9503
    %v9505 = vsel %vm9502, %v9504, %v9500
    %v9506 = vmul.f32 1.0, %v9505
    %v9507 = vrcp.pop %v9401
    %v9508 = vmul.f32 %v9401, %v9507
    %v9509 = vsub.f32 1.0, %v9508
    %v9510 = vmul.f32 %v9507, %v9509
    %v9511 = vadd.f32 %v9507, %v9510
    %vm9512 = vweird.f32 %v9401
    %vm9513 = vweird.f32 %v9507
    %vm9514 = vmor %vm9512, %vm9513
    %v9515 = vsel %vm9514, %v9507, %v9511
    %v9516 = vand.u32 2147483647, %v9401
    %vm9517 = vcmp.eq.f32.partialorder %v9516, 8.507059e+37
    %v9518 = vand.u32 %v9401, 2147483648
    %v9519 = vor.u32 1.1754944e-38, %v9518
    %v9520 = vsel %vm9517, %v9519, %v9515
    %v9521 = vmul.f32 1.0, %v9520
    %v9522 = vrcp.pop %v9402
    %v9523 = vmul.f32 %v9402, %v9522
    %v9524 = vsub.f32 1.0, %v9523
    %v9525 = vmul.f32 %v9522, %v9524
    %v9526 = vadd.f32 %v9522, %v9525
    %vm9527 = vweird.f32 %v9402
    %vm9528 = vweird.f32 %v9522
    %vm9529 = vmor %vm9527, %vm9528
    %v9530 = vsel %vm9529, %v9522, %v9526
    %v9531 = vand.u32 2147483647, %v9402
    %vm9532 = vcmp.eq.f32.partialorder %v9531, 8.507059e+37
    %v9533 = vand.u32 %v9402, 2147483648
    %v9534 = vor.u32 1.1754944e-38, %v9533
    %v9535 = vsel %vm9532, %v9534, %v9530
    %v9536 = vmul.f32 1.0, %v9535
    %v9537 = vrcp.pop %v9403
    %v9538 = vmul.f32 %v9403, %v9537
    %v9539 = vsub.f32 1.0, %v9538
    %v9540 = vmul.f32 %v9537, %v9539
    %v9541 = vadd.f32 %v9537, %v9540
    %vm9542 = vweird.f32 %v9403
    %vm9543 = vweird.f32 %v9537
    %vm9544 = vmor %vm9542, %vm9543
    %v9545 = vsel %vm9544, %v9537, %v9541
    %v9546 = vand.u32 2147483647, %v9403
    %vm9547 = vcmp.eq.f32.partialorder %v9546, 8.507059e+37
    %v9548 = vand.u32 %v9403, 2147483648
    %v9549 = vor.u32 1.1754944e-38, %v9548
    %v9550 = vsel %vm9547, %v9549, %v9545
    %v9551 = vmul.f32 1.0, %v9550
    %v9552 = vrcp.pop %v9404
    %v9553 = vmul.f32 %v9404, %v9552
    %v9554 = vsub.f32 1.0, %v9553
    %v9555 = vmul.f32 %v9552, %v9554
    %v9556 = vadd.f32 %v9552, %v9555
    %vm9557 = vweird.f32 %v9404
    %vm9558 = vweird.f32 %v9552
    %vm9559 = vmor %vm9557, %vm9558
    %v9560 = vsel %vm9559, %v9552, %v9556
    %v9561 = vand.u32 2147483647, %v9404
    %vm9562 = vcmp.eq.f32.partialorder %v9561, 8.507059e+37
    %v9563 = vand.u32 %v9404, 2147483648
    %v9564 = vor.u32 1.1754944e-38, %v9563
    %v9565 = vsel %vm9562, %v9564, %v9560
    %v9566 = vmul.f32 1.0, %v9565
    %v9567 = vrcp.pop %v9405
    %v9568 = vmul.f32 %v9405, %v9567
    %v9569 = vsub.f32 1.0, %v9568
    %v9570 = vmul.f32 %v9567, %v9569
    %v9571 = vadd.f32 %v9567, %v9570
    %vm9572 = vweird.f32 %v9405
    %vm9573 = vweird.f32 %v9567
    %vm9574 = vmor %vm9572, %vm9573
    %v9575 = vsel %vm9574, %v9567, %v9571
    %v9576 = vand.u32 2147483647, %v9405
    %vm9577 = vcmp.eq.f32.partialorder %v9576, 8.507059e+37
    %v9578 = vand.u32 %v9405, 2147483648
    %v9579 = vor.u32 1.1754944e-38, %v9578
    %v9580 = vsel %vm9577, %v9579, %v9575
    %v9581 = vmul.f32 1.0, %v9580
    %v9582 = vrcp.pop %v9406
    %v9583 = vmul.f32 %v9406, %v9582
    %v9584 = vsub.f32 1.0, %v9583
    %v9585 = vmul.f32 %v9582, %v9584
    %v9586 = vadd.f32 %v9582, %v9585
    %vm9587 = vweird.f32 %v9406
    %vm9588 = vweird.f32 %v9582
    %vm9589 = vmor %vm9587, %vm9588
    %v9590 = vsel %vm9589, %v9582, %v9586
    %v9591 = vand.u32 2147483647, %v9406
    %vm9592 = vcmp.eq.f32.partialorder %v9591, 8.507059e+37
    %v9593 = vand.u32 %v9406, 2147483648
    %v9594 = vor.u32 1.1754944e-38, %v9593
    %v9595 = vsel %vm9592, %v9594, %v9590
    %v9596 = vmul.f32 1.0, %v9595
    %v9597 = vrcp.pop %v9407
    %v9598 = vmul.f32 %v9407, %v9597
    %v9599 = vsub.f32 1.0, %v9598
    %v9600 = vmul.f32 %v9597, %v9599
    %v9601 = vadd.f32 %v9597, %v9600
    %vm9602 = vweird.f32 %v9407
    %vm9603 = vweird.f32 %v9597
    %vm9604 = vmor %vm9602, %vm9603
    %v9605 = vsel %vm9604, %v9597, %v9601
    %v9606 = vand.u32 2147483647, %v9407
    %vm9607 = vcmp.eq.f32.partialorder %v9606, 8.507059e+37
    %v9608 = vand.u32 %v9407, 2147483648
    %v9609 = vor.u32 1.1754944e-38, %v9608
    %v9610 = vsel %vm9607, %v9609, %v9605
    %v9611 = vmul.f32 1.0, %v9610
    %v9612 = vrcp.pop %v9408
    %v9613 = vmul.f32 %v9408, %v9612
    %v9614 = vsub.f32 1.0, %v9613
    %v9615 = vmul.f32 %v9612, %v9614
    %v9616 = vadd.f32 %v9612, %v9615
    %vm9617 = vweird.f32 %v9408
    %vm9618 = vweird.f32 %v9612
    %vm9619 = vmor %vm9617, %vm9618
    %v9620 = vsel %vm9619, %v9612, %v9616
    %v9621 = vand.u32 2147483647, %v9408
    %vm9622 = vcmp.eq.f32.partialorder %v9621, 8.507059e+37
    %v9623 = vand.u32 %v9408, 2147483648
    %v9624 = vor.u32 1.1754944e-38, %v9623
    %v9625 = vsel %vm9622, %v9624, %v9620
    %v9626 = vmul.f32 1.0, %v9625
    %v9627 = vrcp.pop %v9409
    %v9628 = vmul.f32 %v9409, %v9627
    %v9629 = vsub.f32 1.0, %v9628
    %v9630 = vmul.f32 %v9627, %v9629
    %v9631 = vadd.f32 %v9627, %v9630
    %vm9632 = vweird.f32 %v9409
    %vm9633 = vweird.f32 %v9627
    %vm9634 = vmor %vm9632, %vm9633
    %v9635 = vsel %vm9634, %v9627, %v9631
    %v9636 = vand.u32 2147483647, %v9409
    %vm9637 = vcmp.eq.f32.partialorder %v9636, 8.507059e+37
    %v9638 = vand.u32 %v9409, 2147483648
    %v9639 = vor.u32 1.1754944e-38, %v9638
    %v9640 = vsel %vm9637, %v9639, %v9635
    %v9641 = vmul.f32 1.0, %v9640
    %v9642 = vrcp.pop %v9410
    %v9643 = vmul.f32 %v9410, %v9642
    %v9644 = vsub.f32 1.0, %v9643
    %v9645 = vmul.f32 %v9642, %v9644
    %v9646 = vadd.f32 %v9642, %v9645
    %vm9647 = vweird.f32 %v9410
    %vm9648 = vweird.f32 %v9642
    %vm9649 = vmor %vm9647, %vm9648
    %v9650 = vsel %vm9649, %v9642, %v9646
    %v9651 = vand.u32 2147483647, %v9410
    %vm9652 = vcmp.eq.f32.partialorder %v9651, 8.507059e+37
    %v9653 = vand.u32 %v9410, 2147483648
    %v9654 = vor.u32 1.1754944e-38, %v9653
    %v9655 = vsel %vm9652, %v9654, %v9650
    %v9656 = vmul.f32 1.0, %v9655
    %v9657 = vrcp.pop %v9411
    %v9658 = vmul.f32 %v9411, %v9657
    %v9659 = vsub.f32 1.0, %v9658
    %v9660 = vmul.f32 %v9657, %v9659
    %v9661 = vadd.f32 %v9657, %v9660
    %vm9662 = vweird.f32 %v9411
    %vm9663 = vweird.f32 %v9657
    %vm9664 = vmor %vm9662, %vm9663
    %v9665 = vsel %vm9664, %v9657, %v9661
    %v9666 = vand.u32 2147483647, %v9411
    %vm9667 = vcmp.eq.f32.partialorder %v9666, 8.507059e+37
    %v9668 = vand.u32 %v9411, 2147483648
    %v9669 = vor.u32 1.1754944e-38, %v9668
    %v9670 = vsel %vm9667, %v9669, %v9665
    %v9671 = vmul.f32 1.0, %v9670
    %v9672 = vrcp.pop %v9412
    %v9673 = vmul.f32 %v9412, %v9672
    %v9674 = vsub.f32 1.0, %v9673
    %v9675 = vmul.f32 %v9672, %v9674
    %v9676 = vadd.f32 %v9672, %v9675
    %vm9677 = vweird.f32 %v9412
    %vm9678 = vweird.f32 %v9672
    %vm9679 = vmor %vm9677, %vm9678
    %v9680 = vsel %vm9679, %v9672, %v9676
    %v9681 = vand.u32 2147483647, %v9412
    %vm9682 = vcmp.eq.f32.partialorder %v9681, 8.507059e+37
    %v9683 = vand.u32 %v9412, 2147483648
    %v9684 = vor.u32 1.1754944e-38, %v9683
    %v9685 = vsel %vm9682, %v9684, %v9680
    %v9686 = vmul.f32 1.0, %v9685
    %v9687 = vrcp.pop %v9413
    %v9688 = vmul.f32 %v9413, %v9687
    %v9689 = vsub.f32 1.0, %v9688
    %v9690 = vmul.f32 %v9687, %v9689
    %v9691 = vadd.f32 %v9687, %v9690
    %vm9692 = vweird.f32 %v9413
    %vm9693 = vweird.f32 %v9687
    %vm9694 = vmor %vm9692, %vm9693
    %v9695 = vsel %vm9694, %v9687, %v9691
    %v9696 = vand.u32 2147483647, %v9413
    %vm9697 = vcmp.eq.f32.partialorder %v9696, 8.507059e+37
    %v9698 = vand.u32 %v9413, 2147483648
    %v9699 = vor.u32 1.1754944e-38, %v9698
    %v9700 = vsel %vm9697, %v9699, %v9695
    %v9701 = vmul.f32 1.0, %v9700
    %v9702 = vrcp.pop %v9414
    %v9703 = vmul.f32 %v9414, %v9702
    %v9704 = vsub.f32 1.0, %v9703
    %v9705 = vmul.f32 %v9702, %v9704
    %v9706 = vadd.f32 %v9702, %v9705
    %vm9707 = vweird.f32 %v9414
    %vm9708 = vweird.f32 %v9702
    %vm9709 = vmor %vm9707, %vm9708
    %v9710 = vsel %vm9709, %v9702, %v9706
    %v9711 = vand.u32 2147483647, %v9414
    %vm9712 = vcmp.eq.f32.partialorder %v9711, 8.507059e+37
    %v9713 = vand.u32 %v9414, 2147483648
    %v9714 = vor.u32 1.1754944e-38, %v9713
    %v9715 = vsel %vm9712, %v9714, %v9710
    %v9716 = vmul.f32 1.0, %v9715
    %v9717 = vrcp.pop %v9415
    %v9718 = vmul.f32 %v9415, %v9717
    %v9719 = vsub.f32 1.0, %v9718
    %v9720 = vmul.f32 %v9717, %v9719
    %v9721 = vadd.f32 %v9717, %v9720
    %vm9722 = vweird.f32 %v9415
    %vm9723 = vweird.f32 %v9717
    %vm9724 = vmor %vm9722, %vm9723
    %v9725 = vsel %vm9724, %v9717, %v9721
    %v9726 = vand.u32 2147483647, %v9415
    %vm9727 = vcmp.eq.f32.partialorder %v9726, 8.507059e+37
    %v9728 = vand.u32 %v9415, 2147483648
    %v9729 = vor.u32 1.1754944e-38, %v9728
    %v9730 = vsel %vm9727, %v9729, %v9725
    %v9731 = vmul.f32 1.0, %v9730
    %v9732 = vrcp.pop %v9416
    %v9733 = vmul.f32 %v9416, %v9732
    %v9734 = vsub.f32 1.0, %v9733
    %v9735 = vmul.f32 %v9732, %v9734
    %v9736 = vadd.f32 %v9732, %v9735
    %vm9737 = vweird.f32 %v9416
    %vm9738 = vweird.f32 %v9732
    %vm9739 = vmor %vm9737, %vm9738
    %v9740 = vsel %vm9739, %v9732, %v9736
    %v9741 = vand.u32 2147483647, %v9416
    %vm9742 = vcmp.eq.f32.partialorder %v9741, 8.507059e+37
    %v9743 = vand.u32 %v9416, 2147483648
    %v9744 = vor.u32 1.1754944e-38, %v9743
    %v9745 = vsel %vm9742, %v9744, %v9740
    %v9746 = vmul.f32 1.0, %v9745
    %v9747 = vrcp.pop %v9417
    %v9748 = vmul.f32 %v9417, %v9747
    %v9749 = vsub.f32 1.0, %v9748
    %v9750 = vmul.f32 %v9747, %v9749
    %v9751 = vadd.f32 %v9747, %v9750
    %vm9752 = vweird.f32 %v9417
    %vm9753 = vweird.f32 %v9747
    %vm9754 = vmor %vm9752, %vm9753
    %v9755 = vsel %vm9754, %v9747, %v9751
    %v9756 = vand.u32 2147483647, %v9417
    %vm9757 = vcmp.eq.f32.partialorder %v9756, 8.507059e+37
    %v9758 = vand.u32 %v9417, 2147483648
    %v9759 = vor.u32 1.1754944e-38, %v9758
    %v9760 = vsel %vm9757, %v9759, %v9755
    %v9761 = vmul.f32 1.0, %v9760
    %v9762 = vrcp.pop %v9418
    %v9763 = vmul.f32 %v9418, %v9762
    %v9764 = vsub.f32 1.0, %v9763
    %v9765 = vmul.f32 %v9762, %v9764
    %v9766 = vadd.f32 %v9762, %v9765
    %vm9767 = vweird.f32 %v9418
    %vm9768 = vweird.f32 %v9762
    %vm9769 = vmor %vm9767, %vm9768
    %v9770 = vsel %vm9769, %v9762, %v9766
    %v9771 = vand.u32 2147483647, %v9418
    %vm9772 = vcmp.eq.f32.partialorder %v9771, 8.507059e+37
    %v9773 = vand.u32 %v9418, 2147483648
    %v9774 = vor.u32 1.1754944e-38, %v9773
    %v9775 = vsel %vm9772, %v9774, %v9770
    %v9776 = vmul.f32 1.0, %v9775
    %v9777 = vrcp.pop %v9419
    %v9778 = vmul.f32 %v9419, %v9777
    %v9779 = vsub.f32 1.0, %v9778
    %v9780 = vmul.f32 %v9777, %v9779
    %v9781 = vadd.f32 %v9777, %v9780
    %vm9782 = vweird.f32 %v9419
    %vm9783 = vweird.f32 %v9777
    %vm9784 = vmor %vm9782, %vm9783
    %v9785 = vsel %vm9784, %v9777, %v9781
    %v9786 = vand.u32 2147483647, %v9419
    %vm9787 = vcmp.eq.f32.partialorder %v9786, 8.507059e+37
    %v9788 = vand.u32 %v9419, 2147483648
    %v9789 = vor.u32 1.1754944e-38, %v9788
    %v9790 = vsel %vm9787, %v9789, %v9785
    %v9791 = vmul.f32 1.0, %v9790
    %v9792 = vrcp.pop %v9420
    %v9793 = vmul.f32 %v9420, %v9792
    %v9794 = vsub.f32 1.0, %v9793
    %v9795 = vmul.f32 %v9792, %v9794
    %v9796 = vadd.f32 %v9792, %v9795
    %vm9797 = vweird.f32 %v9420
    %vm9798 = vweird.f32 %v9792
    %vm9799 = vmor %vm9797, %vm9798
    %v9800 = vsel %vm9799, %v9792, %v9796
    %v9801 = vand.u32 2147483647, %v9420
    %vm9802 = vcmp.eq.f32.partialorder %v9801, 8.507059e+37
    %v9803 = vand.u32 %v9420, 2147483648
    %v9804 = vor.u32 1.1754944e-38, %v9803
    %v9805 = vsel %vm9802, %v9804, %v9800
    %v9806 = vmul.f32 1.0, %v9805
    %v9807 = vrcp.pop %v9421
    %v9808 = vmul.f32 %v9421, %v9807
    %v9809 = vsub.f32 1.0, %v9808
    %v9810 = vmul.f32 %v9807, %v9809
    %v9811 = vadd.f32 %v9807, %v9810
    %vm9812 = vweird.f32 %v9421
    %vm9813 = vweird.f32 %v9807
    %vm9814 = vmor %vm9812, %vm9813
    %v9815 = vsel %vm9814, %v9807, %v9811
    %v9816 = vand.u32 2147483647, %v9421
    %vm9817 = vcmp.eq.f32.partialorder %v9816, 8.507059e+37
    %v9818 = vand.u32 %v9421, 2147483648
    %v9819 = vor.u32 1.1754944e-38, %v9818
    %v9820 = vsel %vm9817, %v9819, %v9815
    %v9821 = vmul.f32 1.0, %v9820
    %v9822 = vrcp.pop %v9422
    %v9823 = vmul.f32 %v9422, %v9822
    %v9824 = vsub.f32 1.0, %v9823
    %v9825 = vmul.f32 %v9822, %v9824
    %v9826 = vadd.f32 %v9822, %v9825
    %vm9827 = vweird.f32 %v9422
    %vm9828 = vweird.f32 %v9822
    %vm9829 = vmor %vm9827, %vm9828
    %v9830 = vsel %vm9829, %v9822, %v9826
    %v9831 = vand.u32 2147483647, %v9422
    %vm9832 = vcmp.eq.f32.partialorder %v9831, 8.507059e+37
    %v9833 = vand.u32 %v9422, 2147483648
    %v9834 = vor.u32 1.1754944e-38, %v9833
    %v9835 = vsel %vm9832, %v9834, %v9830
    %v9836 = vmul.f32 1.0, %v9835
    %v9837 = vrcp.pop %v9423
    %v9838 = vmul.f32 %v9423, %v9837
    %v9839 = vsub.f32 1.0, %v9838
    %v9840 = vmul.f32 %v9837, %v9839
    %v9841 = vadd.f32 %v9837, %v9840
    %vm9842 = vweird.f32 %v9423
    %vm9843 = vweird.f32 %v9837
    %vm9844 = vmor %vm9842, %vm9843
    %v9845 = vsel %vm9844, %v9837, %v9841
    %v9846 = vand.u32 2147483647, %v9423
    %vm9847 = vcmp.eq.f32.partialorder %v9846, 8.507059e+37
    %v9848 = vand.u32 %v9423, 2147483648
    %v9849 = vor.u32 1.1754944e-38, %v9848
    %v9850 = vsel %vm9847, %v9849, %v9845
    %v9851 = vmul.f32 1.0, %v9850
    %v9852 = vrcp.pop %v9424
    %v9853 = vmul.f32 %v9424, %v9852
    %v9854 = vsub.f32 1.0, %v9853
    %v9855 = vmul.f32 %v9852, %v9854
    %v9856 = vadd.f32 %v9852, %v9855
    %vm9857 = vweird.f32 %v9424
    %vm9858 = vweird.f32 %v9852
    %vm9859 = vmor %vm9857, %vm9858
    %v9860 = vsel %vm9859, %v9852, %v9856
    %v9861 = vand.u32 2147483647, %v9424
    %vm9862 = vcmp.eq.f32.partialorder %v9861, 8.507059e+37
    %v9863 = vand.u32 %v9424, 2147483648
    %v9864 = vor.u32 1.1754944e-38, %v9863
    %v9865 = vsel %vm9862, %v9864, %v9860
    %v9866 = vmul.f32 1.0, %v9865
    %v9867 = vrcp.pop %v9425
    %v9868 = vmul.f32 %v9425, %v9867
    %v9869 = vsub.f32 1.0, %v9868
    %v9870 = vmul.f32 %v9867, %v9869
    %v9871 = vadd.f32 %v9867, %v9870
    %vm9872 = vweird.f32 %v9425
    %vm9873 = vweird.f32 %v9867
    %vm9874 = vmor %vm9872, %vm9873
    %v9875 = vsel %vm9874, %v9867, %v9871
    %v9876 = vand.u32 2147483647, %v9425
    %vm9877 = vcmp.eq.f32.partialorder %v9876, 8.507059e+37
    %v9878 = vand.u32 %v9425, 2147483648
    %v9879 = vor.u32 1.1754944e-38, %v9878
    %v9880 = vsel %vm9877, %v9879, %v9875
    %v9881 = vmul.f32 1.0, %v9880
    %v9882 = vrcp.pop %v9426
    %v9883 = vmul.f32 %v9426, %v9882
    %v9884 = vsub.f32 1.0, %v9883
    %v9885 = vmul.f32 %v9882, %v9884
    %v9886 = vadd.f32 %v9882, %v9885
    %vm9887 = vweird.f32 %v9426
    %vm9888 = vweird.f32 %v9882
    %vm9889 = vmor %vm9887, %vm9888
    %v9890 = vsel %vm9889, %v9882, %v9886
    %v9891 = vand.u32 2147483647, %v9426
    %vm9892 = vcmp.eq.f32.partialorder %v9891, 8.507059e+37
    %v9893 = vand.u32 %v9426, 2147483648
    %v9894 = vor.u32 1.1754944e-38, %v9893
    %v9895 = vsel %vm9892, %v9894, %v9890
    %v9896 = vmul.f32 1.0, %v9895
    %v9897 = vrcp.pop %v9427
    %v9898 = vmul.f32 %v9427, %v9897
    %v9899 = vsub.f32 1.0, %v9898
    %v9900 = vmul.f32 %v9897, %v9899
    %v9901 = vadd.f32 %v9897, %v9900
    %vm9902 = vweird.f32 %v9427
    %vm9903 = vweird.f32 %v9897
    %vm9904 = vmor %vm9902, %vm9903
    %v9905 = vsel %vm9904, %v9897, %v9901
    %v9906 = vand.u32 2147483647, %v9427
    %vm9907 = vcmp.eq.f32.partialorder %v9906, 8.507059e+37
    %v9908 = vand.u32 %v9427, 2147483648
    %v9909 = vor.u32 1.1754944e-38, %v9908
    %v9910 = vsel %vm9907, %v9909, %v9905
    %v9911 = vmul.f32 1.0, %v9910
    %v9912 = vrcp.pop %v9428
    %v9913 = vmul.f32 %v9428, %v9912
    %v9914 = vsub.f32 1.0, %v9913
    %v9915 = vmul.f32 %v9912, %v9914
    %v9916 = vadd.f32 %v9912, %v9915
    %vm9917 = vweird.f32 %v9428
    %vm9918 = vweird.f32 %v9912
    %vm9919 = vmor %vm9917, %vm9918
    %v9920 = vsel %vm9919, %v9912, %v9916
    %v9921 = vand.u32 2147483647, %v9428
    %vm9922 = vcmp.eq.f32.partialorder %v9921, 8.507059e+37
    %v9923 = vand.u32 %v9428, 2147483648
    %v9924 = vor.u32 1.1754944e-38, %v9923
    %v9925 = vsel %vm9922, %v9924, %v9920
    %v9926 = vmul.f32 1.0, %v9925
    %v9927 = vrcp.pop %v9429
    %v9928 = vmul.f32 %v9429, %v9927
    %v9929 = vsub.f32 1.0, %v9928
    %v9930 = vmul.f32 %v9927, %v9929
    %v9931 = vadd.f32 %v9927, %v9930
    %vm9932 = vweird.f32 %v9429
    %vm9933 = vweird.f32 %v9927
    %vm9934 = vmor %vm9932, %vm9933
    %v9935 = vsel %vm9934, %v9927, %v9931
    %v9936 = vand.u32 2147483647, %v9429
    %vm9937 = vcmp.eq.f32.partialorder %v9936, 8.507059e+37
    %v9938 = vand.u32 %v9429, 2147483648
    %v9939 = vor.u32 1.1754944e-38, %v9938
    %v9940 = vsel %vm9937, %v9939, %v9935
    %v9941 = vmul.f32 1.0, %v9940
    %v9942 = vrcp.pop %v9430
    %v9943 = vmul.f32 %v9430, %v9942
    %v9944 = vsub.f32 1.0, %v9943
    %v9945 = vmul.f32 %v9942, %v9944
    %v9946 = vadd.f32 %v9942, %v9945
    %vm9947 = vweird.f32 %v9430
    %vm9948 = vweird.f32 %v9942
    %vm9949 = vmor %vm9947, %vm9948
    %v9950 = vsel %vm9949, %v9942, %v9946
    %v9951 = vand.u32 2147483647, %v9430
    %vm9952 = vcmp.eq.f32.partialorder %v9951, 8.507059e+37
    %v9953 = vand.u32 %v9430, 2147483648
    %v9954 = vor.u32 1.1754944e-38, %v9953
    %v9955 = vsel %vm9952, %v9954, %v9950
    %v9956 = vmul.f32 1.0, %v9955
    %v9957 = vrcp.pop %v9431
    %v9958 = vmul.f32 %v9431, %v9957
    %v9959 = vsub.f32 1.0, %v9958
    %v9960 = vmul.f32 %v9957, %v9959
    %v9961 = vadd.f32 %v9957, %v9960
    %vm9962 = vweird.f32 %v9431
    %vm9963 = vweird.f32 %v9957
    %vm9964 = vmor %vm9962, %vm9963
    %v9965 = vsel %vm9964, %v9957, %v9961
    %v9966 = vand.u32 2147483647, %v9431
    %vm9967 = vcmp.eq.f32.partialorder %v9966, 8.507059e+37
    %v9968 = vand.u32 %v9431, 2147483648
    %v9969 = vor.u32 1.1754944e-38, %v9968
    %v9970 = vsel %vm9967, %v9969, %v9965
    %v9971 = vmul.f32 1.0, %v9970
    %v9972 = vrcp.pop %v9432
    %v9973 = vmul.f32 %v9432, %v9972
    %v9974 = vsub.f32 1.0, %v9973
    %v9975 = vmul.f32 %v9972, %v9974
    %v9976 = vadd.f32 %v9972, %v9975
    %vm9977 = vweird.f32 %v9432
    %vm9978 = vweird.f32 %v9972
    %vm9979 = vmor %vm9977, %vm9978
    %v9980 = vsel %vm9979, %v9972, %v9976
    %v9981 = vand.u32 2147483647, %v9432
    %vm9982 = vcmp.eq.f32.partialorder %v9981, 8.507059e+37
    %v9983 = vand.u32 %v9432, 2147483648
    %v9984 = vor.u32 1.1754944e-38, %v9983
    %v9985 = vsel %vm9982, %v9984, %v9980
    %v9986 = vmul.f32 1.0, %v9985
    %v9987 = vrcp.pop %v9433
    %v9988 = vmul.f32 %v9433, %v9987
    %v9989 = vsub.f32 1.0, %v9988
    %v9990 = vmul.f32 %v9987, %v9989
    %v9991 = vadd.f32 %v9987, %v9990
    %vm9992 = vweird.f32 %v9433
    %vm9993 = vweird.f32 %v9987
    %vm9994 = vmor %vm9992, %vm9993
    %v9995 = vsel %vm9994, %v9987, %v9991
    %v9996 = vand.u32 2147483647, %v9433
    %vm9997 = vcmp.eq.f32.partialorder %v9996, 8.507059e+37
    %v9998 = vand.u32 %v9433, 2147483648
    %v9999 = vor.u32 1.1754944e-38, %v9998
    %v10000 = vsel %vm9997, %v9999, %v9995
    %v10001 = vmul.f32 1.0, %v10000
    %v10002 = vrcp.pop %v9434
    %v10003 = vmul.f32 %v9434, %v10002
    %v10004 = vsub.f32 1.0, %v10003
    %v10005 = vmul.f32 %v10002, %v10004
    %v10006 = vadd.f32 %v10002, %v10005
    %vm10007 = vweird.f32 %v9434
    %vm10008 = vweird.f32 %v10002
    %vm10009 = vmor %vm10007, %vm10008
    %v10010 = vsel %vm10009, %v10002, %v10006
    %v10011 = vand.u32 2147483647, %v9434
    %vm10012 = vcmp.eq.f32.partialorder %v10011, 8.507059e+37
    %v10013 = vand.u32 %v9434, 2147483648
    %v10014 = vor.u32 1.1754944e-38, %v10013
    %v10015 = vsel %vm10012, %v10014, %v10010
    %v10016 = vmul.f32 1.0, %v10015
    %v10017 = vrcp.pop %v9435
    %v10018 = vmul.f32 %v9435, %v10017
    %v10019 = vsub.f32 1.0, %v10018
    %v10020 = vmul.f32 %v10017, %v10019
    %v10021 = vadd.f32 %v10017, %v10020
    %vm10022 = vweird.f32 %v9435
    %vm10023 = vweird.f32 %v10017
    %vm10024 = vmor %vm10022, %vm10023
    %v10025 = vsel %vm10024, %v10017, %v10021
    %v10026 = vand.u32 2147483647, %v9435
    %vm10027 = vcmp.eq.f32.partialorder %v10026, 8.507059e+37
    %v10028 = vand.u32 %v9435, 2147483648
    %v10029 = vor.u32 1.1754944e-38, %v10028
    %v10030 = vsel %vm10027, %v10029, %v10025
    %v10031 = vmul.f32 1.0, %v10030
    %v10032 = vrcp.pop %v9436
    %v10033 = vmul.f32 %v9436, %v10032
    %v10034 = vsub.f32 1.0, %v10033
    %v10035 = vmul.f32 %v10032, %v10034
    %v10036 = vadd.f32 %v10032, %v10035
    %vm10037 = vweird.f32 %v9436
    %vm10038 = vweird.f32 %v10032
    %vm10039 = vmor %vm10037, %vm10038
    %v10040 = vsel %vm10039, %v10032, %v10036
    %v10041 = vand.u32 2147483647, %v9436
    %vm10042 = vcmp.eq.f32.partialorder %v10041, 8.507059e+37
    %v10043 = vand.u32 %v9436, 2147483648
    %v10044 = vor.u32 1.1754944e-38, %v10043
    %v10045 = vsel %vm10042, %v10044, %v10040
    %v10046 = vmul.f32 1.0, %v10045
    %v10047 = vrcp.pop %v9437
    %v10048 = vmul.f32 %v9437, %v10047
    %v10049 = vsub.f32 1.0, %v10048
    %v10050 = vmul.f32 %v10047, %v10049
    %v10051 = vadd.f32 %v10047, %v10050
    %vm10052 = vweird.f32 %v9437
    %vm10053 = vweird.f32 %v10047
    %vm10054 = vmor %vm10052, %vm10053
    %v10055 = vsel %vm10054, %v10047, %v10051
    %v10056 = vand.u32 2147483647, %v9437
    %vm10057 = vcmp.eq.f32.partialorder %v10056, 8.507059e+37
    %v10058 = vand.u32 %v9437, 2147483648
    %v10059 = vor.u32 1.1754944e-38, %v10058
    %v10060 = vsel %vm10057, %v10059, %v10055
    %v10061 = vmul.f32 1.0, %v10060
    %v10062 = vrcp.pop %v9438
    %v10063 = vmul.f32 %v9438, %v10062
    %v10064 = vsub.f32 1.0, %v10063
    %v10065 = vmul.f32 %v10062, %v10064
    %v10066 = vadd.f32 %v10062, %v10065
    %vm10067 = vweird.f32 %v9438
    %vm10068 = vweird.f32 %v10062
    %vm10069 = vmor %vm10067, %vm10068
    %v10070 = vsel %vm10069, %v10062, %v10066
    %v10071 = vand.u32 2147483647, %v9438
    %vm10072 = vcmp.eq.f32.partialorder %v10071, 8.507059e+37
    %v10073 = vand.u32 %v9438, 2147483648
    %v10074 = vor.u32 1.1754944e-38, %v10073
    %v10075 = vsel %vm10072, %v10074, %v10070
    %v10076 = vmul.f32 1.0, %v10075
    %v10077 = vrcp.pop %v9439
    %v10078 = vmul.f32 %v9439, %v10077
    %v10079 = vsub.f32 1.0, %v10078
    %v10080 = vmul.f32 %v10077, %v10079
    %v10081 = vadd.f32 %v10077, %v10080
    %vm10082 = vweird.f32 %v9439
    %vm10083 = vweird.f32 %v10077
    %vm10084 = vmor %vm10082, %vm10083
    %v10085 = vsel %vm10084, %v10077, %v10081
    %v10086 = vand.u32 2147483647, %v9439
    %vm10087 = vcmp.eq.f32.partialorder %v10086, 8.507059e+37
    %v10088 = vand.u32 %v9439, 2147483648
    %v10089 = vor.u32 1.1754944e-38, %v10088
    %v10090 = vsel %vm10087, %v10089, %v10085
    %v10091 = vmul.f32 1.0, %v10090
    %v10092 = vrcp.pop %v9440
    %v10093 = vmul.f32 %v9440, %v10092
    %v10094 = vsub.f32 1.0, %v10093
    %v10095 = vmul.f32 %v10092, %v10094
    %v10096 = vadd.f32 %v10092, %v10095
    %vm10097 = vweird.f32 %v9440
    %vm10098 = vweird.f32 %v10092
    %vm10099 = vmor %vm10097, %vm10098
    %v10100 = vsel %vm10099, %v10092, %v10096
    %v10101 = vand.u32 2147483647, %v9440
    %vm10102 = vcmp.eq.f32.partialorder %v10101, 8.507059e+37
    %v10103 = vand.u32 %v9440, 2147483648
    %v10104 = vor.u32 1.1754944e-38, %v10103
    %v10105 = vsel %vm10102, %v10104, %v10100
    %v10106 = vmul.f32 1.0, %v10105
    %v10107 = vrcp.pop %v9441
    %v10108 = vmul.f32 %v9441, %v10107
    %v10109 = vsub.f32 1.0, %v10108
    %v10110 = vmul.f32 %v10107, %v10109
    %v10111 = vadd.f32 %v10107, %v10110
    %vm10112 = vweird.f32 %v9441
    %vm10113 = vweird.f32 %v10107
    %vm10114 = vmor %vm10112, %vm10113
    %v10115 = vsel %vm10114, %v10107, %v10111
    %v10116 = vand.u32 2147483647, %v9441
    %vm10117 = vcmp.eq.f32.partialorder %v10116, 8.507059e+37
    %v10118 = vand.u32 %v9441, 2147483648
    %v10119 = vor.u32 1.1754944e-38, %v10118
    %v10120 = vsel %vm10117, %v10119, %v10115
    %v10121 = vmul.f32 1.0, %v10120
    %v10122 = vrcp.pop %v9442
    %v10123 = vmul.f32 %v9442, %v10122
    %v10124 = vsub.f32 1.0, %v10123
    %v10125 = vmul.f32 %v10122, %v10124
    %v10126 = vadd.f32 %v10122, %v10125
    %vm10127 = vweird.f32 %v9442
    %vm10128 = vweird.f32 %v10122
    %vm10129 = vmor %vm10127, %vm10128
    %v10130 = vsel %vm10129, %v10122, %v10126
    %v10131 = vand.u32 2147483647, %v9442
    %vm10132 = vcmp.eq.f32.partialorder %v10131, 8.507059e+37
    %v10133 = vand.u32 %v9442, 2147483648
    %v10134 = vor.u32 1.1754944e-38, %v10133
    %v10135 = vsel %vm10132, %v10134, %v10130
    %v10136 = vmul.f32 1.0, %v10135
    %v10137 = vrcp.pop %v9443
    %v10138 = vmul.f32 %v9443, %v10137
    %v10139 = vsub.f32 1.0, %v10138
    %v10140 = vmul.f32 %v10137, %v10139
    %v10141 = vadd.f32 %v10137, %v10140
    %vm10142 = vweird.f32 %v9443
    %vm10143 = vweird.f32 %v10137
    %vm10144 = vmor %vm10142, %vm10143
    %v10145 = vsel %vm10144, %v10137, %v10141
    %v10146 = vand.u32 2147483647, %v9443
    %vm10147 = vcmp.eq.f32.partialorder %v10146, 8.507059e+37
    %v10148 = vand.u32 %v9443, 2147483648
    %v10149 = vor.u32 1.1754944e-38, %v10148
    %v10150 = vsel %vm10147, %v10149, %v10145
    %v10151 = vmul.f32 1.0, %v10150
    %v10152 = vrcp.pop %v9444
    %v10153 = vmul.f32 %v9444, %v10152
    %v10154 = vsub.f32 1.0, %v10153
    %v10155 = vmul.f32 %v10152, %v10154
    %v10156 = vadd.f32 %v10152, %v10155
    %vm10157 = vweird.f32 %v9444
    %vm10158 = vweird.f32 %v10152
    %vm10159 = vmor %vm10157, %vm10158
    %v10160 = vsel %vm10159, %v10152, %v10156
    %v10161 = vand.u32 2147483647, %v9444
    %vm10162 = vcmp.eq.f32.partialorder %v10161, 8.507059e+37
    %v10163 = vand.u32 %v9444, 2147483648
    %v10164 = vor.u32 1.1754944e-38, %v10163
    %v10165 = vsel %vm10162, %v10164, %v10160
    %v10166 = vmul.f32 1.0, %v10165
    %v10167 = vrcp.pop %v9445
    %v10168 = vmul.f32 %v9445, %v10167
    %v10169 = vsub.f32 1.0, %v10168
    %v10170 = vmul.f32 %v10167, %v10169
    %v10171 = vadd.f32 %v10167, %v10170
    %vm10172 = vweird.f32 %v9445
    %vm10173 = vweird.f32 %v10167
    %vm10174 = vmor %vm10172, %vm10173
    %v10175 = vsel %vm10174, %v10167, %v10171
    %v10176 = vand.u32 2147483647, %v9445
    %vm10177 = vcmp.eq.f32.partialorder %v10176, 8.507059e+37
    %v10178 = vand.u32 %v9445, 2147483648
    %v10179 = vor.u32 1.1754944e-38, %v10178
    %v10180 = vsel %vm10177, %v10179, %v10175
    %v10181 = vmul.f32 1.0, %v10180
    %v10182 = vrcp.pop %v9446
    %v10183 = vmul.f32 %v9446, %v10182
    %v10184 = vsub.f32 1.0, %v10183
    %v10185 = vmul.f32 %v10182, %v10184
    %v10186 = vadd.f32 %v10182, %v10185
    %vm10187 = vweird.f32 %v9446
    %vm10188 = vweird.f32 %v10182
    %vm10189 = vmor %vm10187, %vm10188
    %v10190 = vsel %vm10189, %v10182, %v10186
    %v10191 = vand.u32 2147483647, %v9446
    %vm10192 = vcmp.eq.f32.partialorder %v10191, 8.507059e+37
    %v10193 = vand.u32 %v9446, 2147483648
    %v10194 = vor.u32 1.1754944e-38, %v10193
    %v10195 = vsel %vm10192, %v10194, %v10190
    %v10196 = vmul.f32 1.0, %v10195
    %v10197 = vrcp.pop %v9447
    %v10198 = vmul.f32 %v9447, %v10197
    %v10199 = vsub.f32 1.0, %v10198
    %v10200 = vmul.f32 %v10197, %v10199
    %v10201 = vadd.f32 %v10197, %v10200
    %vm10202 = vweird.f32 %v9447
    %vm10203 = vweird.f32 %v10197
    %vm10204 = vmor %vm10202, %vm10203
    %v10205 = vsel %vm10204, %v10197, %v10201
    %v10206 = vand.u32 2147483647, %v9447
    %vm10207 = vcmp.eq.f32.partialorder %v10206, 8.507059e+37
    %v10208 = vand.u32 %v9447, 2147483648
    %v10209 = vor.u32 1.1754944e-38, %v10208
    %v10210 = vsel %vm10207, %v10209, %v10205
    %v10211 = vmul.f32 1.0, %v10210
    %v10212 = vrcp.pop %v9448
    %v10213 = vmul.f32 %v9448, %v10212
    %v10214 = vsub.f32 1.0, %v10213
    %v10215 = vmul.f32 %v10212, %v10214
    %v10216 = vadd.f32 %v10212, %v10215
    %vm10217 = vweird.f32 %v9448
    %vm10218 = vweird.f32 %v10212
    %vm10219 = vmor %vm10217, %vm10218
    %v10220 = vsel %vm10219, %v10212, %v10216
    %v10221 = vand.u32 2147483647, %v9448
    %vm10222 = vcmp.eq.f32.partialorder %v10221, 8.507059e+37
    %v10223 = vand.u32 %v9448, 2147483648
    %v10224 = vor.u32 1.1754944e-38, %v10223
    %v10225 = vsel %vm10222, %v10224, %v10220
    %v10226 = vmul.f32 1.0, %v10225
    %v10227 = vrcp.pop %v9449
    %v10228 = vmul.f32 %v9449, %v10227
    %v10229 = vsub.f32 1.0, %v10228
    %v10230 = vmul.f32 %v10227, %v10229
    %v10231 = vadd.f32 %v10227, %v10230
    %vm10232 = vweird.f32 %v9449
    %vm10233 = vweird.f32 %v10227
    %vm10234 = vmor %vm10232, %vm10233
    %v10235 = vsel %vm10234, %v10227, %v10231
    %v10236 = vand.u32 2147483647, %v9449
    %vm10237 = vcmp.eq.f32.partialorder %v10236, 8.507059e+37
    %v10238 = vand.u32 %v9449, 2147483648
    %v10239 = vor.u32 1.1754944e-38, %v10238
    %v10240 = vsel %vm10237, %v10239, %v10235
    %v10241 = vmul.f32 1.0, %v10240
    %v10242 = vrcp.pop %v9450
    %v10243 = vmul.f32 %v9450, %v10242
    %v10244 = vsub.f32 1.0, %v10243
    %v10245 = vmul.f32 %v10242, %v10244
    %v10246 = vadd.f32 %v10242, %v10245
    %vm10247 = vweird.f32 %v9450
    %vm10248 = vweird.f32 %v10242
    %vm10249 = vmor %vm10247, %vm10248
    %v10250 = vsel %vm10249, %v10242, %v10246
    %v10251 = vand.u32 2147483647, %v9450
    %vm10252 = vcmp.eq.f32.partialorder %v10251, 8.507059e+37
    %v10253 = vand.u32 %v9450, 2147483648
    %v10254 = vor.u32 1.1754944e-38, %v10253
    %v10255 = vsel %vm10252, %v10254, %v10250
    %v10256 = vmul.f32 1.0, %v10255
    %v10257 = vrcp.pop %v9451
    %v10258 = vmul.f32 %v9451, %v10257
    %v10259 = vsub.f32 1.0, %v10258
    %v10260 = vmul.f32 %v10257, %v10259
    %v10261 = vadd.f32 %v10257, %v10260
    %vm10262 = vweird.f32 %v9451
    %vm10263 = vweird.f32 %v10257
    %vm10264 = vmor %vm10262, %vm10263
    %v10265 = vsel %vm10264, %v10257, %v10261
    %v10266 = vand.u32 2147483647, %v9451
    %vm10267 = vcmp.eq.f32.partialorder %v10266, 8.507059e+37
    %v10268 = vand.u32 %v9451, 2147483648
    %v10269 = vor.u32 1.1754944e-38, %v10268
    %v10270 = vsel %vm10267, %v10269, %v10265
    %v10271 = vmul.f32 1.0, %v10270
    %v10272 = vrcp.pop %v9452
    %v10273 = vmul.f32 %v9452, %v10272
    %v10274 = vsub.f32 1.0, %v10273
    %v10275 = vmul.f32 %v10272, %v10274
    %v10276 = vadd.f32 %v10272, %v10275
    %vm10277 = vweird.f32 %v9452
    %vm10278 = vweird.f32 %v10272
    %vm10279 = vmor %vm10277, %vm10278
    %v10280 = vsel %vm10279, %v10272, %v10276
    %v10281 = vand.u32 2147483647, %v9452
    %vm10282 = vcmp.eq.f32.partialorder %v10281, 8.507059e+37
    %v10283 = vand.u32 %v9452, 2147483648
    %v10284 = vor.u32 1.1754944e-38, %v10283
    %v10285 = vsel %vm10282, %v10284, %v10280
    %v10286 = vmul.f32 1.0, %v10285
    %v10287 = vrcp.pop %v9453
    %v10288 = vmul.f32 %v9453, %v10287
    %v10289 = vsub.f32 1.0, %v10288
    %v10290 = vmul.f32 %v10287, %v10289
    %v10291 = vadd.f32 %v10287, %v10290
    %vm10292 = vweird.f32 %v9453
    %vm10293 = vweird.f32 %v10287
    %vm10294 = vmor %vm10292, %vm10293
    %v10295 = vsel %vm10294, %v10287, %v10291
    %v10296 = vand.u32 2147483647, %v9453
    %vm10297 = vcmp.eq.f32.partialorder %v10296, 8.507059e+37
    %v10298 = vand.u32 %v9453, 2147483648
    %v10299 = vor.u32 1.1754944e-38, %v10298
    %v10300 = vsel %vm10297, %v10299, %v10295
    %v10301 = vmul.f32 1.0, %v10300
    %v10302 = vrcp.pop %v9454
    %v10303 = vmul.f32 %v9454, %v10302
    %v10304 = vsub.f32 1.0, %v10303
    %v10305 = vmul.f32 %v10302, %v10304
    %v10306 = vadd.f32 %v10302, %v10305
    %vm10307 = vweird.f32 %v9454
    %vm10308 = vweird.f32 %v10302
    %vm10309 = vmor %vm10307, %vm10308
    %v10310 = vsel %vm10309, %v10302, %v10306
    %v10311 = vand.u32 2147483647, %v9454
    %vm10312 = vcmp.eq.f32.partialorder %v10311, 8.507059e+37
    %v10313 = vand.u32 %v9454, 2147483648
    %v10314 = vor.u32 1.1754944e-38, %v10313
    %v10315 = vsel %vm10312, %v10314, %v10310
    %v10316 = vmul.f32 1.0, %v10315
    %v10317 = vrcp.pop %v9455
    %v10318 = vmul.f32 %v9455, %v10317
    %v10319 = vsub.f32 1.0, %v10318
    %v10320 = vmul.f32 %v10317, %v10319
    %v10321 = vadd.f32 %v10317, %v10320
    %vm10322 = vweird.f32 %v9455
    %vm10323 = vweird.f32 %v10317
    %vm10324 = vmor %vm10322, %vm10323
    %v10325 = vsel %vm10324, %v10317, %v10321
    %v10326 = vand.u32 2147483647, %v9455
    %vm10327 = vcmp.eq.f32.partialorder %v10326, 8.507059e+37
    %v10328 = vand.u32 %v9455, 2147483648
    %v10329 = vor.u32 1.1754944e-38, %v10328
    %v10330 = vsel %vm10327, %v10329, %v10325
    %v10331 = vmul.f32 1.0, %v10330
    %v10332 = vrcp.pop %v9456
    %v10333 = vmul.f32 %v9456, %v10332
    %v10334 = vsub.f32 1.0, %v10333
    %v10335 = vmul.f32 %v10332, %v10334
    %v10336 = vadd.f32 %v10332, %v10335
    %vm10337 = vweird.f32 %v9456
    %vm10338 = vweird.f32 %v10332
    %vm10339 = vmor %vm10337, %vm10338
    %v10340 = vsel %vm10339, %v10332, %v10336
    %v10341 = vand.u32 2147483647, %v9456
    %vm10342 = vcmp.eq.f32.partialorder %v10341, 8.507059e+37
    %v10343 = vand.u32 %v9456, 2147483648
    %v10344 = vor.u32 1.1754944e-38, %v10343
    %v10345 = vsel %vm10342, %v10344, %v10340
    %v10346 = vmul.f32 1.0, %v10345
    %v10347 = vrcp.pop %v9457
    %v10348 = vmul.f32 %v9457, %v10347
    %v10349 = vsub.f32 1.0, %v10348
    %v10350 = vmul.f32 %v10347, %v10349
    %v10351 = vadd.f32 %v10347, %v10350
    %vm10352 = vweird.f32 %v9457
    %vm10353 = vweird.f32 %v10347
    %vm10354 = vmor %vm10352, %vm10353
    %v10355 = vsel %vm10354, %v10347, %v10351
    %v10356 = vand.u32 2147483647, %v9457
    %vm10357 = vcmp.eq.f32.partialorder %v10356, 8.507059e+37
    %v10358 = vand.u32 %v9457, 2147483648
    %v10359 = vor.u32 1.1754944e-38, %v10358
    %v10360 = vsel %vm10357, %v10359, %v10355
    %v10361 = vmul.f32 1.0, %v10360
    %v10362 = vrcp.pop %v9458
    %v10363 = vmul.f32 %v9458, %v10362
    %v10364 = vsub.f32 1.0, %v10363
    %v10365 = vmul.f32 %v10362, %v10364
    %v10366 = vadd.f32 %v10362, %v10365
    %vm10367 = vweird.f32 %v9458
    %vm10368 = vweird.f32 %v10362
    %vm10369 = vmor %vm10367, %vm10368
    %v10370 = vsel %vm10369, %v10362, %v10366
    %v10371 = vand.u32 2147483647, %v9458
    %vm10372 = vcmp.eq.f32.partialorder %v10371, 8.507059e+37
    %v10373 = vand.u32 %v9458, 2147483648
    %v10374 = vor.u32 1.1754944e-38, %v10373
    %v10375 = vsel %vm10372, %v10374, %v10370
    %v10376 = vmul.f32 1.0, %v10375
    %v10377 = vrcp.pop %v9459
    %v10378 = vmul.f32 %v9459, %v10377
    %v10379 = vsub.f32 1.0, %v10378
    %v10380 = vmul.f32 %v10377, %v10379
    %v10381 = vadd.f32 %v10377, %v10380
    %vm10382 = vweird.f32 %v9459
    %vm10383 = vweird.f32 %v10377
    %vm10384 = vmor %vm10382, %vm10383
    %v10385 = vsel %vm10384, %v10377, %v10381
    %v10386 = vand.u32 2147483647, %v9459
    %vm10387 = vcmp.eq.f32.partialorder %v10386, 8.507059e+37
    %v10388 = vand.u32 %v9459, 2147483648
    %v10389 = vor.u32 1.1754944e-38, %v10388
    %v10390 = vsel %vm10387, %v10389, %v10385
    %v10391 = vmul.f32 1.0, %v10390
    %v10392 = vrcp.pop %v9460
    %v10393 = vmul.f32 %v9460, %v10392
    %v10394 = vsub.f32 1.0, %v10393
    %v10395 = vmul.f32 %v10392, %v10394
    %v10396 = vadd.f32 %v10392, %v10395
    %vm10397 = vweird.f32 %v9460
    %vm10398 = vweird.f32 %v10392
    %vm10399 = vmor %vm10397, %vm10398
    %v10400 = vsel %vm10399, %v10392, %v10396
    %v10401 = vand.u32 2147483647, %v9460
    %vm10402 = vcmp.eq.f32.partialorder %v10401, 8.507059e+37
    %v10403 = vand.u32 %v9460, 2147483648
    %v10404 = vor.u32 1.1754944e-38, %v10403
    %v10405 = vsel %vm10402, %v10404, %v10400
    %v10406 = vmul.f32 1.0, %v10405
    %v10407 = vrcp.pop %v9461
    %v10408 = vmul.f32 %v9461, %v10407
    %v10409 = vsub.f32 1.0, %v10408
    %v10410 = vmul.f32 %v10407, %v10409
    %v10411 = vadd.f32 %v10407, %v10410
    %vm10412 = vweird.f32 %v9461
    %vm10413 = vweird.f32 %v10407
    %vm10414 = vmor %vm10412, %vm10413
    %v10415 = vsel %vm10414, %v10407, %v10411
    %v10416 = vand.u32 2147483647, %v9461
    %vm10417 = vcmp.eq.f32.partialorder %v10416, 8.507059e+37
    %v10418 = vand.u32 %v9461, 2147483648
    %v10419 = vor.u32 1.1754944e-38, %v10418
    %v10420 = vsel %vm10417, %v10419, %v10415
    %v10421 = vmul.f32 1.0, %v10420
    %10422 = vst [vmem:[%s10] sm:$0xff] %v9476
    %10423 = vst [vmem:[%s10 + $0x8] sm:$0xff] %v9491
    %10424 = vst [vmem:[%s10 + $0x10] sm:$0xff] %v9506
    %10425 = vst [vmem:[%s10 + $0x18] sm:$0xff] %v9521
    %10426 = vst [vmem:[%s10 + $0x20] sm:$0xff] %v9536
    %10427 = vst [vmem:[%s10 + $0x28] sm:$0xff] %v9551
    %10428 = vst [vmem:[%s10 + $0x30] sm:$0xff] %v9566
    %10429 = vst [vmem:[%s10 + $0x38] sm:$0xff] %v9581
    %10430 = vst [vmem:[%s10 + $0x40] sm:$0xff] %v9596
    %10431 = vst [vmem:[%s10 + $0x48] sm:$0xff] %v9611
    %10432 = vst [vmem:[%s10 + $0x50] sm:$0xff] %v9626
    %10433 = vst [vmem:[%s10 + $0x58] sm:$0xff] %v9641
    %10434 = vst [vmem:[%s10 + $0x60] sm:$0xff] %v9656
    %10435 = vst [vmem:[%s10 + $0x68] sm:$0xff] %v9671
    %10436 = vst [vmem:[%s10 + $0x70] sm:$0xff] %v9686
    %10437 = vst [vmem:[%s10 + $0x78] sm:$0xff] %v9701
    %10438 = vst [vmem:[%s10 + $0x80] sm:$0xff] %v9716
    %10439 = vst [vmem:[%s10 + $0x88] sm:$0xff] %v9731
    %10440 = vst [vmem:[%s10 + $0x90] sm:$0xff] %v9746
    %10441 = vst [vmem:[%s10 + $0x98] sm:$0xff] %v9761
    %10442 = vst [vmem:[%s10 + $0xa0] sm:$0xff] %v9776
    %10443 = vst [vmem:[%s10 + $0xa8] sm:$0xff] %v9791
    %10444 = vst [vmem:[%s10 + $0xb0] sm:$0xff] %v9806
    %10445 = vst [vmem:[%s10 + $0xb8] sm:$0xff] %v9821
    %10446 = vst [vmem:[%s10 + $0xc0] sm:$0xff] %v9836
    %10447 = vst [vmem:[%s10 + $0xc8] sm:$0xff] %v9851
    %10448 = vst [vmem:[%s10 + $0xd0] sm:$0xff] %v9866
    %10449 = vst [vmem:[%s10 + $0xd8] sm:$0xff] %v9881
    %10450 = vst [vmem:[%s10 + $0xe0] sm:$0xff] %v9896
    %10451 = vst [vmem:[%s10 + $0xe8] sm:$0xff] %v9911
    %10452 = vst [vmem:[%s10 + $0xf0] sm:$0xff] %v9926
    %10453 = vst [vmem:[%s10 + $0xf8] sm:$0xff] %v9941
    %10454 = vst [vmem:[%s10 + $0x100] sm:$0xff] %v9956
    %10455 = vst [vmem:[%s10 + $0x108] sm:$0xff] %v9971
    %10456 = vst [vmem:[%s10 + $0x110] sm:$0xff] %v9986
    %10457 = vst [vmem:[%s10 + $0x118] sm:$0xff] %v10001
    %10458 = vst [vmem:[%s10 + $0x120] sm:$0xff] %v10016
    %10459 = vst [vmem:[%s10 + $0x128] sm:$0xff] %v10031
    %10460 = vst [vmem:[%s10 + $0x130] sm:$0xff] %v10046
    %10461 = vst [vmem:[%s10 + $0x138] sm:$0xff] %v10061
    %10462 = vst [vmem:[%s10 + $0x140] sm:$0xff] %v10076
    %10463 = vst [vmem:[%s10 + $0x148] sm:$0xff] %v10091
    %10464 = vst [vmem:[%s10 + $0x150] sm:$0xff] %v10106
    %10465 = vst [vmem:[%s10 + $0x158] sm:$0xff] %v10121
    %10466 = vst [vmem:[%s10 + $0x160] sm:$0xff] %v10136
    %10467 = vst [vmem:[%s10 + $0x168] sm:$0xff] %v10151
    %10468 = vst [vmem:[%s10 + $0x170] sm:$0xff] %v10166
    %10469 = vst [vmem:[%s10 + $0x178] sm:$0xff] %v10181
    %10470 = vst [vmem:[%s10 + $0x180] sm:$0xff] %v10196
    %10471 = vst [vmem:[%s10 + $0x188] sm:$0xff] %v10211
    %10472 = vst [vmem:[%s10 + $0x190] sm:$0xff] %v10226
    %10473 = vst [vmem:[%s10 + $0x198] sm:$0xff] %v10241
    %10474 = vst [vmem:[%s10 + $0x1a0] sm:$0xff] %v10256
    %10475 = vst [vmem:[%s10 + $0x1a8] sm:$0xff] %v10271
    %10476 = vst [vmem:[%s10 + $0x1b0] sm:$0xff] %v10286
    %10477 = vst [vmem:[%s10 + $0x1b8] sm:$0xff] %v10301
    %10478 = vst [vmem:[%s10 + $0x1c0] sm:$0xff] %v10316
    %10479 = vst [vmem:[%s10 + $0x1c8] sm:$0xff] %v10331
    %10480 = vst [vmem:[%s10 + $0x1d0] sm:$0xff] %v10346
    %10481 = vst [vmem:[%s10 + $0x1d8] sm:$0xff] %v10361
    %10482 = vst [vmem:[%s10 + $0x1e0] sm:$0xff] %v10376
    %10483 = vst [vmem:[%s10 + $0x1e8] sm:$0xff] %v10391
    %10484 = vst [vmem:[%s10 + $0x1f0] sm:$0xff] %v10406
    %10485 = vst [vmem:[%s10 + $0x1f8] sm:$0xff] %v10421
    // Predicated region
    $region73: #{vaefc_ae_forward.1} parent=1 // pred_check
      _
    $region74: #{vaefc_ae_forward.1} parent=1 // pred_check_branch
      %10487 = sbr.rel (0) target = $region76
    $region75: #{vaefc_ae_forward.1} parent=1 // pred_region
      _
    $region76: #{vaefc_ae_forward.1} parent=1 // pred_fallthru
      _
    // Predicated region
    $region77: #{vaefc_ae_forward.1} parent=1 // pred_check
      _
    $region78: #{vaefc_ae_forward.1} parent=1 // pred_check_branch
      %10489 = sbr.rel (0) target = $region80
    $region79: #{vaefc_ae_forward.1} parent=1 // pred_region
      _
    $region80: #{vaefc_ae_forward.1} parent=1 // pred_fallthru
      _
    %10490 = vsyncpa [#allocation7], 1
    %10491 = vsyncpa [#allocation9], 1
    %10492 = vsyncpa [#allocation12], 1
  %10493 = vsyncmov [#allocation5]
  %s10494 = vpop.sfrf %10493
  %p10495 = scmp.eq.s32.totalorder %s10494, 0
  %p10496 = pneg %p10495
  %10498 = shalt.err (%p10496)
  %s10499 = scalar_lea.sflag [#allocation5], 1
  %10500 = vsyncmov %s10499
  %s10501 = vpop.sfrf %10500
  %p10502 = scmp.eq.s32.totalorder %s10501, 0
  %p10503 = pneg %p10502
  %10505 = shalt.err (%p10503)
  %s10506 = scalar_lea.sflag [#allocation5], 2
  %10507 = vsyncmov %s10506
  %s10508 = vpop.sfrf %10507
  %p10509 = scmp.eq.s32.totalorder %s10508, 0
  %p10510 = pneg %p10509
  %10512 = shalt.err (%p10510)

</llo_original>
